<compile_context>
chip_gen: v5e
topology: v5e:2x2
jax: 0.10.0
libtpu: 0.0.40
codegen_flags: <defaults>
</compile_context>

<pallas_src>
import jax
import jax.numpy as jnp
from jax import lax
from jax.experimental import pallas as pl
from jax.experimental.pallas import tpu as pltpu

K = 5            # ConvBlock default kernel_size=5
PAD = K // 2     # -> padding=2 ("same")


def _im2col(z3d, pad_ref, patch_ref):
    """Build the im2col slab for one 5x5 'same' conv.

    z3d:       [H, W, Cin]               activated input (post-ReLU)
    pad_ref:   [H+2*PAD, W+2*PAD, Cin]   VMEM scratch (zero ring = padding)
    patch_ref: [H*W, K*K*Cin]            VMEM scratch
    returns    [H*W, K*K*Cin]            patch matrix
    """
    H, W, Cin = z3d.shape
    pad_ref[...] = jnp.zeros_like(pad_ref)        # zero padding ring in-kernel
    pad_ref[PAD:PAD + H, PAD:PAD + W, :] = z3d
    zp = pad_ref[...]
    for kh in range(K):
        for kw in range(K):
            c0 = (kh * K + kw) * Cin
            patch_ref[:, c0:c0 + Cin] = (
                zp[kh:kh + H, kw:kw + W, :].reshape(H * W, Cin))
    return patch_ref[...]


def _make_cnn_kernel(num_blocks, H, W):
    def kernel(*refs):
        x_ref = refs[0]
        w_refs = refs[1:1 + num_blocks]
        b_refs = refs[1 + num_blocks:1 + 2 * num_blocks]
        o_ref = refs[1 + 2 * num_blocks]
        pad_refs = refs[2 + 2 * num_blocks:2 + 3 * num_blocks]
        pat_refs = refs[2 + 3 * num_blocks:2 + 4 * num_blocks]

        a = x_ref[0]                                        # [H, W, C0]
        for l in range(num_blocks):
            z = jnp.maximum(a, 0.0)                         # ConvBlock: conv(relu(x))
            if z.ndim == 2:                                 # [H*W, C] from prev layer
                z = z.reshape(H, W, z.shape[-1])
            patches = _im2col(z, pad_refs[l], pat_refs[l])  # [H*W, K*K*Cin]
            if l < num_blocks - 1:
                # Standard orientation [H*W, Cout]; feeds next layer's im2col.
                a = jnp.dot(patches, w_refs[l][...],
                            preferred_element_type=jnp.float32) + b_refs[l][...]
            else:
                # Final layer: transposed-B dot -> channels-first [Cout, H*W]
                # so the output store is lane-dense (H*W lanes, not Cout).
                a = lax.dot_general(
                    w_refs[l][...], patches,
                    (((1,), (1,)), ((), ())),
                    preferred_element_type=jnp.float32) + b_refs[l][...]
        o_ref[0] = a.astype(o_ref.dtype)                    # [C_out, H*W]
    return kernel


def cnn_forward(x, params):
    """CNN.forward: x [m, H, W, c] (channels-last) -> [m, H, W, c_out]."""
    B, H, W, C0 = x.shape
    n = len(params)
    chans = [C0] + [w.shape[-1] for w, _ in params]
    C_out = chans[-1]

    # Weight layout prep (wrapper-side, layout plumbing only):
    #  - blocks 0..n-2:  [K*K*Cin, Cout]  (im2col @ W)
    #  - last block:     [Cout, K*K*Cin]  (for the transposed-B dot)
    w_mats, b_mats = [], []
    for l, (w, b) in enumerate(params):
        cin, cout = chans[l], chans[l + 1]
        wm = w.reshape(K * K * cin, cout)
        if l == n - 1:
            w_mats.append(wm.T)                  # [Cout, K*K*Cin]
            b_mats.append(b.reshape(cout, 1))    # broadcast over H*W lanes
        else:
            w_mats.append(wm)
            b_mats.append(b.reshape(1, cout))

    in_specs = [pl.BlockSpec((1, H, W, C0), lambda i: (i, 0, 0, 0))]
    in_specs += [pl.BlockSpec(w.shape, lambda i: (0, 0)) for w in w_mats]
    in_specs += [pl.BlockSpec(b.shape, lambda i: (0, 0)) for b in b_mats]

    scratch_shapes = (
        [pltpu.VMEM((H + 2 * PAD, W + 2 * PAD, c), jnp.float32)
         for c in chans[:-1]] +
        [pltpu.VMEM((H * W, K * K * c), jnp.float32) for c in chans[:-1]])

    flops = 2 * B * H * W * K * K * sum(
        ci * co for ci, co in zip(chans[:-1], chans[1:]))
    bytes_accessed = 4 * (x.size
                          + sum(w.size for w in w_mats)
                          + sum(b.size for b in b_mats)
                          + B * C_out * H * W)

    out_cf = pl.pallas_call(
        _make_cnn_kernel(n, H, W),
        out_shape=jax.ShapeDtypeStruct((B, C_out, H * W), x.dtype),
        grid=(B,),
        in_specs=in_specs,
        out_specs=pl.BlockSpec((1, C_out, H * W), lambda i: (i, 0, 0)),
        scratch_shapes=scratch_shapes,
        compiler_params=pltpu.CompilerParams(
            dimension_semantics=("parallel",)),
        cost_estimate=pl.CostEstimate(
            flops=flops, transcendentals=0, bytes_accessed=bytes_accessed),
    )(x, *w_mats, *b_mats)

    # Back to the module's channels-last interface (single boundary transpose).
    return out_cf.reshape(B, C_out, H, W).transpose(0, 2, 3, 1)


def init_cnn_params(key, num_channels):
    """Synthetic params matching CNN(dim=2, num_channels=...), HWIO layout.

    (PyTorch nn.Conv2d weight is OIHW; w_hwio[kh, kw, ci, co] == w_oihw[co, ci, kh, kw].)
    """
    in_out = list(zip(num_channels, num_channels[1:]))
    params = []
    for i, (cin, cout) in enumerate(in_out):
        kw_key, kb_key = jax.random.split(jax.random.fold_in(key, i))
        fan_in = cin * K * K
        bound = 1.0 / (fan_in ** 0.5)
        w = jax.random.uniform(kw_key, (K, K, cin, cout), jnp.float32,
                               minval=-bound, maxval=bound)
        b = jax.random.uniform(kb_key, (cout,), jnp.float32,
                               minval=-bound, maxval=bound)
        params.append((w, b))
    return params


def cnn_reference(x, params):
    """Pure-JAX reference of the PyTorch CNN forward (NHWC/HWIO)."""
    for w, b in params:
        x = lax.conv_general_dilated(
            jnp.maximum(x, 0.0), w, window_strides=(1, 1), padding="SAME",
            dimension_numbers=("NHWC", "HWIO", "NHWC"),
            precision=lax.Precision.HIGHEST) + b.reshape(1, 1, 1, -1)
    return x


if __name__ == "__main__":
    key = jax.random.PRNGKey(0)
    x_key, p_key = jax.random.split(key)

    # CNN(dim=2, num_channels=[4, 8, 4]) -> blocks (4->8), (8->4)
    num_channels = [4, 8, 4]
    B, H, W = 2, 16, 16

    x = jax.random.normal(x_key, (B, H, W, num_channels[0]), jnp.float32)
    params = init_cnn_params(p_key, num_channels)

    out = jax.block_until_ready(jax.jit(cnn_forward)(x, params))
    assert out.shape == (B, H, W, num_channels[-1]), out.shape
    assert out.dtype == jnp.float32

    ref = jax.block_until_ready(cnn_reference(x, params))
    max_err = float(jnp.max(jnp.abs(out - ref)))
    assert max_err < 1e-3, f"max abs error vs reference: {max_err}"

    print("KERNEL_OK")
</pallas_src>

<mosaic_0001>
module attributes {stable_mosaic.version = 11 : i64} {
  func.func @kernel(%arg0: i32, %arg1: memref<1x16x16x4xf32, #tpu.memory_space<vmem>>, %arg2: memref<100x8xf32, #tpu.memory_space<vmem>>, %arg3: memref<4x200xf32, #tpu.memory_space<vmem>>, %arg4: memref<1x8xf32, #tpu.memory_space<vmem>>, %arg5: memref<4x1xf32, #tpu.memory_space<vmem>>, %arg6: memref<1x4x256xf32, #tpu.memory_space<vmem>>, %arg7: memref<20x20x4xf32, #tpu.memory_space<vmem>>, %arg8: memref<20x20x8xf32, #tpu.memory_space<vmem>>, %arg9: memref<256x100xf32, #tpu.memory_space<vmem>>, %arg10: memref<256x200xf32, #tpu.memory_space<vmem>>) attributes {dimension_semantics = [#tpu.dimension_semantics<parallel>], iteration_bounds = array<i64: 2>, scalar_prefetch = 0 : i64, scratch_operands = 4 : i64, tpu.core_type = #tpu.core_type<tc>, window_params = [{transform_indices = @transform_0, window_bounds = array<i64: 1, 16, 16, 4>}, {pipeline_mode = #tpu.pipeline_mode<synchronous>, transform_indices = @transform_1, window_bounds = array<i64: 100, 8>}, {pipeline_mode = #tpu.pipeline_mode<synchronous>, transform_indices = @transform_2, window_bounds = array<i64: 4, 200>}, {pipeline_mode = #tpu.pipeline_mode<synchronous>, transform_indices = @transform_3, window_bounds = array<i64: 1, 8>}, {pipeline_mode = #tpu.pipeline_mode<synchronous>, transform_indices = @transform_4, window_bounds = array<i64: 4, 1>}, {transform_indices = @transform_5, window_bounds = array<i64: 1, 4, 256>}]} {
    %c0 = arith.constant 0 : index
    %c0_0 = arith.constant 0 : index
    %c0_1 = arith.constant 0 : index
    %c0_2 = arith.constant 0 : index
    %0 = vector.load %arg1[%c0, %c0_0, %c0_1, %c0_2] : memref<1x16x16x4xf32, #tpu.memory_space<vmem>>, vector<1x16x16x4xf32>
    %1 = vector.shape_cast %0 : vector<1x16x16x4xf32> to vector<16x16x4xf32>
    %cst = arith.constant 0.000000e+00 : f32
    %2 = vector.broadcast %cst : f32 to vector<16x16x4xf32>
    %3 = arith.maximumf %1, %2 : vector<16x16x4xf32>
    %cst_3 = arith.constant 0.000000e+00 : f32
    %4 = vector.broadcast %cst_3 : f32 to vector<20x20x4xf32>
    %c0_4 = arith.constant 0 : index
    %c0_5 = arith.constant 0 : index
    %c0_6 = arith.constant 0 : index
    %5 = vector.load %arg7[%c0_4, %c0_5, %c0_6] : memref<20x20x4xf32, #tpu.memory_space<vmem>>, vector<20x20x4xf32>
    tpu.vector_store %arg7[%c0_4, %c0_5, %c0_6], %4 {strides = array<i32>} : memref<20x20x4xf32, #tpu.memory_space<vmem>>, vector<20x20x4xf32>,
    %c2 = arith.constant 2 : index
    %c2_7 = arith.constant 2 : index
    %c0_8 = arith.constant 0 : index
    %6 = vector.load %arg7[%c2, %c2_7, %c0_8] : memref<20x20x4xf32, #tpu.memory_space<vmem>>, vector<16x16x4xf32>
    tpu.vector_store %arg7[%c2, %c2_7, %c0_8], %3 {strides = array<i32>} : memref<20x20x4xf32, #tpu.memory_space<vmem>>, vector<16x16x4xf32>,
    %c0_9 = arith.constant 0 : index
    %c0_10 = arith.constant 0 : index
    %c0_11 = arith.constant 0 : index
    %7 = vector.load %arg7[%c0_9, %c0_10, %c0_11] : memref<20x20x4xf32, #tpu.memory_space<vmem>>, vector<20x20x4xf32>
    %8 = vector.extract_strided_slice %7 {offsets = [0, 0, 0], sizes = [16, 16, 4], strides = [1, 1, 1]} : vector<20x20x4xf32> to vector<16x16x4xf32>
    %9 = vector.shape_cast %8 : vector<16x16x4xf32> to vector<256x4xf32>
    %c0_12 = arith.constant 0 : index
    %c0_13 = arith.constant 0 : index
    %10 = vector.load %arg9[%c0_12, %c0_13] : memref<256x100xf32, #tpu.memory_space<vmem>>, vector<256x4xf32>
    tpu.vector_store %arg9[%c0_12, %c0_13], %9 {strides = array<i32>} : memref<256x100xf32, #tpu.memory_space<vmem>>, vector<256x4xf32>,
    %11 = vector.extract_strided_slice %7 {offsets = [0, 1, 0], sizes = [16, 16, 4], strides = [1, 1, 1]} : vector<20x20x4xf32> to vector<16x16x4xf32>
    %12 = vector.shape_cast %11 : vector<16x16x4xf32> to vector<256x4xf32>
    %c0_14 = arith.constant 0 : index
    %c4 = arith.constant 4 : index
    %13 = vector.load %arg9[%c0_14, %c4] : memref<256x100xf32, #tpu.memory_space<vmem>>, vector<256x4xf32>
    tpu.vector_store %arg9[%c0_14, %c4], %12 {strides = array<i32>} : memref<256x100xf32, #tpu.memory_space<vmem>>, vector<256x4xf32>,
    %14 = vector.extract_strided_slice %7 {offsets = [0, 2, 0], sizes = [16, 16, 4], strides = [1, 1, 1]} : vector<20x20x4xf32> to vector<16x16x4xf32>
    %15 = vector.shape_cast %14 : vector<16x16x4xf32> to vector<256x4xf32>
    %c0_15 = arith.constant 0 : index
    %c8 = arith.constant 8 : index
    %16 = vector.load %arg9[%c0_15, %c8] : memref<256x100xf32, #tpu.memory_space<vmem>>, vector<256x4xf32>
    tpu.vector_store %arg9[%c0_15, %c8], %15 {strides = array<i32>} : memref<256x100xf32, #tpu.memory_space<vmem>>, vector<256x4xf32>,
    %17 = vector.extract_strided_slice %7 {offsets = [0, 3, 0], sizes = [16, 16, 4], strides = [1, 1, 1]} : vector<20x20x4xf32> to vector<16x16x4xf32>
    %18 = vector.shape_cast %17 : vector<16x16x4xf32> to vector<256x4xf32>
    %c0_16 = arith.constant 0 : index
    %c12 = arith.constant 12 : index
    %19 = vector.load %arg9[%c0_16, %c12] : memref<256x100xf32, #tpu.memory_space<vmem>>, vector<256x4xf32>
    tpu.vector_store %arg9[%c0_16, %c12], %18 {strides = array<i32>} : memref<256x100xf32, #tpu.memory_space<vmem>>, vector<256x4xf32>,
    %20 = vector.extract_strided_slice %7 {offsets = [0, 4, 0], sizes = [16, 16, 4], strides = [1, 1, 1]} : vector<20x20x4xf32> to vector<16x16x4xf32>
    %21 = vector.shape_cast %20 : vector<16x16x4xf32> to vector<256x4xf32>
    %c0_17 = arith.constant 0 : index
    %c16 = arith.constant 16 : index
    %22 = vector.load %arg9[%c0_17, %c16] : memref<256x100xf32, #tpu.memory_space<vmem>>, vector<256x4xf32>
    tpu.vector_store %arg9[%c0_17, %c16], %21 {strides = array<i32>} : memref<256x100xf32, #tpu.memory_space<vmem>>, vector<256x4xf32>,
    %23 = vector.extract_strided_slice %7 {offsets = [1, 0, 0], sizes = [16, 16, 4], strides = [1, 1, 1]} : vector<20x20x4xf32> to vector<16x16x4xf32>
    %24 = vector.shape_cast %23 : vector<16x16x4xf32> to vector<256x4xf32>
    %c0_18 = arith.constant 0 : index
    %c20 = arith.constant 20 : index
    %25 = vector.load %arg9[%c0_18, %c20] : memref<256x100xf32, #tpu.memory_space<vmem>>, vector<256x4xf32>
    tpu.vector_store %arg9[%c0_18, %c20], %24 {strides = array<i32>} : memref<256x100xf32, #tpu.memory_space<vmem>>, vector<256x4xf32>,
    %26 = vector.extract_strided_slice %7 {offsets = [1, 1, 0], sizes = [16, 16, 4], strides = [1, 1, 1]} : vector<20x20x4xf32> to vector<16x16x4xf32>
    %27 = vector.shape_cast %26 : vector<16x16x4xf32> to vector<256x4xf32>
    %c0_19 = arith.constant 0 : index
    %c24 = arith.constant 24 : index
    %28 = vector.load %arg9[%c0_19, %c24] : memref<256x100xf32, #tpu.memory_space<vmem>>, vector<256x4xf32>
    tpu.vector_store %arg9[%c0_19, %c24], %27 {strides = array<i32>} : memref<256x100xf32, #tpu.memory_space<vmem>>, vector<256x4xf32>,
    %29 = vector.extract_strided_slice %7 {offsets = [1, 2, 0], sizes = [16, 16, 4], strides = [1, 1, 1]} : vector<20x20x4xf32> to vector<16x16x4xf32>
    %30 = vector.shape_cast %29 : vector<16x16x4xf32> to vector<256x4xf32>
    %c0_20 = arith.constant 0 : index
    %c28 = arith.constant 28 : index
    %31 = vector.load %arg9[%c0_20, %c28] : memref<256x100xf32, #tpu.memory_space<vmem>>, vector<256x4xf32>
    tpu.vector_store %arg9[%c0_20, %c28], %30 {strides = array<i32>} : memref<256x100xf32, #tpu.memory_space<vmem>>, vector<256x4xf32>,
    %32 = vector.extract_strided_slice %7 {offsets = [1, 3, 0], sizes = [16, 16, 4], strides = [1, 1, 1]} : vector<20x20x4xf32> to vector<16x16x4xf32>
    %33 = vector.shape_cast %32 : vector<16x16x4xf32> to vector<256x4xf32>
    %c0_21 = arith.constant 0 : index
    %c32 = arith.constant 32 : index
    %34 = vector.load %arg9[%c0_21, %c32] : memref<256x100xf32, #tpu.memory_space<vmem>>, vector<256x4xf32>
    tpu.vector_store %arg9[%c0_21, %c32], %33 {strides = array<i32>} : memref<256x100xf32, #tpu.memory_space<vmem>>, vector<256x4xf32>,
    %35 = vector.extract_strided_slice %7 {offsets = [1, 4, 0], sizes = [16, 16, 4], strides = [1, 1, 1]} : vector<20x20x4xf32> to vector<16x16x4xf32>
    %36 = vector.shape_cast %35 : vector<16x16x4xf32> to vector<256x4xf32>
    %c0_22 = arith.constant 0 : index
    %c36 = arith.constant 36 : index
    %37 = vector.load %arg9[%c0_22, %c36] : memref<256x100xf32, #tpu.memory_space<vmem>>, vector<256x4xf32>
    tpu.vector_store %arg9[%c0_22, %c36], %36 {strides = array<i32>} : memref<256x100xf32, #tpu.memory_space<vmem>>, vector<256x4xf32>,
    %38 = vector.extract_strided_slice %7 {offsets = [2, 0, 0], sizes = [16, 16, 4], strides = [1, 1, 1]} : vector<20x20x4xf32> to vector<16x16x4xf32>
    %39 = vector.shape_cast %38 : vector<16x16x4xf32> to vector<256x4xf32>
    %c0_23 = arith.constant 0 : index
    %c40 = arith.constant 40 : index
    %40 = vector.load %arg9[%c0_23, %c40] : memref<256x100xf32, #tpu.memory_space<vmem>>, vector<256x4xf32>
    tpu.vector_store %arg9[%c0_23, %c40], %39 {strides = array<i32>} : memref<256x100xf32, #tpu.memory_space<vmem>>, vector<256x4xf32>,
    %41 = vector.extract_strided_slice %7 {offsets = [2, 1, 0], sizes = [16, 16, 4], strides = [1, 1, 1]} : vector<20x20x4xf32> to vector<16x16x4xf32>
    %42 = vector.shape_cast %41 : vector<16x16x4xf32> to vector<256x4xf32>
    %c0_24 = arith.constant 0 : index
    %c44 = arith.constant 44 : index
    %43 = vector.load %arg9[%c0_24, %c44] : memref<256x100xf32, #tpu.memory_space<vmem>>, vector<256x4xf32>
    tpu.vector_store %arg9[%c0_24, %c44], %42 {strides = array<i32>} : memref<256x100xf32, #tpu.memory_space<vmem>>, vector<256x4xf32>,
    %44 = vector.extract_strided_slice %7 {offsets = [2, 2, 0], sizes = [16, 16, 4], strides = [1, 1, 1]} : vector<20x20x4xf32> to vector<16x16x4xf32>
    %45 = vector.shape_cast %44 : vector<16x16x4xf32> to vector<256x4xf32>
    %c0_25 = arith.constant 0 : index
    %c48 = arith.constant 48 : index
    %46 = vector.load %arg9[%c0_25, %c48] : memref<256x100xf32, #tpu.memory_space<vmem>>, vector<256x4xf32>
    tpu.vector_store %arg9[%c0_25, %c48], %45 {strides = array<i32>} : memref<256x100xf32, #tpu.memory_space<vmem>>, vector<256x4xf32>,
    %47 = vector.extract_strided_slice %7 {offsets = [2, 3, 0], sizes = [16, 16, 4], strides = [1, 1, 1]} : vector<20x20x4xf32> to vector<16x16x4xf32>
    %48 = vector.shape_cast %47 : vector<16x16x4xf32> to vector<256x4xf32>
    %c0_26 = arith.constant 0 : index
    %c52 = arith.constant 52 : index
    %49 = vector.load %arg9[%c0_26, %c52] : memref<256x100xf32, #tpu.memory_space<vmem>>, vector<256x4xf32>
    tpu.vector_store %arg9[%c0_26, %c52], %48 {strides = array<i32>} : memref<256x100xf32, #tpu.memory_space<vmem>>, vector<256x4xf32>,
    %50 = vector.extract_strided_slice %7 {offsets = [2, 4, 0], sizes = [16, 16, 4], strides = [1, 1, 1]} : vector<20x20x4xf32> to vector<16x16x4xf32>
    %51 = vector.shape_cast %50 : vector<16x16x4xf32> to vector<256x4xf32>
    %c0_27 = arith.constant 0 : index
    %c56 = arith.constant 56 : index
    %52 = vector.load %arg9[%c0_27, %c56] : memref<256x100xf32, #tpu.memory_space<vmem>>, vector<256x4xf32>
    tpu.vector_store %arg9[%c0_27, %c56], %51 {strides = array<i32>} : memref<256x100xf32, #tpu.memory_space<vmem>>, vector<256x4xf32>,
    %53 = vector.extract_strided_slice %7 {offsets = [3, 0, 0], sizes = [16, 16, 4], strides = [1, 1, 1]} : vector<20x20x4xf32> to vector<16x16x4xf32>
    %54 = vector.shape_cast %53 : vector<16x16x4xf32> to vector<256x4xf32>
    %c0_28 = arith.constant 0 : index
    %c60 = arith.constant 60 : index
    %55 = vector.load %arg9[%c0_28, %c60] : memref<256x100xf32, #tpu.memory_space<vmem>>, vector<256x4xf32>
    tpu.vector_store %arg9[%c0_28, %c60], %54 {strides = array<i32>} : memref<256x100xf32, #tpu.memory_space<vmem>>, vector<256x4xf32>,
    %56 = vector.extract_strided_slice %7 {offsets = [3, 1, 0], sizes = [16, 16, 4], strides = [1, 1, 1]} : vector<20x20x4xf32> to vector<16x16x4xf32>
    %57 = vector.shape_cast %56 : vector<16x16x4xf32> to vector<256x4xf32>
    %c0_29 = arith.constant 0 : index
    %c64 = arith.constant 64 : index
    %58 = vector.load %arg9[%c0_29, %c64] : memref<256x100xf32, #tpu.memory_space<vmem>>, vector<256x4xf32>
    tpu.vector_store %arg9[%c0_29, %c64], %57 {strides = array<i32>} : memref<256x100xf32, #tpu.memory_space<vmem>>, vector<256x4xf32>,
    %59 = vector.extract_strided_slice %7 {offsets = [3, 2, 0], sizes = [16, 16, 4], strides = [1, 1, 1]} : vector<20x20x4xf32> to vector<16x16x4xf32>
    %60 = vector.shape_cast %59 : vector<16x16x4xf32> to vector<256x4xf32>
    %c0_30 = arith.constant 0 : index
    %c68 = arith.constant 68 : index
    %61 = vector.load %arg9[%c0_30, %c68] : memref<256x100xf32, #tpu.memory_space<vmem>>, vector<256x4xf32>
    tpu.vector_store %arg9[%c0_30, %c68], %60 {strides = array<i32>} : memref<256x100xf32, #tpu.memory_space<vmem>>, vector<256x4xf32>,
    %62 = vector.extract_strided_slice %7 {offsets = [3, 3, 0], sizes = [16, 16, 4], strides = [1, 1, 1]} : vector<20x20x4xf32> to vector<16x16x4xf32>
    %63 = vector.shape_cast %62 : vector<16x16x4xf32> to vector<256x4xf32>
    %c0_31 = arith.constant 0 : index
    %c72 = arith.constant 72 : index
    %64 = vector.load %arg9[%c0_31, %c72] : memref<256x100xf32, #tpu.memory_space<vmem>>, vector<256x4xf32>
    tpu.vector_store %arg9[%c0_31, %c72], %63 {strides = array<i32>} : memref<256x100xf32, #tpu.memory_space<vmem>>, vector<256x4xf32>,
    %65 = vector.extract_strided_slice %7 {offsets = [3, 4, 0], sizes = [16, 16, 4], strides = [1, 1, 1]} : vector<20x20x4xf32> to vector<16x16x4xf32>
    %66 = vector.shape_cast %65 : vector<16x16x4xf32> to vector<256x4xf32>
    %c0_32 = arith.constant 0 : index
    %c76 = arith.constant 76 : index
    %67 = vector.load %arg9[%c0_32, %c76] : memref<256x100xf32, #tpu.memory_space<vmem>>, vector<256x4xf32>
    tpu.vector_store %arg9[%c0_32, %c76], %66 {strides = array<i32>} : memref<256x100xf32, #tpu.memory_space<vmem>>, vector<256x4xf32>,
    %68 = vector.extract_strided_slice %7 {offsets = [4, 0, 0], sizes = [16, 16, 4], strides = [1, 1, 1]} : vector<20x20x4xf32> to vector<16x16x4xf32>
    %69 = vector.shape_cast %68 : vector<16x16x4xf32> to vector<256x4xf32>
    %c0_33 = arith.constant 0 : index
    %c80 = arith.constant 80 : index
    %70 = vector.load %arg9[%c0_33, %c80] : memref<256x100xf32, #tpu.memory_space<vmem>>, vector<256x4xf32>
    tpu.vector_store %arg9[%c0_33, %c80], %69 {strides = array<i32>} : memref<256x100xf32, #tpu.memory_space<vmem>>, vector<256x4xf32>,
    %71 = vector.extract_strided_slice %7 {offsets = [4, 1, 0], sizes = [16, 16, 4], strides = [1, 1, 1]} : vector<20x20x4xf32> to vector<16x16x4xf32>
    %72 = vector.shape_cast %71 : vector<16x16x4xf32> to vector<256x4xf32>
    %c0_34 = arith.constant 0 : index
    %c84 = arith.constant 84 : index
    %73 = vector.load %arg9[%c0_34, %c84] : memref<256x100xf32, #tpu.memory_space<vmem>>, vector<256x4xf32>
    tpu.vector_store %arg9[%c0_34, %c84], %72 {strides = array<i32>} : memref<256x100xf32, #tpu.memory_space<vmem>>, vector<256x4xf32>,
    %74 = vector.extract_strided_slice %7 {offsets = [4, 2, 0], sizes = [16, 16, 4], strides = [1, 1, 1]} : vector<20x20x4xf32> to vector<16x16x4xf32>
    %75 = vector.shape_cast %74 : vector<16x16x4xf32> to vector<256x4xf32>
    %c0_35 = arith.constant 0 : index
    %c88 = arith.constant 88 : index
    %76 = vector.load %arg9[%c0_35, %c88] : memref<256x100xf32, #tpu.memory_space<vmem>>, vector<256x4xf32>
    tpu.vector_store %arg9[%c0_35, %c88], %75 {strides = array<i32>} : memref<256x100xf32, #tpu.memory_space<vmem>>, vector<256x4xf32>,
    %77 = vector.extract_strided_slice %7 {offsets = [4, 3, 0], sizes = [16, 16, 4], strides = [1, 1, 1]} : vector<20x20x4xf32> to vector<16x16x4xf32>
    %78 = vector.shape_cast %77 : vector<16x16x4xf32> to vector<256x4xf32>
    %c0_36 = arith.constant 0 : index
    %c92 = arith.constant 92 : index
    %79 = vector.load %arg9[%c0_36, %c92] : memref<256x100xf32, #tpu.memory_space<vmem>>, vector<256x4xf32>
    tpu.vector_store %arg9[%c0_36, %c92], %78 {strides = array<i32>} : memref<256x100xf32, #tpu.memory_space<vmem>>, vector<256x4xf32>,
    %80 = vector.extract_strided_slice %7 {offsets = [4, 4, 0], sizes = [16, 16, 4], strides = [1, 1, 1]} : vector<20x20x4xf32> to vector<16x16x4xf32>
    %81 = vector.shape_cast %80 : vector<16x16x4xf32> to vector<256x4xf32>
    %c0_37 = arith.constant 0 : index
    %c96 = arith.constant 96 : index
    %82 = vector.load %arg9[%c0_37, %c96] : memref<256x100xf32, #tpu.memory_space<vmem>>, vector<256x4xf32>
    tpu.vector_store %arg9[%c0_37, %c96], %81 {strides = array<i32>} : memref<256x100xf32, #tpu.memory_space<vmem>>, vector<256x4xf32>,
    %c0_38 = arith.constant 0 : index
    %c0_39 = arith.constant 0 : index
    %83 = vector.load %arg9[%c0_38, %c0_39] : memref<256x100xf32, #tpu.memory_space<vmem>>, vector<256x100xf32>
    %c0_40 = arith.constant 0 : index
    %c0_41 = arith.constant 0 : index
    %84 = vector.load %arg2[%c0_40, %c0_41] : memref<100x8xf32, #tpu.memory_space<vmem>>, vector<100x8xf32>
    %cst_42 = arith.constant dense<0.000000e+00> : vector<256x8xf32>
    %85 = tpu.matmul %83, %84, %cst_42 {dimension_numbers = #tpu.dot_dimension_numbers<[1], [0], [0], [1], [0, 0, 1, 1], [], []>} : vector<256x100xf32>, vector<100x8xf32>, vector<256x8xf32> -> vector<256x8xf32>
    %c0_43 = arith.constant 0 : index
    %c0_44 = arith.constant 0 : index
    %86 = vector.load %arg4[%c0_43, %c0_44] : memref<1x8xf32, #tpu.memory_space<vmem>>, vector<1x8xf32>
    %87 = vector.broadcast %86 : vector<1x8xf32> to vector<256x8xf32>
    %88 = arith.addf %85, %87 : vector<256x8xf32>
    %cst_45 = arith.constant 0.000000e+00 : f32
    %89 = vector.broadcast %cst_45 : f32 to vector<256x8xf32>
    %90 = arith.maximumf %88, %89 : vector<256x8xf32>
    %91 = vector.shape_cast %90 : vector<256x8xf32> to vector<16x16x8xf32>
    %cst_46 = arith.constant 0.000000e+00 : f32
    %92 = vector.broadcast %cst_46 : f32 to vector<20x20x8xf32>
    %c0_47 = arith.constant 0 : index
    %c0_48 = arith.constant 0 : index
    %c0_49 = arith.constant 0 : index
    %93 = vector.load %arg8[%c0_47, %c0_48, %c0_49] : memref<20x20x8xf32, #tpu.memory_space<vmem>>, vector<20x20x8xf32>
    tpu.vector_store %arg8[%c0_47, %c0_48, %c0_49], %92 {strides = array<i32>} : memref<20x20x8xf32, #tpu.memory_space<vmem>>, vector<20x20x8xf32>,
    %c2_50 = arith.constant 2 : index
    %c2_51 = arith.constant 2 : index
    %c0_52 = arith.constant 0 : index
    %94 = vector.load %arg8[%c2_50, %c2_51, %c0_52] : memref<20x20x8xf32, #tpu.memory_space<vmem>>, vector<16x16x8xf32>
    tpu.vector_store %arg8[%c2_50, %c2_51, %c0_52], %91 {strides = array<i32>} : memref<20x20x8xf32, #tpu.memory_space<vmem>>, vector<16x16x8xf32>,
    %c0_53 = arith.constant 0 : index
    %c0_54 = arith.constant 0 : index
    %c0_55 = arith.constant 0 : index
    %95 = vector.load %arg8[%c0_53, %c0_54, %c0_55] : memref<20x20x8xf32, #tpu.memory_space<vmem>>, vector<20x20x8xf32>
    %96 = vector.extract_strided_slice %95 {offsets = [0, 0, 0], sizes = [16, 16, 8], strides = [1, 1, 1]} : vector<20x20x8xf32> to vector<16x16x8xf32>
    %97 = vector.shape_cast %96 : vector<16x16x8xf32> to vector<256x8xf32>
    %c0_56 = arith.constant 0 : index
    %c0_57 = arith.constant 0 : index
    %98 = vector.load %arg10[%c0_56, %c0_57] : memref<256x200xf32, #tpu.memory_space<vmem>>, vector<256x8xf32>
    tpu.vector_store %arg10[%c0_56, %c0_57], %97 {strides = array<i32>} : memref<256x200xf32, #tpu.memory_space<vmem>>, vector<256x8xf32>,
    %99 = vector.extract_strided_slice %95 {offsets = [0, 1, 0], sizes = [16, 16, 8], strides = [1, 1, 1]} : vector<20x20x8xf32> to vector<16x16x8xf32>
    %100 = vector.shape_cast %99 : vector<16x16x8xf32> to vector<256x8xf32>
    %c0_58 = arith.constant 0 : index
    %c8_59 = arith.constant 8 : index
    %101 = vector.load %arg10[%c0_58, %c8_59] : memref<256x200xf32, #tpu.memory_space<vmem>>, vector<256x8xf32>
    tpu.vector_store %arg10[%c0_58, %c8_59], %100 {strides = array<i32>} : memref<256x200xf32, #tpu.memory_space<vmem>>, vector<256x8xf32>,
    %102 = vector.extract_strided_slice %95 {offsets = [0, 2, 0], sizes = [16, 16, 8], strides = [1, 1, 1]} : vector<20x20x8xf32> to vector<16x16x8xf32>
    %103 = vector.shape_cast %102 : vector<16x16x8xf32> to vector<256x8xf32>
    %c0_60 = arith.constant 0 : index
    %c16_61 = arith.constant 16 : index
    %104 = vector.load %arg10[%c0_60, %c16_61] : memref<256x200xf32, #tpu.memory_space<vmem>>, vector<256x8xf32>
    tpu.vector_store %arg10[%c0_60, %c16_61], %103 {strides = array<i32>} : memref<256x200xf32, #tpu.memory_space<vmem>>, vector<256x8xf32>,
    %105 = vector.extract_strided_slice %95 {offsets = [0, 3, 0], sizes = [16, 16, 8], strides = [1, 1, 1]} : vector<20x20x8xf32> to vector<16x16x8xf32>
    %106 = vector.shape_cast %105 : vector<16x16x8xf32> to vector<256x8xf32>
    %c0_62 = arith.constant 0 : index
    %c24_63 = arith.constant 24 : index
    %107 = vector.load %arg10[%c0_62, %c24_63] : memref<256x200xf32, #tpu.memory_space<vmem>>, vector<256x8xf32>
    tpu.vector_store %arg10[%c0_62, %c24_63], %106 {strides = array<i32>} : memref<256x200xf32, #tpu.memory_space<vmem>>, vector<256x8xf32>,
    %108 = vector.extract_strided_slice %95 {offsets = [0, 4, 0], sizes = [16, 16, 8], strides = [1, 1, 1]} : vector<20x20x8xf32> to vector<16x16x8xf32>
    %109 = vector.shape_cast %108 : vector<16x16x8xf32> to vector<256x8xf32>
    %c0_64 = arith.constant 0 : index
    %c32_65 = arith.constant 32 : index
    %110 = vector.load %arg10[%c0_64, %c32_65] : memref<256x200xf32, #tpu.memory_space<vmem>>, vector<256x8xf32>
    tpu.vector_store %arg10[%c0_64, %c32_65], %109 {strides = array<i32>} : memref<256x200xf32, #tpu.memory_space<vmem>>, vector<256x8xf32>,
    %111 = vector.extract_strided_slice %95 {offsets = [1, 0, 0], sizes = [16, 16, 8], strides = [1, 1, 1]} : vector<20x20x8xf32> to vector<16x16x8xf32>
    %112 = vector.shape_cast %111 : vector<16x16x8xf32> to vector<256x8xf32>
    %c0_66 = arith.constant 0 : index
    %c40_67 = arith.constant 40 : index
    %113 = vector.load %arg10[%c0_66, %c40_67] : memref<256x200xf32, #tpu.memory_space<vmem>>, vector<256x8xf32>
    tpu.vector_store %arg10[%c0_66, %c40_67], %112 {strides = array<i32>} : memref<256x200xf32, #tpu.memory_space<vmem>>, vector<256x8xf32>,
    %114 = vector.extract_strided_slice %95 {offsets = [1, 1, 0], sizes = [16, 16, 8], strides = [1, 1, 1]} : vector<20x20x8xf32> to vector<16x16x8xf32>
    %115 = vector.shape_cast %114 : vector<16x16x8xf32> to vector<256x8xf32>
    %c0_68 = arith.constant 0 : index
    %c48_69 = arith.constant 48 : index
    %116 = vector.load %arg10[%c0_68, %c48_69] : memref<256x200xf32, #tpu.memory_space<vmem>>, vector<256x8xf32>
    tpu.vector_store %arg10[%c0_68, %c48_69], %115 {strides = array<i32>} : memref<256x200xf32, #tpu.memory_space<vmem>>, vector<256x8xf32>,
    %117 = vector.extract_strided_slice %95 {offsets = [1, 2, 0], sizes = [16, 16, 8], strides = [1, 1, 1]} : vector<20x20x8xf32> to vector<16x16x8xf32>
    %118 = vector.shape_cast %117 : vector<16x16x8xf32> to vector<256x8xf32>
    %c0_70 = arith.constant 0 : index
    %c56_71 = arith.constant 56 : index
    %119 = vector.load %arg10[%c0_70, %c56_71] : memref<256x200xf32, #tpu.memory_space<vmem>>, vector<256x8xf32>
    tpu.vector_store %arg10[%c0_70, %c56_71], %118 {strides = array<i32>} : memref<256x200xf32, #tpu.memory_space<vmem>>, vector<256x8xf32>,
    %120 = vector.extract_strided_slice %95 {offsets = [1, 3, 0], sizes = [16, 16, 8], strides = [1, 1, 1]} : vector<20x20x8xf32> to vector<16x16x8xf32>
    %121 = vector.shape_cast %120 : vector<16x16x8xf32> to vector<256x8xf32>
    %c0_72 = arith.constant 0 : index
    %c64_73 = arith.constant 64 : index
    %122 = vector.load %arg10[%c0_72, %c64_73] : memref<256x200xf32, #tpu.memory_space<vmem>>, vector<256x8xf32>
    tpu.vector_store %arg10[%c0_72, %c64_73], %121 {strides = array<i32>} : memref<256x200xf32, #tpu.memory_space<vmem>>, vector<256x8xf32>,
    %123 = vector.extract_strided_slice %95 {offsets = [1, 4, 0], sizes = [16, 16, 8], strides = [1, 1, 1]} : vector<20x20x8xf32> to vector<16x16x8xf32>
    %124 = vector.shape_cast %123 : vector<16x16x8xf32> to vector<256x8xf32>
    %c0_74 = arith.constant 0 : index
    %c72_75 = arith.constant 72 : index
    %125 = vector.load %arg10[%c0_74, %c72_75] : memref<256x200xf32, #tpu.memory_space<vmem>>, vector<256x8xf32>
    tpu.vector_store %arg10[%c0_74, %c72_75], %124 {strides = array<i32>} : memref<256x200xf32, #tpu.memory_space<vmem>>, vector<256x8xf32>,
    %126 = vector.extract_strided_slice %95 {offsets = [2, 0, 0], sizes = [16, 16, 8], strides = [1, 1, 1]} : vector<20x20x8xf32> to vector<16x16x8xf32>
    %127 = vector.shape_cast %126 : vector<16x16x8xf32> to vector<256x8xf32>
    %c0_76 = arith.constant 0 : index
    %c80_77 = arith.constant 80 : index
    %128 = vector.load %arg10[%c0_76, %c80_77] : memref<256x200xf32, #tpu.memory_space<vmem>>, vector<256x8xf32>
    tpu.vector_store %arg10[%c0_76, %c80_77], %127 {strides = array<i32>} : memref<256x200xf32, #tpu.memory_space<vmem>>, vector<256x8xf32>,
    %129 = vector.extract_strided_slice %95 {offsets = [2, 1, 0], sizes = [16, 16, 8], strides = [1, 1, 1]} : vector<20x20x8xf32> to vector<16x16x8xf32>
    %130 = vector.shape_cast %129 : vector<16x16x8xf32> to vector<256x8xf32>
    %c0_78 = arith.constant 0 : index
    %c88_79 = arith.constant 88 : index
    %131 = vector.load %arg10[%c0_78, %c88_79] : memref<256x200xf32, #tpu.memory_space<vmem>>, vector<256x8xf32>
    tpu.vector_store %arg10[%c0_78, %c88_79], %130 {strides = array<i32>} : memref<256x200xf32, #tpu.memory_space<vmem>>, vector<256x8xf32>,
    %132 = vector.extract_strided_slice %95 {offsets = [2, 2, 0], sizes = [16, 16, 8], strides = [1, 1, 1]} : vector<20x20x8xf32> to vector<16x16x8xf32>
    %133 = vector.shape_cast %132 : vector<16x16x8xf32> to vector<256x8xf32>
    %c0_80 = arith.constant 0 : index
    %c96_81 = arith.constant 96 : index
    %134 = vector.load %arg10[%c0_80, %c96_81] : memref<256x200xf32, #tpu.memory_space<vmem>>, vector<256x8xf32>
    tpu.vector_store %arg10[%c0_80, %c96_81], %133 {strides = array<i32>} : memref<256x200xf32, #tpu.memory_space<vmem>>, vector<256x8xf32>,
    %135 = vector.extract_strided_slice %95 {offsets = [2, 3, 0], sizes = [16, 16, 8], strides = [1, 1, 1]} : vector<20x20x8xf32> to vector<16x16x8xf32>
    %136 = vector.shape_cast %135 : vector<16x16x8xf32> to vector<256x8xf32>
    %c0_82 = arith.constant 0 : index
    %c104 = arith.constant 104 : index
    %137 = vector.load %arg10[%c0_82, %c104] : memref<256x200xf32, #tpu.memory_space<vmem>>, vector<256x8xf32>
    tpu.vector_store %arg10[%c0_82, %c104], %136 {strides = array<i32>} : memref<256x200xf32, #tpu.memory_space<vmem>>, vector<256x8xf32>,
    %138 = vector.extract_strided_slice %95 {offsets = [2, 4, 0], sizes = [16, 16, 8], strides = [1, 1, 1]} : vector<20x20x8xf32> to vector<16x16x8xf32>
    %139 = vector.shape_cast %138 : vector<16x16x8xf32> to vector<256x8xf32>
    %c0_83 = arith.constant 0 : index
    %c112 = arith.constant 112 : index
    %140 = vector.load %arg10[%c0_83, %c112] : memref<256x200xf32, #tpu.memory_space<vmem>>, vector<256x8xf32>
    tpu.vector_store %arg10[%c0_83, %c112], %139 {strides = array<i32>} : memref<256x200xf32, #tpu.memory_space<vmem>>, vector<256x8xf32>,
    %141 = vector.extract_strided_slice %95 {offsets = [3, 0, 0], sizes = [16, 16, 8], strides = [1, 1, 1]} : vector<20x20x8xf32> to vector<16x16x8xf32>
    %142 = vector.shape_cast %141 : vector<16x16x8xf32> to vector<256x8xf32>
    %c0_84 = arith.constant 0 : index
    %c120 = arith.constant 120 : index
    %143 = vector.load %arg10[%c0_84, %c120] : memref<256x200xf32, #tpu.memory_space<vmem>>, vector<256x8xf32>
    tpu.vector_store %arg10[%c0_84, %c120], %142 {strides = array<i32>} : memref<256x200xf32, #tpu.memory_space<vmem>>, vector<256x8xf32>,
    %144 = vector.extract_strided_slice %95 {offsets = [3, 1, 0], sizes = [16, 16, 8], strides = [1, 1, 1]} : vector<20x20x8xf32> to vector<16x16x8xf32>
    %145 = vector.shape_cast %144 : vector<16x16x8xf32> to vector<256x8xf32>
    %c0_85 = arith.constant 0 : index
    %c128 = arith.constant 128 : index
    %146 = vector.load %arg10[%c0_85, %c128] : memref<256x200xf32, #tpu.memory_space<vmem>>, vector<256x8xf32>
    tpu.vector_store %arg10[%c0_85, %c128], %145 {strides = array<i32>} : memref<256x200xf32, #tpu.memory_space<vmem>>, vector<256x8xf32>,
    %147 = vector.extract_strided_slice %95 {offsets = [3, 2, 0], sizes = [16, 16, 8], strides = [1, 1, 1]} : vector<20x20x8xf32> to vector<16x16x8xf32>
    %148 = vector.shape_cast %147 : vector<16x16x8xf32> to vector<256x8xf32>
    %c0_86 = arith.constant 0 : index
    %c136 = arith.constant 136 : index
    %149 = vector.load %arg10[%c0_86, %c136] : memref<256x200xf32, #tpu.memory_space<vmem>>, vector<256x8xf32>
    tpu.vector_store %arg10[%c0_86, %c136], %148 {strides = array<i32>} : memref<256x200xf32, #tpu.memory_space<vmem>>, vector<256x8xf32>,
    %150 = vector.extract_strided_slice %95 {offsets = [3, 3, 0], sizes = [16, 16, 8], strides = [1, 1, 1]} : vector<20x20x8xf32> to vector<16x16x8xf32>
    %151 = vector.shape_cast %150 : vector<16x16x8xf32> to vector<256x8xf32>
    %c0_87 = arith.constant 0 : index
    %c144 = arith.constant 144 : index
    %152 = vector.load %arg10[%c0_87, %c144] : memref<256x200xf32, #tpu.memory_space<vmem>>, vector<256x8xf32>
    tpu.vector_store %arg10[%c0_87, %c144], %151 {strides = array<i32>} : memref<256x200xf32, #tpu.memory_space<vmem>>, vector<256x8xf32>,
    %153 = vector.extract_strided_slice %95 {offsets = [3, 4, 0], sizes = [16, 16, 8], strides = [1, 1, 1]} : vector<20x20x8xf32> to vector<16x16x8xf32>
    %154 = vector.shape_cast %153 : vector<16x16x8xf32> to vector<256x8xf32>
    %c0_88 = arith.constant 0 : index
    %c152 = arith.constant 152 : index
    %155 = vector.load %arg10[%c0_88, %c152] : memref<256x200xf32, #tpu.memory_space<vmem>>, vector<256x8xf32>
    tpu.vector_store %arg10[%c0_88, %c152], %154 {strides = array<i32>} : memref<256x200xf32, #tpu.memory_space<vmem>>, vector<256x8xf32>,
    %156 = vector.extract_strided_slice %95 {offsets = [4, 0, 0], sizes = [16, 16, 8], strides = [1, 1, 1]} : vector<20x20x8xf32> to vector<16x16x8xf32>
    %157 = vector.shape_cast %156 : vector<16x16x8xf32> to vector<256x8xf32>
    %c0_89 = arith.constant 0 : index
    %c160 = arith.constant 160 : index
    %158 = vector.load %arg10[%c0_89, %c160] : memref<256x200xf32, #tpu.memory_space<vmem>>, vector<256x8xf32>
    tpu.vector_store %arg10[%c0_89, %c160], %157 {strides = array<i32>} : memref<256x200xf32, #tpu.memory_space<vmem>>, vector<256x8xf32>,
    %159 = vector.extract_strided_slice %95 {offsets = [4, 1, 0], sizes = [16, 16, 8], strides = [1, 1, 1]} : vector<20x20x8xf32> to vector<16x16x8xf32>
    %160 = vector.shape_cast %159 : vector<16x16x8xf32> to vector<256x8xf32>
    %c0_90 = arith.constant 0 : index
    %c168 = arith.constant 168 : index
    %161 = vector.load %arg10[%c0_90, %c168] : memref<256x200xf32, #tpu.memory_space<vmem>>, vector<256x8xf32>
    tpu.vector_store %arg10[%c0_90, %c168], %160 {strides = array<i32>} : memref<256x200xf32, #tpu.memory_space<vmem>>, vector<256x8xf32>,
    %162 = vector.extract_strided_slice %95 {offsets = [4, 2, 0], sizes = [16, 16, 8], strides = [1, 1, 1]} : vector<20x20x8xf32> to vector<16x16x8xf32>
    %163 = vector.shape_cast %162 : vector<16x16x8xf32> to vector<256x8xf32>
    %c0_91 = arith.constant 0 : index
    %c176 = arith.constant 176 : index
    %164 = vector.load %arg10[%c0_91, %c176] : memref<256x200xf32, #tpu.memory_space<vmem>>, vector<256x8xf32>
    tpu.vector_store %arg10[%c0_91, %c176], %163 {strides = array<i32>} : memref<256x200xf32, #tpu.memory_space<vmem>>, vector<256x8xf32>,
    %165 = vector.extract_strided_slice %95 {offsets = [4, 3, 0], sizes = [16, 16, 8], strides = [1, 1, 1]} : vector<20x20x8xf32> to vector<16x16x8xf32>
    %166 = vector.shape_cast %165 : vector<16x16x8xf32> to vector<256x8xf32>
    %c0_92 = arith.constant 0 : index
    %c184 = arith.constant 184 : index
    %167 = vector.load %arg10[%c0_92, %c184] : memref<256x200xf32, #tpu.memory_space<vmem>>, vector<256x8xf32>
    tpu.vector_store %arg10[%c0_92, %c184], %166 {strides = array<i32>} : memref<256x200xf32, #tpu.memory_space<vmem>>, vector<256x8xf32>,
    %168 = vector.extract_strided_slice %95 {offsets = [4, 4, 0], sizes = [16, 16, 8], strides = [1, 1, 1]} : vector<20x20x8xf32> to vector<16x16x8xf32>
    %169 = vector.shape_cast %168 : vector<16x16x8xf32> to vector<256x8xf32>
    %c0_93 = arith.constant 0 : index
    %c192 = arith.constant 192 : index
    %170 = vector.load %arg10[%c0_93, %c192] : memref<256x200xf32, #tpu.memory_space<vmem>>, vector<256x8xf32>
    tpu.vector_store %arg10[%c0_93, %c192], %169 {strides = array<i32>} : memref<256x200xf32, #tpu.memory_space<vmem>>, vector<256x8xf32>,
    %c0_94 = arith.constant 0 : index
    %c0_95 = arith.constant 0 : index
    %171 = vector.load %arg10[%c0_94, %c0_95] : memref<256x200xf32, #tpu.memory_space<vmem>>, vector<256x200xf32>
    %c0_96 = arith.constant 0 : index
    %c0_97 = arith.constant 0 : index
    %172 = vector.load %arg3[%c0_96, %c0_97] : memref<4x200xf32, #tpu.memory_space<vmem>>, vector<4x200xf32>
    %cst_98 = arith.constant dense<0.000000e+00> : vector<4x256xf32>
    %173 = tpu.matmul %172, %171, %cst_98 {dimension_numbers = #tpu.dot_dimension_numbers<[1], [1], [0], [0], [0, 0, 1, 0], [], []>} : vector<4x200xf32>, vector<256x200xf32>, vector<4x256xf32> -> vector<4x256xf32>
    %c0_99 = arith.constant 0 : index
    %c0_100 = arith.constant 0 : index
    %174 = vector.load %arg5[%c0_99, %c0_100] : memref<4x1xf32, #tpu.memory_space<vmem>>, vector<4x1xf32>
    %175 = vector.broadcast %174 : vector<4x1xf32> to vector<4x256xf32>
    %176 = arith.addf %173, %175 : vector<4x256xf32>
    %c0_101 = arith.constant 0 : index
    %c0_102 = arith.constant 0 : index
    %c0_103 = arith.constant 0 : index
    %177 = vector.load %arg6[%c0_101, %c0_102, %c0_103] : memref<1x4x256xf32, #tpu.memory_space<vmem>>, vector<1x4x256xf32>
    %178 = vector.shape_cast %177 : vector<1x4x256xf32> to vector<4x256xf32>
    %179 = vector.shape_cast %176 : vector<4x256xf32> to vector<1x4x256xf32>
    tpu.vector_store %arg6[%c0_101, %c0_102, %c0_103], %179 {strides = array<i32>} : memref<1x4x256xf32, #tpu.memory_space<vmem>>, vector<1x4x256xf32>,
    return
  }
  func.func @transform_0(%arg0: i32) -> (i32, i32, i32, i32) {
    %c0_i32 = arith.constant 0 : i32
    %c0_i32_0 = arith.constant 0 : i32
    %c0_i32_1 = arith.constant 0 : i32
    %c0_i32_2 = arith.constant 0 : i32
    return %arg0, %c0_i32, %c0_i32_0, %c0_i32_1 : i32, i32, i32, i32
  }
  func.func @transform_1(%arg0: i32) -> (i32, i32) {
    %c0_i32 = arith.constant 0 : i32
    %c0_i32_0 = arith.constant 0 : i32
    %c0_i32_1 = arith.constant 0 : i32
    return %c0_i32, %c0_i32_0 : i32, i32
  }
  func.func @transform_2(%arg0: i32) -> (i32, i32) {
    %c0_i32 = arith.constant 0 : i32
    %c0_i32_0 = arith.constant 0 : i32
    %c0_i32_1 = arith.constant 0 : i32
    return %c0_i32, %c0_i32_0 : i32, i32
  }
  func.func @transform_3(%arg0: i32) -> (i32, i32) {
    %c0_i32 = arith.constant 0 : i32
    %c0_i32_0 = arith.constant 0 : i32
    %c0_i32_1 = arith.constant 0 : i32
    return %c0_i32, %c0_i32_0 : i32, i32
  }
  func.func @transform_4(%arg0: i32) -> (i32, i32) {
    %c0_i32 = arith.constant 0 : i32
    %c0_i32_0 = arith.constant 0 : i32
    %c0_i32_1 = arith.constant 0 : i32
    return %c0_i32, %c0_i32_0 : i32, i32
  }
  func.func @transform_5(%arg0: i32) -> (i32, i32, i32) {
    %c0_i32 = arith.constant 0 : i32
    %c0_i32_0 = arith.constant 0 : i32
    %c0_i32_1 = arith.constant 0 : i32
    return %arg0, %c0_i32, %c0_i32_0 : i32, i32, i32
  }
}

</mosaic_0001>

<llo_original>
// kernel: cnn_forward.1
$region0: #{cnn_forward.1}
  #allocation0 [shape = 'u32[]', space=smem, size = 0x4, offset = 0x4, fixed_abs, tag = 'smem constant byte address 0x4 - core index']
  #allocation1 [shape = 'u32[72,128]{1,0:T(1,128)}', space=vmem, size = 0x9000, scoped, tag = 'internal scratch']
  #allocation2 [shape = 'f32[20,20,4]{2,1,0:T(8,128)}', space=vmem, size = 0x3c000, scoped, tag = 'scratch operand']
  #allocation3 [shape = 'f32[20,20,8]{2,1,0:T(8,128)}', space=vmem, size = 0x3c000, scoped, tag = 'scratch operand']
  #allocation4 [shape = 'f32[256,100]{1,0:T(8,128)}', space=vmem, size = 0x20000, scoped, tag = 'scratch operand']
  #allocation5 [shape = 'f32[256,200]{1,0:T(8,128)}', space=vmem, size = 0x40000, scoped, tag = 'scratch operand']
  %s0 = inlined_call_operand.vmem [shape: f32[2,16,16,4], index: 0, kind: input, shape index: {}]
  %s1 = inlined_call_operand.vmem [shape: f32[100,8], index: 1, kind: input, shape index: {}]
  %s2 = inlined_call_operand.vmem [shape: f32[4,200], index: 2, kind: input, shape index: {}]
  %s3 = inlined_call_operand.vmem [shape: f32[1,8], index: 3, kind: input, shape index: {}]
  %s4 = inlined_call_operand.vmem [shape: f32[4,1], index: 4, kind: input, shape index: {}]
  %s5 = inlined_call_operand.vmem [shape: f32[2,4,256], index: 5, kind: output, shape index: {}]
  %s6 = sld [smem:[#allocation0]]
  $region53: #{cnn_forward.1} parent=0
    _
  %s8 = ssub.s32 1, %s6
  %s9 = scalar_select 0, %s8, %s6
  loop: start=0, step=1, limit=4
  $region2: #{cnn_forward.1} parent=0 // loop_pre_header
    _
  $region3: #{cnn_forward.1} parent=0 // loop_header
    %s11 = sphi 0, %s15
    %p12 = scmp.ge.s32.totalorder %s11, 4
    %s21 = sphi 0, %s23
    %s24 = sphi 0, %s21
    %s25 = sphi 0, %s24
    %s41 = sphi 0, %s25
    %s45 = sphi 0, %s45
    %s47 = sphi 0, %s45
    %s48 = sphi 0, %s47
    %s62 = sphi 0, %s48
    %s66 = sphi 0, %s66
    %s68 = sphi 0, %s66
    %s69 = sphi 0, %s68
    %s83 = sphi 0, %s69
    %s87 = sphi 0, %s87
    %s89 = sphi 0, %s87
    %s90 = sphi 0, %s89
    %s104 = sphi 0, %s90
    %s108 = sphi 0, %s108
    %s110 = sphi 0, %s108
    %s111 = sphi 0, %s110
    %s125 = sphi 0, %s111
    %s131 = sphi 0, %s133
    %s134 = sphi 0, %s131
    %s135 = sphi 0, %s134
    %s151 = sphi 0, %s135
  $region4: #{cnn_forward.1} parent=0 // loop_header_branch
    %14 = sbr.rel (%p12) target = $region8
  $region5: #{cnn_forward.1} parent=0 // loop_body
    %s16 = ssub.s32 %s11, 1
    %s17 = ssub.s32 %s11, 2
    %s18 = sadd.s32 %s11, 1
    %s19 = ssub.s32 %s11, %s18
    %p20 = scmp.eq.s32.totalorder %s19, 0
    %s22 = sadd.s32 %s21, 1
    %s23 = scalar_select %p20, %s21, %s22
    %p26 = pneg %p20
    %p27 = scmp.eq.s32.totalorder %s11, 1
    %p28 = por %p26, %p27
    %p29 = scmp.ne.s32.totalorder %s21, %s24
    %p30 = scmp.eq.s32.totalorder %s11, 0
    %p31 = por %p29, %p30
    %p32 = scmp.ne.s32.totalorder %s21, %s24
    %p33 = scmp.eq.s32.totalorder %s16, 1
    %p34 = por %p32, %p33
    %p35 = scmp.ne.s32.totalorder %s24, %s25
    %p36 = scmp.eq.s32.totalorder %s16, 0
    %p37 = por %p35, %p36
    %p38 = scmp.ne.s32.totalorder %s24, %s25
    %p39 = scmp.eq.s32.totalorder %s17, 1
    %p40 = por %p38, %p39
    %p42 = scmp.ne.s32.totalorder %s25, %s41
    %p43 = scmp.eq.s32.totalorder %s17, 0
    %p44 = por %p42, %p43
    %s46 = sadd.s32 %s45, 1
    %p49 = scmp.eq.s32.totalorder %s11, 1
    %p50 = scmp.ne.s32.totalorder %s45, %s47
    %p51 = scmp.eq.s32.totalorder %s11, 0
    %p52 = por %p50, %p51
    %p53 = scmp.ne.s32.totalorder %s45, %s47
    %p54 = scmp.eq.s32.totalorder %s16, 1
    %p55 = por %p53, %p54
    %p56 = scmp.ne.s32.totalorder %s47, %s48
    %p57 = scmp.eq.s32.totalorder %s16, 0
    %p58 = por %p56, %p57
    %p59 = scmp.ne.s32.totalorder %s47, %s48
    %p60 = scmp.eq.s32.totalorder %s17, 1
    %p61 = por %p59, %p60
    %p63 = scmp.ne.s32.totalorder %s48, %s62
    %p64 = scmp.eq.s32.totalorder %s17, 0
    %p65 = por %p63, %p64
    %s67 = sadd.s32 %s66, 1
    %p70 = scmp.eq.s32.totalorder %s11, 1
    %p71 = scmp.ne.s32.totalorder %s66, %s68
    %p72 = scmp.eq.s32.totalorder %s11, 0
    %p73 = por %p71, %p72
    %p74 = scmp.ne.s32.totalorder %s66, %s68
    %p75 = scmp.eq.s32.totalorder %s16, 1
    %p76 = por %p74, %p75
    %p77 = scmp.ne.s32.totalorder %s68, %s69
    %p78 = scmp.eq.s32.totalorder %s16, 0
    %p79 = por %p77, %p78
    %p80 = scmp.ne.s32.totalorder %s68, %s69
    %p81 = scmp.eq.s32.totalorder %s17, 1
    %p82 = por %p80, %p81
    %p84 = scmp.ne.s32.totalorder %s69, %s83
    %p85 = scmp.eq.s32.totalorder %s17, 0
    %p86 = por %p84, %p85
    %s88 = sadd.s32 %s87, 1
    %p91 = scmp.eq.s32.totalorder %s11, 1
    %p92 = scmp.ne.s32.totalorder %s87, %s89
    %p93 = scmp.eq.s32.totalorder %s11, 0
    %p94 = por %p92, %p93
    %p95 = scmp.ne.s32.totalorder %s87, %s89
    %p96 = scmp.eq.s32.totalorder %s16, 1
    %p97 = por %p95, %p96
    %p98 = scmp.ne.s32.totalorder %s89, %s90
    %p99 = scmp.eq.s32.totalorder %s16, 0
    %p100 = por %p98, %p99
    %p101 = scmp.ne.s32.totalorder %s89, %s90
    %p102 = scmp.eq.s32.totalorder %s17, 1
    %p103 = por %p101, %p102
    %p105 = scmp.ne.s32.totalorder %s90, %s104
    %p106 = scmp.eq.s32.totalorder %s17, 0
    %p107 = por %p105, %p106
    %s109 = sadd.s32 %s108, 1
    %p112 = scmp.eq.s32.totalorder %s11, 1
    %p113 = scmp.ne.s32.totalorder %s108, %s110
    %p114 = scmp.eq.s32.totalorder %s11, 0
    %p115 = por %p113, %p114
    %p116 = scmp.ne.s32.totalorder %s108, %s110
    %p117 = scmp.eq.s32.totalorder %s16, 1
    %p118 = por %p116, %p117
    %p119 = scmp.ne.s32.totalorder %s110, %s111
    %p120 = scmp.eq.s32.totalorder %s16, 0
    %p121 = por %p119, %p120
    %p122 = scmp.ne.s32.totalorder %s110, %s111
    %p123 = scmp.eq.s32.totalorder %s17, 1
    %p124 = por %p122, %p123
    %p126 = scmp.ne.s32.totalorder %s111, %s125
    %p127 = scmp.eq.s32.totalorder %s17, 0
    %p128 = por %p126, %p127
    %s129 = ssub.s32 %s11, %s18
    %p130 = scmp.eq.s32.totalorder %s129, 0
    %s132 = sadd.s32 %s131, 1
    %s133 = scalar_select %p130, %s131, %s132
    %p136 = pneg %p130
    %p137 = scmp.eq.s32.totalorder %s11, 1
    %p138 = por %p136, %p137
    %p139 = scmp.ne.s32.totalorder %s131, %s134
    %p140 = scmp.eq.s32.totalorder %s11, 0
    %p141 = por %p139, %p140
    %p142 = scmp.ne.s32.totalorder %s131, %s134
    %p143 = scmp.eq.s32.totalorder %s16, 1
    %p144 = por %p142, %p143
    %p145 = scmp.ne.s32.totalorder %s134, %s135
    %p146 = scmp.eq.s32.totalorder %s16, 0
    %p147 = por %p145, %p146
    %p148 = scmp.ne.s32.totalorder %s134, %s135
    %p149 = scmp.eq.s32.totalorder %s17, 1
    %p150 = por %p148, %p149
    %p152 = scmp.ne.s32.totalorder %s135, %s151
    %p153 = scmp.eq.s32.totalorder %s17, 0
    %p154 = por %p152, %p153
    %p155 = scmp.le.s32.totalorder 1, %s11
    %p156 = scmp.lt.s32.totalorder %s11, 3
    %p157 = pnand %p155, %p156
    %p158 = pneg %p157
    // Predicated region
    $region9: #{cnn_forward.1} parent=5 // pred_check
      _
    $region10: #{cnn_forward.1} parent=5 // pred_check_branch
      %160 = sbr.rel (%p157) target = $region12
    $region11: #{cnn_forward.1} parent=5 // pred_region
      %s161 = ssub.s32 %s11, 1
      // Predicated region
      $region13: #{cnn_forward.1} parent=11 // pred_check
        %p162 = pneg %p58
      $region14: #{cnn_forward.1} parent=11 // pred_check_branch
        %164 = sbr.rel (%p162) target = $region16
      $region15: #{cnn_forward.1} parent=11 // pred_region
        _
      $region16: #{cnn_forward.1} parent=11 // pred_fallthru
        _
      // Predicated region
      $region17: #{cnn_forward.1} parent=11 // pred_check
        %p165 = pneg %p79
      $region18: #{cnn_forward.1} parent=11 // pred_check_branch
        %167 = sbr.rel (%p165) target = $region20
      $region19: #{cnn_forward.1} parent=11 // pred_region
        _
      $region20: #{cnn_forward.1} parent=11 // pred_fallthru
        _
      // Predicated region
      $region21: #{cnn_forward.1} parent=11 // pred_check
        %p168 = pneg %p100
      $region22: #{cnn_forward.1} parent=11 // pred_check_branch
        %170 = sbr.rel (%p168) target = $region24
      $region23: #{cnn_forward.1} parent=11 // pred_region
        _
      $region24: #{cnn_forward.1} parent=11 // pred_fallthru
        _
      // Predicated region
      $region25: #{cnn_forward.1} parent=11 // pred_check
        %p171 = pneg %p121
      $region26: #{cnn_forward.1} parent=11 // pred_check_branch
        %173 = sbr.rel (%p171) target = $region28
      $region27: #{cnn_forward.1} parent=11 // pred_region
        _
      $region28: #{cnn_forward.1} parent=11 // pred_fallthru
        _
    $region12: #{cnn_forward.1} parent=5 // pred_fallthru
      _
    %p174 = scmp.lt.s32.totalorder %s11, 2
    // Predicated region
    $region29: #{cnn_forward.1} parent=5 // pred_check
      %p175 = pneg %p174
    $region30: #{cnn_forward.1} parent=5 // pred_check_branch
      %177 = sbr.rel (%p175) target = $region32
    $region31: #{cnn_forward.1} parent=5 // pred_region
      // Predicated region
      $region33: #{cnn_forward.1} parent=31 // pred_check
        %p178 = pneg %p31
      $region34: #{cnn_forward.1} parent=31 // pred_check_branch
        %180 = sbr.rel (%p178) target = $region36
      $region35: #{cnn_forward.1} parent=31 // pred_region
        %p181 = scmp.lt.s32.totalorder %s11, 1
        %s182 = scalar_select %p181, %s11, 1
        %s183 = smul.addr %s182, 32
        %s184 = smul.addr %s183, 8
        %s185 = scalar_lea.vmem %s0, %s184
      $region36: #{cnn_forward.1} parent=31 // pred_fallthru
        _
    $region32: #{cnn_forward.1} parent=5 // pred_fallthru
      _
    %p186 = scmp.le.s32.totalorder 1, %s11
    %p187 = scmp.lt.s32.totalorder %s11, 3
    %p188 = pnand %p186, %p187
    %p189 = pneg %p188
    // Predicated region
    $region37: #{cnn_forward.1} parent=5 // pred_check
      _
    $region38: #{cnn_forward.1} parent=5 // pred_check_branch
      %191 = sbr.rel (%p188) target = $region40
    $region39: #{cnn_forward.1} parent=5 // pred_region
      %s192 = ssub.s32 %s11, 1
      %p193 = scmp.lt.s32.totalorder %s16, 1
      %s194 = scalar_select %p193, %s16, 1
      %s195 = smul.addr %s194, 32
      %s196 = smul.addr %s195, 8
      %s197 = scalar_lea.vmem %s0, %s196
      %p198 = pneg %p37
      %p199 = pneg %p34
      %p200 = pneg %p58
      %p201 = pneg %p55
      %p202 = pneg %p79
      %p203 = pneg %p76
      %p204 = pneg %p100
      %p205 = pneg %p97
      %p206 = pneg %p121
      %p207 = pneg %p118
      %p208 = pneg %p147
      %p209 = pneg %p144
      %p210 = scmp.lt.s32.totalorder %s16, 1
      %s211 = scalar_select %p210, %s16, 1
      %s212 = smul.addr %s211, 2
      %s213 = smul.addr %s212, 4
      %s214 = scalar_lea.vmem %s5, %s213
      %p215 = scmp.lt.s32.totalorder %s16, 1
      %s216 = scalar_select %p215, %s16, 1
      %s217 = smul.addr %s216, 32
      %s218 = smul.addr %s217, 8
      %s219 = scalar_lea.vmem %s0, %s218
      %p220 = scmp.lt.s32.totalorder %s16, 1
      %s221 = scalar_select %p220, %s16, 1
      %s222 = smul.addr %s221, 2
      %s223 = smul.addr %s222, 4
      %s224 = scalar_lea.vmem %s5, %s223
      %v225 = vld [vmem:[%s219] sm:$0xff]
      %v226 = vld [vmem:[%s219 + $0x8] sm:$0xff]
      %v227 = vld [vmem:[%s219 + $0x10] sm:$0xff]
      %v228 = vld [vmem:[%s219 + $0x18] sm:$0xff]
      %v229 = vld [vmem:[%s219 + $0x20] sm:$0xff]
      %v230 = vld [vmem:[%s219 + $0x28] sm:$0xff]
      %v231 = vld [vmem:[%s219 + $0x30] sm:$0xff]
      %v232 = vld [vmem:[%s219 + $0x38] sm:$0xff]
      %v233 = vld [vmem:[%s219 + $0x40] sm:$0xff]
      %v234 = vld [vmem:[%s219 + $0x48] sm:$0xff]
      %v235 = vld [vmem:[%s219 + $0x50] sm:$0xff]
      %v236 = vld [vmem:[%s219 + $0x58] sm:$0xff]
      %v237 = vld [vmem:[%s219 + $0x60] sm:$0xff]
      %v238 = vld [vmem:[%s219 + $0x68] sm:$0xff]
      %v239 = vld [vmem:[%s219 + $0x70] sm:$0xff]
      %v240 = vld [vmem:[%s219 + $0x78] sm:$0xff]
      %v241 = vld [vmem:[%s219 + $0x80] sm:$0xff]
      %v242 = vld [vmem:[%s219 + $0x88] sm:$0xff]
      %v243 = vld [vmem:[%s219 + $0x90] sm:$0xff]
      %v244 = vld [vmem:[%s219 + $0x98] sm:$0xff]
      %v245 = vld [vmem:[%s219 + $0xa0] sm:$0xff]
      %v246 = vld [vmem:[%s219 + $0xa8] sm:$0xff]
      %v247 = vld [vmem:[%s219 + $0xb0] sm:$0xff]
      %v248 = vld [vmem:[%s219 + $0xb8] sm:$0xff]
      %v249 = vld [vmem:[%s219 + $0xc0] sm:$0xff]
      %v250 = vld [vmem:[%s219 + $0xc8] sm:$0xff]
      %v251 = vld [vmem:[%s219 + $0xd0] sm:$0xff]
      %v252 = vld [vmem:[%s219 + $0xd8] sm:$0xff]
      %v253 = vld [vmem:[%s219 + $0xe0] sm:$0xff]
      %v254 = vld [vmem:[%s219 + $0xe8] sm:$0xff]
      %v255 = vld [vmem:[%s219 + $0xf0] sm:$0xff]
      %v256 = vld [vmem:[%s219 + $0xf8] sm:$0xff]
      %v257 = vmax.f32 %v225, 0.0
      %v258 = vmax.f32 %v226, 0.0
      %v259 = vmax.f32 %v227, 0.0
      %v260 = vmax.f32 %v228, 0.0
      %v261 = vmax.f32 %v229, 0.0
      %v262 = vmax.f32 %v230, 0.0
      %v263 = vmax.f32 %v231, 0.0
      %v264 = vmax.f32 %v232, 0.0
      %v265 = vmax.f32 %v233, 0.0
      %v266 = vmax.f32 %v234, 0.0
      %v267 = vmax.f32 %v235, 0.0
      %v268 = vmax.f32 %v236, 0.0
      %v269 = vmax.f32 %v237, 0.0
      %v270 = vmax.f32 %v238, 0.0
      %v271 = vmax.f32 %v239, 0.0
      %v272 = vmax.f32 %v240, 0.0
      %v273 = vmax.f32 %v241, 0.0
      %v274 = vmax.f32 %v242, 0.0
      %v275 = vmax.f32 %v243, 0.0
      %v276 = vmax.f32 %v244, 0.0
      %v277 = vmax.f32 %v245, 0.0
      %v278 = vmax.f32 %v246, 0.0
      %v279 = vmax.f32 %v247, 0.0
      %v280 = vmax.f32 %v248, 0.0
      %v281 = vmax.f32 %v249, 0.0
      %v282 = vmax.f32 %v250, 0.0
      %v283 = vmax.f32 %v251, 0.0
      %v284 = vmax.f32 %v252, 0.0
      %v285 = vmax.f32 %v253, 0.0
      %v286 = vmax.f32 %v254, 0.0
      %v287 = vmax.f32 %v255, 0.0
      %v288 = vmax.f32 %v256, 0.0
      %vm289 = vcmask 31744
      %290 = vst.msk [vmem:[#allocation2] sm:$0xff] %vm289, 0.0
      %291 = vst.msk [vmem:[#allocation2 + $0x8] sm:$0xff] %vm289, 0.0
      %vm292 = vcmask 27648
      %293 = vst.msk [vmem:[#allocation2 + $0x10] sm:$0xf] %vm292, 0.0
      %294 = vst.msk [vmem:[#allocation2 + $0x18] sm:$0xff] %vm289, 0.0
      %295 = vst.msk [vmem:[#allocation2 + $0x20] sm:$0xff] %vm289, 0.0
      %296 = vst.msk [vmem:[#allocation2 + $0x28] sm:$0xf] %vm292, 0.0
      %297 = vst.msk [vmem:[#allocation2 + $0x30] sm:$0xff] %vm289, 0.0
      %298 = vst.msk [vmem:[#allocation2 + $0x38] sm:$0xff] %vm289, 0.0
      %299 = vst.msk [vmem:[#allocation2 + $0x40] sm:$0xf] %vm292, 0.0
      %300 = vst.msk [vmem:[#allocation2 + $0x48] sm:$0xff] %vm289, 0.0
      %301 = vst.msk [vmem:[#allocation2 + $0x50] sm:$0xff] %vm289, 0.0
      %302 = vst.msk [vmem:[#allocation2 + $0x58] sm:$0xf] %vm292, 0.0
      %303 = vst.msk [vmem:[#allocation2 + $0x60] sm:$0xff] %vm289, 0.0
      %304 = vst.msk [vmem:[#allocation2 + $0x68] sm:$0xff] %vm289, 0.0
      %305 = vst.msk [vmem:[#allocation2 + $0x70] sm:$0xf] %vm292, 0.0
      %306 = vst.msk [vmem:[#allocation2 + $0x78] sm:$0xff] %vm289, 0.0
      %307 = vst.msk [vmem:[#allocation2 + $0x80] sm:$0xff] %vm289, 0.0
      %308 = vst.msk [vmem:[#allocation2 + $0x88] sm:$0xf] %vm292, 0.0
      %309 = vst.msk [vmem:[#allocation2 + $0x90] sm:$0xff] %vm289, 0.0
      %310 = vst.msk [vmem:[#allocation2 + $0x98] sm:$0xff] %vm289, 0.0
      %311 = vst.msk [vmem:[#allocation2 + $0xa0] sm:$0xf] %vm292, 0.0
      %312 = vst.msk [vmem:[#allocation2 + $0xa8] sm:$0xff] %vm289, 0.0
      %313 = vst.msk [vmem:[#allocation2 + $0xb0] sm:$0xff] %vm289, 0.0
      %314 = vst.msk [vmem:[#allocation2 + $0xb8] sm:$0xf] %vm292, 0.0
      %315 = vst.msk [vmem:[#allocation2 + $0xc0] sm:$0xff] %vm289, 0.0
      %316 = vst.msk [vmem:[#allocation2 + $0xc8] sm:$0xff] %vm289, 0.0
      %317 = vst.msk [vmem:[#allocation2 + $0xd0] sm:$0xf] %vm292, 0.0
      %318 = vst.msk [vmem:[#allocation2 + $0xd8] sm:$0xff] %vm289, 0.0
      %319 = vst.msk [vmem:[#allocation2 + $0xe0] sm:$0xff] %vm289, 0.0
      %320 = vst.msk [vmem:[#allocation2 + $0xe8] sm:$0xf] %vm292, 0.0
      %321 = vst.msk [vmem:[#allocation2 + $0xf0] sm:$0xff] %vm289, 0.0
      %322 = vst.msk [vmem:[#allocation2 + $0xf8] sm:$0xff] %vm289, 0.0
      %323 = vst.msk [vmem:[#allocation2 + $0x100] sm:$0xf] %vm292, 0.0
      %324 = vst.msk [vmem:[#allocation2 + $0x108] sm:$0xff] %vm289, 0.0
      %325 = vst.msk [vmem:[#allocation2 + $0x110] sm:$0xff] %vm289, 0.0
      %326 = vst.msk [vmem:[#allocation2 + $0x118] sm:$0xf] %vm292, 0.0
      %327 = vst.msk [vmem:[#allocation2 + $0x120] sm:$0xff] %vm289, 0.0
      %328 = vst.msk [vmem:[#allocation2 + $0x128] sm:$0xff] %vm289, 0.0
      %329 = vst.msk [vmem:[#allocation2 + $0x130] sm:$0xf] %vm292, 0.0
      %330 = vst.msk [vmem:[#allocation2 + $0x138] sm:$0xff] %vm289, 0.0
      %331 = vst.msk [vmem:[#allocation2 + $0x140] sm:$0xff] %vm289, 0.0
      %332 = vst.msk [vmem:[#allocation2 + $0x148] sm:$0xf] %vm292, 0.0
      %333 = vst.msk [vmem:[#allocation2 + $0x150] sm:$0xff] %vm289, 0.0
      %334 = vst.msk [vmem:[#allocation2 + $0x158] sm:$0xff] %vm289, 0.0
      %335 = vst.msk [vmem:[#allocation2 + $0x160] sm:$0xf] %vm292, 0.0
      %336 = vst.msk [vmem:[#allocation2 + $0x168] sm:$0xff] %vm289, 0.0
      %337 = vst.msk [vmem:[#allocation2 + $0x170] sm:$0xff] %vm289, 0.0
      %338 = vst.msk [vmem:[#allocation2 + $0x178] sm:$0xf] %vm292, 0.0
      %339 = vst.msk [vmem:[#allocation2 + $0x180] sm:$0xff] %vm289, 0.0
      %340 = vst.msk [vmem:[#allocation2 + $0x188] sm:$0xff] %vm289, 0.0
      %341 = vst.msk [vmem:[#allocation2 + $0x190] sm:$0xf] %vm292, 0.0
      %342 = vst.msk [vmem:[#allocation2 + $0x198] sm:$0xff] %vm289, 0.0
      %343 = vst.msk [vmem:[#allocation2 + $0x1a0] sm:$0xff] %vm289, 0.0
      %344 = vst.msk [vmem:[#allocation2 + $0x1a8] sm:$0xf] %vm292, 0.0
      %345 = vst.msk [vmem:[#allocation2 + $0x1b0] sm:$0xff] %vm289, 0.0
      %346 = vst.msk [vmem:[#allocation2 + $0x1b8] sm:$0xff] %vm289, 0.0
      %347 = vst.msk [vmem:[#allocation2 + $0x1c0] sm:$0xf] %vm292, 0.0
      %348 = vst.msk [vmem:[#allocation2 + $0x1c8] sm:$0xff] %vm289, 0.0
      %349 = vst.msk [vmem:[#allocation2 + $0x1d0] sm:$0xff] %vm289, 0.0
      %350 = vst.msk [vmem:[#allocation2 + $0x1d8] sm:$0xf] %vm292, 0.0
      %s351 = scalar_lea.vmem [#allocation2], 48
      %352 = vst.msk [vmem:[%s351 + $0x2] sm:$0xff] %vm289, %v257
      %353 = vst.msk [vmem:[%s351 + $0xa] sm:$0xff] %vm289, %v258
      %354 = vst.msk [vmem:[%s351 + $0x1a] sm:$0xff] %vm289, %v259
      %355 = vst.msk [vmem:[%s351 + $0x22] sm:$0xff] %vm289, %v260
      %356 = vst.msk [vmem:[%s351 + $0x32] sm:$0xff] %vm289, %v261
      %357 = vst.msk [vmem:[%s351 + $0x3a] sm:$0xff] %vm289, %v262
      %358 = vst.msk [vmem:[%s351 + $0x4a] sm:$0xff] %vm289, %v263
      %359 = vst.msk [vmem:[%s351 + $0x52] sm:$0xff] %vm289, %v264
      %360 = vst.msk [vmem:[%s351 + $0x62] sm:$0xff] %vm289, %v265
      %361 = vst.msk [vmem:[%s351 + $0x6a] sm:$0xff] %vm289, %v266
      %362 = vst.msk [vmem:[%s351 + $0x7a] sm:$0xff] %vm289, %v267
      %363 = vst.msk [vmem:[%s351 + $0x82] sm:$0xff] %vm289, %v268
      %364 = vst.msk [vmem:[%s351 + $0x92] sm:$0xff] %vm289, %v269
      %365 = vst.msk [vmem:[%s351 + $0x9a] sm:$0xff] %vm289, %v270
      %366 = vst.msk [vmem:[%s351 + $0xaa] sm:$0xff] %vm289, %v271
      %367 = vst.msk [vmem:[%s351 + $0xb2] sm:$0xff] %vm289, %v272
      %368 = vst.msk [vmem:[%s351 + $0xc2] sm:$0xff] %vm289, %v273
      %369 = vst.msk [vmem:[%s351 + $0xca] sm:$0xff] %vm289, %v274
      %370 = vst.msk [vmem:[%s351 + $0xda] sm:$0xff] %vm289, %v275
      %371 = vst.msk [vmem:[%s351 + $0xe2] sm:$0xff] %vm289, %v276
      %372 = vst.msk [vmem:[%s351 + $0xf2] sm:$0xff] %vm289, %v277
      %373 = vst.msk [vmem:[%s351 + $0xfa] sm:$0xff] %vm289, %v278
      %374 = vst.msk [vmem:[%s351 + $0x10a] sm:$0xff] %vm289, %v279
      %375 = vst.msk [vmem:[%s351 + $0x112] sm:$0xff] %vm289, %v280
      %376 = vst.msk [vmem:[%s351 + $0x122] sm:$0xff] %vm289, %v281
      %377 = vst.msk [vmem:[%s351 + $0x12a] sm:$0xff] %vm289, %v282
      %378 = vst.msk [vmem:[%s351 + $0x13a] sm:$0xff] %vm289, %v283
      %379 = vst.msk [vmem:[%s351 + $0x142] sm:$0xff] %vm289, %v284
      %380 = vst.msk [vmem:[%s351 + $0x152] sm:$0xff] %vm289, %v285
      %381 = vst.msk [vmem:[%s351 + $0x15a] sm:$0xff] %vm289, %v286
      %382 = vst.msk [vmem:[%s351 + $0x16a] sm:$0xff] %vm289, %v287
      %383 = vst.msk [vmem:[%s351 + $0x172] sm:$0xff] %vm289, %v288
      %v384 = vld [vmem:[#allocation2] sm:$0xff]
      %v385 = vld [vmem:[#allocation2 + $0x8] sm:$0xff]
      %v386 = vld [vmem:[#allocation2 + $0x10] sm:$0xf]
      %v387 = vld [vmem:[#allocation2 + $0x18] sm:$0xff]
      %v388 = vld [vmem:[#allocation2 + $0x20] sm:$0xff]
      %v389 = vld [vmem:[#allocation2 + $0x28] sm:$0xf]
      %v390 = vld [vmem:[#allocation2 + $0x30] sm:$0xff]
      %v391 = vld [vmem:[#allocation2 + $0x38] sm:$0xff]
      %v392 = vld [vmem:[#allocation2 + $0x40] sm:$0xf]
      %v393 = vld [vmem:[#allocation2 + $0x48] sm:$0xff]
      %v394 = vld [vmem:[#allocation2 + $0x50] sm:$0xff]
      %v395 = vld [vmem:[#allocation2 + $0x58] sm:$0xf]
      %v396 = vld [vmem:[#allocation2 + $0x60] sm:$0xff]
      %v397 = vld [vmem:[#allocation2 + $0x68] sm:$0xff]
      %v398 = vld [vmem:[#allocation2 + $0x70] sm:$0xf]
      %v399 = vld [vmem:[#allocation2 + $0x78] sm:$0xff]
      %v400 = vld [vmem:[#allocation2 + $0x80] sm:$0xff]
      %v401 = vld [vmem:[#allocation2 + $0x88] sm:$0xf]
      %v402 = vld [vmem:[#allocation2 + $0x90] sm:$0xff]
      %v403 = vld [vmem:[#allocation2 + $0x98] sm:$0xff]
      %v404 = vld [vmem:[#allocation2 + $0xa0] sm:$0xf]
      %v405 = vld [vmem:[#allocation2 + $0xa8] sm:$0xff]
      %v406 = vld [vmem:[#allocation2 + $0xb0] sm:$0xff]
      %v407 = vld [vmem:[#allocation2 + $0xb8] sm:$0xf]
      %v408 = vld [vmem:[#allocation2 + $0xc0] sm:$0xff]
      %v409 = vld [vmem:[#allocation2 + $0xc8] sm:$0xff]
      %v410 = vld [vmem:[#allocation2 + $0xd0] sm:$0xf]
      %v411 = vld [vmem:[#allocation2 + $0xd8] sm:$0xff]
      %v412 = vld [vmem:[#allocation2 + $0xe0] sm:$0xff]
      %v413 = vld [vmem:[#allocation2 + $0xe8] sm:$0xf]
      %v414 = vld [vmem:[#allocation2 + $0xf0] sm:$0xff]
      %v415 = vld [vmem:[#allocation2 + $0xf8] sm:$0xff]
      %v416 = vld [vmem:[#allocation2 + $0x100] sm:$0xf]
      %v417 = vld [vmem:[#allocation2 + $0x108] sm:$0xff]
      %v418 = vld [vmem:[#allocation2 + $0x110] sm:$0xff]
      %v419 = vld [vmem:[#allocation2 + $0x118] sm:$0xf]
      %v420 = vld [vmem:[#allocation2 + $0x120] sm:$0xff]
      %v421 = vld [vmem:[#allocation2 + $0x128] sm:$0xff]
      %v422 = vld [vmem:[#allocation2 + $0x130] sm:$0xf]
      %v423 = vld [vmem:[#allocation2 + $0x138] sm:$0xff]
      %v424 = vld [vmem:[#allocation2 + $0x140] sm:$0xff]
      %v425 = vld [vmem:[#allocation2 + $0x148] sm:$0xf]
      %v426 = vld [vmem:[#allocation2 + $0x150] sm:$0xff]
      %v427 = vld [vmem:[#allocation2 + $0x158] sm:$0xff]
      %v428 = vld [vmem:[#allocation2 + $0x160] sm:$0xf]
      %v429 = vld [vmem:[#allocation2 + $0x168] sm:$0xff]
      %v430 = vld [vmem:[#allocation2 + $0x170] sm:$0xff]
      %v431 = vld [vmem:[#allocation2 + $0x178] sm:$0xf]
      %v432 = vld [vmem:[#allocation2 + $0x180] sm:$0xff]
      %v433 = vld [vmem:[#allocation2 + $0x188] sm:$0xff]
      %v434 = vld [vmem:[#allocation2 + $0x190] sm:$0xf]
      %v435 = vld [vmem:[#allocation2 + $0x198] sm:$0xff]
      %v436 = vld [vmem:[#allocation2 + $0x1a0] sm:$0xff]
      %v437 = vld [vmem:[#allocation2 + $0x1a8] sm:$0xf]
      %v438 = vld [vmem:[#allocation2 + $0x1b0] sm:$0xff]
      %v439 = vld [vmem:[#allocation2 + $0x1b8] sm:$0xff]
      %v440 = vld [vmem:[#allocation2 + $0x1c0] sm:$0xf]
      %v441 = vld [vmem:[#allocation2 + $0x1c8] sm:$0xff]
      %v442 = vld [vmem:[#allocation2 + $0x1d0] sm:$0xff]
      %v443 = vld [vmem:[#allocation2 + $0x1d8] sm:$0xf]
      %444 = vst.msk [vmem:[#allocation4] sm:$0xff] %vm289, %v384
      %445 = vst.msk [vmem:[#allocation4 + $0x8] sm:$0xff] %vm289, %v385
      %446 = vst.msk [vmem:[#allocation4 + $0x10] sm:$0xff] %vm289, %v387
      %447 = vst.msk [vmem:[#allocation4 + $0x18] sm:$0xff] %vm289, %v388
      %448 = vst.msk [vmem:[#allocation4 + $0x20] sm:$0xff] %vm289, %v390
      %449 = vst.msk [vmem:[#allocation4 + $0x28] sm:$0xff] %vm289, %v391
      %450 = vst.msk [vmem:[#allocation4 + $0x30] sm:$0xff] %vm289, %v393
      %451 = vst.msk [vmem:[#allocation4 + $0x38] sm:$0xff] %vm289, %v394
      %452 = vst.msk [vmem:[#allocation4 + $0x40] sm:$0xff] %vm289, %v396
      %453 = vst.msk [vmem:[#allocation4 + $0x48] sm:$0xff] %vm289, %v397
      %454 = vst.msk [vmem:[#allocation4 + $0x50] sm:$0xff] %vm289, %v399
      %455 = vst.msk [vmem:[#allocation4 + $0x58] sm:$0xff] %vm289, %v400
      %456 = vst.msk [vmem:[#allocation4 + $0x60] sm:$0xff] %vm289, %v402
      %457 = vst.msk [vmem:[#allocation4 + $0x68] sm:$0xff] %vm289, %v403
      %458 = vst.msk [vmem:[#allocation4 + $0x70] sm:$0xff] %vm289, %v405
      %459 = vst.msk [vmem:[#allocation4 + $0x78] sm:$0xff] %vm289, %v406
      %460 = vst.msk [vmem:[#allocation4 + $0x80] sm:$0xff] %vm289, %v408
      %461 = vst.msk [vmem:[#allocation4 + $0x88] sm:$0xff] %vm289, %v409
      %462 = vst.msk [vmem:[#allocation4 + $0x90] sm:$0xff] %vm289, %v411
      %463 = vst.msk [vmem:[#allocation4 + $0x98] sm:$0xff] %vm289, %v412
      %464 = vst.msk [vmem:[#allocation4 + $0xa0] sm:$0xff] %vm289, %v414
      %465 = vst.msk [vmem:[#allocation4 + $0xa8] sm:$0xff] %vm289, %v415
      %466 = vst.msk [vmem:[#allocation4 + $0xb0] sm:$0xff] %vm289, %v417
      %467 = vst.msk [vmem:[#allocation4 + $0xb8] sm:$0xff] %vm289, %v418
      %468 = vst.msk [vmem:[#allocation4 + $0xc0] sm:$0xff] %vm289, %v420
      %469 = vst.msk [vmem:[#allocation4 + $0xc8] sm:$0xff] %vm289, %v421
      %470 = vst.msk [vmem:[#allocation4 + $0xd0] sm:$0xff] %vm289, %v423
      %471 = vst.msk [vmem:[#allocation4 + $0xd8] sm:$0xff] %vm289, %v424
      %472 = vst.msk [vmem:[#allocation4 + $0xe0] sm:$0xff] %vm289, %v426
      %473 = vst.msk [vmem:[#allocation4 + $0xe8] sm:$0xff] %vm289, %v427
      %474 = vst.msk [vmem:[#allocation4 + $0xf0] sm:$0xff] %vm289, %v429
      %475 = vst.msk [vmem:[#allocation4 + $0xf8] sm:$0xff] %vm289, %v430
      %vm524 = vcmask 1046528
      %v525 = vrot.slane %v384, 1
      %v526 = vrot.slane %v385, 1
      %v527 = vsel %vm524, %v525, %v526
      %v528 = vrot.slane %v386, 1
      %v529 = vsel %vm524, %v526, %v528
      %v530 = vrot.slane %v387, 1
      %v531 = vrot.slane %v388, 1
      %v532 = vsel %vm524, %v530, %v531
      %v533 = vrot.slane %v389, 1
      %v534 = vsel %vm524, %v531, %v533
      %v535 = vrot.slane %v390, 1
      %v536 = vrot.slane %v391, 1
      %v537 = vsel %vm524, %v535, %v536
      %v538 = vrot.slane %v392, 1
      %v539 = vsel %vm524, %v536, %v538
      %v540 = vrot.slane %v393, 1
      %v541 = vrot.slane %v394, 1
      %v542 = vsel %vm524, %v540, %v541
      %v543 = vrot.slane %v395, 1
      %v544 = vsel %vm524, %v541, %v543
      %v545 = vrot.slane %v396, 1
      %v546 = vrot.slane %v397, 1
      %v547 = vsel %vm524, %v545, %v546
      %v548 = vrot.slane %v398, 1
      %v549 = vsel %vm524, %v546, %v548
      %v550 = vrot.slane %v399, 1
      %v551 = vrot.slane %v400, 1
      %v552 = vsel %vm524, %v550, %v551
      %v553 = vrot.slane %v401, 1
      %v554 = vsel %vm524, %v551, %v553
      %v555 = vrot.slane %v402, 1
      %v556 = vrot.slane %v403, 1
      %v557 = vsel %vm524, %v555, %v556
      %v558 = vrot.slane %v404, 1
      %v559 = vsel %vm524, %v556, %v558
      %v560 = vrot.slane %v405, 1
      %v561 = vrot.slane %v406, 1
      %v562 = vsel %vm524, %v560, %v561
      %v563 = vrot.slane %v407, 1
      %v564 = vsel %vm524, %v561, %v563
      %v565 = vrot.slane %v408, 1
      %v566 = vrot.slane %v409, 1
      %v567 = vsel %vm524, %v565, %v566
      %v568 = vrot.slane %v410, 1
      %v569 = vsel %vm524, %v566, %v568
      %v570 = vrot.slane %v411, 1
      %v571 = vrot.slane %v412, 1
      %v572 = vsel %vm524, %v570, %v571
      %v573 = vrot.slane %v413, 1
      %v574 = vsel %vm524, %v571, %v573
      %v575 = vrot.slane %v414, 1
      %v576 = vrot.slane %v415, 1
      %v577 = vsel %vm524, %v575, %v576
      %v578 = vrot.slane %v416, 1
      %v579 = vsel %vm524, %v576, %v578
      %v580 = vrot.slane %v417, 1
      %v581 = vrot.slane %v418, 1
      %v582 = vsel %vm524, %v580, %v581
      %v583 = vrot.slane %v419, 1
      %v584 = vsel %vm524, %v581, %v583
      %v585 = vrot.slane %v420, 1
      %v586 = vrot.slane %v421, 1
      %v587 = vsel %vm524, %v585, %v586
      %v588 = vrot.slane %v422, 1
      %v589 = vsel %vm524, %v586, %v588
      %v590 = vrot.slane %v423, 1
      %v591 = vrot.slane %v424, 1
      %v592 = vsel %vm524, %v590, %v591
      %v593 = vrot.slane %v425, 1
      %v594 = vsel %vm524, %v591, %v593
      %v595 = vrot.slane %v426, 1
      %v596 = vrot.slane %v427, 1
      %v597 = vsel %vm524, %v595, %v596
      %v598 = vrot.slane %v428, 1
      %v599 = vsel %vm524, %v596, %v598
      %v600 = vrot.slane %v429, 1
      %v601 = vrot.slane %v430, 1
      %v602 = vsel %vm524, %v600, %v601
      %v603 = vrot.slane %v431, 1
      %v604 = vsel %vm524, %v601, %v603
      %605 = vrot.lane.b32.xlu0 %v527, 4
      %v606 = vpop.permute.xlu0 %605
      %607 = vrot.lane.b32.xlu0 %v529, 4
      %v608 = vpop.permute.xlu0 %607
      %609 = vrot.lane.b32.xlu0 %v532, 4
      %v610 = vpop.permute.xlu0 %609
      %611 = vrot.lane.b32.xlu0 %v534, 4
      %v612 = vpop.permute.xlu0 %611
      %613 = vrot.lane.b32.xlu0 %v537, 4
      %v614 = vpop.permute.xlu0 %613
      %615 = vrot.lane.b32.xlu0 %v539, 4
      %v616 = vpop.permute.xlu0 %615
      %617 = vrot.lane.b32.xlu0 %v542, 4
      %v618 = vpop.permute.xlu0 %617
      %619 = vrot.lane.b32.xlu0 %v544, 4
      %v620 = vpop.permute.xlu0 %619
      %621 = vrot.lane.b32.xlu0 %v547, 4
      %v622 = vpop.permute.xlu0 %621
      %623 = vrot.lane.b32.xlu0 %v549, 4
      %v624 = vpop.permute.xlu0 %623
      %625 = vrot.lane.b32.xlu0 %v552, 4
      %v626 = vpop.permute.xlu0 %625
      %627 = vrot.lane.b32.xlu0 %v554, 4
      %v628 = vpop.permute.xlu0 %627
      %629 = vrot.lane.b32.xlu0 %v557, 4
      %v630 = vpop.permute.xlu0 %629
      %631 = vrot.lane.b32.xlu0 %v559, 4
      %v632 = vpop.permute.xlu0 %631
      %633 = vrot.lane.b32.xlu0 %v562, 4
      %v634 = vpop.permute.xlu0 %633
      %635 = vrot.lane.b32.xlu0 %v564, 4
      %v636 = vpop.permute.xlu0 %635
      %637 = vrot.lane.b32.xlu0 %v567, 4
      %v638 = vpop.permute.xlu0 %637
      %639 = vrot.lane.b32.xlu0 %v569, 4
      %v640 = vpop.permute.xlu0 %639
      %641 = vrot.lane.b32.xlu0 %v572, 4
      %v642 = vpop.permute.xlu0 %641
      %643 = vrot.lane.b32.xlu0 %v574, 4
      %v644 = vpop.permute.xlu0 %643
      %645 = vrot.lane.b32.xlu0 %v577, 4
      %v646 = vpop.permute.xlu0 %645
      %647 = vrot.lane.b32.xlu0 %v579, 4
      %v648 = vpop.permute.xlu0 %647
      %649 = vrot.lane.b32.xlu0 %v582, 4
      %v650 = vpop.permute.xlu0 %649
      %651 = vrot.lane.b32.xlu0 %v584, 4
      %v652 = vpop.permute.xlu0 %651
      %653 = vrot.lane.b32.xlu0 %v587, 4
      %v654 = vpop.permute.xlu0 %653
      %655 = vrot.lane.b32.xlu0 %v589, 4
      %v656 = vpop.permute.xlu0 %655
      %657 = vrot.lane.b32.xlu0 %v592, 4
      %v658 = vpop.permute.xlu0 %657
      %659 = vrot.lane.b32.xlu0 %v594, 4
      %v660 = vpop.permute.xlu0 %659
      %661 = vrot.lane.b32.xlu0 %v597, 4
      %v662 = vpop.permute.xlu0 %661
      %663 = vrot.lane.b32.xlu0 %v599, 4
      %v664 = vpop.permute.xlu0 %663
      %665 = vrot.lane.b32.xlu0 %v602, 4
      %v666 = vpop.permute.xlu0 %665
      %667 = vrot.lane.b32.xlu0 %v604, 4
      %v668 = vpop.permute.xlu0 %667
      %vm701 = vcmask 64544
      %702 = vst.msk [vmem:[#allocation4] sm:$0xff] %vm701, %v606
      %703 = vst.msk [vmem:[#allocation4 + $0x8] sm:$0xff] %vm701, %v608
      %704 = vst.msk [vmem:[#allocation4 + $0x10] sm:$0xff] %vm701, %v610
      %705 = vst.msk [vmem:[#allocation4 + $0x18] sm:$0xff] %vm701, %v612
      %706 = vst.msk [vmem:[#allocation4 + $0x20] sm:$0xff] %vm701, %v614
      %707 = vst.msk [vmem:[#allocation4 + $0x28] sm:$0xff] %vm701, %v616
      %708 = vst.msk [vmem:[#allocation4 + $0x30] sm:$0xff] %vm701, %v618
      %709 = vst.msk [vmem:[#allocation4 + $0x38] sm:$0xff] %vm701, %v620
      %710 = vst.msk [vmem:[#allocation4 + $0x40] sm:$0xff] %vm701, %v622
      %711 = vst.msk [vmem:[#allocation4 + $0x48] sm:$0xff] %vm701, %v624
      %712 = vst.msk [vmem:[#allocation4 + $0x50] sm:$0xff] %vm701, %v626
      %713 = vst.msk [vmem:[#allocation4 + $0x58] sm:$0xff] %vm701, %v628
      %714 = vst.msk [vmem:[#allocation4 + $0x60] sm:$0xff] %vm701, %v630
      %715 = vst.msk [vmem:[#allocation4 + $0x68] sm:$0xff] %vm701, %v632
      %716 = vst.msk [vmem:[#allocation4 + $0x70] sm:$0xff] %vm701, %v634
      %717 = vst.msk [vmem:[#allocation4 + $0x78] sm:$0xff] %vm701, %v636
      %718 = vst.msk [vmem:[#allocation4 + $0x80] sm:$0xff] %vm701, %v638
      %719 = vst.msk [vmem:[#allocation4 + $0x88] sm:$0xff] %vm701, %v640
      %720 = vst.msk [vmem:[#allocation4 + $0x90] sm:$0xff] %vm701, %v642
      %721 = vst.msk [vmem:[#allocation4 + $0x98] sm:$0xff] %vm701, %v644
      %722 = vst.msk [vmem:[#allocation4 + $0xa0] sm:$0xff] %vm701, %v646
      %723 = vst.msk [vmem:[#allocation4 + $0xa8] sm:$0xff] %vm701, %v648
      %724 = vst.msk [vmem:[#allocation4 + $0xb0] sm:$0xff] %vm701, %v650
      %725 = vst.msk [vmem:[#allocation4 + $0xb8] sm:$0xff] %vm701, %v652
      %726 = vst.msk [vmem:[#allocation4 + $0xc0] sm:$0xff] %vm701, %v654
      %727 = vst.msk [vmem:[#allocation4 + $0xc8] sm:$0xff] %vm701, %v656
      %728 = vst.msk [vmem:[#allocation4 + $0xd0] sm:$0xff] %vm701, %v658
      %729 = vst.msk [vmem:[#allocation4 + $0xd8] sm:$0xff] %vm701, %v660
      %730 = vst.msk [vmem:[#allocation4 + $0xe0] sm:$0xff] %vm701, %v662
      %731 = vst.msk [vmem:[#allocation4 + $0xe8] sm:$0xff] %vm701, %v664
      %732 = vst.msk [vmem:[#allocation4 + $0xf0] sm:$0xff] %vm701, %v666
      %733 = vst.msk [vmem:[#allocation4 + $0xf8] sm:$0xff] %vm701, %v668
      %vm734 = vcmask 1045504
      %v735 = vrot.slane %v384, 2
      %v736 = vrot.slane %v385, 2
      %v737 = vsel %vm734, %v735, %v736
      %v738 = vrot.slane %v386, 2
      %v739 = vsel %vm734, %v736, %v738
      %v740 = vrot.slane %v387, 2
      %v741 = vrot.slane %v388, 2
      %v742 = vsel %vm734, %v740, %v741
      %v743 = vrot.slane %v389, 2
      %v744 = vsel %vm734, %v741, %v743
      %v745 = vrot.slane %v390, 2
      %v746 = vrot.slane %v391, 2
      %v747 = vsel %vm734, %v745, %v746
      %v748 = vrot.slane %v392, 2
      %v749 = vsel %vm734, %v746, %v748
      %v750 = vrot.slane %v393, 2
      %v751 = vrot.slane %v394, 2
      %v752 = vsel %vm734, %v750, %v751
      %v753 = vrot.slane %v395, 2
      %v754 = vsel %vm734, %v751, %v753
      %v755 = vrot.slane %v396, 2
      %v756 = vrot.slane %v397, 2
      %v757 = vsel %vm734, %v755, %v756
      %v758 = vrot.slane %v398, 2
      %v759 = vsel %vm734, %v756, %v758
      %v760 = vrot.slane %v399, 2
      %v761 = vrot.slane %v400, 2
      %v762 = vsel %vm734, %v760, %v761
      %v763 = vrot.slane %v401, 2
      %v764 = vsel %vm734, %v761, %v763
      %v765 = vrot.slane %v402, 2
      %v766 = vrot.slane %v403, 2
      %v767 = vsel %vm734, %v765, %v766
      %v768 = vrot.slane %v404, 2
      %v769 = vsel %vm734, %v766, %v768
      %v770 = vrot.slane %v405, 2
      %v771 = vrot.slane %v406, 2
      %v772 = vsel %vm734, %v770, %v771
      %v773 = vrot.slane %v407, 2
      %v774 = vsel %vm734, %v771, %v773
      %v775 = vrot.slane %v408, 2
      %v776 = vrot.slane %v409, 2
      %v777 = vsel %vm734, %v775, %v776
      %v778 = vrot.slane %v410, 2
      %v779 = vsel %vm734, %v776, %v778
      %v780 = vrot.slane %v411, 2
      %v781 = vrot.slane %v412, 2
      %v782 = vsel %vm734, %v780, %v781
      %v783 = vrot.slane %v413, 2
      %v784 = vsel %vm734, %v781, %v783
      %v785 = vrot.slane %v414, 2
      %v786 = vrot.slane %v415, 2
      %v787 = vsel %vm734, %v785, %v786
      %v788 = vrot.slane %v416, 2
      %v789 = vsel %vm734, %v786, %v788
      %v790 = vrot.slane %v417, 2
      %v791 = vrot.slane %v418, 2
      %v792 = vsel %vm734, %v790, %v791
      %v793 = vrot.slane %v419, 2
      %v794 = vsel %vm734, %v791, %v793
      %v795 = vrot.slane %v420, 2
      %v796 = vrot.slane %v421, 2
      %v797 = vsel %vm734, %v795, %v796
      %v798 = vrot.slane %v422, 2
      %v799 = vsel %vm734, %v796, %v798
      %v800 = vrot.slane %v423, 2
      %v801 = vrot.slane %v424, 2
      %v802 = vsel %vm734, %v800, %v801
      %v803 = vrot.slane %v425, 2
      %v804 = vsel %vm734, %v801, %v803
      %v805 = vrot.slane %v426, 2
      %v806 = vrot.slane %v427, 2
      %v807 = vsel %vm734, %v805, %v806
      %v808 = vrot.slane %v428, 2
      %v809 = vsel %vm734, %v806, %v808
      %v810 = vrot.slane %v429, 2
      %v811 = vrot.slane %v430, 2
      %v812 = vsel %vm734, %v810, %v811
      %v813 = vrot.slane %v431, 2
      %v814 = vsel %vm734, %v811, %v813
      %815 = vrot.lane.b32.xlu0 %v737, 8
      %v816 = vpop.permute.xlu0 %815
      %817 = vrot.lane.b32.xlu0 %v739, 8
      %v818 = vpop.permute.xlu0 %817
      %819 = vrot.lane.b32.xlu0 %v742, 8
      %v820 = vpop.permute.xlu0 %819
      %821 = vrot.lane.b32.xlu0 %v744, 8
      %v822 = vpop.permute.xlu0 %821
      %823 = vrot.lane.b32.xlu0 %v747, 8
      %v824 = vpop.permute.xlu0 %823
      %825 = vrot.lane.b32.xlu0 %v749, 8
      %v826 = vpop.permute.xlu0 %825
      %827 = vrot.lane.b32.xlu0 %v752, 8
      %v828 = vpop.permute.xlu0 %827
      %829 = vrot.lane.b32.xlu0 %v754, 8
      %v830 = vpop.permute.xlu0 %829
      %831 = vrot.lane.b32.xlu0 %v757, 8
      %v832 = vpop.permute.xlu0 %831
      %833 = vrot.lane.b32.xlu0 %v759, 8
      %v834 = vpop.permute.xlu0 %833
      %835 = vrot.lane.b32.xlu0 %v762, 8
      %v836 = vpop.permute.xlu0 %835
      %837 = vrot.lane.b32.xlu0 %v764, 8
      %v838 = vpop.permute.xlu0 %837
      %839 = vrot.lane.b32.xlu0 %v767, 8
      %v840 = vpop.permute.xlu0 %839
      %841 = vrot.lane.b32.xlu0 %v769, 8
      %v842 = vpop.permute.xlu0 %841
      %843 = vrot.lane.b32.xlu0 %v772, 8
      %v844 = vpop.permute.xlu0 %843
      %845 = vrot.lane.b32.xlu0 %v774, 8
      %v846 = vpop.permute.xlu0 %845
      %847 = vrot.lane.b32.xlu0 %v777, 8
      %v848 = vpop.permute.xlu0 %847
      %849 = vrot.lane.b32.xlu0 %v779, 8
      %v850 = vpop.permute.xlu0 %849
      %851 = vrot.lane.b32.xlu0 %v782, 8
      %v852 = vpop.permute.xlu0 %851
      %853 = vrot.lane.b32.xlu0 %v784, 8
      %v854 = vpop.permute.xlu0 %853
      %855 = vrot.lane.b32.xlu0 %v787, 8
      %v856 = vpop.permute.xlu0 %855
      %857 = vrot.lane.b32.xlu0 %v789, 8
      %v858 = vpop.permute.xlu0 %857
      %859 = vrot.lane.b32.xlu0 %v792, 8
      %v860 = vpop.permute.xlu0 %859
      %861 = vrot.lane.b32.xlu0 %v794, 8
      %v862 = vpop.permute.xlu0 %861
      %863 = vrot.lane.b32.xlu0 %v797, 8
      %v864 = vpop.permute.xlu0 %863
      %865 = vrot.lane.b32.xlu0 %v799, 8
      %v866 = vpop.permute.xlu0 %865
      %867 = vrot.lane.b32.xlu0 %v802, 8
      %v868 = vpop.permute.xlu0 %867
      %869 = vrot.lane.b32.xlu0 %v804, 8
      %v870 = vpop.permute.xlu0 %869
      %871 = vrot.lane.b32.xlu0 %v807, 8
      %v872 = vpop.permute.xlu0 %871
      %873 = vrot.lane.b32.xlu0 %v809, 8
      %v874 = vpop.permute.xlu0 %873
      %875 = vrot.lane.b32.xlu0 %v812, 8
      %v876 = vpop.permute.xlu0 %875
      %877 = vrot.lane.b32.xlu0 %v814, 8
      %v878 = vpop.permute.xlu0 %877
      %vm911 = vcmask 97344
      %912 = vst.msk [vmem:[#allocation4] sm:$0xff] %vm911, %v816
      %913 = vst.msk [vmem:[#allocation4 + $0x8] sm:$0xff] %vm911, %v818
      %914 = vst.msk [vmem:[#allocation4 + $0x10] sm:$0xff] %vm911, %v820
      %915 = vst.msk [vmem:[#allocation4 + $0x18] sm:$0xff] %vm911, %v822
      %916 = vst.msk [vmem:[#allocation4 + $0x20] sm:$0xff] %vm911, %v824
      %917 = vst.msk [vmem:[#allocation4 + $0x28] sm:$0xff] %vm911, %v826
      %918 = vst.msk [vmem:[#allocation4 + $0x30] sm:$0xff] %vm911, %v828
      %919 = vst.msk [vmem:[#allocation4 + $0x38] sm:$0xff] %vm911, %v830
      %920 = vst.msk [vmem:[#allocation4 + $0x40] sm:$0xff] %vm911, %v832
      %921 = vst.msk [vmem:[#allocation4 + $0x48] sm:$0xff] %vm911, %v834
      %922 = vst.msk [vmem:[#allocation4 + $0x50] sm:$0xff] %vm911, %v836
      %923 = vst.msk [vmem:[#allocation4 + $0x58] sm:$0xff] %vm911, %v838
      %924 = vst.msk [vmem:[#allocation4 + $0x60] sm:$0xff] %vm911, %v840
      %925 = vst.msk [vmem:[#allocation4 + $0x68] sm:$0xff] %vm911, %v842
      %926 = vst.msk [vmem:[#allocation4 + $0x70] sm:$0xff] %vm911, %v844
      %927 = vst.msk [vmem:[#allocation4 + $0x78] sm:$0xff] %vm911, %v846
      %928 = vst.msk [vmem:[#allocation4 + $0x80] sm:$0xff] %vm911, %v848
      %929 = vst.msk [vmem:[#allocation4 + $0x88] sm:$0xff] %vm911, %v850
      %930 = vst.msk [vmem:[#allocation4 + $0x90] sm:$0xff] %vm911, %v852
      %931 = vst.msk [vmem:[#allocation4 + $0x98] sm:$0xff] %vm911, %v854
      %932 = vst.msk [vmem:[#allocation4 + $0xa0] sm:$0xff] %vm911, %v856
      %933 = vst.msk [vmem:[#allocation4 + $0xa8] sm:$0xff] %vm911, %v858
      %934 = vst.msk [vmem:[#allocation4 + $0xb0] sm:$0xff] %vm911, %v860
      %935 = vst.msk [vmem:[#allocation4 + $0xb8] sm:$0xff] %vm911, %v862
      %936 = vst.msk [vmem:[#allocation4 + $0xc0] sm:$0xff] %vm911, %v864
      %937 = vst.msk [vmem:[#allocation4 + $0xc8] sm:$0xff] %vm911, %v866
      %938 = vst.msk [vmem:[#allocation4 + $0xd0] sm:$0xff] %vm911, %v868
      %939 = vst.msk [vmem:[#allocation4 + $0xd8] sm:$0xff] %vm911, %v870
      %940 = vst.msk [vmem:[#allocation4 + $0xe0] sm:$0xff] %vm911, %v872
      %941 = vst.msk [vmem:[#allocation4 + $0xe8] sm:$0xff] %vm911, %v874
      %942 = vst.msk [vmem:[#allocation4 + $0xf0] sm:$0xff] %vm911, %v876
      %943 = vst.msk [vmem:[#allocation4 + $0xf8] sm:$0xff] %vm911, %v878
      %vm944 = vcmask 1044480
      %v945 = vrot.slane %v384, 3
      %v946 = vrot.slane %v385, 3
      %v947 = vsel %vm944, %v945, %v946
      %v948 = vrot.slane %v386, 3
      %v949 = vsel %vm944, %v946, %v948
      %v950 = vrot.slane %v387, 3
      %v951 = vrot.slane %v388, 3
      %v952 = vsel %vm944, %v950, %v951
      %v953 = vrot.slane %v389, 3
      %v954 = vsel %vm944, %v951, %v953
      %v955 = vrot.slane %v390, 3
      %v956 = vrot.slane %v391, 3
      %v957 = vsel %vm944, %v955, %v956
      %v958 = vrot.slane %v392, 3
      %v959 = vsel %vm944, %v956, %v958
      %v960 = vrot.slane %v393, 3
      %v961 = vrot.slane %v394, 3
      %v962 = vsel %vm944, %v960, %v961
      %v963 = vrot.slane %v395, 3
      %v964 = vsel %vm944, %v961, %v963
      %v965 = vrot.slane %v396, 3
      %v966 = vrot.slane %v397, 3
      %v967 = vsel %vm944, %v965, %v966
      %v968 = vrot.slane %v398, 3
      %v969 = vsel %vm944, %v966, %v968
      %v970 = vrot.slane %v399, 3
      %v971 = vrot.slane %v400, 3
      %v972 = vsel %vm944, %v970, %v971
      %v973 = vrot.slane %v401, 3
      %v974 = vsel %vm944, %v971, %v973
      %v975 = vrot.slane %v402, 3
      %v976 = vrot.slane %v403, 3
      %v977 = vsel %vm944, %v975, %v976
      %v978 = vrot.slane %v404, 3
      %v979 = vsel %vm944, %v976, %v978
      %v980 = vrot.slane %v405, 3
      %v981 = vrot.slane %v406, 3
      %v982 = vsel %vm944, %v980, %v981
      %v983 = vrot.slane %v407, 3
      %v984 = vsel %vm944, %v981, %v983
      %v985 = vrot.slane %v408, 3
      %v986 = vrot.slane %v409, 3
      %v987 = vsel %vm944, %v985, %v986
      %v988 = vrot.slane %v410, 3
      %v989 = vsel %vm944, %v986, %v988
      %v990 = vrot.slane %v411, 3
      %v991 = vrot.slane %v412, 3
      %v992 = vsel %vm944, %v990, %v991
      %v993 = vrot.slane %v413, 3
      %v994 = vsel %vm944, %v991, %v993
      %v995 = vrot.slane %v414, 3
      %v996 = vrot.slane %v415, 3
      %v997 = vsel %vm944, %v995, %v996
      %v998 = vrot.slane %v416, 3
      %v999 = vsel %vm944, %v996, %v998
      %v1000 = vrot.slane %v417, 3
      %v1001 = vrot.slane %v418, 3
      %v1002 = vsel %vm944, %v1000, %v1001
      %v1003 = vrot.slane %v419, 3
      %v1004 = vsel %vm944, %v1001, %v1003
      %v1005 = vrot.slane %v420, 3
      %v1006 = vrot.slane %v421, 3
      %v1007 = vsel %vm944, %v1005, %v1006
      %v1008 = vrot.slane %v422, 3
      %v1009 = vsel %vm944, %v1006, %v1008
      %v1010 = vrot.slane %v423, 3
      %v1011 = vrot.slane %v424, 3
      %v1012 = vsel %vm944, %v1010, %v1011
      %v1013 = vrot.slane %v425, 3
      %v1014 = vsel %vm944, %v1011, %v1013
      %v1015 = vrot.slane %v426, 3
      %v1016 = vrot.slane %v427, 3
      %v1017 = vsel %vm944, %v1015, %v1016
      %v1018 = vrot.slane %v428, 3
      %v1019 = vsel %vm944, %v1016, %v1018
      %v1020 = vrot.slane %v429, 3
      %v1021 = vrot.slane %v430, 3
      %v1022 = vsel %vm944, %v1020, %v1021
      %v1023 = vrot.slane %v431, 3
      %v1024 = vsel %vm944, %v1021, %v1023
      %1025 = vrot.lane.b32.xlu0 %v947, 12
      %v1026 = vpop.permute.xlu0 %1025
      %1027 = vrot.lane.b32.xlu0 %v949, 12
      %v1028 = vpop.permute.xlu0 %1027
      %1029 = vrot.lane.b32.xlu0 %v952, 12
      %v1030 = vpop.permute.xlu0 %1029
      %1031 = vrot.lane.b32.xlu0 %v954, 12
      %v1032 = vpop.permute.xlu0 %1031
      %1033 = vrot.lane.b32.xlu0 %v957, 12
      %v1034 = vpop.permute.xlu0 %1033
      %1035 = vrot.lane.b32.xlu0 %v959, 12
      %v1036 = vpop.permute.xlu0 %1035
      %1037 = vrot.lane.b32.xlu0 %v962, 12
      %v1038 = vpop.permute.xlu0 %1037
      %1039 = vrot.lane.b32.xlu0 %v964, 12
      %v1040 = vpop.permute.xlu0 %1039
      %1041 = vrot.lane.b32.xlu0 %v967, 12
      %v1042 = vpop.permute.xlu0 %1041
      %1043 = vrot.lane.b32.xlu0 %v969, 12
      %v1044 = vpop.permute.xlu0 %1043
      %1045 = vrot.lane.b32.xlu0 %v972, 12
      %v1046 = vpop.permute.xlu0 %1045
      %1047 = vrot.lane.b32.xlu0 %v974, 12
      %v1048 = vpop.permute.xlu0 %1047
      %1049 = vrot.lane.b32.xlu0 %v977, 12
      %v1050 = vpop.permute.xlu0 %1049
      %1051 = vrot.lane.b32.xlu0 %v979, 12
      %v1052 = vpop.permute.xlu0 %1051
      %1053 = vrot.lane.b32.xlu0 %v982, 12
      %v1054 = vpop.permute.xlu0 %1053
      %1055 = vrot.lane.b32.xlu0 %v984, 12
      %v1056 = vpop.permute.xlu0 %1055
      %1057 = vrot.lane.b32.xlu0 %v987, 12
      %v1058 = vpop.permute.xlu0 %1057
      %1059 = vrot.lane.b32.xlu0 %v989, 12
      %v1060 = vpop.permute.xlu0 %1059
      %1061 = vrot.lane.b32.xlu0 %v992, 12
      %v1062 = vpop.permute.xlu0 %1061
      %1063 = vrot.lane.b32.xlu0 %v994, 12
      %v1064 = vpop.permute.xlu0 %1063
      %1065 = vrot.lane.b32.xlu0 %v997, 12
      %v1066 = vpop.permute.xlu0 %1065
      %1067 = vrot.lane.b32.xlu0 %v999, 12
      %v1068 = vpop.permute.xlu0 %1067
      %1069 = vrot.lane.b32.xlu0 %v1002, 12
      %v1070 = vpop.permute.xlu0 %1069
      %1071 = vrot.lane.b32.xlu0 %v1004, 12
      %v1072 = vpop.permute.xlu0 %1071
      %1073 = vrot.lane.b32.xlu0 %v1007, 12
      %v1074 = vpop.permute.xlu0 %1073
      %1075 = vrot.lane.b32.xlu0 %v1009, 12
      %v1076 = vpop.permute.xlu0 %1075
      %1077 = vrot.lane.b32.xlu0 %v1012, 12
      %v1078 = vpop.permute.xlu0 %1077
      %1079 = vrot.lane.b32.xlu0 %v1014, 12
      %v1080 = vpop.permute.xlu0 %1079
      %1081 = vrot.lane.b32.xlu0 %v1017, 12
      %v1082 = vpop.permute.xlu0 %1081
      %1083 = vrot.lane.b32.xlu0 %v1019, 12
      %v1084 = vpop.permute.xlu0 %1083
      %1085 = vrot.lane.b32.xlu0 %v1022, 12
      %v1086 = vpop.permute.xlu0 %1085
      %1087 = vrot.lane.b32.xlu0 %v1024, 12
      %v1088 = vpop.permute.xlu0 %1087
      %vm1121 = vcmask 130144
      %1122 = vst.msk [vmem:[#allocation4] sm:$0xff] %vm1121, %v1026
      %1123 = vst.msk [vmem:[#allocation4 + $0x8] sm:$0xff] %vm1121, %v1028
      %1124 = vst.msk [vmem:[#allocation4 + $0x10] sm:$0xff] %vm1121, %v1030
      %1125 = vst.msk [vmem:[#allocation4 + $0x18] sm:$0xff] %vm1121, %v1032
      %1126 = vst.msk [vmem:[#allocation4 + $0x20] sm:$0xff] %vm1121, %v1034
      %1127 = vst.msk [vmem:[#allocation4 + $0x28] sm:$0xff] %vm1121, %v1036
      %1128 = vst.msk [vmem:[#allocation4 + $0x30] sm:$0xff] %vm1121, %v1038
      %1129 = vst.msk [vmem:[#allocation4 + $0x38] sm:$0xff] %vm1121, %v1040
      %1130 = vst.msk [vmem:[#allocation4 + $0x40] sm:$0xff] %vm1121, %v1042
      %1131 = vst.msk [vmem:[#allocation4 + $0x48] sm:$0xff] %vm1121, %v1044
      %1132 = vst.msk [vmem:[#allocation4 + $0x50] sm:$0xff] %vm1121, %v1046
      %1133 = vst.msk [vmem:[#allocation4 + $0x58] sm:$0xff] %vm1121, %v1048
      %1134 = vst.msk [vmem:[#allocation4 + $0x60] sm:$0xff] %vm1121, %v1050
      %1135 = vst.msk [vmem:[#allocation4 + $0x68] sm:$0xff] %vm1121, %v1052
      %1136 = vst.msk [vmem:[#allocation4 + $0x70] sm:$0xff] %vm1121, %v1054
      %1137 = vst.msk [vmem:[#allocation4 + $0x78] sm:$0xff] %vm1121, %v1056
      %1138 = vst.msk [vmem:[#allocation4 + $0x80] sm:$0xff] %vm1121, %v1058
      %1139 = vst.msk [vmem:[#allocation4 + $0x88] sm:$0xff] %vm1121, %v1060
      %1140 = vst.msk [vmem:[#allocation4 + $0x90] sm:$0xff] %vm1121, %v1062
      %1141 = vst.msk [vmem:[#allocation4 + $0x98] sm:$0xff] %vm1121, %v1064
      %1142 = vst.msk [vmem:[#allocation4 + $0xa0] sm:$0xff] %vm1121, %v1066
      %1143 = vst.msk [vmem:[#allocation4 + $0xa8] sm:$0xff] %vm1121, %v1068
      %1144 = vst.msk [vmem:[#allocation4 + $0xb0] sm:$0xff] %vm1121, %v1070
      %1145 = vst.msk [vmem:[#allocation4 + $0xb8] sm:$0xff] %vm1121, %v1072
      %1146 = vst.msk [vmem:[#allocation4 + $0xc0] sm:$0xff] %vm1121, %v1074
      %1147 = vst.msk [vmem:[#allocation4 + $0xc8] sm:$0xff] %vm1121, %v1076
      %1148 = vst.msk [vmem:[#allocation4 + $0xd0] sm:$0xff] %vm1121, %v1078
      %1149 = vst.msk [vmem:[#allocation4 + $0xd8] sm:$0xff] %vm1121, %v1080
      %1150 = vst.msk [vmem:[#allocation4 + $0xe0] sm:$0xff] %vm1121, %v1082
      %1151 = vst.msk [vmem:[#allocation4 + $0xe8] sm:$0xff] %vm1121, %v1084
      %1152 = vst.msk [vmem:[#allocation4 + $0xf0] sm:$0xff] %vm1121, %v1086
      %1153 = vst.msk [vmem:[#allocation4 + $0xf8] sm:$0xff] %vm1121, %v1088
      %vm1154 = vcmask 1043456
      %v1155 = vrot.slane %v384, 4
      %v1156 = vrot.slane %v385, 4
      %v1157 = vsel %vm1154, %v1155, %v1156
      %v1158 = vrot.slane %v386, 4
      %v1159 = vsel %vm1154, %v1156, %v1158
      %v1160 = vrot.slane %v387, 4
      %v1161 = vrot.slane %v388, 4
      %v1162 = vsel %vm1154, %v1160, %v1161
      %v1163 = vrot.slane %v389, 4
      %v1164 = vsel %vm1154, %v1161, %v1163
      %v1165 = vrot.slane %v390, 4
      %v1166 = vrot.slane %v391, 4
      %v1167 = vsel %vm1154, %v1165, %v1166
      %v1168 = vrot.slane %v392, 4
      %v1169 = vsel %vm1154, %v1166, %v1168
      %v1170 = vrot.slane %v393, 4
      %v1171 = vrot.slane %v394, 4
      %v1172 = vsel %vm1154, %v1170, %v1171
      %v1173 = vrot.slane %v395, 4
      %v1174 = vsel %vm1154, %v1171, %v1173
      %v1175 = vrot.slane %v396, 4
      %v1176 = vrot.slane %v397, 4
      %v1177 = vsel %vm1154, %v1175, %v1176
      %v1178 = vrot.slane %v398, 4
      %v1179 = vsel %vm1154, %v1176, %v1178
      %v1180 = vrot.slane %v399, 4
      %v1181 = vrot.slane %v400, 4
      %v1182 = vsel %vm1154, %v1180, %v1181
      %v1183 = vrot.slane %v401, 4
      %v1184 = vsel %vm1154, %v1181, %v1183
      %v1185 = vrot.slane %v402, 4
      %v1186 = vrot.slane %v403, 4
      %v1187 = vsel %vm1154, %v1185, %v1186
      %v1188 = vrot.slane %v404, 4
      %v1189 = vsel %vm1154, %v1186, %v1188
      %v1190 = vrot.slane %v405, 4
      %v1191 = vrot.slane %v406, 4
      %v1192 = vsel %vm1154, %v1190, %v1191
      %v1193 = vrot.slane %v407, 4
      %v1194 = vsel %vm1154, %v1191, %v1193
      %v1195 = vrot.slane %v408, 4
      %v1196 = vrot.slane %v409, 4
      %v1197 = vsel %vm1154, %v1195, %v1196
      %v1198 = vrot.slane %v410, 4
      %v1199 = vsel %vm1154, %v1196, %v1198
      %v1200 = vrot.slane %v411, 4
      %v1201 = vrot.slane %v412, 4
      %v1202 = vsel %vm1154, %v1200, %v1201
      %v1203 = vrot.slane %v413, 4
      %v1204 = vsel %vm1154, %v1201, %v1203
      %v1205 = vrot.slane %v414, 4
      %v1206 = vrot.slane %v415, 4
      %v1207 = vsel %vm1154, %v1205, %v1206
      %v1208 = vrot.slane %v416, 4
      %v1209 = vsel %vm1154, %v1206, %v1208
      %v1210 = vrot.slane %v417, 4
      %v1211 = vrot.slane %v418, 4
      %v1212 = vsel %vm1154, %v1210, %v1211
      %v1213 = vrot.slane %v419, 4
      %v1214 = vsel %vm1154, %v1211, %v1213
      %v1215 = vrot.slane %v420, 4
      %v1216 = vrot.slane %v421, 4
      %v1217 = vsel %vm1154, %v1215, %v1216
      %v1218 = vrot.slane %v422, 4
      %v1219 = vsel %vm1154, %v1216, %v1218
      %v1220 = vrot.slane %v423, 4
      %v1221 = vrot.slane %v424, 4
      %v1222 = vsel %vm1154, %v1220, %v1221
      %v1223 = vrot.slane %v425, 4
      %v1224 = vsel %vm1154, %v1221, %v1223
      %v1225 = vrot.slane %v426, 4
      %v1226 = vrot.slane %v427, 4
      %v1227 = vsel %vm1154, %v1225, %v1226
      %v1228 = vrot.slane %v428, 4
      %v1229 = vsel %vm1154, %v1226, %v1228
      %v1230 = vrot.slane %v429, 4
      %v1231 = vrot.slane %v430, 4
      %v1232 = vsel %vm1154, %v1230, %v1231
      %v1233 = vrot.slane %v431, 4
      %v1234 = vsel %vm1154, %v1231, %v1233
      %1235 = vrot.lane.b32.xlu0 %v1157, 16
      %v1236 = vpop.permute.xlu0 %1235
      %1237 = vrot.lane.b32.xlu0 %v1159, 16
      %v1238 = vpop.permute.xlu0 %1237
      %1239 = vrot.lane.b32.xlu0 %v1162, 16
      %v1240 = vpop.permute.xlu0 %1239
      %1241 = vrot.lane.b32.xlu0 %v1164, 16
      %v1242 = vpop.permute.xlu0 %1241
      %1243 = vrot.lane.b32.xlu0 %v1167, 16
      %v1244 = vpop.permute.xlu0 %1243
      %1245 = vrot.lane.b32.xlu0 %v1169, 16
      %v1246 = vpop.permute.xlu0 %1245
      %1247 = vrot.lane.b32.xlu0 %v1172, 16
      %v1248 = vpop.permute.xlu0 %1247
      %1249 = vrot.lane.b32.xlu0 %v1174, 16
      %v1250 = vpop.permute.xlu0 %1249
      %1251 = vrot.lane.b32.xlu0 %v1177, 16
      %v1252 = vpop.permute.xlu0 %1251
      %1253 = vrot.lane.b32.xlu0 %v1179, 16
      %v1254 = vpop.permute.xlu0 %1253
      %1255 = vrot.lane.b32.xlu0 %v1182, 16
      %v1256 = vpop.permute.xlu0 %1255
      %1257 = vrot.lane.b32.xlu0 %v1184, 16
      %v1258 = vpop.permute.xlu0 %1257
      %1259 = vrot.lane.b32.xlu0 %v1187, 16
      %v1260 = vpop.permute.xlu0 %1259
      %1261 = vrot.lane.b32.xlu0 %v1189, 16
      %v1262 = vpop.permute.xlu0 %1261
      %1263 = vrot.lane.b32.xlu0 %v1192, 16
      %v1264 = vpop.permute.xlu0 %1263
      %1265 = vrot.lane.b32.xlu0 %v1194, 16
      %v1266 = vpop.permute.xlu0 %1265
      %1267 = vrot.lane.b32.xlu0 %v1197, 16
      %v1268 = vpop.permute.xlu0 %1267
      %1269 = vrot.lane.b32.xlu0 %v1199, 16
      %v1270 = vpop.permute.xlu0 %1269
      %1271 = vrot.lane.b32.xlu0 %v1202, 16
      %v1272 = vpop.permute.xlu0 %1271
      %1273 = vrot.lane.b32.xlu0 %v1204, 16
      %v1274 = vpop.permute.xlu0 %1273
      %1275 = vrot.lane.b32.xlu0 %v1207, 16
      %v1276 = vpop.permute.xlu0 %1275
      %1277 = vrot.lane.b32.xlu0 %v1209, 16
      %v1278 = vpop.permute.xlu0 %1277
      %1279 = vrot.lane.b32.xlu0 %v1212, 16
      %v1280 = vpop.permute.xlu0 %1279
      %1281 = vrot.lane.b32.xlu0 %v1214, 16
      %v1282 = vpop.permute.xlu0 %1281
      %1283 = vrot.lane.b32.xlu0 %v1217, 16
      %v1284 = vpop.permute.xlu0 %1283
      %1285 = vrot.lane.b32.xlu0 %v1219, 16
      %v1286 = vpop.permute.xlu0 %1285
      %1287 = vrot.lane.b32.xlu0 %v1222, 16
      %v1288 = vpop.permute.xlu0 %1287
      %1289 = vrot.lane.b32.xlu0 %v1224, 16
      %v1290 = vpop.permute.xlu0 %1289
      %1291 = vrot.lane.b32.xlu0 %v1227, 16
      %v1292 = vpop.permute.xlu0 %1291
      %1293 = vrot.lane.b32.xlu0 %v1229, 16
      %v1294 = vpop.permute.xlu0 %1293
      %1295 = vrot.lane.b32.xlu0 %v1232, 16
      %v1296 = vpop.permute.xlu0 %1295
      %1297 = vrot.lane.b32.xlu0 %v1234, 16
      %v1298 = vpop.permute.xlu0 %1297
      %vm1331 = vcmask 162944
      %1332 = vst.msk [vmem:[#allocation4] sm:$0xff] %vm1331, %v1236
      %1333 = vst.msk [vmem:[#allocation4 + $0x8] sm:$0xff] %vm1331, %v1238
      %1334 = vst.msk [vmem:[#allocation4 + $0x10] sm:$0xff] %vm1331, %v1240
      %1335 = vst.msk [vmem:[#allocation4 + $0x18] sm:$0xff] %vm1331, %v1242
      %1336 = vst.msk [vmem:[#allocation4 + $0x20] sm:$0xff] %vm1331, %v1244
      %1337 = vst.msk [vmem:[#allocation4 + $0x28] sm:$0xff] %vm1331, %v1246
      %1338 = vst.msk [vmem:[#allocation4 + $0x30] sm:$0xff] %vm1331, %v1248
      %1339 = vst.msk [vmem:[#allocation4 + $0x38] sm:$0xff] %vm1331, %v1250
      %1340 = vst.msk [vmem:[#allocation4 + $0x40] sm:$0xff] %vm1331, %v1252
      %1341 = vst.msk [vmem:[#allocation4 + $0x48] sm:$0xff] %vm1331, %v1254
      %1342 = vst.msk [vmem:[#allocation4 + $0x50] sm:$0xff] %vm1331, %v1256
      %1343 = vst.msk [vmem:[#allocation4 + $0x58] sm:$0xff] %vm1331, %v1258
      %1344 = vst.msk [vmem:[#allocation4 + $0x60] sm:$0xff] %vm1331, %v1260
      %1345 = vst.msk [vmem:[#allocation4 + $0x68] sm:$0xff] %vm1331, %v1262
      %1346 = vst.msk [vmem:[#allocation4 + $0x70] sm:$0xff] %vm1331, %v1264
      %1347 = vst.msk [vmem:[#allocation4 + $0x78] sm:$0xff] %vm1331, %v1266
      %1348 = vst.msk [vmem:[#allocation4 + $0x80] sm:$0xff] %vm1331, %v1268
      %1349 = vst.msk [vmem:[#allocation4 + $0x88] sm:$0xff] %vm1331, %v1270
      %1350 = vst.msk [vmem:[#allocation4 + $0x90] sm:$0xff] %vm1331, %v1272
      %1351 = vst.msk [vmem:[#allocation4 + $0x98] sm:$0xff] %vm1331, %v1274
      %1352 = vst.msk [vmem:[#allocation4 + $0xa0] sm:$0xff] %vm1331, %v1276
      %1353 = vst.msk [vmem:[#allocation4 + $0xa8] sm:$0xff] %vm1331, %v1278
      %1354 = vst.msk [vmem:[#allocation4 + $0xb0] sm:$0xff] %vm1331, %v1280
      %1355 = vst.msk [vmem:[#allocation4 + $0xb8] sm:$0xff] %vm1331, %v1282
      %1356 = vst.msk [vmem:[#allocation4 + $0xc0] sm:$0xff] %vm1331, %v1284
      %1357 = vst.msk [vmem:[#allocation4 + $0xc8] sm:$0xff] %vm1331, %v1286
      %1358 = vst.msk [vmem:[#allocation4 + $0xd0] sm:$0xff] %vm1331, %v1288
      %1359 = vst.msk [vmem:[#allocation4 + $0xd8] sm:$0xff] %vm1331, %v1290
      %1360 = vst.msk [vmem:[#allocation4 + $0xe0] sm:$0xff] %vm1331, %v1292
      %1361 = vst.msk [vmem:[#allocation4 + $0xe8] sm:$0xff] %vm1331, %v1294
      %1362 = vst.msk [vmem:[#allocation4 + $0xf0] sm:$0xff] %vm1331, %v1296
      %1363 = vst.msk [vmem:[#allocation4 + $0xf8] sm:$0xff] %vm1331, %v1298
      %1366 = vrot.lane.b32.xlu0 %v387, 20
      %v1367 = vpop.permute.xlu0 %1366
      %1368 = vrot.lane.b32.xlu0 %v388, 20
      %v1369 = vpop.permute.xlu0 %1368
      %1370 = vrot.lane.b32.xlu0 %v390, 20
      %v1371 = vpop.permute.xlu0 %1370
      %1372 = vrot.lane.b32.xlu0 %v391, 20
      %v1373 = vpop.permute.xlu0 %1372
      %1374 = vrot.lane.b32.xlu0 %v393, 20
      %v1375 = vpop.permute.xlu0 %1374
      %1376 = vrot.lane.b32.xlu0 %v394, 20
      %v1377 = vpop.permute.xlu0 %1376
      %1378 = vrot.lane.b32.xlu0 %v396, 20
      %v1379 = vpop.permute.xlu0 %1378
      %1380 = vrot.lane.b32.xlu0 %v397, 20
      %v1381 = vpop.permute.xlu0 %1380
      %1382 = vrot.lane.b32.xlu0 %v399, 20
      %v1383 = vpop.permute.xlu0 %1382
      %1384 = vrot.lane.b32.xlu0 %v400, 20
      %v1385 = vpop.permute.xlu0 %1384
      %1386 = vrot.lane.b32.xlu0 %v402, 20
      %v1387 = vpop.permute.xlu0 %1386
      %1388 = vrot.lane.b32.xlu0 %v403, 20
      %v1389 = vpop.permute.xlu0 %1388
      %1390 = vrot.lane.b32.xlu0 %v405, 20
      %v1391 = vpop.permute.xlu0 %1390
      %1392 = vrot.lane.b32.xlu0 %v406, 20
      %v1393 = vpop.permute.xlu0 %1392
      %1394 = vrot.lane.b32.xlu0 %v408, 20
      %v1395 = vpop.permute.xlu0 %1394
      %1396 = vrot.lane.b32.xlu0 %v409, 20
      %v1397 = vpop.permute.xlu0 %1396
      %1398 = vrot.lane.b32.xlu0 %v411, 20
      %v1399 = vpop.permute.xlu0 %1398
      %1400 = vrot.lane.b32.xlu0 %v412, 20
      %v1401 = vpop.permute.xlu0 %1400
      %1402 = vrot.lane.b32.xlu0 %v414, 20
      %v1403 = vpop.permute.xlu0 %1402
      %1404 = vrot.lane.b32.xlu0 %v415, 20
      %v1405 = vpop.permute.xlu0 %1404
      %1406 = vrot.lane.b32.xlu0 %v417, 20
      %v1407 = vpop.permute.xlu0 %1406
      %1408 = vrot.lane.b32.xlu0 %v418, 20
      %v1409 = vpop.permute.xlu0 %1408
      %1410 = vrot.lane.b32.xlu0 %v420, 20
      %v1411 = vpop.permute.xlu0 %1410
      %1412 = vrot.lane.b32.xlu0 %v421, 20
      %v1413 = vpop.permute.xlu0 %1412
      %1414 = vrot.lane.b32.xlu0 %v423, 20
      %v1415 = vpop.permute.xlu0 %1414
      %1416 = vrot.lane.b32.xlu0 %v424, 20
      %v1417 = vpop.permute.xlu0 %1416
      %1418 = vrot.lane.b32.xlu0 %v426, 20
      %v1419 = vpop.permute.xlu0 %1418
      %1420 = vrot.lane.b32.xlu0 %v427, 20
      %v1421 = vpop.permute.xlu0 %1420
      %1422 = vrot.lane.b32.xlu0 %v429, 20
      %v1423 = vpop.permute.xlu0 %1422
      %1424 = vrot.lane.b32.xlu0 %v430, 20
      %v1425 = vpop.permute.xlu0 %1424
      %1426 = vrot.lane.b32.xlu0 %v432, 20
      %v1427 = vpop.permute.xlu0 %1426
      %1428 = vrot.lane.b32.xlu0 %v433, 20
      %v1429 = vpop.permute.xlu0 %1428
      %vm1462 = vcmask 195744
      %1463 = vst.msk [vmem:[#allocation4] sm:$0xff] %vm1462, %v1367
      %1464 = vst.msk [vmem:[#allocation4 + $0x8] sm:$0xff] %vm1462, %v1369
      %1465 = vst.msk [vmem:[#allocation4 + $0x10] sm:$0xff] %vm1462, %v1371
      %1466 = vst.msk [vmem:[#allocation4 + $0x18] sm:$0xff] %vm1462, %v1373
      %1467 = vst.msk [vmem:[#allocation4 + $0x20] sm:$0xff] %vm1462, %v1375
      %1468 = vst.msk [vmem:[#allocation4 + $0x28] sm:$0xff] %vm1462, %v1377
      %1469 = vst.msk [vmem:[#allocation4 + $0x30] sm:$0xff] %vm1462, %v1379
      %1470 = vst.msk [vmem:[#allocation4 + $0x38] sm:$0xff] %vm1462, %v1381
      %1471 = vst.msk [vmem:[#allocation4 + $0x40] sm:$0xff] %vm1462, %v1383
      %1472 = vst.msk [vmem:[#allocation4 + $0x48] sm:$0xff] %vm1462, %v1385
      %1473 = vst.msk [vmem:[#allocation4 + $0x50] sm:$0xff] %vm1462, %v1387
      %1474 = vst.msk [vmem:[#allocation4 + $0x58] sm:$0xff] %vm1462, %v1389
      %1475 = vst.msk [vmem:[#allocation4 + $0x60] sm:$0xff] %vm1462, %v1391
      %1476 = vst.msk [vmem:[#allocation4 + $0x68] sm:$0xff] %vm1462, %v1393
      %1477 = vst.msk [vmem:[#allocation4 + $0x70] sm:$0xff] %vm1462, %v1395
      %1478 = vst.msk [vmem:[#allocation4 + $0x78] sm:$0xff] %vm1462, %v1397
      %1479 = vst.msk [vmem:[#allocation4 + $0x80] sm:$0xff] %vm1462, %v1399
      %1480 = vst.msk [vmem:[#allocation4 + $0x88] sm:$0xff] %vm1462, %v1401
      %1481 = vst.msk [vmem:[#allocation4 + $0x90] sm:$0xff] %vm1462, %v1403
      %1482 = vst.msk [vmem:[#allocation4 + $0x98] sm:$0xff] %vm1462, %v1405
      %1483 = vst.msk [vmem:[#allocation4 + $0xa0] sm:$0xff] %vm1462, %v1407
      %1484 = vst.msk [vmem:[#allocation4 + $0xa8] sm:$0xff] %vm1462, %v1409
      %1485 = vst.msk [vmem:[#allocation4 + $0xb0] sm:$0xff] %vm1462, %v1411
      %1486 = vst.msk [vmem:[#allocation4 + $0xb8] sm:$0xff] %vm1462, %v1413
      %1487 = vst.msk [vmem:[#allocation4 + $0xc0] sm:$0xff] %vm1462, %v1415
      %1488 = vst.msk [vmem:[#allocation4 + $0xc8] sm:$0xff] %vm1462, %v1417
      %1489 = vst.msk [vmem:[#allocation4 + $0xd0] sm:$0xff] %vm1462, %v1419
      %1490 = vst.msk [vmem:[#allocation4 + $0xd8] sm:$0xff] %vm1462, %v1421
      %1491 = vst.msk [vmem:[#allocation4 + $0xe0] sm:$0xff] %vm1462, %v1423
      %1492 = vst.msk [vmem:[#allocation4 + $0xe8] sm:$0xff] %vm1462, %v1425
      %1493 = vst.msk [vmem:[#allocation4 + $0xf0] sm:$0xff] %vm1462, %v1427
      %1494 = vst.msk [vmem:[#allocation4 + $0xf8] sm:$0xff] %vm1462, %v1429
      %v1496 = vrot.slane %v432, 1
      %v1497 = vrot.slane %v433, 1
      %v1498 = vsel %vm524, %v1496, %v1497
      %v1499 = vrot.slane %v434, 1
      %v1500 = vsel %vm524, %v1497, %v1499
      %1501 = vrot.lane.b32.xlu0 %v532, 24
      %v1502 = vpop.permute.xlu0 %1501
      %1503 = vrot.lane.b32.xlu0 %v534, 24
      %v1504 = vpop.permute.xlu0 %1503
      %1505 = vrot.lane.b32.xlu0 %v537, 24
      %v1506 = vpop.permute.xlu0 %1505
      %1507 = vrot.lane.b32.xlu0 %v539, 24
      %v1508 = vpop.permute.xlu0 %1507
      %1509 = vrot.lane.b32.xlu0 %v542, 24
      %v1510 = vpop.permute.xlu0 %1509
      %1511 = vrot.lane.b32.xlu0 %v544, 24
      %v1512 = vpop.permute.xlu0 %1511
      %1513 = vrot.lane.b32.xlu0 %v547, 24
      %v1514 = vpop.permute.xlu0 %1513
      %1515 = vrot.lane.b32.xlu0 %v549, 24
      %v1516 = vpop.permute.xlu0 %1515
      %1517 = vrot.lane.b32.xlu0 %v552, 24
      %v1518 = vpop.permute.xlu0 %1517
      %1519 = vrot.lane.b32.xlu0 %v554, 24
      %v1520 = vpop.permute.xlu0 %1519
      %1521 = vrot.lane.b32.xlu0 %v557, 24
      %v1522 = vpop.permute.xlu0 %1521
      %1523 = vrot.lane.b32.xlu0 %v559, 24
      %v1524 = vpop.permute.xlu0 %1523
      %1525 = vrot.lane.b32.xlu0 %v562, 24
      %v1526 = vpop.permute.xlu0 %1525
      %1527 = vrot.lane.b32.xlu0 %v564, 24
      %v1528 = vpop.permute.xlu0 %1527
      %1529 = vrot.lane.b32.xlu0 %v567, 24
      %v1530 = vpop.permute.xlu0 %1529
      %1531 = vrot.lane.b32.xlu0 %v569, 24
      %v1532 = vpop.permute.xlu0 %1531
      %1533 = vrot.lane.b32.xlu0 %v572, 24
      %v1534 = vpop.permute.xlu0 %1533
      %1535 = vrot.lane.b32.xlu0 %v574, 24
      %v1536 = vpop.permute.xlu0 %1535
      %1537 = vrot.lane.b32.xlu0 %v577, 24
      %v1538 = vpop.permute.xlu0 %1537
      %1539 = vrot.lane.b32.xlu0 %v579, 24
      %v1540 = vpop.permute.xlu0 %1539
      %1541 = vrot.lane.b32.xlu0 %v582, 24
      %v1542 = vpop.permute.xlu0 %1541
      %1543 = vrot.lane.b32.xlu0 %v584, 24
      %v1544 = vpop.permute.xlu0 %1543
      %1545 = vrot.lane.b32.xlu0 %v587, 24
      %v1546 = vpop.permute.xlu0 %1545
      %1547 = vrot.lane.b32.xlu0 %v589, 24
      %v1548 = vpop.permute.xlu0 %1547
      %1549 = vrot.lane.b32.xlu0 %v592, 24
      %v1550 = vpop.permute.xlu0 %1549
      %1551 = vrot.lane.b32.xlu0 %v594, 24
      %v1552 = vpop.permute.xlu0 %1551
      %1553 = vrot.lane.b32.xlu0 %v597, 24
      %v1554 = vpop.permute.xlu0 %1553
      %1555 = vrot.lane.b32.xlu0 %v599, 24
      %v1556 = vpop.permute.xlu0 %1555
      %1557 = vrot.lane.b32.xlu0 %v602, 24
      %v1558 = vpop.permute.xlu0 %1557
      %1559 = vrot.lane.b32.xlu0 %v604, 24
      %v1560 = vpop.permute.xlu0 %1559
      %1561 = vrot.lane.b32.xlu0 %v1498, 24
      %v1562 = vpop.permute.xlu0 %1561
      %1563 = vrot.lane.b32.xlu0 %v1500, 24
      %v1564 = vpop.permute.xlu0 %1563
      %vm1597 = vcmask 228544
      %1598 = vst.msk [vmem:[#allocation4] sm:$0xff] %vm1597, %v1502
      %1599 = vst.msk [vmem:[#allocation4 + $0x8] sm:$0xff] %vm1597, %v1504
      %1600 = vst.msk [vmem:[#allocation4 + $0x10] sm:$0xff] %vm1597, %v1506
      %1601 = vst.msk [vmem:[#allocation4 + $0x18] sm:$0xff] %vm1597, %v1508
      %1602 = vst.msk [vmem:[#allocation4 + $0x20] sm:$0xff] %vm1597, %v1510
      %1603 = vst.msk [vmem:[#allocation4 + $0x28] sm:$0xff] %vm1597, %v1512
      %1604 = vst.msk [vmem:[#allocation4 + $0x30] sm:$0xff] %vm1597, %v1514
      %1605 = vst.msk [vmem:[#allocation4 + $0x38] sm:$0xff] %vm1597, %v1516
      %1606 = vst.msk [vmem:[#allocation4 + $0x40] sm:$0xff] %vm1597, %v1518
      %1607 = vst.msk [vmem:[#allocation4 + $0x48] sm:$0xff] %vm1597, %v1520
      %1608 = vst.msk [vmem:[#allocation4 + $0x50] sm:$0xff] %vm1597, %v1522
      %1609 = vst.msk [vmem:[#allocation4 + $0x58] sm:$0xff] %vm1597, %v1524
      %1610 = vst.msk [vmem:[#allocation4 + $0x60] sm:$0xff] %vm1597, %v1526
      %1611 = vst.msk [vmem:[#allocation4 + $0x68] sm:$0xff] %vm1597, %v1528
      %1612 = vst.msk [vmem:[#allocation4 + $0x70] sm:$0xff] %vm1597, %v1530
      %1613 = vst.msk [vmem:[#allocation4 + $0x78] sm:$0xff] %vm1597, %v1532
      %1614 = vst.msk [vmem:[#allocation4 + $0x80] sm:$0xff] %vm1597, %v1534
      %1615 = vst.msk [vmem:[#allocation4 + $0x88] sm:$0xff] %vm1597, %v1536
      %1616 = vst.msk [vmem:[#allocation4 + $0x90] sm:$0xff] %vm1597, %v1538
      %1617 = vst.msk [vmem:[#allocation4 + $0x98] sm:$0xff] %vm1597, %v1540
      %1618 = vst.msk [vmem:[#allocation4 + $0xa0] sm:$0xff] %vm1597, %v1542
      %1619 = vst.msk [vmem:[#allocation4 + $0xa8] sm:$0xff] %vm1597, %v1544
      %1620 = vst.msk [vmem:[#allocation4 + $0xb0] sm:$0xff] %vm1597, %v1546
      %1621 = vst.msk [vmem:[#allocation4 + $0xb8] sm:$0xff] %vm1597, %v1548
      %1622 = vst.msk [vmem:[#allocation4 + $0xc0] sm:$0xff] %vm1597, %v1550
      %1623 = vst.msk [vmem:[#allocation4 + $0xc8] sm:$0xff] %vm1597, %v1552
      %1624 = vst.msk [vmem:[#allocation4 + $0xd0] sm:$0xff] %vm1597, %v1554
      %1625 = vst.msk [vmem:[#allocation4 + $0xd8] sm:$0xff] %vm1597, %v1556
      %1626 = vst.msk [vmem:[#allocation4 + $0xe0] sm:$0xff] %vm1597, %v1558
      %1627 = vst.msk [vmem:[#allocation4 + $0xe8] sm:$0xff] %vm1597, %v1560
      %1628 = vst.msk [vmem:[#allocation4 + $0xf0] sm:$0xff] %vm1597, %v1562
      %1629 = vst.msk [vmem:[#allocation4 + $0xf8] sm:$0xff] %vm1597, %v1564
      %v1630 = vrot.slane %v432, 2
      %v1631 = vrot.slane %v433, 2
      %v1632 = vsel %vm734, %v1630, %v1631
      %v1633 = vrot.slane %v434, 2
      %v1634 = vsel %vm734, %v1631, %v1633
      %1635 = vrot.lane.b32.xlu0 %v742, 28
      %v1636 = vpop.permute.xlu0 %1635
      %1637 = vrot.lane.b32.xlu0 %v744, 28
      %v1638 = vpop.permute.xlu0 %1637
      %1639 = vrot.lane.b32.xlu0 %v747, 28
      %v1640 = vpop.permute.xlu0 %1639
      %1641 = vrot.lane.b32.xlu0 %v749, 28
      %v1642 = vpop.permute.xlu0 %1641
      %1643 = vrot.lane.b32.xlu0 %v752, 28
      %v1644 = vpop.permute.xlu0 %1643
      %1645 = vrot.lane.b32.xlu0 %v754, 28
      %v1646 = vpop.permute.xlu0 %1645
      %1647 = vrot.lane.b32.xlu0 %v757, 28
      %v1648 = vpop.permute.xlu0 %1647
      %1649 = vrot.lane.b32.xlu0 %v759, 28
      %v1650 = vpop.permute.xlu0 %1649
      %1651 = vrot.lane.b32.xlu0 %v762, 28
      %v1652 = vpop.permute.xlu0 %1651
      %1653 = vrot.lane.b32.xlu0 %v764, 28
      %v1654 = vpop.permute.xlu0 %1653
      %1655 = vrot.lane.b32.xlu0 %v767, 28
      %v1656 = vpop.permute.xlu0 %1655
      %1657 = vrot.lane.b32.xlu0 %v769, 28
      %v1658 = vpop.permute.xlu0 %1657
      %1659 = vrot.lane.b32.xlu0 %v772, 28
      %v1660 = vpop.permute.xlu0 %1659
      %1661 = vrot.lane.b32.xlu0 %v774, 28
      %v1662 = vpop.permute.xlu0 %1661
      %1663 = vrot.lane.b32.xlu0 %v777, 28
      %v1664 = vpop.permute.xlu0 %1663
      %1665 = vrot.lane.b32.xlu0 %v779, 28
      %v1666 = vpop.permute.xlu0 %1665
      %1667 = vrot.lane.b32.xlu0 %v782, 28
      %v1668 = vpop.permute.xlu0 %1667
      %1669 = vrot.lane.b32.xlu0 %v784, 28
      %v1670 = vpop.permute.xlu0 %1669
      %1671 = vrot.lane.b32.xlu0 %v787, 28
      %v1672 = vpop.permute.xlu0 %1671
      %1673 = vrot.lane.b32.xlu0 %v789, 28
      %v1674 = vpop.permute.xlu0 %1673
      %1675 = vrot.lane.b32.xlu0 %v792, 28
      %v1676 = vpop.permute.xlu0 %1675
      %1677 = vrot.lane.b32.xlu0 %v794, 28
      %v1678 = vpop.permute.xlu0 %1677
      %1679 = vrot.lane.b32.xlu0 %v797, 28
      %v1680 = vpop.permute.xlu0 %1679
      %1681 = vrot.lane.b32.xlu0 %v799, 28
      %v1682 = vpop.permute.xlu0 %1681
      %1683 = vrot.lane.b32.xlu0 %v802, 28
      %v1684 = vpop.permute.xlu0 %1683
      %1685 = vrot.lane.b32.xlu0 %v804, 28
      %v1686 = vpop.permute.xlu0 %1685
      %1687 = vrot.lane.b32.xlu0 %v807, 28
      %v1688 = vpop.permute.xlu0 %1687
      %1689 = vrot.lane.b32.xlu0 %v809, 28
      %v1690 = vpop.permute.xlu0 %1689
      %1691 = vrot.lane.b32.xlu0 %v812, 28
      %v1692 = vpop.permute.xlu0 %1691
      %1693 = vrot.lane.b32.xlu0 %v814, 28
      %v1694 = vpop.permute.xlu0 %1693
      %1695 = vrot.lane.b32.xlu0 %v1632, 28
      %v1696 = vpop.permute.xlu0 %1695
      %1697 = vrot.lane.b32.xlu0 %v1634, 28
      %v1698 = vpop.permute.xlu0 %1697
      %vm1731 = vcmask 261344
      %1732 = vst.msk [vmem:[#allocation4] sm:$0xff] %vm1731, %v1636
      %1733 = vst.msk [vmem:[#allocation4 + $0x8] sm:$0xff] %vm1731, %v1638
      %1734 = vst.msk [vmem:[#allocation4 + $0x10] sm:$0xff] %vm1731, %v1640
      %1735 = vst.msk [vmem:[#allocation4 + $0x18] sm:$0xff] %vm1731, %v1642
      %1736 = vst.msk [vmem:[#allocation4 + $0x20] sm:$0xff] %vm1731, %v1644
      %1737 = vst.msk [vmem:[#allocation4 + $0x28] sm:$0xff] %vm1731, %v1646
      %1738 = vst.msk [vmem:[#allocation4 + $0x30] sm:$0xff] %vm1731, %v1648
      %1739 = vst.msk [vmem:[#allocation4 + $0x38] sm:$0xff] %vm1731, %v1650
      %1740 = vst.msk [vmem:[#allocation4 + $0x40] sm:$0xff] %vm1731, %v1652
      %1741 = vst.msk [vmem:[#allocation4 + $0x48] sm:$0xff] %vm1731, %v1654
      %1742 = vst.msk [vmem:[#allocation4 + $0x50] sm:$0xff] %vm1731, %v1656
      %1743 = vst.msk [vmem:[#allocation4 + $0x58] sm:$0xff] %vm1731, %v1658
      %1744 = vst.msk [vmem:[#allocation4 + $0x60] sm:$0xff] %vm1731, %v1660
      %1745 = vst.msk [vmem:[#allocation4 + $0x68] sm:$0xff] %vm1731, %v1662
      %1746 = vst.msk [vmem:[#allocation4 + $0x70] sm:$0xff] %vm1731, %v1664
      %1747 = vst.msk [vmem:[#allocation4 + $0x78] sm:$0xff] %vm1731, %v1666
      %1748 = vst.msk [vmem:[#allocation4 + $0x80] sm:$0xff] %vm1731, %v1668
      %1749 = vst.msk [vmem:[#allocation4 + $0x88] sm:$0xff] %vm1731, %v1670
      %1750 = vst.msk [vmem:[#allocation4 + $0x90] sm:$0xff] %vm1731, %v1672
      %1751 = vst.msk [vmem:[#allocation4 + $0x98] sm:$0xff] %vm1731, %v1674
      %1752 = vst.msk [vmem:[#allocation4 + $0xa0] sm:$0xff] %vm1731, %v1676
      %1753 = vst.msk [vmem:[#allocation4 + $0xa8] sm:$0xff] %vm1731, %v1678
      %1754 = vst.msk [vmem:[#allocation4 + $0xb0] sm:$0xff] %vm1731, %v1680
      %1755 = vst.msk [vmem:[#allocation4 + $0xb8] sm:$0xff] %vm1731, %v1682
      %1756 = vst.msk [vmem:[#allocation4 + $0xc0] sm:$0xff] %vm1731, %v1684
      %1757 = vst.msk [vmem:[#allocation4 + $0xc8] sm:$0xff] %vm1731, %v1686
      %1758 = vst.msk [vmem:[#allocation4 + $0xd0] sm:$0xff] %vm1731, %v1688
      %1759 = vst.msk [vmem:[#allocation4 + $0xd8] sm:$0xff] %vm1731, %v1690
      %1760 = vst.msk [vmem:[#allocation4 + $0xe0] sm:$0xff] %vm1731, %v1692
      %1761 = vst.msk [vmem:[#allocation4 + $0xe8] sm:$0xff] %vm1731, %v1694
      %1762 = vst.msk [vmem:[#allocation4 + $0xf0] sm:$0xff] %vm1731, %v1696
      %1763 = vst.msk [vmem:[#allocation4 + $0xf8] sm:$0xff] %vm1731, %v1698
      %v1764 = vrot.slane %v432, 3
      %v1765 = vrot.slane %v433, 3
      %v1766 = vsel %vm944, %v1764, %v1765
      %v1767 = vrot.slane %v434, 3
      %v1768 = vsel %vm944, %v1765, %v1767
      %1769 = vrot.lane.b32.xlu0 %v952, 32
      %v1770 = vpop.permute.xlu0 %1769
      %1771 = vrot.lane.b32.xlu0 %v954, 32
      %v1772 = vpop.permute.xlu0 %1771
      %1773 = vrot.lane.b32.xlu0 %v957, 32
      %v1774 = vpop.permute.xlu0 %1773
      %1775 = vrot.lane.b32.xlu0 %v959, 32
      %v1776 = vpop.permute.xlu0 %1775
      %1777 = vrot.lane.b32.xlu0 %v962, 32
      %v1778 = vpop.permute.xlu0 %1777
      %1779 = vrot.lane.b32.xlu0 %v964, 32
      %v1780 = vpop.permute.xlu0 %1779
      %1781 = vrot.lane.b32.xlu0 %v967, 32
      %v1782 = vpop.permute.xlu0 %1781
      %1783 = vrot.lane.b32.xlu0 %v969, 32
      %v1784 = vpop.permute.xlu0 %1783
      %1785 = vrot.lane.b32.xlu0 %v972, 32
      %v1786 = vpop.permute.xlu0 %1785
      %1787 = vrot.lane.b32.xlu0 %v974, 32
      %v1788 = vpop.permute.xlu0 %1787
      %1789 = vrot.lane.b32.xlu0 %v977, 32
      %v1790 = vpop.permute.xlu0 %1789
      %1791 = vrot.lane.b32.xlu0 %v979, 32
      %v1792 = vpop.permute.xlu0 %1791
      %1793 = vrot.lane.b32.xlu0 %v982, 32
      %v1794 = vpop.permute.xlu0 %1793
      %1795 = vrot.lane.b32.xlu0 %v984, 32
      %v1796 = vpop.permute.xlu0 %1795
      %1797 = vrot.lane.b32.xlu0 %v987, 32
      %v1798 = vpop.permute.xlu0 %1797
      %1799 = vrot.lane.b32.xlu0 %v989, 32
      %v1800 = vpop.permute.xlu0 %1799
      %1801 = vrot.lane.b32.xlu0 %v992, 32
      %v1802 = vpop.permute.xlu0 %1801
      %1803 = vrot.lane.b32.xlu0 %v994, 32
      %v1804 = vpop.permute.xlu0 %1803
      %1805 = vrot.lane.b32.xlu0 %v997, 32
      %v1806 = vpop.permute.xlu0 %1805
      %1807 = vrot.lane.b32.xlu0 %v999, 32
      %v1808 = vpop.permute.xlu0 %1807
      %1809 = vrot.lane.b32.xlu0 %v1002, 32
      %v1810 = vpop.permute.xlu0 %1809
      %1811 = vrot.lane.b32.xlu0 %v1004, 32
      %v1812 = vpop.permute.xlu0 %1811
      %1813 = vrot.lane.b32.xlu0 %v1007, 32
      %v1814 = vpop.permute.xlu0 %1813
      %1815 = vrot.lane.b32.xlu0 %v1009, 32
      %v1816 = vpop.permute.xlu0 %1815
      %1817 = vrot.lane.b32.xlu0 %v1012, 32
      %v1818 = vpop.permute.xlu0 %1817
      %1819 = vrot.lane.b32.xlu0 %v1014, 32
      %v1820 = vpop.permute.xlu0 %1819
      %1821 = vrot.lane.b32.xlu0 %v1017, 32
      %v1822 = vpop.permute.xlu0 %1821
      %1823 = vrot.lane.b32.xlu0 %v1019, 32
      %v1824 = vpop.permute.xlu0 %1823
      %1825 = vrot.lane.b32.xlu0 %v1022, 32
      %v1826 = vpop.permute.xlu0 %1825
      %1827 = vrot.lane.b32.xlu0 %v1024, 32
      %v1828 = vpop.permute.xlu0 %1827
      %1829 = vrot.lane.b32.xlu0 %v1766, 32
      %v1830 = vpop.permute.xlu0 %1829
      %1831 = vrot.lane.b32.xlu0 %v1768, 32
      %v1832 = vpop.permute.xlu0 %1831
      %vm1865 = vcmask 294144
      %1866 = vst.msk [vmem:[#allocation4] sm:$0xff] %vm1865, %v1770
      %1867 = vst.msk [vmem:[#allocation4 + $0x8] sm:$0xff] %vm1865, %v1772
      %1868 = vst.msk [vmem:[#allocation4 + $0x10] sm:$0xff] %vm1865, %v1774
      %1869 = vst.msk [vmem:[#allocation4 + $0x18] sm:$0xff] %vm1865, %v1776
      %1870 = vst.msk [vmem:[#allocation4 + $0x20] sm:$0xff] %vm1865, %v1778
      %1871 = vst.msk [vmem:[#allocation4 + $0x28] sm:$0xff] %vm1865, %v1780
      %1872 = vst.msk [vmem:[#allocation4 + $0x30] sm:$0xff] %vm1865, %v1782
      %1873 = vst.msk [vmem:[#allocation4 + $0x38] sm:$0xff] %vm1865, %v1784
      %1874 = vst.msk [vmem:[#allocation4 + $0x40] sm:$0xff] %vm1865, %v1786
      %1875 = vst.msk [vmem:[#allocation4 + $0x48] sm:$0xff] %vm1865, %v1788
      %1876 = vst.msk [vmem:[#allocation4 + $0x50] sm:$0xff] %vm1865, %v1790
      %1877 = vst.msk [vmem:[#allocation4 + $0x58] sm:$0xff] %vm1865, %v1792
      %1878 = vst.msk [vmem:[#allocation4 + $0x60] sm:$0xff] %vm1865, %v1794
      %1879 = vst.msk [vmem:[#allocation4 + $0x68] sm:$0xff] %vm1865, %v1796
      %1880 = vst.msk [vmem:[#allocation4 + $0x70] sm:$0xff] %vm1865, %v1798
      %1881 = vst.msk [vmem:[#allocation4 + $0x78] sm:$0xff] %vm1865, %v1800
      %1882 = vst.msk [vmem:[#allocation4 + $0x80] sm:$0xff] %vm1865, %v1802
      %1883 = vst.msk [vmem:[#allocation4 + $0x88] sm:$0xff] %vm1865, %v1804
      %1884 = vst.msk [vmem:[#allocation4 + $0x90] sm:$0xff] %vm1865, %v1806
      %1885 = vst.msk [vmem:[#allocation4 + $0x98] sm:$0xff] %vm1865, %v1808
      %1886 = vst.msk [vmem:[#allocation4 + $0xa0] sm:$0xff] %vm1865, %v1810
      %1887 = vst.msk [vmem:[#allocation4 + $0xa8] sm:$0xff] %vm1865, %v1812
      %1888 = vst.msk [vmem:[#allocation4 + $0xb0] sm:$0xff] %vm1865, %v1814
      %1889 = vst.msk [vmem:[#allocation4 + $0xb8] sm:$0xff] %vm1865, %v1816
      %1890 = vst.msk [vmem:[#allocation4 + $0xc0] sm:$0xff] %vm1865, %v1818
      %1891 = vst.msk [vmem:[#allocation4 + $0xc8] sm:$0xff] %vm1865, %v1820
      %1892 = vst.msk [vmem:[#allocation4 + $0xd0] sm:$0xff] %vm1865, %v1822
      %1893 = vst.msk [vmem:[#allocation4 + $0xd8] sm:$0xff] %vm1865, %v1824
      %1894 = vst.msk [vmem:[#allocation4 + $0xe0] sm:$0xff] %vm1865, %v1826
      %1895 = vst.msk [vmem:[#allocation4 + $0xe8] sm:$0xff] %vm1865, %v1828
      %1896 = vst.msk [vmem:[#allocation4 + $0xf0] sm:$0xff] %vm1865, %v1830
      %1897 = vst.msk [vmem:[#allocation4 + $0xf8] sm:$0xff] %vm1865, %v1832
      %v1898 = vrot.slane %v432, 4
      %v1899 = vrot.slane %v433, 4
      %v1900 = vsel %vm1154, %v1898, %v1899
      %v1901 = vrot.slane %v434, 4
      %v1902 = vsel %vm1154, %v1899, %v1901
      %1903 = vrot.lane.b32.xlu0 %v1162, 36
      %v1904 = vpop.permute.xlu0 %1903
      %1905 = vrot.lane.b32.xlu0 %v1164, 36
      %v1906 = vpop.permute.xlu0 %1905
      %1907 = vrot.lane.b32.xlu0 %v1167, 36
      %v1908 = vpop.permute.xlu0 %1907
      %1909 = vrot.lane.b32.xlu0 %v1169, 36
      %v1910 = vpop.permute.xlu0 %1909
      %1911 = vrot.lane.b32.xlu0 %v1172, 36
      %v1912 = vpop.permute.xlu0 %1911
      %1913 = vrot.lane.b32.xlu0 %v1174, 36
      %v1914 = vpop.permute.xlu0 %1913
      %1915 = vrot.lane.b32.xlu0 %v1177, 36
      %v1916 = vpop.permute.xlu0 %1915
      %1917 = vrot.lane.b32.xlu0 %v1179, 36
      %v1918 = vpop.permute.xlu0 %1917
      %1919 = vrot.lane.b32.xlu0 %v1182, 36
      %v1920 = vpop.permute.xlu0 %1919
      %1921 = vrot.lane.b32.xlu0 %v1184, 36
      %v1922 = vpop.permute.xlu0 %1921
      %1923 = vrot.lane.b32.xlu0 %v1187, 36
      %v1924 = vpop.permute.xlu0 %1923
      %1925 = vrot.lane.b32.xlu0 %v1189, 36
      %v1926 = vpop.permute.xlu0 %1925
      %1927 = vrot.lane.b32.xlu0 %v1192, 36
      %v1928 = vpop.permute.xlu0 %1927
      %1929 = vrot.lane.b32.xlu0 %v1194, 36
      %v1930 = vpop.permute.xlu0 %1929
      %1931 = vrot.lane.b32.xlu0 %v1197, 36
      %v1932 = vpop.permute.xlu0 %1931
      %1933 = vrot.lane.b32.xlu0 %v1199, 36
      %v1934 = vpop.permute.xlu0 %1933
      %1935 = vrot.lane.b32.xlu0 %v1202, 36
      %v1936 = vpop.permute.xlu0 %1935
      %1937 = vrot.lane.b32.xlu0 %v1204, 36
      %v1938 = vpop.permute.xlu0 %1937
      %1939 = vrot.lane.b32.xlu0 %v1207, 36
      %v1940 = vpop.permute.xlu0 %1939
      %1941 = vrot.lane.b32.xlu0 %v1209, 36
      %v1942 = vpop.permute.xlu0 %1941
      %1943 = vrot.lane.b32.xlu0 %v1212, 36
      %v1944 = vpop.permute.xlu0 %1943
      %1945 = vrot.lane.b32.xlu0 %v1214, 36
      %v1946 = vpop.permute.xlu0 %1945
      %1947 = vrot.lane.b32.xlu0 %v1217, 36
      %v1948 = vpop.permute.xlu0 %1947
      %1949 = vrot.lane.b32.xlu0 %v1219, 36
      %v1950 = vpop.permute.xlu0 %1949
      %1951 = vrot.lane.b32.xlu0 %v1222, 36
      %v1952 = vpop.permute.xlu0 %1951
      %1953 = vrot.lane.b32.xlu0 %v1224, 36
      %v1954 = vpop.permute.xlu0 %1953
      %1955 = vrot.lane.b32.xlu0 %v1227, 36
      %v1956 = vpop.permute.xlu0 %1955
      %1957 = vrot.lane.b32.xlu0 %v1229, 36
      %v1958 = vpop.permute.xlu0 %1957
      %1959 = vrot.lane.b32.xlu0 %v1232, 36
      %v1960 = vpop.permute.xlu0 %1959
      %1961 = vrot.lane.b32.xlu0 %v1234, 36
      %v1962 = vpop.permute.xlu0 %1961
      %1963 = vrot.lane.b32.xlu0 %v1900, 36
      %v1964 = vpop.permute.xlu0 %1963
      %1965 = vrot.lane.b32.xlu0 %v1902, 36
      %v1966 = vpop.permute.xlu0 %1965
      %vm1999 = vcmask 326944
      %2000 = vst.msk [vmem:[#allocation4] sm:$0xff] %vm1999, %v1904
      %2001 = vst.msk [vmem:[#allocation4 + $0x8] sm:$0xff] %vm1999, %v1906
      %2002 = vst.msk [vmem:[#allocation4 + $0x10] sm:$0xff] %vm1999, %v1908
      %2003 = vst.msk [vmem:[#allocation4 + $0x18] sm:$0xff] %vm1999, %v1910
      %2004 = vst.msk [vmem:[#allocation4 + $0x20] sm:$0xff] %vm1999, %v1912
      %2005 = vst.msk [vmem:[#allocation4 + $0x28] sm:$0xff] %vm1999, %v1914
      %2006 = vst.msk [vmem:[#allocation4 + $0x30] sm:$0xff] %vm1999, %v1916
      %2007 = vst.msk [vmem:[#allocation4 + $0x38] sm:$0xff] %vm1999, %v1918
      %2008 = vst.msk [vmem:[#allocation4 + $0x40] sm:$0xff] %vm1999, %v1920
      %2009 = vst.msk [vmem:[#allocation4 + $0x48] sm:$0xff] %vm1999, %v1922
      %2010 = vst.msk [vmem:[#allocation4 + $0x50] sm:$0xff] %vm1999, %v1924
      %2011 = vst.msk [vmem:[#allocation4 + $0x58] sm:$0xff] %vm1999, %v1926
      %2012 = vst.msk [vmem:[#allocation4 + $0x60] sm:$0xff] %vm1999, %v1928
      %2013 = vst.msk [vmem:[#allocation4 + $0x68] sm:$0xff] %vm1999, %v1930
      %2014 = vst.msk [vmem:[#allocation4 + $0x70] sm:$0xff] %vm1999, %v1932
      %2015 = vst.msk [vmem:[#allocation4 + $0x78] sm:$0xff] %vm1999, %v1934
      %2016 = vst.msk [vmem:[#allocation4 + $0x80] sm:$0xff] %vm1999, %v1936
      %2017 = vst.msk [vmem:[#allocation4 + $0x88] sm:$0xff] %vm1999, %v1938
      %2018 = vst.msk [vmem:[#allocation4 + $0x90] sm:$0xff] %vm1999, %v1940
      %2019 = vst.msk [vmem:[#allocation4 + $0x98] sm:$0xff] %vm1999, %v1942
      %2020 = vst.msk [vmem:[#allocation4 + $0xa0] sm:$0xff] %vm1999, %v1944
      %2021 = vst.msk [vmem:[#allocation4 + $0xa8] sm:$0xff] %vm1999, %v1946
      %2022 = vst.msk [vmem:[#allocation4 + $0xb0] sm:$0xff] %vm1999, %v1948
      %2023 = vst.msk [vmem:[#allocation4 + $0xb8] sm:$0xff] %vm1999, %v1950
      %2024 = vst.msk [vmem:[#allocation4 + $0xc0] sm:$0xff] %vm1999, %v1952
      %2025 = vst.msk [vmem:[#allocation4 + $0xc8] sm:$0xff] %vm1999, %v1954
      %2026 = vst.msk [vmem:[#allocation4 + $0xd0] sm:$0xff] %vm1999, %v1956
      %2027 = vst.msk [vmem:[#allocation4 + $0xd8] sm:$0xff] %vm1999, %v1958
      %2028 = vst.msk [vmem:[#allocation4 + $0xe0] sm:$0xff] %vm1999, %v1960
      %2029 = vst.msk [vmem:[#allocation4 + $0xe8] sm:$0xff] %vm1999, %v1962
      %2030 = vst.msk [vmem:[#allocation4 + $0xf0] sm:$0xff] %vm1999, %v1964
      %2031 = vst.msk [vmem:[#allocation4 + $0xf8] sm:$0xff] %vm1999, %v1966
      %2034 = vrot.lane.b32.xlu0 %v390, 40
      %v2035 = vpop.permute.xlu0 %2034
      %2036 = vrot.lane.b32.xlu0 %v391, 40
      %v2037 = vpop.permute.xlu0 %2036
      %2038 = vrot.lane.b32.xlu0 %v393, 40
      %v2039 = vpop.permute.xlu0 %2038
      %2040 = vrot.lane.b32.xlu0 %v394, 40
      %v2041 = vpop.permute.xlu0 %2040
      %2042 = vrot.lane.b32.xlu0 %v396, 40
      %v2043 = vpop.permute.xlu0 %2042
      %2044 = vrot.lane.b32.xlu0 %v397, 40
      %v2045 = vpop.permute.xlu0 %2044
      %2046 = vrot.lane.b32.xlu0 %v399, 40
      %v2047 = vpop.permute.xlu0 %2046
      %2048 = vrot.lane.b32.xlu0 %v400, 40
      %v2049 = vpop.permute.xlu0 %2048
      %2050 = vrot.lane.b32.xlu0 %v402, 40
      %v2051 = vpop.permute.xlu0 %2050
      %2052 = vrot.lane.b32.xlu0 %v403, 40
      %v2053 = vpop.permute.xlu0 %2052
      %2054 = vrot.lane.b32.xlu0 %v405, 40
      %v2055 = vpop.permute.xlu0 %2054
      %2056 = vrot.lane.b32.xlu0 %v406, 40
      %v2057 = vpop.permute.xlu0 %2056
      %2058 = vrot.lane.b32.xlu0 %v408, 40
      %v2059 = vpop.permute.xlu0 %2058
      %2060 = vrot.lane.b32.xlu0 %v409, 40
      %v2061 = vpop.permute.xlu0 %2060
      %2062 = vrot.lane.b32.xlu0 %v411, 40
      %v2063 = vpop.permute.xlu0 %2062
      %2064 = vrot.lane.b32.xlu0 %v412, 40
      %v2065 = vpop.permute.xlu0 %2064
      %2066 = vrot.lane.b32.xlu0 %v414, 40
      %v2067 = vpop.permute.xlu0 %2066
      %2068 = vrot.lane.b32.xlu0 %v415, 40
      %v2069 = vpop.permute.xlu0 %2068
      %2070 = vrot.lane.b32.xlu0 %v417, 40
      %v2071 = vpop.permute.xlu0 %2070
      %2072 = vrot.lane.b32.xlu0 %v418, 40
      %v2073 = vpop.permute.xlu0 %2072
      %2074 = vrot.lane.b32.xlu0 %v420, 40
      %v2075 = vpop.permute.xlu0 %2074
      %2076 = vrot.lane.b32.xlu0 %v421, 40
      %v2077 = vpop.permute.xlu0 %2076
      %2078 = vrot.lane.b32.xlu0 %v423, 40
      %v2079 = vpop.permute.xlu0 %2078
      %2080 = vrot.lane.b32.xlu0 %v424, 40
      %v2081 = vpop.permute.xlu0 %2080
      %2082 = vrot.lane.b32.xlu0 %v426, 40
      %v2083 = vpop.permute.xlu0 %2082
      %2084 = vrot.lane.b32.xlu0 %v427, 40
      %v2085 = vpop.permute.xlu0 %2084
      %2086 = vrot.lane.b32.xlu0 %v429, 40
      %v2087 = vpop.permute.xlu0 %2086
      %2088 = vrot.lane.b32.xlu0 %v430, 40
      %v2089 = vpop.permute.xlu0 %2088
      %2090 = vrot.lane.b32.xlu0 %v432, 40
      %v2091 = vpop.permute.xlu0 %2090
      %2092 = vrot.lane.b32.xlu0 %v433, 40
      %v2093 = vpop.permute.xlu0 %2092
      %2094 = vrot.lane.b32.xlu0 %v435, 40
      %v2095 = vpop.permute.xlu0 %2094
      %2096 = vrot.lane.b32.xlu0 %v436, 40
      %v2097 = vpop.permute.xlu0 %2096
      %vm2130 = vcmask 359744
      %2131 = vst.msk [vmem:[#allocation4] sm:$0xff] %vm2130, %v2035
      %2132 = vst.msk [vmem:[#allocation4 + $0x8] sm:$0xff] %vm2130, %v2037
      %2133 = vst.msk [vmem:[#allocation4 + $0x10] sm:$0xff] %vm2130, %v2039
      %2134 = vst.msk [vmem:[#allocation4 + $0x18] sm:$0xff] %vm2130, %v2041
      %2135 = vst.msk [vmem:[#allocation4 + $0x20] sm:$0xff] %vm2130, %v2043
      %2136 = vst.msk [vmem:[#allocation4 + $0x28] sm:$0xff] %vm2130, %v2045
      %2137 = vst.msk [vmem:[#allocation4 + $0x30] sm:$0xff] %vm2130, %v2047
      %2138 = vst.msk [vmem:[#allocation4 + $0x38] sm:$0xff] %vm2130, %v2049
      %2139 = vst.msk [vmem:[#allocation4 + $0x40] sm:$0xff] %vm2130, %v2051
      %2140 = vst.msk [vmem:[#allocation4 + $0x48] sm:$0xff] %vm2130, %v2053
      %2141 = vst.msk [vmem:[#allocation4 + $0x50] sm:$0xff] %vm2130, %v2055
      %2142 = vst.msk [vmem:[#allocation4 + $0x58] sm:$0xff] %vm2130, %v2057
      %2143 = vst.msk [vmem:[#allocation4 + $0x60] sm:$0xff] %vm2130, %v2059
      %2144 = vst.msk [vmem:[#allocation4 + $0x68] sm:$0xff] %vm2130, %v2061
      %2145 = vst.msk [vmem:[#allocation4 + $0x70] sm:$0xff] %vm2130, %v2063
      %2146 = vst.msk [vmem:[#allocation4 + $0x78] sm:$0xff] %vm2130, %v2065
      %2147 = vst.msk [vmem:[#allocation4 + $0x80] sm:$0xff] %vm2130, %v2067
      %2148 = vst.msk [vmem:[#allocation4 + $0x88] sm:$0xff] %vm2130, %v2069
      %2149 = vst.msk [vmem:[#allocation4 + $0x90] sm:$0xff] %vm2130, %v2071
      %2150 = vst.msk [vmem:[#allocation4 + $0x98] sm:$0xff] %vm2130, %v2073
      %2151 = vst.msk [vmem:[#allocation4 + $0xa0] sm:$0xff] %vm2130, %v2075
      %2152 = vst.msk [vmem:[#allocation4 + $0xa8] sm:$0xff] %vm2130, %v2077
      %2153 = vst.msk [vmem:[#allocation4 + $0xb0] sm:$0xff] %vm2130, %v2079
      %2154 = vst.msk [vmem:[#allocation4 + $0xb8] sm:$0xff] %vm2130, %v2081
      %2155 = vst.msk [vmem:[#allocation4 + $0xc0] sm:$0xff] %vm2130, %v2083
      %2156 = vst.msk [vmem:[#allocation4 + $0xc8] sm:$0xff] %vm2130, %v2085
      %2157 = vst.msk [vmem:[#allocation4 + $0xd0] sm:$0xff] %vm2130, %v2087
      %2158 = vst.msk [vmem:[#allocation4 + $0xd8] sm:$0xff] %vm2130, %v2089
      %2159 = vst.msk [vmem:[#allocation4 + $0xe0] sm:$0xff] %vm2130, %v2091
      %2160 = vst.msk [vmem:[#allocation4 + $0xe8] sm:$0xff] %vm2130, %v2093
      %2161 = vst.msk [vmem:[#allocation4 + $0xf0] sm:$0xff] %vm2130, %v2095
      %2162 = vst.msk [vmem:[#allocation4 + $0xf8] sm:$0xff] %vm2130, %v2097
      %v2164 = vrot.slane %v435, 1
      %v2165 = vrot.slane %v436, 1
      %v2166 = vsel %vm524, %v2164, %v2165
      %v2167 = vrot.slane %v437, 1
      %v2168 = vsel %vm524, %v2165, %v2167
      %2169 = vrot.lane.b32.xlu0 %v537, 44
      %v2170 = vpop.permute.xlu0 %2169
      %2171 = vrot.lane.b32.xlu0 %v539, 44
      %v2172 = vpop.permute.xlu0 %2171
      %2173 = vrot.lane.b32.xlu0 %v542, 44
      %v2174 = vpop.permute.xlu0 %2173
      %2175 = vrot.lane.b32.xlu0 %v544, 44
      %v2176 = vpop.permute.xlu0 %2175
      %2177 = vrot.lane.b32.xlu0 %v547, 44
      %v2178 = vpop.permute.xlu0 %2177
      %2179 = vrot.lane.b32.xlu0 %v549, 44
      %v2180 = vpop.permute.xlu0 %2179
      %2181 = vrot.lane.b32.xlu0 %v552, 44
      %v2182 = vpop.permute.xlu0 %2181
      %2183 = vrot.lane.b32.xlu0 %v554, 44
      %v2184 = vpop.permute.xlu0 %2183
      %2185 = vrot.lane.b32.xlu0 %v557, 44
      %v2186 = vpop.permute.xlu0 %2185
      %2187 = vrot.lane.b32.xlu0 %v559, 44
      %v2188 = vpop.permute.xlu0 %2187
      %2189 = vrot.lane.b32.xlu0 %v562, 44
      %v2190 = vpop.permute.xlu0 %2189
      %2191 = vrot.lane.b32.xlu0 %v564, 44
      %v2192 = vpop.permute.xlu0 %2191
      %2193 = vrot.lane.b32.xlu0 %v567, 44
      %v2194 = vpop.permute.xlu0 %2193
      %2195 = vrot.lane.b32.xlu0 %v569, 44
      %v2196 = vpop.permute.xlu0 %2195
      %2197 = vrot.lane.b32.xlu0 %v572, 44
      %v2198 = vpop.permute.xlu0 %2197
      %2199 = vrot.lane.b32.xlu0 %v574, 44
      %v2200 = vpop.permute.xlu0 %2199
      %2201 = vrot.lane.b32.xlu0 %v577, 44
      %v2202 = vpop.permute.xlu0 %2201
      %2203 = vrot.lane.b32.xlu0 %v579, 44
      %v2204 = vpop.permute.xlu0 %2203
      %2205 = vrot.lane.b32.xlu0 %v582, 44
      %v2206 = vpop.permute.xlu0 %2205
      %2207 = vrot.lane.b32.xlu0 %v584, 44
      %v2208 = vpop.permute.xlu0 %2207
      %2209 = vrot.lane.b32.xlu0 %v587, 44
      %v2210 = vpop.permute.xlu0 %2209
      %2211 = vrot.lane.b32.xlu0 %v589, 44
      %v2212 = vpop.permute.xlu0 %2211
      %2213 = vrot.lane.b32.xlu0 %v592, 44
      %v2214 = vpop.permute.xlu0 %2213
      %2215 = vrot.lane.b32.xlu0 %v594, 44
      %v2216 = vpop.permute.xlu0 %2215
      %2217 = vrot.lane.b32.xlu0 %v597, 44
      %v2218 = vpop.permute.xlu0 %2217
      %2219 = vrot.lane.b32.xlu0 %v599, 44
      %v2220 = vpop.permute.xlu0 %2219
      %2221 = vrot.lane.b32.xlu0 %v602, 44
      %v2222 = vpop.permute.xlu0 %2221
      %2223 = vrot.lane.b32.xlu0 %v604, 44
      %v2224 = vpop.permute.xlu0 %2223
      %2225 = vrot.lane.b32.xlu0 %v1498, 44
      %v2226 = vpop.permute.xlu0 %2225
      %2227 = vrot.lane.b32.xlu0 %v1500, 44
      %v2228 = vpop.permute.xlu0 %2227
      %2229 = vrot.lane.b32.xlu0 %v2166, 44
      %v2230 = vpop.permute.xlu0 %2229
      %2231 = vrot.lane.b32.xlu0 %v2168, 44
      %v2232 = vpop.permute.xlu0 %2231
      %vm2265 = vcmask 392544
      %2266 = vst.msk [vmem:[#allocation4] sm:$0xff] %vm2265, %v2170
      %2267 = vst.msk [vmem:[#allocation4 + $0x8] sm:$0xff] %vm2265, %v2172
      %2268 = vst.msk [vmem:[#allocation4 + $0x10] sm:$0xff] %vm2265, %v2174
      %2269 = vst.msk [vmem:[#allocation4 + $0x18] sm:$0xff] %vm2265, %v2176
      %2270 = vst.msk [vmem:[#allocation4 + $0x20] sm:$0xff] %vm2265, %v2178
      %2271 = vst.msk [vmem:[#allocation4 + $0x28] sm:$0xff] %vm2265, %v2180
      %2272 = vst.msk [vmem:[#allocation4 + $0x30] sm:$0xff] %vm2265, %v2182
      %2273 = vst.msk [vmem:[#allocation4 + $0x38] sm:$0xff] %vm2265, %v2184
      %2274 = vst.msk [vmem:[#allocation4 + $0x40] sm:$0xff] %vm2265, %v2186
      %2275 = vst.msk [vmem:[#allocation4 + $0x48] sm:$0xff] %vm2265, %v2188
      %2276 = vst.msk [vmem:[#allocation4 + $0x50] sm:$0xff] %vm2265, %v2190
      %2277 = vst.msk [vmem:[#allocation4 + $0x58] sm:$0xff] %vm2265, %v2192
      %2278 = vst.msk [vmem:[#allocation4 + $0x60] sm:$0xff] %vm2265, %v2194
      %2279 = vst.msk [vmem:[#allocation4 + $0x68] sm:$0xff] %vm2265, %v2196
      %2280 = vst.msk [vmem:[#allocation4 + $0x70] sm:$0xff] %vm2265, %v2198
      %2281 = vst.msk [vmem:[#allocation4 + $0x78] sm:$0xff] %vm2265, %v2200
      %2282 = vst.msk [vmem:[#allocation4 + $0x80] sm:$0xff] %vm2265, %v2202
      %2283 = vst.msk [vmem:[#allocation4 + $0x88] sm:$0xff] %vm2265, %v2204
      %2284 = vst.msk [vmem:[#allocation4 + $0x90] sm:$0xff] %vm2265, %v2206
      %2285 = vst.msk [vmem:[#allocation4 + $0x98] sm:$0xff] %vm2265, %v2208
      %2286 = vst.msk [vmem:[#allocation4 + $0xa0] sm:$0xff] %vm2265, %v2210
      %2287 = vst.msk [vmem:[#allocation4 + $0xa8] sm:$0xff] %vm2265, %v2212
      %2288 = vst.msk [vmem:[#allocation4 + $0xb0] sm:$0xff] %vm2265, %v2214
      %2289 = vst.msk [vmem:[#allocation4 + $0xb8] sm:$0xff] %vm2265, %v2216
      %2290 = vst.msk [vmem:[#allocation4 + $0xc0] sm:$0xff] %vm2265, %v2218
      %2291 = vst.msk [vmem:[#allocation4 + $0xc8] sm:$0xff] %vm2265, %v2220
      %2292 = vst.msk [vmem:[#allocation4 + $0xd0] sm:$0xff] %vm2265, %v2222
      %2293 = vst.msk [vmem:[#allocation4 + $0xd8] sm:$0xff] %vm2265, %v2224
      %2294 = vst.msk [vmem:[#allocation4 + $0xe0] sm:$0xff] %vm2265, %v2226
      %2295 = vst.msk [vmem:[#allocation4 + $0xe8] sm:$0xff] %vm2265, %v2228
      %2296 = vst.msk [vmem:[#allocation4 + $0xf0] sm:$0xff] %vm2265, %v2230
      %2297 = vst.msk [vmem:[#allocation4 + $0xf8] sm:$0xff] %vm2265, %v2232
      %v2298 = vrot.slane %v435, 2
      %v2299 = vrot.slane %v436, 2
      %v2300 = vsel %vm734, %v2298, %v2299
      %v2301 = vrot.slane %v437, 2
      %v2302 = vsel %vm734, %v2299, %v2301
      %2303 = vrot.lane.b32.xlu0 %v747, 48
      %v2304 = vpop.permute.xlu0 %2303
      %2305 = vrot.lane.b32.xlu0 %v749, 48
      %v2306 = vpop.permute.xlu0 %2305
      %2307 = vrot.lane.b32.xlu0 %v752, 48
      %v2308 = vpop.permute.xlu0 %2307
      %2309 = vrot.lane.b32.xlu0 %v754, 48
      %v2310 = vpop.permute.xlu0 %2309
      %2311 = vrot.lane.b32.xlu0 %v757, 48
      %v2312 = vpop.permute.xlu0 %2311
      %2313 = vrot.lane.b32.xlu0 %v759, 48
      %v2314 = vpop.permute.xlu0 %2313
      %2315 = vrot.lane.b32.xlu0 %v762, 48
      %v2316 = vpop.permute.xlu0 %2315
      %2317 = vrot.lane.b32.xlu0 %v764, 48
      %v2318 = vpop.permute.xlu0 %2317
      %2319 = vrot.lane.b32.xlu0 %v767, 48
      %v2320 = vpop.permute.xlu0 %2319
      %2321 = vrot.lane.b32.xlu0 %v769, 48
      %v2322 = vpop.permute.xlu0 %2321
      %2323 = vrot.lane.b32.xlu0 %v772, 48
      %v2324 = vpop.permute.xlu0 %2323
      %2325 = vrot.lane.b32.xlu0 %v774, 48
      %v2326 = vpop.permute.xlu0 %2325
      %2327 = vrot.lane.b32.xlu0 %v777, 48
      %v2328 = vpop.permute.xlu0 %2327
      %2329 = vrot.lane.b32.xlu0 %v779, 48
      %v2330 = vpop.permute.xlu0 %2329
      %2331 = vrot.lane.b32.xlu0 %v782, 48
      %v2332 = vpop.permute.xlu0 %2331
      %2333 = vrot.lane.b32.xlu0 %v784, 48
      %v2334 = vpop.permute.xlu0 %2333
      %2335 = vrot.lane.b32.xlu0 %v787, 48
      %v2336 = vpop.permute.xlu0 %2335
      %2337 = vrot.lane.b32.xlu0 %v789, 48
      %v2338 = vpop.permute.xlu0 %2337
      %2339 = vrot.lane.b32.xlu0 %v792, 48
      %v2340 = vpop.permute.xlu0 %2339
      %2341 = vrot.lane.b32.xlu0 %v794, 48
      %v2342 = vpop.permute.xlu0 %2341
      %2343 = vrot.lane.b32.xlu0 %v797, 48
      %v2344 = vpop.permute.xlu0 %2343
      %2345 = vrot.lane.b32.xlu0 %v799, 48
      %v2346 = vpop.permute.xlu0 %2345
      %2347 = vrot.lane.b32.xlu0 %v802, 48
      %v2348 = vpop.permute.xlu0 %2347
      %2349 = vrot.lane.b32.xlu0 %v804, 48
      %v2350 = vpop.permute.xlu0 %2349
      %2351 = vrot.lane.b32.xlu0 %v807, 48
      %v2352 = vpop.permute.xlu0 %2351
      %2353 = vrot.lane.b32.xlu0 %v809, 48
      %v2354 = vpop.permute.xlu0 %2353
      %2355 = vrot.lane.b32.xlu0 %v812, 48
      %v2356 = vpop.permute.xlu0 %2355
      %2357 = vrot.lane.b32.xlu0 %v814, 48
      %v2358 = vpop.permute.xlu0 %2357
      %2359 = vrot.lane.b32.xlu0 %v1632, 48
      %v2360 = vpop.permute.xlu0 %2359
      %2361 = vrot.lane.b32.xlu0 %v1634, 48
      %v2362 = vpop.permute.xlu0 %2361
      %2363 = vrot.lane.b32.xlu0 %v2300, 48
      %v2364 = vpop.permute.xlu0 %2363
      %2365 = vrot.lane.b32.xlu0 %v2302, 48
      %v2366 = vpop.permute.xlu0 %2365
      %vm2399 = vcmask 425344
      %2400 = vst.msk [vmem:[#allocation4] sm:$0xff] %vm2399, %v2304
      %2401 = vst.msk [vmem:[#allocation4 + $0x8] sm:$0xff] %vm2399, %v2306
      %2402 = vst.msk [vmem:[#allocation4 + $0x10] sm:$0xff] %vm2399, %v2308
      %2403 = vst.msk [vmem:[#allocation4 + $0x18] sm:$0xff] %vm2399, %v2310
      %2404 = vst.msk [vmem:[#allocation4 + $0x20] sm:$0xff] %vm2399, %v2312
      %2405 = vst.msk [vmem:[#allocation4 + $0x28] sm:$0xff] %vm2399, %v2314
      %2406 = vst.msk [vmem:[#allocation4 + $0x30] sm:$0xff] %vm2399, %v2316
      %2407 = vst.msk [vmem:[#allocation4 + $0x38] sm:$0xff] %vm2399, %v2318
      %2408 = vst.msk [vmem:[#allocation4 + $0x40] sm:$0xff] %vm2399, %v2320
      %2409 = vst.msk [vmem:[#allocation4 + $0x48] sm:$0xff] %vm2399, %v2322
      %2410 = vst.msk [vmem:[#allocation4 + $0x50] sm:$0xff] %vm2399, %v2324
      %2411 = vst.msk [vmem:[#allocation4 + $0x58] sm:$0xff] %vm2399, %v2326
      %2412 = vst.msk [vmem:[#allocation4 + $0x60] sm:$0xff] %vm2399, %v2328
      %2413 = vst.msk [vmem:[#allocation4 + $0x68] sm:$0xff] %vm2399, %v2330
      %2414 = vst.msk [vmem:[#allocation4 + $0x70] sm:$0xff] %vm2399, %v2332
      %2415 = vst.msk [vmem:[#allocation4 + $0x78] sm:$0xff] %vm2399, %v2334
      %2416 = vst.msk [vmem:[#allocation4 + $0x80] sm:$0xff] %vm2399, %v2336
      %2417 = vst.msk [vmem:[#allocation4 + $0x88] sm:$0xff] %vm2399, %v2338
      %2418 = vst.msk [vmem:[#allocation4 + $0x90] sm:$0xff] %vm2399, %v2340
      %2419 = vst.msk [vmem:[#allocation4 + $0x98] sm:$0xff] %vm2399, %v2342
      %2420 = vst.msk [vmem:[#allocation4 + $0xa0] sm:$0xff] %vm2399, %v2344
      %2421 = vst.msk [vmem:[#allocation4 + $0xa8] sm:$0xff] %vm2399, %v2346
      %2422 = vst.msk [vmem:[#allocation4 + $0xb0] sm:$0xff] %vm2399, %v2348
      %2423 = vst.msk [vmem:[#allocation4 + $0xb8] sm:$0xff] %vm2399, %v2350
      %2424 = vst.msk [vmem:[#allocation4 + $0xc0] sm:$0xff] %vm2399, %v2352
      %2425 = vst.msk [vmem:[#allocation4 + $0xc8] sm:$0xff] %vm2399, %v2354
      %2426 = vst.msk [vmem:[#allocation4 + $0xd0] sm:$0xff] %vm2399, %v2356
      %2427 = vst.msk [vmem:[#allocation4 + $0xd8] sm:$0xff] %vm2399, %v2358
      %2428 = vst.msk [vmem:[#allocation4 + $0xe0] sm:$0xff] %vm2399, %v2360
      %2429 = vst.msk [vmem:[#allocation4 + $0xe8] sm:$0xff] %vm2399, %v2362
      %2430 = vst.msk [vmem:[#allocation4 + $0xf0] sm:$0xff] %vm2399, %v2364
      %2431 = vst.msk [vmem:[#allocation4 + $0xf8] sm:$0xff] %vm2399, %v2366
      %v2432 = vrot.slane %v435, 3
      %v2433 = vrot.slane %v436, 3
      %v2434 = vsel %vm944, %v2432, %v2433
      %v2435 = vrot.slane %v437, 3
      %v2436 = vsel %vm944, %v2433, %v2435
      %2437 = vrot.lane.b32.xlu0 %v957, 52
      %v2438 = vpop.permute.xlu0 %2437
      %2439 = vrot.lane.b32.xlu0 %v959, 52
      %v2440 = vpop.permute.xlu0 %2439
      %2441 = vrot.lane.b32.xlu0 %v962, 52
      %v2442 = vpop.permute.xlu0 %2441
      %2443 = vrot.lane.b32.xlu0 %v964, 52
      %v2444 = vpop.permute.xlu0 %2443
      %2445 = vrot.lane.b32.xlu0 %v967, 52
      %v2446 = vpop.permute.xlu0 %2445
      %2447 = vrot.lane.b32.xlu0 %v969, 52
      %v2448 = vpop.permute.xlu0 %2447
      %2449 = vrot.lane.b32.xlu0 %v972, 52
      %v2450 = vpop.permute.xlu0 %2449
      %2451 = vrot.lane.b32.xlu0 %v974, 52
      %v2452 = vpop.permute.xlu0 %2451
      %2453 = vrot.lane.b32.xlu0 %v977, 52
      %v2454 = vpop.permute.xlu0 %2453
      %2455 = vrot.lane.b32.xlu0 %v979, 52
      %v2456 = vpop.permute.xlu0 %2455
      %2457 = vrot.lane.b32.xlu0 %v982, 52
      %v2458 = vpop.permute.xlu0 %2457
      %2459 = vrot.lane.b32.xlu0 %v984, 52
      %v2460 = vpop.permute.xlu0 %2459
      %2461 = vrot.lane.b32.xlu0 %v987, 52
      %v2462 = vpop.permute.xlu0 %2461
      %2463 = vrot.lane.b32.xlu0 %v989, 52
      %v2464 = vpop.permute.xlu0 %2463
      %2465 = vrot.lane.b32.xlu0 %v992, 52
      %v2466 = vpop.permute.xlu0 %2465
      %2467 = vrot.lane.b32.xlu0 %v994, 52
      %v2468 = vpop.permute.xlu0 %2467
      %2469 = vrot.lane.b32.xlu0 %v997, 52
      %v2470 = vpop.permute.xlu0 %2469
      %2471 = vrot.lane.b32.xlu0 %v999, 52
      %v2472 = vpop.permute.xlu0 %2471
      %2473 = vrot.lane.b32.xlu0 %v1002, 52
      %v2474 = vpop.permute.xlu0 %2473
      %2475 = vrot.lane.b32.xlu0 %v1004, 52
      %v2476 = vpop.permute.xlu0 %2475
      %2477 = vrot.lane.b32.xlu0 %v1007, 52
      %v2478 = vpop.permute.xlu0 %2477
      %2479 = vrot.lane.b32.xlu0 %v1009, 52
      %v2480 = vpop.permute.xlu0 %2479
      %2481 = vrot.lane.b32.xlu0 %v1012, 52
      %v2482 = vpop.permute.xlu0 %2481
      %2483 = vrot.lane.b32.xlu0 %v1014, 52
      %v2484 = vpop.permute.xlu0 %2483
      %2485 = vrot.lane.b32.xlu0 %v1017, 52
      %v2486 = vpop.permute.xlu0 %2485
      %2487 = vrot.lane.b32.xlu0 %v1019, 52
      %v2488 = vpop.permute.xlu0 %2487
      %2489 = vrot.lane.b32.xlu0 %v1022, 52
      %v2490 = vpop.permute.xlu0 %2489
      %2491 = vrot.lane.b32.xlu0 %v1024, 52
      %v2492 = vpop.permute.xlu0 %2491
      %2493 = vrot.lane.b32.xlu0 %v1766, 52
      %v2494 = vpop.permute.xlu0 %2493
      %2495 = vrot.lane.b32.xlu0 %v1768, 52
      %v2496 = vpop.permute.xlu0 %2495
      %2497 = vrot.lane.b32.xlu0 %v2434, 52
      %v2498 = vpop.permute.xlu0 %2497
      %2499 = vrot.lane.b32.xlu0 %v2436, 52
      %v2500 = vpop.permute.xlu0 %2499
      %vm2533 = vcmask 458144
      %2534 = vst.msk [vmem:[#allocation4] sm:$0xff] %vm2533, %v2438
      %2535 = vst.msk [vmem:[#allocation4 + $0x8] sm:$0xff] %vm2533, %v2440
      %2536 = vst.msk [vmem:[#allocation4 + $0x10] sm:$0xff] %vm2533, %v2442
      %2537 = vst.msk [vmem:[#allocation4 + $0x18] sm:$0xff] %vm2533, %v2444
      %2538 = vst.msk [vmem:[#allocation4 + $0x20] sm:$0xff] %vm2533, %v2446
      %2539 = vst.msk [vmem:[#allocation4 + $0x28] sm:$0xff] %vm2533, %v2448
      %2540 = vst.msk [vmem:[#allocation4 + $0x30] sm:$0xff] %vm2533, %v2450
      %2541 = vst.msk [vmem:[#allocation4 + $0x38] sm:$0xff] %vm2533, %v2452
      %2542 = vst.msk [vmem:[#allocation4 + $0x40] sm:$0xff] %vm2533, %v2454
      %2543 = vst.msk [vmem:[#allocation4 + $0x48] sm:$0xff] %vm2533, %v2456
      %2544 = vst.msk [vmem:[#allocation4 + $0x50] sm:$0xff] %vm2533, %v2458
      %2545 = vst.msk [vmem:[#allocation4 + $0x58] sm:$0xff] %vm2533, %v2460
      %2546 = vst.msk [vmem:[#allocation4 + $0x60] sm:$0xff] %vm2533, %v2462
      %2547 = vst.msk [vmem:[#allocation4 + $0x68] sm:$0xff] %vm2533, %v2464
      %2548 = vst.msk [vmem:[#allocation4 + $0x70] sm:$0xff] %vm2533, %v2466
      %2549 = vst.msk [vmem:[#allocation4 + $0x78] sm:$0xff] %vm2533, %v2468
      %2550 = vst.msk [vmem:[#allocation4 + $0x80] sm:$0xff] %vm2533, %v2470
      %2551 = vst.msk [vmem:[#allocation4 + $0x88] sm:$0xff] %vm2533, %v2472
      %2552 = vst.msk [vmem:[#allocation4 + $0x90] sm:$0xff] %vm2533, %v2474
      %2553 = vst.msk [vmem:[#allocation4 + $0x98] sm:$0xff] %vm2533, %v2476
      %2554 = vst.msk [vmem:[#allocation4 + $0xa0] sm:$0xff] %vm2533, %v2478
      %2555 = vst.msk [vmem:[#allocation4 + $0xa8] sm:$0xff] %vm2533, %v2480
      %2556 = vst.msk [vmem:[#allocation4 + $0xb0] sm:$0xff] %vm2533, %v2482
      %2557 = vst.msk [vmem:[#allocation4 + $0xb8] sm:$0xff] %vm2533, %v2484
      %2558 = vst.msk [vmem:[#allocation4 + $0xc0] sm:$0xff] %vm2533, %v2486
      %2559 = vst.msk [vmem:[#allocation4 + $0xc8] sm:$0xff] %vm2533, %v2488
      %2560 = vst.msk [vmem:[#allocation4 + $0xd0] sm:$0xff] %vm2533, %v2490
      %2561 = vst.msk [vmem:[#allocation4 + $0xd8] sm:$0xff] %vm2533, %v2492
      %2562 = vst.msk [vmem:[#allocation4 + $0xe0] sm:$0xff] %vm2533, %v2494
      %2563 = vst.msk [vmem:[#allocation4 + $0xe8] sm:$0xff] %vm2533, %v2496
      %2564 = vst.msk [vmem:[#allocation4 + $0xf0] sm:$0xff] %vm2533, %v2498
      %2565 = vst.msk [vmem:[#allocation4 + $0xf8] sm:$0xff] %vm2533, %v2500
      %v2566 = vrot.slane %v435, 4
      %v2567 = vrot.slane %v436, 4
      %v2568 = vsel %vm1154, %v2566, %v2567
      %v2569 = vrot.slane %v437, 4
      %v2570 = vsel %vm1154, %v2567, %v2569
      %2571 = vrot.lane.b32.xlu0 %v1167, 56
      %v2572 = vpop.permute.xlu0 %2571
      %2573 = vrot.lane.b32.xlu0 %v1169, 56
      %v2574 = vpop.permute.xlu0 %2573
      %2575 = vrot.lane.b32.xlu0 %v1172, 56
      %v2576 = vpop.permute.xlu0 %2575
      %2577 = vrot.lane.b32.xlu0 %v1174, 56
      %v2578 = vpop.permute.xlu0 %2577
      %2579 = vrot.lane.b32.xlu0 %v1177, 56
      %v2580 = vpop.permute.xlu0 %2579
      %2581 = vrot.lane.b32.xlu0 %v1179, 56
      %v2582 = vpop.permute.xlu0 %2581
      %2583 = vrot.lane.b32.xlu0 %v1182, 56
      %v2584 = vpop.permute.xlu0 %2583
      %2585 = vrot.lane.b32.xlu0 %v1184, 56
      %v2586 = vpop.permute.xlu0 %2585
      %2587 = vrot.lane.b32.xlu0 %v1187, 56
      %v2588 = vpop.permute.xlu0 %2587
      %2589 = vrot.lane.b32.xlu0 %v1189, 56
      %v2590 = vpop.permute.xlu0 %2589
      %2591 = vrot.lane.b32.xlu0 %v1192, 56
      %v2592 = vpop.permute.xlu0 %2591
      %2593 = vrot.lane.b32.xlu0 %v1194, 56
      %v2594 = vpop.permute.xlu0 %2593
      %2595 = vrot.lane.b32.xlu0 %v1197, 56
      %v2596 = vpop.permute.xlu0 %2595
      %2597 = vrot.lane.b32.xlu0 %v1199, 56
      %v2598 = vpop.permute.xlu0 %2597
      %2599 = vrot.lane.b32.xlu0 %v1202, 56
      %v2600 = vpop.permute.xlu0 %2599
      %2601 = vrot.lane.b32.xlu0 %v1204, 56
      %v2602 = vpop.permute.xlu0 %2601
      %2603 = vrot.lane.b32.xlu0 %v1207, 56
      %v2604 = vpop.permute.xlu0 %2603
      %2605 = vrot.lane.b32.xlu0 %v1209, 56
      %v2606 = vpop.permute.xlu0 %2605
      %2607 = vrot.lane.b32.xlu0 %v1212, 56
      %v2608 = vpop.permute.xlu0 %2607
      %2609 = vrot.lane.b32.xlu0 %v1214, 56
      %v2610 = vpop.permute.xlu0 %2609
      %2611 = vrot.lane.b32.xlu0 %v1217, 56
      %v2612 = vpop.permute.xlu0 %2611
      %2613 = vrot.lane.b32.xlu0 %v1219, 56
      %v2614 = vpop.permute.xlu0 %2613
      %2615 = vrot.lane.b32.xlu0 %v1222, 56
      %v2616 = vpop.permute.xlu0 %2615
      %2617 = vrot.lane.b32.xlu0 %v1224, 56
      %v2618 = vpop.permute.xlu0 %2617
      %2619 = vrot.lane.b32.xlu0 %v1227, 56
      %v2620 = vpop.permute.xlu0 %2619
      %2621 = vrot.lane.b32.xlu0 %v1229, 56
      %v2622 = vpop.permute.xlu0 %2621
      %2623 = vrot.lane.b32.xlu0 %v1232, 56
      %v2624 = vpop.permute.xlu0 %2623
      %2625 = vrot.lane.b32.xlu0 %v1234, 56
      %v2626 = vpop.permute.xlu0 %2625
      %2627 = vrot.lane.b32.xlu0 %v1900, 56
      %v2628 = vpop.permute.xlu0 %2627
      %2629 = vrot.lane.b32.xlu0 %v1902, 56
      %v2630 = vpop.permute.xlu0 %2629
      %2631 = vrot.lane.b32.xlu0 %v2568, 56
      %v2632 = vpop.permute.xlu0 %2631
      %2633 = vrot.lane.b32.xlu0 %v2570, 56
      %v2634 = vpop.permute.xlu0 %2633
      %vm2667 = vcmask 490944
      %2668 = vst.msk [vmem:[#allocation4] sm:$0xff] %vm2667, %v2572
      %2669 = vst.msk [vmem:[#allocation4 + $0x8] sm:$0xff] %vm2667, %v2574
      %2670 = vst.msk [vmem:[#allocation4 + $0x10] sm:$0xff] %vm2667, %v2576
      %2671 = vst.msk [vmem:[#allocation4 + $0x18] sm:$0xff] %vm2667, %v2578
      %2672 = vst.msk [vmem:[#allocation4 + $0x20] sm:$0xff] %vm2667, %v2580
      %2673 = vst.msk [vmem:[#allocation4 + $0x28] sm:$0xff] %vm2667, %v2582
      %2674 = vst.msk [vmem:[#allocation4 + $0x30] sm:$0xff] %vm2667, %v2584
      %2675 = vst.msk [vmem:[#allocation4 + $0x38] sm:$0xff] %vm2667, %v2586
      %2676 = vst.msk [vmem:[#allocation4 + $0x40] sm:$0xff] %vm2667, %v2588
      %2677 = vst.msk [vmem:[#allocation4 + $0x48] sm:$0xff] %vm2667, %v2590
      %2678 = vst.msk [vmem:[#allocation4 + $0x50] sm:$0xff] %vm2667, %v2592
      %2679 = vst.msk [vmem:[#allocation4 + $0x58] sm:$0xff] %vm2667, %v2594
      %2680 = vst.msk [vmem:[#allocation4 + $0x60] sm:$0xff] %vm2667, %v2596
      %2681 = vst.msk [vmem:[#allocation4 + $0x68] sm:$0xff] %vm2667, %v2598
      %2682 = vst.msk [vmem:[#allocation4 + $0x70] sm:$0xff] %vm2667, %v2600
      %2683 = vst.msk [vmem:[#allocation4 + $0x78] sm:$0xff] %vm2667, %v2602
      %2684 = vst.msk [vmem:[#allocation4 + $0x80] sm:$0xff] %vm2667, %v2604
      %2685 = vst.msk [vmem:[#allocation4 + $0x88] sm:$0xff] %vm2667, %v2606
      %2686 = vst.msk [vmem:[#allocation4 + $0x90] sm:$0xff] %vm2667, %v2608
      %2687 = vst.msk [vmem:[#allocation4 + $0x98] sm:$0xff] %vm2667, %v2610
      %2688 = vst.msk [vmem:[#allocation4 + $0xa0] sm:$0xff] %vm2667, %v2612
      %2689 = vst.msk [vmem:[#allocation4 + $0xa8] sm:$0xff] %vm2667, %v2614
      %2690 = vst.msk [vmem:[#allocation4 + $0xb0] sm:$0xff] %vm2667, %v2616
      %2691 = vst.msk [vmem:[#allocation4 + $0xb8] sm:$0xff] %vm2667, %v2618
      %2692 = vst.msk [vmem:[#allocation4 + $0xc0] sm:$0xff] %vm2667, %v2620
      %2693 = vst.msk [vmem:[#allocation4 + $0xc8] sm:$0xff] %vm2667, %v2622
      %2694 = vst.msk [vmem:[#allocation4 + $0xd0] sm:$0xff] %vm2667, %v2624
      %2695 = vst.msk [vmem:[#allocation4 + $0xd8] sm:$0xff] %vm2667, %v2626
      %2696 = vst.msk [vmem:[#allocation4 + $0xe0] sm:$0xff] %vm2667, %v2628
      %2697 = vst.msk [vmem:[#allocation4 + $0xe8] sm:$0xff] %vm2667, %v2630
      %2698 = vst.msk [vmem:[#allocation4 + $0xf0] sm:$0xff] %vm2667, %v2632
      %2699 = vst.msk [vmem:[#allocation4 + $0xf8] sm:$0xff] %vm2667, %v2634
      %2702 = vrot.lane.b32.xlu0 %v393, 60
      %v2703 = vpop.permute.xlu0 %2702
      %2704 = vrot.lane.b32.xlu0 %v394, 60
      %v2705 = vpop.permute.xlu0 %2704
      %2706 = vrot.lane.b32.xlu0 %v396, 60
      %v2707 = vpop.permute.xlu0 %2706
      %2708 = vrot.lane.b32.xlu0 %v397, 60
      %v2709 = vpop.permute.xlu0 %2708
      %2710 = vrot.lane.b32.xlu0 %v399, 60
      %v2711 = vpop.permute.xlu0 %2710
      %2712 = vrot.lane.b32.xlu0 %v400, 60
      %v2713 = vpop.permute.xlu0 %2712
      %2714 = vrot.lane.b32.xlu0 %v402, 60
      %v2715 = vpop.permute.xlu0 %2714
      %2716 = vrot.lane.b32.xlu0 %v403, 60
      %v2717 = vpop.permute.xlu0 %2716
      %2718 = vrot.lane.b32.xlu0 %v405, 60
      %v2719 = vpop.permute.xlu0 %2718
      %2720 = vrot.lane.b32.xlu0 %v406, 60
      %v2721 = vpop.permute.xlu0 %2720
      %2722 = vrot.lane.b32.xlu0 %v408, 60
      %v2723 = vpop.permute.xlu0 %2722
      %2724 = vrot.lane.b32.xlu0 %v409, 60
      %v2725 = vpop.permute.xlu0 %2724
      %2726 = vrot.lane.b32.xlu0 %v411, 60
      %v2727 = vpop.permute.xlu0 %2726
      %2728 = vrot.lane.b32.xlu0 %v412, 60
      %v2729 = vpop.permute.xlu0 %2728
      %2730 = vrot.lane.b32.xlu0 %v414, 60
      %v2731 = vpop.permute.xlu0 %2730
      %2732 = vrot.lane.b32.xlu0 %v415, 60
      %v2733 = vpop.permute.xlu0 %2732
      %2734 = vrot.lane.b32.xlu0 %v417, 60
      %v2735 = vpop.permute.xlu0 %2734
      %2736 = vrot.lane.b32.xlu0 %v418, 60
      %v2737 = vpop.permute.xlu0 %2736
      %2738 = vrot.lane.b32.xlu0 %v420, 60
      %v2739 = vpop.permute.xlu0 %2738
      %2740 = vrot.lane.b32.xlu0 %v421, 60
      %v2741 = vpop.permute.xlu0 %2740
      %2742 = vrot.lane.b32.xlu0 %v423, 60
      %v2743 = vpop.permute.xlu0 %2742
      %2744 = vrot.lane.b32.xlu0 %v424, 60
      %v2745 = vpop.permute.xlu0 %2744
      %2746 = vrot.lane.b32.xlu0 %v426, 60
      %v2747 = vpop.permute.xlu0 %2746
      %2748 = vrot.lane.b32.xlu0 %v427, 60
      %v2749 = vpop.permute.xlu0 %2748
      %2750 = vrot.lane.b32.xlu0 %v429, 60
      %v2751 = vpop.permute.xlu0 %2750
      %2752 = vrot.lane.b32.xlu0 %v430, 60
      %v2753 = vpop.permute.xlu0 %2752
      %2754 = vrot.lane.b32.xlu0 %v432, 60
      %v2755 = vpop.permute.xlu0 %2754
      %2756 = vrot.lane.b32.xlu0 %v433, 60
      %v2757 = vpop.permute.xlu0 %2756
      %2758 = vrot.lane.b32.xlu0 %v435, 60
      %v2759 = vpop.permute.xlu0 %2758
      %2760 = vrot.lane.b32.xlu0 %v436, 60
      %v2761 = vpop.permute.xlu0 %2760
      %2762 = vrot.lane.b32.xlu0 %v438, 60
      %v2763 = vpop.permute.xlu0 %2762
      %2764 = vrot.lane.b32.xlu0 %v439, 60
      %v2765 = vpop.permute.xlu0 %2764
      %vm2798 = vcmask 523744
      %2799 = vst.msk [vmem:[#allocation4] sm:$0xff] %vm2798, %v2703
      %2800 = vst.msk [vmem:[#allocation4 + $0x8] sm:$0xff] %vm2798, %v2705
      %2801 = vst.msk [vmem:[#allocation4 + $0x10] sm:$0xff] %vm2798, %v2707
      %2802 = vst.msk [vmem:[#allocation4 + $0x18] sm:$0xff] %vm2798, %v2709
      %2803 = vst.msk [vmem:[#allocation4 + $0x20] sm:$0xff] %vm2798, %v2711
      %2804 = vst.msk [vmem:[#allocation4 + $0x28] sm:$0xff] %vm2798, %v2713
      %2805 = vst.msk [vmem:[#allocation4 + $0x30] sm:$0xff] %vm2798, %v2715
      %2806 = vst.msk [vmem:[#allocation4 + $0x38] sm:$0xff] %vm2798, %v2717
      %2807 = vst.msk [vmem:[#allocation4 + $0x40] sm:$0xff] %vm2798, %v2719
      %2808 = vst.msk [vmem:[#allocation4 + $0x48] sm:$0xff] %vm2798, %v2721
      %2809 = vst.msk [vmem:[#allocation4 + $0x50] sm:$0xff] %vm2798, %v2723
      %2810 = vst.msk [vmem:[#allocation4 + $0x58] sm:$0xff] %vm2798, %v2725
      %2811 = vst.msk [vmem:[#allocation4 + $0x60] sm:$0xff] %vm2798, %v2727
      %2812 = vst.msk [vmem:[#allocation4 + $0x68] sm:$0xff] %vm2798, %v2729
      %2813 = vst.msk [vmem:[#allocation4 + $0x70] sm:$0xff] %vm2798, %v2731
      %2814 = vst.msk [vmem:[#allocation4 + $0x78] sm:$0xff] %vm2798, %v2733
      %2815 = vst.msk [vmem:[#allocation4 + $0x80] sm:$0xff] %vm2798, %v2735
      %2816 = vst.msk [vmem:[#allocation4 + $0x88] sm:$0xff] %vm2798, %v2737
      %2817 = vst.msk [vmem:[#allocation4 + $0x90] sm:$0xff] %vm2798, %v2739
      %2818 = vst.msk [vmem:[#allocation4 + $0x98] sm:$0xff] %vm2798, %v2741
      %2819 = vst.msk [vmem:[#allocation4 + $0xa0] sm:$0xff] %vm2798, %v2743
      %2820 = vst.msk [vmem:[#allocation4 + $0xa8] sm:$0xff] %vm2798, %v2745
      %2821 = vst.msk [vmem:[#allocation4 + $0xb0] sm:$0xff] %vm2798, %v2747
      %2822 = vst.msk [vmem:[#allocation4 + $0xb8] sm:$0xff] %vm2798, %v2749
      %2823 = vst.msk [vmem:[#allocation4 + $0xc0] sm:$0xff] %vm2798, %v2751
      %2824 = vst.msk [vmem:[#allocation4 + $0xc8] sm:$0xff] %vm2798, %v2753
      %2825 = vst.msk [vmem:[#allocation4 + $0xd0] sm:$0xff] %vm2798, %v2755
      %2826 = vst.msk [vmem:[#allocation4 + $0xd8] sm:$0xff] %vm2798, %v2757
      %2827 = vst.msk [vmem:[#allocation4 + $0xe0] sm:$0xff] %vm2798, %v2759
      %2828 = vst.msk [vmem:[#allocation4 + $0xe8] sm:$0xff] %vm2798, %v2761
      %2829 = vst.msk [vmem:[#allocation4 + $0xf0] sm:$0xff] %vm2798, %v2763
      %2830 = vst.msk [vmem:[#allocation4 + $0xf8] sm:$0xff] %vm2798, %v2765
      %v2832 = vrot.slane %v438, 1
      %v2833 = vrot.slane %v439, 1
      %v2834 = vsel %vm524, %v2832, %v2833
      %v2835 = vrot.slane %v440, 1
      %v2836 = vsel %vm524, %v2833, %v2835
      %2837 = vrot.lane.b32.xlu0 %v542, 64
      %v2838 = vpop.permute.xlu0 %2837
      %2839 = vrot.lane.b32.xlu0 %v544, 64
      %v2840 = vpop.permute.xlu0 %2839
      %2841 = vrot.lane.b32.xlu0 %v547, 64
      %v2842 = vpop.permute.xlu0 %2841
      %2843 = vrot.lane.b32.xlu0 %v549, 64
      %v2844 = vpop.permute.xlu0 %2843
      %2845 = vrot.lane.b32.xlu0 %v552, 64
      %v2846 = vpop.permute.xlu0 %2845
      %2847 = vrot.lane.b32.xlu0 %v554, 64
      %v2848 = vpop.permute.xlu0 %2847
      %2849 = vrot.lane.b32.xlu0 %v557, 64
      %v2850 = vpop.permute.xlu0 %2849
      %2851 = vrot.lane.b32.xlu0 %v559, 64
      %v2852 = vpop.permute.xlu0 %2851
      %2853 = vrot.lane.b32.xlu0 %v562, 64
      %v2854 = vpop.permute.xlu0 %2853
      %2855 = vrot.lane.b32.xlu0 %v564, 64
      %v2856 = vpop.permute.xlu0 %2855
      %2857 = vrot.lane.b32.xlu0 %v567, 64
      %v2858 = vpop.permute.xlu0 %2857
      %2859 = vrot.lane.b32.xlu0 %v569, 64
      %v2860 = vpop.permute.xlu0 %2859
      %2861 = vrot.lane.b32.xlu0 %v572, 64
      %v2862 = vpop.permute.xlu0 %2861
      %2863 = vrot.lane.b32.xlu0 %v574, 64
      %v2864 = vpop.permute.xlu0 %2863
      %2865 = vrot.lane.b32.xlu0 %v577, 64
      %v2866 = vpop.permute.xlu0 %2865
      %2867 = vrot.lane.b32.xlu0 %v579, 64
      %v2868 = vpop.permute.xlu0 %2867
      %2869 = vrot.lane.b32.xlu0 %v582, 64
      %v2870 = vpop.permute.xlu0 %2869
      %2871 = vrot.lane.b32.xlu0 %v584, 64
      %v2872 = vpop.permute.xlu0 %2871
      %2873 = vrot.lane.b32.xlu0 %v587, 64
      %v2874 = vpop.permute.xlu0 %2873
      %2875 = vrot.lane.b32.xlu0 %v589, 64
      %v2876 = vpop.permute.xlu0 %2875
      %2877 = vrot.lane.b32.xlu0 %v592, 64
      %v2878 = vpop.permute.xlu0 %2877
      %2879 = vrot.lane.b32.xlu0 %v594, 64
      %v2880 = vpop.permute.xlu0 %2879
      %2881 = vrot.lane.b32.xlu0 %v597, 64
      %v2882 = vpop.permute.xlu0 %2881
      %2883 = vrot.lane.b32.xlu0 %v599, 64
      %v2884 = vpop.permute.xlu0 %2883
      %2885 = vrot.lane.b32.xlu0 %v602, 64
      %v2886 = vpop.permute.xlu0 %2885
      %2887 = vrot.lane.b32.xlu0 %v604, 64
      %v2888 = vpop.permute.xlu0 %2887
      %2889 = vrot.lane.b32.xlu0 %v1498, 64
      %v2890 = vpop.permute.xlu0 %2889
      %2891 = vrot.lane.b32.xlu0 %v1500, 64
      %v2892 = vpop.permute.xlu0 %2891
      %2893 = vrot.lane.b32.xlu0 %v2166, 64
      %v2894 = vpop.permute.xlu0 %2893
      %2895 = vrot.lane.b32.xlu0 %v2168, 64
      %v2896 = vpop.permute.xlu0 %2895
      %2897 = vrot.lane.b32.xlu0 %v2834, 64
      %v2898 = vpop.permute.xlu0 %2897
      %2899 = vrot.lane.b32.xlu0 %v2836, 64
      %v2900 = vpop.permute.xlu0 %2899
      %vm2933 = vcmask 556544
      %2934 = vst.msk [vmem:[#allocation4] sm:$0xff] %vm2933, %v2838
      %2935 = vst.msk [vmem:[#allocation4 + $0x8] sm:$0xff] %vm2933, %v2840
      %2936 = vst.msk [vmem:[#allocation4 + $0x10] sm:$0xff] %vm2933, %v2842
      %2937 = vst.msk [vmem:[#allocation4 + $0x18] sm:$0xff] %vm2933, %v2844
      %2938 = vst.msk [vmem:[#allocation4 + $0x20] sm:$0xff] %vm2933, %v2846
      %2939 = vst.msk [vmem:[#allocation4 + $0x28] sm:$0xff] %vm2933, %v2848
      %2940 = vst.msk [vmem:[#allocation4 + $0x30] sm:$0xff] %vm2933, %v2850
      %2941 = vst.msk [vmem:[#allocation4 + $0x38] sm:$0xff] %vm2933, %v2852
      %2942 = vst.msk [vmem:[#allocation4 + $0x40] sm:$0xff] %vm2933, %v2854
      %2943 = vst.msk [vmem:[#allocation4 + $0x48] sm:$0xff] %vm2933, %v2856
      %2944 = vst.msk [vmem:[#allocation4 + $0x50] sm:$0xff] %vm2933, %v2858
      %2945 = vst.msk [vmem:[#allocation4 + $0x58] sm:$0xff] %vm2933, %v2860
      %2946 = vst.msk [vmem:[#allocation4 + $0x60] sm:$0xff] %vm2933, %v2862
      %2947 = vst.msk [vmem:[#allocation4 + $0x68] sm:$0xff] %vm2933, %v2864
      %2948 = vst.msk [vmem:[#allocation4 + $0x70] sm:$0xff] %vm2933, %v2866
      %2949 = vst.msk [vmem:[#allocation4 + $0x78] sm:$0xff] %vm2933, %v2868
      %2950 = vst.msk [vmem:[#allocation4 + $0x80] sm:$0xff] %vm2933, %v2870
      %2951 = vst.msk [vmem:[#allocation4 + $0x88] sm:$0xff] %vm2933, %v2872
      %2952 = vst.msk [vmem:[#allocation4 + $0x90] sm:$0xff] %vm2933, %v2874
      %2953 = vst.msk [vmem:[#allocation4 + $0x98] sm:$0xff] %vm2933, %v2876
      %2954 = vst.msk [vmem:[#allocation4 + $0xa0] sm:$0xff] %vm2933, %v2878
      %2955 = vst.msk [vmem:[#allocation4 + $0xa8] sm:$0xff] %vm2933, %v2880
      %2956 = vst.msk [vmem:[#allocation4 + $0xb0] sm:$0xff] %vm2933, %v2882
      %2957 = vst.msk [vmem:[#allocation4 + $0xb8] sm:$0xff] %vm2933, %v2884
      %2958 = vst.msk [vmem:[#allocation4 + $0xc0] sm:$0xff] %vm2933, %v2886
      %2959 = vst.msk [vmem:[#allocation4 + $0xc8] sm:$0xff] %vm2933, %v2888
      %2960 = vst.msk [vmem:[#allocation4 + $0xd0] sm:$0xff] %vm2933, %v2890
      %2961 = vst.msk [vmem:[#allocation4 + $0xd8] sm:$0xff] %vm2933, %v2892
      %2962 = vst.msk [vmem:[#allocation4 + $0xe0] sm:$0xff] %vm2933, %v2894
      %2963 = vst.msk [vmem:[#allocation4 + $0xe8] sm:$0xff] %vm2933, %v2896
      %2964 = vst.msk [vmem:[#allocation4 + $0xf0] sm:$0xff] %vm2933, %v2898
      %2965 = vst.msk [vmem:[#allocation4 + $0xf8] sm:$0xff] %vm2933, %v2900
      %v2966 = vrot.slane %v438, 2
      %v2967 = vrot.slane %v439, 2
      %v2968 = vsel %vm734, %v2966, %v2967
      %v2969 = vrot.slane %v440, 2
      %v2970 = vsel %vm734, %v2967, %v2969
      %2971 = vrot.lane.b32.xlu0 %v752, 68
      %v2972 = vpop.permute.xlu0 %2971
      %2973 = vrot.lane.b32.xlu0 %v754, 68
      %v2974 = vpop.permute.xlu0 %2973
      %2975 = vrot.lane.b32.xlu0 %v757, 68
      %v2976 = vpop.permute.xlu0 %2975
      %2977 = vrot.lane.b32.xlu0 %v759, 68
      %v2978 = vpop.permute.xlu0 %2977
      %2979 = vrot.lane.b32.xlu0 %v762, 68
      %v2980 = vpop.permute.xlu0 %2979
      %2981 = vrot.lane.b32.xlu0 %v764, 68
      %v2982 = vpop.permute.xlu0 %2981
      %2983 = vrot.lane.b32.xlu0 %v767, 68
      %v2984 = vpop.permute.xlu0 %2983
      %2985 = vrot.lane.b32.xlu0 %v769, 68
      %v2986 = vpop.permute.xlu0 %2985
      %2987 = vrot.lane.b32.xlu0 %v772, 68
      %v2988 = vpop.permute.xlu0 %2987
      %2989 = vrot.lane.b32.xlu0 %v774, 68
      %v2990 = vpop.permute.xlu0 %2989
      %2991 = vrot.lane.b32.xlu0 %v777, 68
      %v2992 = vpop.permute.xlu0 %2991
      %2993 = vrot.lane.b32.xlu0 %v779, 68
      %v2994 = vpop.permute.xlu0 %2993
      %2995 = vrot.lane.b32.xlu0 %v782, 68
      %v2996 = vpop.permute.xlu0 %2995
      %2997 = vrot.lane.b32.xlu0 %v784, 68
      %v2998 = vpop.permute.xlu0 %2997
      %2999 = vrot.lane.b32.xlu0 %v787, 68
      %v3000 = vpop.permute.xlu0 %2999
      %3001 = vrot.lane.b32.xlu0 %v789, 68
      %v3002 = vpop.permute.xlu0 %3001
      %3003 = vrot.lane.b32.xlu0 %v792, 68
      %v3004 = vpop.permute.xlu0 %3003
      %3005 = vrot.lane.b32.xlu0 %v794, 68
      %v3006 = vpop.permute.xlu0 %3005
      %3007 = vrot.lane.b32.xlu0 %v797, 68
      %v3008 = vpop.permute.xlu0 %3007
      %3009 = vrot.lane.b32.xlu0 %v799, 68
      %v3010 = vpop.permute.xlu0 %3009
      %3011 = vrot.lane.b32.xlu0 %v802, 68
      %v3012 = vpop.permute.xlu0 %3011
      %3013 = vrot.lane.b32.xlu0 %v804, 68
      %v3014 = vpop.permute.xlu0 %3013
      %3015 = vrot.lane.b32.xlu0 %v807, 68
      %v3016 = vpop.permute.xlu0 %3015
      %3017 = vrot.lane.b32.xlu0 %v809, 68
      %v3018 = vpop.permute.xlu0 %3017
      %3019 = vrot.lane.b32.xlu0 %v812, 68
      %v3020 = vpop.permute.xlu0 %3019
      %3021 = vrot.lane.b32.xlu0 %v814, 68
      %v3022 = vpop.permute.xlu0 %3021
      %3023 = vrot.lane.b32.xlu0 %v1632, 68
      %v3024 = vpop.permute.xlu0 %3023
      %3025 = vrot.lane.b32.xlu0 %v1634, 68
      %v3026 = vpop.permute.xlu0 %3025
      %3027 = vrot.lane.b32.xlu0 %v2300, 68
      %v3028 = vpop.permute.xlu0 %3027
      %3029 = vrot.lane.b32.xlu0 %v2302, 68
      %v3030 = vpop.permute.xlu0 %3029
      %3031 = vrot.lane.b32.xlu0 %v2968, 68
      %v3032 = vpop.permute.xlu0 %3031
      %3033 = vrot.lane.b32.xlu0 %v2970, 68
      %v3034 = vpop.permute.xlu0 %3033
      %vm3067 = vcmask 589344
      %3068 = vst.msk [vmem:[#allocation4] sm:$0xff] %vm3067, %v2972
      %3069 = vst.msk [vmem:[#allocation4 + $0x8] sm:$0xff] %vm3067, %v2974
      %3070 = vst.msk [vmem:[#allocation4 + $0x10] sm:$0xff] %vm3067, %v2976
      %3071 = vst.msk [vmem:[#allocation4 + $0x18] sm:$0xff] %vm3067, %v2978
      %3072 = vst.msk [vmem:[#allocation4 + $0x20] sm:$0xff] %vm3067, %v2980
      %3073 = vst.msk [vmem:[#allocation4 + $0x28] sm:$0xff] %vm3067, %v2982
      %3074 = vst.msk [vmem:[#allocation4 + $0x30] sm:$0xff] %vm3067, %v2984
      %3075 = vst.msk [vmem:[#allocation4 + $0x38] sm:$0xff] %vm3067, %v2986
      %3076 = vst.msk [vmem:[#allocation4 + $0x40] sm:$0xff] %vm3067, %v2988
      %3077 = vst.msk [vmem:[#allocation4 + $0x48] sm:$0xff] %vm3067, %v2990
      %3078 = vst.msk [vmem:[#allocation4 + $0x50] sm:$0xff] %vm3067, %v2992
      %3079 = vst.msk [vmem:[#allocation4 + $0x58] sm:$0xff] %vm3067, %v2994
      %3080 = vst.msk [vmem:[#allocation4 + $0x60] sm:$0xff] %vm3067, %v2996
      %3081 = vst.msk [vmem:[#allocation4 + $0x68] sm:$0xff] %vm3067, %v2998
      %3082 = vst.msk [vmem:[#allocation4 + $0x70] sm:$0xff] %vm3067, %v3000
      %3083 = vst.msk [vmem:[#allocation4 + $0x78] sm:$0xff] %vm3067, %v3002
      %3084 = vst.msk [vmem:[#allocation4 + $0x80] sm:$0xff] %vm3067, %v3004
      %3085 = vst.msk [vmem:[#allocation4 + $0x88] sm:$0xff] %vm3067, %v3006
      %3086 = vst.msk [vmem:[#allocation4 + $0x90] sm:$0xff] %vm3067, %v3008
      %3087 = vst.msk [vmem:[#allocation4 + $0x98] sm:$0xff] %vm3067, %v3010
      %3088 = vst.msk [vmem:[#allocation4 + $0xa0] sm:$0xff] %vm3067, %v3012
      %3089 = vst.msk [vmem:[#allocation4 + $0xa8] sm:$0xff] %vm3067, %v3014
      %3090 = vst.msk [vmem:[#allocation4 + $0xb0] sm:$0xff] %vm3067, %v3016
      %3091 = vst.msk [vmem:[#allocation4 + $0xb8] sm:$0xff] %vm3067, %v3018
      %3092 = vst.msk [vmem:[#allocation4 + $0xc0] sm:$0xff] %vm3067, %v3020
      %3093 = vst.msk [vmem:[#allocation4 + $0xc8] sm:$0xff] %vm3067, %v3022
      %3094 = vst.msk [vmem:[#allocation4 + $0xd0] sm:$0xff] %vm3067, %v3024
      %3095 = vst.msk [vmem:[#allocation4 + $0xd8] sm:$0xff] %vm3067, %v3026
      %3096 = vst.msk [vmem:[#allocation4 + $0xe0] sm:$0xff] %vm3067, %v3028
      %3097 = vst.msk [vmem:[#allocation4 + $0xe8] sm:$0xff] %vm3067, %v3030
      %3098 = vst.msk [vmem:[#allocation4 + $0xf0] sm:$0xff] %vm3067, %v3032
      %3099 = vst.msk [vmem:[#allocation4 + $0xf8] sm:$0xff] %vm3067, %v3034
      %v3100 = vrot.slane %v438, 3
      %v3101 = vrot.slane %v439, 3
      %v3102 = vsel %vm944, %v3100, %v3101
      %v3103 = vrot.slane %v440, 3
      %v3104 = vsel %vm944, %v3101, %v3103
      %3105 = vrot.lane.b32.xlu0 %v962, 72
      %v3106 = vpop.permute.xlu0 %3105
      %3107 = vrot.lane.b32.xlu0 %v964, 72
      %v3108 = vpop.permute.xlu0 %3107
      %3109 = vrot.lane.b32.xlu0 %v967, 72
      %v3110 = vpop.permute.xlu0 %3109
      %3111 = vrot.lane.b32.xlu0 %v969, 72
      %v3112 = vpop.permute.xlu0 %3111
      %3113 = vrot.lane.b32.xlu0 %v972, 72
      %v3114 = vpop.permute.xlu0 %3113
      %3115 = vrot.lane.b32.xlu0 %v974, 72
      %v3116 = vpop.permute.xlu0 %3115
      %3117 = vrot.lane.b32.xlu0 %v977, 72
      %v3118 = vpop.permute.xlu0 %3117
      %3119 = vrot.lane.b32.xlu0 %v979, 72
      %v3120 = vpop.permute.xlu0 %3119
      %3121 = vrot.lane.b32.xlu0 %v982, 72
      %v3122 = vpop.permute.xlu0 %3121
      %3123 = vrot.lane.b32.xlu0 %v984, 72
      %v3124 = vpop.permute.xlu0 %3123
      %3125 = vrot.lane.b32.xlu0 %v987, 72
      %v3126 = vpop.permute.xlu0 %3125
      %3127 = vrot.lane.b32.xlu0 %v989, 72
      %v3128 = vpop.permute.xlu0 %3127
      %3129 = vrot.lane.b32.xlu0 %v992, 72
      %v3130 = vpop.permute.xlu0 %3129
      %3131 = vrot.lane.b32.xlu0 %v994, 72
      %v3132 = vpop.permute.xlu0 %3131
      %3133 = vrot.lane.b32.xlu0 %v997, 72
      %v3134 = vpop.permute.xlu0 %3133
      %3135 = vrot.lane.b32.xlu0 %v999, 72
      %v3136 = vpop.permute.xlu0 %3135
      %3137 = vrot.lane.b32.xlu0 %v1002, 72
      %v3138 = vpop.permute.xlu0 %3137
      %3139 = vrot.lane.b32.xlu0 %v1004, 72
      %v3140 = vpop.permute.xlu0 %3139
      %3141 = vrot.lane.b32.xlu0 %v1007, 72
      %v3142 = vpop.permute.xlu0 %3141
      %3143 = vrot.lane.b32.xlu0 %v1009, 72
      %v3144 = vpop.permute.xlu0 %3143
      %3145 = vrot.lane.b32.xlu0 %v1012, 72
      %v3146 = vpop.permute.xlu0 %3145
      %3147 = vrot.lane.b32.xlu0 %v1014, 72
      %v3148 = vpop.permute.xlu0 %3147
      %3149 = vrot.lane.b32.xlu0 %v1017, 72
      %v3150 = vpop.permute.xlu0 %3149
      %3151 = vrot.lane.b32.xlu0 %v1019, 72
      %v3152 = vpop.permute.xlu0 %3151
      %3153 = vrot.lane.b32.xlu0 %v1022, 72
      %v3154 = vpop.permute.xlu0 %3153
      %3155 = vrot.lane.b32.xlu0 %v1024, 72
      %v3156 = vpop.permute.xlu0 %3155
      %3157 = vrot.lane.b32.xlu0 %v1766, 72
      %v3158 = vpop.permute.xlu0 %3157
      %3159 = vrot.lane.b32.xlu0 %v1768, 72
      %v3160 = vpop.permute.xlu0 %3159
      %3161 = vrot.lane.b32.xlu0 %v2434, 72
      %v3162 = vpop.permute.xlu0 %3161
      %3163 = vrot.lane.b32.xlu0 %v2436, 72
      %v3164 = vpop.permute.xlu0 %3163
      %3165 = vrot.lane.b32.xlu0 %v3102, 72
      %v3166 = vpop.permute.xlu0 %3165
      %3167 = vrot.lane.b32.xlu0 %v3104, 72
      %v3168 = vpop.permute.xlu0 %3167
      %vm3201 = vcmask 622144
      %3202 = vst.msk [vmem:[#allocation4] sm:$0xff] %vm3201, %v3106
      %3203 = vst.msk [vmem:[#allocation4 + $0x8] sm:$0xff] %vm3201, %v3108
      %3204 = vst.msk [vmem:[#allocation4 + $0x10] sm:$0xff] %vm3201, %v3110
      %3205 = vst.msk [vmem:[#allocation4 + $0x18] sm:$0xff] %vm3201, %v3112
      %3206 = vst.msk [vmem:[#allocation4 + $0x20] sm:$0xff] %vm3201, %v3114
      %3207 = vst.msk [vmem:[#allocation4 + $0x28] sm:$0xff] %vm3201, %v3116
      %3208 = vst.msk [vmem:[#allocation4 + $0x30] sm:$0xff] %vm3201, %v3118
      %3209 = vst.msk [vmem:[#allocation4 + $0x38] sm:$0xff] %vm3201, %v3120
      %3210 = vst.msk [vmem:[#allocation4 + $0x40] sm:$0xff] %vm3201, %v3122
      %3211 = vst.msk [vmem:[#allocation4 + $0x48] sm:$0xff] %vm3201, %v3124
      %3212 = vst.msk [vmem:[#allocation4 + $0x50] sm:$0xff] %vm3201, %v3126
      %3213 = vst.msk [vmem:[#allocation4 + $0x58] sm:$0xff] %vm3201, %v3128
      %3214 = vst.msk [vmem:[#allocation4 + $0x60] sm:$0xff] %vm3201, %v3130
      %3215 = vst.msk [vmem:[#allocation4 + $0x68] sm:$0xff] %vm3201, %v3132
      %3216 = vst.msk [vmem:[#allocation4 + $0x70] sm:$0xff] %vm3201, %v3134
      %3217 = vst.msk [vmem:[#allocation4 + $0x78] sm:$0xff] %vm3201, %v3136
      %3218 = vst.msk [vmem:[#allocation4 + $0x80] sm:$0xff] %vm3201, %v3138
      %3219 = vst.msk [vmem:[#allocation4 + $0x88] sm:$0xff] %vm3201, %v3140
      %3220 = vst.msk [vmem:[#allocation4 + $0x90] sm:$0xff] %vm3201, %v3142
      %3221 = vst.msk [vmem:[#allocation4 + $0x98] sm:$0xff] %vm3201, %v3144
      %3222 = vst.msk [vmem:[#allocation4 + $0xa0] sm:$0xff] %vm3201, %v3146
      %3223 = vst.msk [vmem:[#allocation4 + $0xa8] sm:$0xff] %vm3201, %v3148
      %3224 = vst.msk [vmem:[#allocation4 + $0xb0] sm:$0xff] %vm3201, %v3150
      %3225 = vst.msk [vmem:[#allocation4 + $0xb8] sm:$0xff] %vm3201, %v3152
      %3226 = vst.msk [vmem:[#allocation4 + $0xc0] sm:$0xff] %vm3201, %v3154
      %3227 = vst.msk [vmem:[#allocation4 + $0xc8] sm:$0xff] %vm3201, %v3156
      %3228 = vst.msk [vmem:[#allocation4 + $0xd0] sm:$0xff] %vm3201, %v3158
      %3229 = vst.msk [vmem:[#allocation4 + $0xd8] sm:$0xff] %vm3201, %v3160
      %3230 = vst.msk [vmem:[#allocation4 + $0xe0] sm:$0xff] %vm3201, %v3162
      %3231 = vst.msk [vmem:[#allocation4 + $0xe8] sm:$0xff] %vm3201, %v3164
      %3232 = vst.msk [vmem:[#allocation4 + $0xf0] sm:$0xff] %vm3201, %v3166
      %3233 = vst.msk [vmem:[#allocation4 + $0xf8] sm:$0xff] %vm3201, %v3168
      %v3234 = vrot.slane %v438, 4
      %v3235 = vrot.slane %v439, 4
      %v3236 = vsel %vm1154, %v3234, %v3235
      %v3237 = vrot.slane %v440, 4
      %v3238 = vsel %vm1154, %v3235, %v3237
      %3239 = vrot.lane.b32.xlu0 %v1172, 76
      %v3240 = vpop.permute.xlu0 %3239
      %3241 = vrot.lane.b32.xlu0 %v1174, 76
      %v3242 = vpop.permute.xlu0 %3241
      %3243 = vrot.lane.b32.xlu0 %v1177, 76
      %v3244 = vpop.permute.xlu0 %3243
      %3245 = vrot.lane.b32.xlu0 %v1179, 76
      %v3246 = vpop.permute.xlu0 %3245
      %3247 = vrot.lane.b32.xlu0 %v1182, 76
      %v3248 = vpop.permute.xlu0 %3247
      %3249 = vrot.lane.b32.xlu0 %v1184, 76
      %v3250 = vpop.permute.xlu0 %3249
      %3251 = vrot.lane.b32.xlu0 %v1187, 76
      %v3252 = vpop.permute.xlu0 %3251
      %3253 = vrot.lane.b32.xlu0 %v1189, 76
      %v3254 = vpop.permute.xlu0 %3253
      %3255 = vrot.lane.b32.xlu0 %v1192, 76
      %v3256 = vpop.permute.xlu0 %3255
      %3257 = vrot.lane.b32.xlu0 %v1194, 76
      %v3258 = vpop.permute.xlu0 %3257
      %3259 = vrot.lane.b32.xlu0 %v1197, 76
      %v3260 = vpop.permute.xlu0 %3259
      %3261 = vrot.lane.b32.xlu0 %v1199, 76
      %v3262 = vpop.permute.xlu0 %3261
      %3263 = vrot.lane.b32.xlu0 %v1202, 76
      %v3264 = vpop.permute.xlu0 %3263
      %3265 = vrot.lane.b32.xlu0 %v1204, 76
      %v3266 = vpop.permute.xlu0 %3265
      %3267 = vrot.lane.b32.xlu0 %v1207, 76
      %v3268 = vpop.permute.xlu0 %3267
      %3269 = vrot.lane.b32.xlu0 %v1209, 76
      %v3270 = vpop.permute.xlu0 %3269
      %3271 = vrot.lane.b32.xlu0 %v1212, 76
      %v3272 = vpop.permute.xlu0 %3271
      %3273 = vrot.lane.b32.xlu0 %v1214, 76
      %v3274 = vpop.permute.xlu0 %3273
      %3275 = vrot.lane.b32.xlu0 %v1217, 76
      %v3276 = vpop.permute.xlu0 %3275
      %3277 = vrot.lane.b32.xlu0 %v1219, 76
      %v3278 = vpop.permute.xlu0 %3277
      %3279 = vrot.lane.b32.xlu0 %v1222, 76
      %v3280 = vpop.permute.xlu0 %3279
      %3281 = vrot.lane.b32.xlu0 %v1224, 76
      %v3282 = vpop.permute.xlu0 %3281
      %3283 = vrot.lane.b32.xlu0 %v1227, 76
      %v3284 = vpop.permute.xlu0 %3283
      %3285 = vrot.lane.b32.xlu0 %v1229, 76
      %v3286 = vpop.permute.xlu0 %3285
      %3287 = vrot.lane.b32.xlu0 %v1232, 76
      %v3288 = vpop.permute.xlu0 %3287
      %3289 = vrot.lane.b32.xlu0 %v1234, 76
      %v3290 = vpop.permute.xlu0 %3289
      %3291 = vrot.lane.b32.xlu0 %v1900, 76
      %v3292 = vpop.permute.xlu0 %3291
      %3293 = vrot.lane.b32.xlu0 %v1902, 76
      %v3294 = vpop.permute.xlu0 %3293
      %3295 = vrot.lane.b32.xlu0 %v2568, 76
      %v3296 = vpop.permute.xlu0 %3295
      %3297 = vrot.lane.b32.xlu0 %v2570, 76
      %v3298 = vpop.permute.xlu0 %3297
      %3299 = vrot.lane.b32.xlu0 %v3236, 76
      %v3300 = vpop.permute.xlu0 %3299
      %3301 = vrot.lane.b32.xlu0 %v3238, 76
      %v3302 = vpop.permute.xlu0 %3301
      %vm3335 = vcmask 654944
      %3336 = vst.msk [vmem:[#allocation4] sm:$0xff] %vm3335, %v3240
      %3337 = vst.msk [vmem:[#allocation4 + $0x8] sm:$0xff] %vm3335, %v3242
      %3338 = vst.msk [vmem:[#allocation4 + $0x10] sm:$0xff] %vm3335, %v3244
      %3339 = vst.msk [vmem:[#allocation4 + $0x18] sm:$0xff] %vm3335, %v3246
      %3340 = vst.msk [vmem:[#allocation4 + $0x20] sm:$0xff] %vm3335, %v3248
      %3341 = vst.msk [vmem:[#allocation4 + $0x28] sm:$0xff] %vm3335, %v3250
      %3342 = vst.msk [vmem:[#allocation4 + $0x30] sm:$0xff] %vm3335, %v3252
      %3343 = vst.msk [vmem:[#allocation4 + $0x38] sm:$0xff] %vm3335, %v3254
      %3344 = vst.msk [vmem:[#allocation4 + $0x40] sm:$0xff] %vm3335, %v3256
      %3345 = vst.msk [vmem:[#allocation4 + $0x48] sm:$0xff] %vm3335, %v3258
      %3346 = vst.msk [vmem:[#allocation4 + $0x50] sm:$0xff] %vm3335, %v3260
      %3347 = vst.msk [vmem:[#allocation4 + $0x58] sm:$0xff] %vm3335, %v3262
      %3348 = vst.msk [vmem:[#allocation4 + $0x60] sm:$0xff] %vm3335, %v3264
      %3349 = vst.msk [vmem:[#allocation4 + $0x68] sm:$0xff] %vm3335, %v3266
      %3350 = vst.msk [vmem:[#allocation4 + $0x70] sm:$0xff] %vm3335, %v3268
      %3351 = vst.msk [vmem:[#allocation4 + $0x78] sm:$0xff] %vm3335, %v3270
      %3352 = vst.msk [vmem:[#allocation4 + $0x80] sm:$0xff] %vm3335, %v3272
      %3353 = vst.msk [vmem:[#allocation4 + $0x88] sm:$0xff] %vm3335, %v3274
      %3354 = vst.msk [vmem:[#allocation4 + $0x90] sm:$0xff] %vm3335, %v3276
      %3355 = vst.msk [vmem:[#allocation4 + $0x98] sm:$0xff] %vm3335, %v3278
      %3356 = vst.msk [vmem:[#allocation4 + $0xa0] sm:$0xff] %vm3335, %v3280
      %3357 = vst.msk [vmem:[#allocation4 + $0xa8] sm:$0xff] %vm3335, %v3282
      %3358 = vst.msk [vmem:[#allocation4 + $0xb0] sm:$0xff] %vm3335, %v3284
      %3359 = vst.msk [vmem:[#allocation4 + $0xb8] sm:$0xff] %vm3335, %v3286
      %3360 = vst.msk [vmem:[#allocation4 + $0xc0] sm:$0xff] %vm3335, %v3288
      %3361 = vst.msk [vmem:[#allocation4 + $0xc8] sm:$0xff] %vm3335, %v3290
      %3362 = vst.msk [vmem:[#allocation4 + $0xd0] sm:$0xff] %vm3335, %v3292
      %3363 = vst.msk [vmem:[#allocation4 + $0xd8] sm:$0xff] %vm3335, %v3294
      %3364 = vst.msk [vmem:[#allocation4 + $0xe0] sm:$0xff] %vm3335, %v3296
      %3365 = vst.msk [vmem:[#allocation4 + $0xe8] sm:$0xff] %vm3335, %v3298
      %3366 = vst.msk [vmem:[#allocation4 + $0xf0] sm:$0xff] %vm3335, %v3300
      %3367 = vst.msk [vmem:[#allocation4 + $0xf8] sm:$0xff] %vm3335, %v3302
      %3370 = vrot.lane.b32.xlu0 %v396, 80
      %v3371 = vpop.permute.xlu0 %3370
      %3372 = vrot.lane.b32.xlu0 %v397, 80
      %v3373 = vpop.permute.xlu0 %3372
      %3374 = vrot.lane.b32.xlu0 %v399, 80
      %v3375 = vpop.permute.xlu0 %3374
      %3376 = vrot.lane.b32.xlu0 %v400, 80
      %v3377 = vpop.permute.xlu0 %3376
      %3378 = vrot.lane.b32.xlu0 %v402, 80
      %v3379 = vpop.permute.xlu0 %3378
      %3380 = vrot.lane.b32.xlu0 %v403, 80
      %v3381 = vpop.permute.xlu0 %3380
      %3382 = vrot.lane.b32.xlu0 %v405, 80
      %v3383 = vpop.permute.xlu0 %3382
      %3384 = vrot.lane.b32.xlu0 %v406, 80
      %v3385 = vpop.permute.xlu0 %3384
      %3386 = vrot.lane.b32.xlu0 %v408, 80
      %v3387 = vpop.permute.xlu0 %3386
      %3388 = vrot.lane.b32.xlu0 %v409, 80
      %v3389 = vpop.permute.xlu0 %3388
      %3390 = vrot.lane.b32.xlu0 %v411, 80
      %v3391 = vpop.permute.xlu0 %3390
      %3392 = vrot.lane.b32.xlu0 %v412, 80
      %v3393 = vpop.permute.xlu0 %3392
      %3394 = vrot.lane.b32.xlu0 %v414, 80
      %v3395 = vpop.permute.xlu0 %3394
      %3396 = vrot.lane.b32.xlu0 %v415, 80
      %v3397 = vpop.permute.xlu0 %3396
      %3398 = vrot.lane.b32.xlu0 %v417, 80
      %v3399 = vpop.permute.xlu0 %3398
      %3400 = vrot.lane.b32.xlu0 %v418, 80
      %v3401 = vpop.permute.xlu0 %3400
      %3402 = vrot.lane.b32.xlu0 %v420, 80
      %v3403 = vpop.permute.xlu0 %3402
      %3404 = vrot.lane.b32.xlu0 %v421, 80
      %v3405 = vpop.permute.xlu0 %3404
      %3406 = vrot.lane.b32.xlu0 %v423, 80
      %v3407 = vpop.permute.xlu0 %3406
      %3408 = vrot.lane.b32.xlu0 %v424, 80
      %v3409 = vpop.permute.xlu0 %3408
      %3410 = vrot.lane.b32.xlu0 %v426, 80
      %v3411 = vpop.permute.xlu0 %3410
      %3412 = vrot.lane.b32.xlu0 %v427, 80
      %v3413 = vpop.permute.xlu0 %3412
      %3414 = vrot.lane.b32.xlu0 %v429, 80
      %v3415 = vpop.permute.xlu0 %3414
      %3416 = vrot.lane.b32.xlu0 %v430, 80
      %v3417 = vpop.permute.xlu0 %3416
      %3418 = vrot.lane.b32.xlu0 %v432, 80
      %v3419 = vpop.permute.xlu0 %3418
      %3420 = vrot.lane.b32.xlu0 %v433, 80
      %v3421 = vpop.permute.xlu0 %3420
      %3422 = vrot.lane.b32.xlu0 %v435, 80
      %v3423 = vpop.permute.xlu0 %3422
      %3424 = vrot.lane.b32.xlu0 %v436, 80
      %v3425 = vpop.permute.xlu0 %3424
      %3426 = vrot.lane.b32.xlu0 %v438, 80
      %v3427 = vpop.permute.xlu0 %3426
      %3428 = vrot.lane.b32.xlu0 %v439, 80
      %v3429 = vpop.permute.xlu0 %3428
      %3430 = vrot.lane.b32.xlu0 %v441, 80
      %v3431 = vpop.permute.xlu0 %3430
      %3432 = vrot.lane.b32.xlu0 %v442, 80
      %v3433 = vpop.permute.xlu0 %3432
      %vm3466 = vcmask 687744
      %3467 = vst.msk [vmem:[#allocation4] sm:$0xff] %vm3466, %v3371
      %3468 = vst.msk [vmem:[#allocation4 + $0x8] sm:$0xff] %vm3466, %v3373
      %3469 = vst.msk [vmem:[#allocation4 + $0x10] sm:$0xff] %vm3466, %v3375
      %3470 = vst.msk [vmem:[#allocation4 + $0x18] sm:$0xff] %vm3466, %v3377
      %3471 = vst.msk [vmem:[#allocation4 + $0x20] sm:$0xff] %vm3466, %v3379
      %3472 = vst.msk [vmem:[#allocation4 + $0x28] sm:$0xff] %vm3466, %v3381
      %3473 = vst.msk [vmem:[#allocation4 + $0x30] sm:$0xff] %vm3466, %v3383
      %3474 = vst.msk [vmem:[#allocation4 + $0x38] sm:$0xff] %vm3466, %v3385
      %3475 = vst.msk [vmem:[#allocation4 + $0x40] sm:$0xff] %vm3466, %v3387
      %3476 = vst.msk [vmem:[#allocation4 + $0x48] sm:$0xff] %vm3466, %v3389
      %3477 = vst.msk [vmem:[#allocation4 + $0x50] sm:$0xff] %vm3466, %v3391
      %3478 = vst.msk [vmem:[#allocation4 + $0x58] sm:$0xff] %vm3466, %v3393
      %3479 = vst.msk [vmem:[#allocation4 + $0x60] sm:$0xff] %vm3466, %v3395
      %3480 = vst.msk [vmem:[#allocation4 + $0x68] sm:$0xff] %vm3466, %v3397
      %3481 = vst.msk [vmem:[#allocation4 + $0x70] sm:$0xff] %vm3466, %v3399
      %3482 = vst.msk [vmem:[#allocation4 + $0x78] sm:$0xff] %vm3466, %v3401
      %3483 = vst.msk [vmem:[#allocation4 + $0x80] sm:$0xff] %vm3466, %v3403
      %3484 = vst.msk [vmem:[#allocation4 + $0x88] sm:$0xff] %vm3466, %v3405
      %3485 = vst.msk [vmem:[#allocation4 + $0x90] sm:$0xff] %vm3466, %v3407
      %3486 = vst.msk [vmem:[#allocation4 + $0x98] sm:$0xff] %vm3466, %v3409
      %3487 = vst.msk [vmem:[#allocation4 + $0xa0] sm:$0xff] %vm3466, %v3411
      %3488 = vst.msk [vmem:[#allocation4 + $0xa8] sm:$0xff] %vm3466, %v3413
      %3489 = vst.msk [vmem:[#allocation4 + $0xb0] sm:$0xff] %vm3466, %v3415
      %3490 = vst.msk [vmem:[#allocation4 + $0xb8] sm:$0xff] %vm3466, %v3417
      %3491 = vst.msk [vmem:[#allocation4 + $0xc0] sm:$0xff] %vm3466, %v3419
      %3492 = vst.msk [vmem:[#allocation4 + $0xc8] sm:$0xff] %vm3466, %v3421
      %3493 = vst.msk [vmem:[#allocation4 + $0xd0] sm:$0xff] %vm3466, %v3423
      %3494 = vst.msk [vmem:[#allocation4 + $0xd8] sm:$0xff] %vm3466, %v3425
      %3495 = vst.msk [vmem:[#allocation4 + $0xe0] sm:$0xff] %vm3466, %v3427
      %3496 = vst.msk [vmem:[#allocation4 + $0xe8] sm:$0xff] %vm3466, %v3429
      %3497 = vst.msk [vmem:[#allocation4 + $0xf0] sm:$0xff] %vm3466, %v3431
      %3498 = vst.msk [vmem:[#allocation4 + $0xf8] sm:$0xff] %vm3466, %v3433
      %v3500 = vrot.slane %v441, 1
      %v3501 = vrot.slane %v442, 1
      %v3502 = vsel %vm524, %v3500, %v3501
      %v3503 = vrot.slane %v443, 1
      %v3504 = vsel %vm524, %v3501, %v3503
      %3505 = vrot.lane.b32.xlu0 %v547, 84
      %v3506 = vpop.permute.xlu0 %3505
      %3507 = vrot.lane.b32.xlu0 %v549, 84
      %v3508 = vpop.permute.xlu0 %3507
      %3509 = vrot.lane.b32.xlu0 %v552, 84
      %v3510 = vpop.permute.xlu0 %3509
      %3511 = vrot.lane.b32.xlu0 %v554, 84
      %v3512 = vpop.permute.xlu0 %3511
      %3513 = vrot.lane.b32.xlu0 %v557, 84
      %v3514 = vpop.permute.xlu0 %3513
      %3515 = vrot.lane.b32.xlu0 %v559, 84
      %v3516 = vpop.permute.xlu0 %3515
      %3517 = vrot.lane.b32.xlu0 %v562, 84
      %v3518 = vpop.permute.xlu0 %3517
      %3519 = vrot.lane.b32.xlu0 %v564, 84
      %v3520 = vpop.permute.xlu0 %3519
      %3521 = vrot.lane.b32.xlu0 %v567, 84
      %v3522 = vpop.permute.xlu0 %3521
      %3523 = vrot.lane.b32.xlu0 %v569, 84
      %v3524 = vpop.permute.xlu0 %3523
      %3525 = vrot.lane.b32.xlu0 %v572, 84
      %v3526 = vpop.permute.xlu0 %3525
      %3527 = vrot.lane.b32.xlu0 %v574, 84
      %v3528 = vpop.permute.xlu0 %3527
      %3529 = vrot.lane.b32.xlu0 %v577, 84
      %v3530 = vpop.permute.xlu0 %3529
      %3531 = vrot.lane.b32.xlu0 %v579, 84
      %v3532 = vpop.permute.xlu0 %3531
      %3533 = vrot.lane.b32.xlu0 %v582, 84
      %v3534 = vpop.permute.xlu0 %3533
      %3535 = vrot.lane.b32.xlu0 %v584, 84
      %v3536 = vpop.permute.xlu0 %3535
      %3537 = vrot.lane.b32.xlu0 %v587, 84
      %v3538 = vpop.permute.xlu0 %3537
      %3539 = vrot.lane.b32.xlu0 %v589, 84
      %v3540 = vpop.permute.xlu0 %3539
      %3541 = vrot.lane.b32.xlu0 %v592, 84
      %v3542 = vpop.permute.xlu0 %3541
      %3543 = vrot.lane.b32.xlu0 %v594, 84
      %v3544 = vpop.permute.xlu0 %3543
      %3545 = vrot.lane.b32.xlu0 %v597, 84
      %v3546 = vpop.permute.xlu0 %3545
      %3547 = vrot.lane.b32.xlu0 %v599, 84
      %v3548 = vpop.permute.xlu0 %3547
      %3549 = vrot.lane.b32.xlu0 %v602, 84
      %v3550 = vpop.permute.xlu0 %3549
      %3551 = vrot.lane.b32.xlu0 %v604, 84
      %v3552 = vpop.permute.xlu0 %3551
      %3553 = vrot.lane.b32.xlu0 %v1498, 84
      %v3554 = vpop.permute.xlu0 %3553
      %3555 = vrot.lane.b32.xlu0 %v1500, 84
      %v3556 = vpop.permute.xlu0 %3555
      %3557 = vrot.lane.b32.xlu0 %v2166, 84
      %v3558 = vpop.permute.xlu0 %3557
      %3559 = vrot.lane.b32.xlu0 %v2168, 84
      %v3560 = vpop.permute.xlu0 %3559
      %3561 = vrot.lane.b32.xlu0 %v2834, 84
      %v3562 = vpop.permute.xlu0 %3561
      %3563 = vrot.lane.b32.xlu0 %v2836, 84
      %v3564 = vpop.permute.xlu0 %3563
      %3565 = vrot.lane.b32.xlu0 %v3502, 84
      %v3566 = vpop.permute.xlu0 %3565
      %3567 = vrot.lane.b32.xlu0 %v3504, 84
      %v3568 = vpop.permute.xlu0 %3567
      %vm3601 = vcmask 720544
      %3602 = vst.msk [vmem:[#allocation4] sm:$0xff] %vm3601, %v3506
      %3603 = vst.msk [vmem:[#allocation4 + $0x8] sm:$0xff] %vm3601, %v3508
      %3604 = vst.msk [vmem:[#allocation4 + $0x10] sm:$0xff] %vm3601, %v3510
      %3605 = vst.msk [vmem:[#allocation4 + $0x18] sm:$0xff] %vm3601, %v3512
      %3606 = vst.msk [vmem:[#allocation4 + $0x20] sm:$0xff] %vm3601, %v3514
      %3607 = vst.msk [vmem:[#allocation4 + $0x28] sm:$0xff] %vm3601, %v3516
      %3608 = vst.msk [vmem:[#allocation4 + $0x30] sm:$0xff] %vm3601, %v3518
      %3609 = vst.msk [vmem:[#allocation4 + $0x38] sm:$0xff] %vm3601, %v3520
      %3610 = vst.msk [vmem:[#allocation4 + $0x40] sm:$0xff] %vm3601, %v3522
      %3611 = vst.msk [vmem:[#allocation4 + $0x48] sm:$0xff] %vm3601, %v3524
      %3612 = vst.msk [vmem:[#allocation4 + $0x50] sm:$0xff] %vm3601, %v3526
      %3613 = vst.msk [vmem:[#allocation4 + $0x58] sm:$0xff] %vm3601, %v3528
      %3614 = vst.msk [vmem:[#allocation4 + $0x60] sm:$0xff] %vm3601, %v3530
      %3615 = vst.msk [vmem:[#allocation4 + $0x68] sm:$0xff] %vm3601, %v3532
      %3616 = vst.msk [vmem:[#allocation4 + $0x70] sm:$0xff] %vm3601, %v3534
      %3617 = vst.msk [vmem:[#allocation4 + $0x78] sm:$0xff] %vm3601, %v3536
      %3618 = vst.msk [vmem:[#allocation4 + $0x80] sm:$0xff] %vm3601, %v3538
      %3619 = vst.msk [vmem:[#allocation4 + $0x88] sm:$0xff] %vm3601, %v3540
      %3620 = vst.msk [vmem:[#allocation4 + $0x90] sm:$0xff] %vm3601, %v3542
      %3621 = vst.msk [vmem:[#allocation4 + $0x98] sm:$0xff] %vm3601, %v3544
      %3622 = vst.msk [vmem:[#allocation4 + $0xa0] sm:$0xff] %vm3601, %v3546
      %3623 = vst.msk [vmem:[#allocation4 + $0xa8] sm:$0xff] %vm3601, %v3548
      %3624 = vst.msk [vmem:[#allocation4 + $0xb0] sm:$0xff] %vm3601, %v3550
      %3625 = vst.msk [vmem:[#allocation4 + $0xb8] sm:$0xff] %vm3601, %v3552
      %3626 = vst.msk [vmem:[#allocation4 + $0xc0] sm:$0xff] %vm3601, %v3554
      %3627 = vst.msk [vmem:[#allocation4 + $0xc8] sm:$0xff] %vm3601, %v3556
      %3628 = vst.msk [vmem:[#allocation4 + $0xd0] sm:$0xff] %vm3601, %v3558
      %3629 = vst.msk [vmem:[#allocation4 + $0xd8] sm:$0xff] %vm3601, %v3560
      %3630 = vst.msk [vmem:[#allocation4 + $0xe0] sm:$0xff] %vm3601, %v3562
      %3631 = vst.msk [vmem:[#allocation4 + $0xe8] sm:$0xff] %vm3601, %v3564
      %3632 = vst.msk [vmem:[#allocation4 + $0xf0] sm:$0xff] %vm3601, %v3566
      %3633 = vst.msk [vmem:[#allocation4 + $0xf8] sm:$0xff] %vm3601, %v3568
      %v3634 = vrot.slane %v441, 2
      %v3635 = vrot.slane %v442, 2
      %v3636 = vsel %vm734, %v3634, %v3635
      %v3637 = vrot.slane %v443, 2
      %v3638 = vsel %vm734, %v3635, %v3637
      %3639 = vrot.lane.b32.xlu0 %v757, 88
      %v3640 = vpop.permute.xlu0 %3639
      %3641 = vrot.lane.b32.xlu0 %v759, 88
      %v3642 = vpop.permute.xlu0 %3641
      %3643 = vrot.lane.b32.xlu0 %v762, 88
      %v3644 = vpop.permute.xlu0 %3643
      %3645 = vrot.lane.b32.xlu0 %v764, 88
      %v3646 = vpop.permute.xlu0 %3645
      %3647 = vrot.lane.b32.xlu0 %v767, 88
      %v3648 = vpop.permute.xlu0 %3647
      %3649 = vrot.lane.b32.xlu0 %v769, 88
      %v3650 = vpop.permute.xlu0 %3649
      %3651 = vrot.lane.b32.xlu0 %v772, 88
      %v3652 = vpop.permute.xlu0 %3651
      %3653 = vrot.lane.b32.xlu0 %v774, 88
      %v3654 = vpop.permute.xlu0 %3653
      %3655 = vrot.lane.b32.xlu0 %v777, 88
      %v3656 = vpop.permute.xlu0 %3655
      %3657 = vrot.lane.b32.xlu0 %v779, 88
      %v3658 = vpop.permute.xlu0 %3657
      %3659 = vrot.lane.b32.xlu0 %v782, 88
      %v3660 = vpop.permute.xlu0 %3659
      %3661 = vrot.lane.b32.xlu0 %v784, 88
      %v3662 = vpop.permute.xlu0 %3661
      %3663 = vrot.lane.b32.xlu0 %v787, 88
      %v3664 = vpop.permute.xlu0 %3663
      %3665 = vrot.lane.b32.xlu0 %v789, 88
      %v3666 = vpop.permute.xlu0 %3665
      %3667 = vrot.lane.b32.xlu0 %v792, 88
      %v3668 = vpop.permute.xlu0 %3667
      %3669 = vrot.lane.b32.xlu0 %v794, 88
      %v3670 = vpop.permute.xlu0 %3669
      %3671 = vrot.lane.b32.xlu0 %v797, 88
      %v3672 = vpop.permute.xlu0 %3671
      %3673 = vrot.lane.b32.xlu0 %v799, 88
      %v3674 = vpop.permute.xlu0 %3673
      %3675 = vrot.lane.b32.xlu0 %v802, 88
      %v3676 = vpop.permute.xlu0 %3675
      %3677 = vrot.lane.b32.xlu0 %v804, 88
      %v3678 = vpop.permute.xlu0 %3677
      %3679 = vrot.lane.b32.xlu0 %v807, 88
      %v3680 = vpop.permute.xlu0 %3679
      %3681 = vrot.lane.b32.xlu0 %v809, 88
      %v3682 = vpop.permute.xlu0 %3681
      %3683 = vrot.lane.b32.xlu0 %v812, 88
      %v3684 = vpop.permute.xlu0 %3683
      %3685 = vrot.lane.b32.xlu0 %v814, 88
      %v3686 = vpop.permute.xlu0 %3685
      %3687 = vrot.lane.b32.xlu0 %v1632, 88
      %v3688 = vpop.permute.xlu0 %3687
      %3689 = vrot.lane.b32.xlu0 %v1634, 88
      %v3690 = vpop.permute.xlu0 %3689
      %3691 = vrot.lane.b32.xlu0 %v2300, 88
      %v3692 = vpop.permute.xlu0 %3691
      %3693 = vrot.lane.b32.xlu0 %v2302, 88
      %v3694 = vpop.permute.xlu0 %3693
      %3695 = vrot.lane.b32.xlu0 %v2968, 88
      %v3696 = vpop.permute.xlu0 %3695
      %3697 = vrot.lane.b32.xlu0 %v2970, 88
      %v3698 = vpop.permute.xlu0 %3697
      %3699 = vrot.lane.b32.xlu0 %v3636, 88
      %v3700 = vpop.permute.xlu0 %3699
      %3701 = vrot.lane.b32.xlu0 %v3638, 88
      %v3702 = vpop.permute.xlu0 %3701
      %vm3735 = vcmask 753344
      %3736 = vst.msk [vmem:[#allocation4] sm:$0xff] %vm3735, %v3640
      %3737 = vst.msk [vmem:[#allocation4 + $0x8] sm:$0xff] %vm3735, %v3642
      %3738 = vst.msk [vmem:[#allocation4 + $0x10] sm:$0xff] %vm3735, %v3644
      %3739 = vst.msk [vmem:[#allocation4 + $0x18] sm:$0xff] %vm3735, %v3646
      %3740 = vst.msk [vmem:[#allocation4 + $0x20] sm:$0xff] %vm3735, %v3648
      %3741 = vst.msk [vmem:[#allocation4 + $0x28] sm:$0xff] %vm3735, %v3650
      %3742 = vst.msk [vmem:[#allocation4 + $0x30] sm:$0xff] %vm3735, %v3652
      %3743 = vst.msk [vmem:[#allocation4 + $0x38] sm:$0xff] %vm3735, %v3654
      %3744 = vst.msk [vmem:[#allocation4 + $0x40] sm:$0xff] %vm3735, %v3656
      %3745 = vst.msk [vmem:[#allocation4 + $0x48] sm:$0xff] %vm3735, %v3658
      %3746 = vst.msk [vmem:[#allocation4 + $0x50] sm:$0xff] %vm3735, %v3660
      %3747 = vst.msk [vmem:[#allocation4 + $0x58] sm:$0xff] %vm3735, %v3662
      %3748 = vst.msk [vmem:[#allocation4 + $0x60] sm:$0xff] %vm3735, %v3664
      %3749 = vst.msk [vmem:[#allocation4 + $0x68] sm:$0xff] %vm3735, %v3666
      %3750 = vst.msk [vmem:[#allocation4 + $0x70] sm:$0xff] %vm3735, %v3668
      %3751 = vst.msk [vmem:[#allocation4 + $0x78] sm:$0xff] %vm3735, %v3670
      %3752 = vst.msk [vmem:[#allocation4 + $0x80] sm:$0xff] %vm3735, %v3672
      %3753 = vst.msk [vmem:[#allocation4 + $0x88] sm:$0xff] %vm3735, %v3674
      %3754 = vst.msk [vmem:[#allocation4 + $0x90] sm:$0xff] %vm3735, %v3676
      %3755 = vst.msk [vmem:[#allocation4 + $0x98] sm:$0xff] %vm3735, %v3678
      %3756 = vst.msk [vmem:[#allocation4 + $0xa0] sm:$0xff] %vm3735, %v3680
      %3757 = vst.msk [vmem:[#allocation4 + $0xa8] sm:$0xff] %vm3735, %v3682
      %3758 = vst.msk [vmem:[#allocation4 + $0xb0] sm:$0xff] %vm3735, %v3684
      %3759 = vst.msk [vmem:[#allocation4 + $0xb8] sm:$0xff] %vm3735, %v3686
      %3760 = vst.msk [vmem:[#allocation4 + $0xc0] sm:$0xff] %vm3735, %v3688
      %3761 = vst.msk [vmem:[#allocation4 + $0xc8] sm:$0xff] %vm3735, %v3690
      %3762 = vst.msk [vmem:[#allocation4 + $0xd0] sm:$0xff] %vm3735, %v3692
      %3763 = vst.msk [vmem:[#allocation4 + $0xd8] sm:$0xff] %vm3735, %v3694
      %3764 = vst.msk [vmem:[#allocation4 + $0xe0] sm:$0xff] %vm3735, %v3696
      %3765 = vst.msk [vmem:[#allocation4 + $0xe8] sm:$0xff] %vm3735, %v3698
      %3766 = vst.msk [vmem:[#allocation4 + $0xf0] sm:$0xff] %vm3735, %v3700
      %3767 = vst.msk [vmem:[#allocation4 + $0xf8] sm:$0xff] %vm3735, %v3702
      %v3768 = vrot.slane %v441, 3
      %v3769 = vrot.slane %v442, 3
      %v3770 = vsel %vm944, %v3768, %v3769
      %v3771 = vrot.slane %v443, 3
      %v3772 = vsel %vm944, %v3769, %v3771
      %3773 = vrot.lane.b32.xlu0 %v967, 92
      %v3774 = vpop.permute.xlu0 %3773
      %3775 = vrot.lane.b32.xlu0 %v969, 92
      %v3776 = vpop.permute.xlu0 %3775
      %3777 = vrot.lane.b32.xlu0 %v972, 92
      %v3778 = vpop.permute.xlu0 %3777
      %3779 = vrot.lane.b32.xlu0 %v974, 92
      %v3780 = vpop.permute.xlu0 %3779
      %3781 = vrot.lane.b32.xlu0 %v977, 92
      %v3782 = vpop.permute.xlu0 %3781
      %3783 = vrot.lane.b32.xlu0 %v979, 92
      %v3784 = vpop.permute.xlu0 %3783
      %3785 = vrot.lane.b32.xlu0 %v982, 92
      %v3786 = vpop.permute.xlu0 %3785
      %3787 = vrot.lane.b32.xlu0 %v984, 92
      %v3788 = vpop.permute.xlu0 %3787
      %3789 = vrot.lane.b32.xlu0 %v987, 92
      %v3790 = vpop.permute.xlu0 %3789
      %3791 = vrot.lane.b32.xlu0 %v989, 92
      %v3792 = vpop.permute.xlu0 %3791
      %3793 = vrot.lane.b32.xlu0 %v992, 92
      %v3794 = vpop.permute.xlu0 %3793
      %3795 = vrot.lane.b32.xlu0 %v994, 92
      %v3796 = vpop.permute.xlu0 %3795
      %3797 = vrot.lane.b32.xlu0 %v997, 92
      %v3798 = vpop.permute.xlu0 %3797
      %3799 = vrot.lane.b32.xlu0 %v999, 92
      %v3800 = vpop.permute.xlu0 %3799
      %3801 = vrot.lane.b32.xlu0 %v1002, 92
      %v3802 = vpop.permute.xlu0 %3801
      %3803 = vrot.lane.b32.xlu0 %v1004, 92
      %v3804 = vpop.permute.xlu0 %3803
      %3805 = vrot.lane.b32.xlu0 %v1007, 92
      %v3806 = vpop.permute.xlu0 %3805
      %3807 = vrot.lane.b32.xlu0 %v1009, 92
      %v3808 = vpop.permute.xlu0 %3807
      %3809 = vrot.lane.b32.xlu0 %v1012, 92
      %v3810 = vpop.permute.xlu0 %3809
      %3811 = vrot.lane.b32.xlu0 %v1014, 92
      %v3812 = vpop.permute.xlu0 %3811
      %3813 = vrot.lane.b32.xlu0 %v1017, 92
      %v3814 = vpop.permute.xlu0 %3813
      %3815 = vrot.lane.b32.xlu0 %v1019, 92
      %v3816 = vpop.permute.xlu0 %3815
      %3817 = vrot.lane.b32.xlu0 %v1022, 92
      %v3818 = vpop.permute.xlu0 %3817
      %3819 = vrot.lane.b32.xlu0 %v1024, 92
      %v3820 = vpop.permute.xlu0 %3819
      %3821 = vrot.lane.b32.xlu0 %v1766, 92
      %v3822 = vpop.permute.xlu0 %3821
      %3823 = vrot.lane.b32.xlu0 %v1768, 92
      %v3824 = vpop.permute.xlu0 %3823
      %3825 = vrot.lane.b32.xlu0 %v2434, 92
      %v3826 = vpop.permute.xlu0 %3825
      %3827 = vrot.lane.b32.xlu0 %v2436, 92
      %v3828 = vpop.permute.xlu0 %3827
      %3829 = vrot.lane.b32.xlu0 %v3102, 92
      %v3830 = vpop.permute.xlu0 %3829
      %3831 = vrot.lane.b32.xlu0 %v3104, 92
      %v3832 = vpop.permute.xlu0 %3831
      %3833 = vrot.lane.b32.xlu0 %v3770, 92
      %v3834 = vpop.permute.xlu0 %3833
      %3835 = vrot.lane.b32.xlu0 %v3772, 92
      %v3836 = vpop.permute.xlu0 %3835
      %vm3869 = vcmask 786144
      %3870 = vst.msk [vmem:[#allocation4] sm:$0xff] %vm3869, %v3774
      %3871 = vst.msk [vmem:[#allocation4 + $0x8] sm:$0xff] %vm3869, %v3776
      %3872 = vst.msk [vmem:[#allocation4 + $0x10] sm:$0xff] %vm3869, %v3778
      %3873 = vst.msk [vmem:[#allocation4 + $0x18] sm:$0xff] %vm3869, %v3780
      %3874 = vst.msk [vmem:[#allocation4 + $0x20] sm:$0xff] %vm3869, %v3782
      %3875 = vst.msk [vmem:[#allocation4 + $0x28] sm:$0xff] %vm3869, %v3784
      %3876 = vst.msk [vmem:[#allocation4 + $0x30] sm:$0xff] %vm3869, %v3786
      %3877 = vst.msk [vmem:[#allocation4 + $0x38] sm:$0xff] %vm3869, %v3788
      %3878 = vst.msk [vmem:[#allocation4 + $0x40] sm:$0xff] %vm3869, %v3790
      %3879 = vst.msk [vmem:[#allocation4 + $0x48] sm:$0xff] %vm3869, %v3792
      %3880 = vst.msk [vmem:[#allocation4 + $0x50] sm:$0xff] %vm3869, %v3794
      %3881 = vst.msk [vmem:[#allocation4 + $0x58] sm:$0xff] %vm3869, %v3796
      %3882 = vst.msk [vmem:[#allocation4 + $0x60] sm:$0xff] %vm3869, %v3798
      %3883 = vst.msk [vmem:[#allocation4 + $0x68] sm:$0xff] %vm3869, %v3800
      %3884 = vst.msk [vmem:[#allocation4 + $0x70] sm:$0xff] %vm3869, %v3802
      %3885 = vst.msk [vmem:[#allocation4 + $0x78] sm:$0xff] %vm3869, %v3804
      %3886 = vst.msk [vmem:[#allocation4 + $0x80] sm:$0xff] %vm3869, %v3806
      %3887 = vst.msk [vmem:[#allocation4 + $0x88] sm:$0xff] %vm3869, %v3808
      %3888 = vst.msk [vmem:[#allocation4 + $0x90] sm:$0xff] %vm3869, %v3810
      %3889 = vst.msk [vmem:[#allocation4 + $0x98] sm:$0xff] %vm3869, %v3812
      %3890 = vst.msk [vmem:[#allocation4 + $0xa0] sm:$0xff] %vm3869, %v3814
      %3891 = vst.msk [vmem:[#allocation4 + $0xa8] sm:$0xff] %vm3869, %v3816
      %3892 = vst.msk [vmem:[#allocation4 + $0xb0] sm:$0xff] %vm3869, %v3818
      %3893 = vst.msk [vmem:[#allocation4 + $0xb8] sm:$0xff] %vm3869, %v3820
      %3894 = vst.msk [vmem:[#allocation4 + $0xc0] sm:$0xff] %vm3869, %v3822
      %3895 = vst.msk [vmem:[#allocation4 + $0xc8] sm:$0xff] %vm3869, %v3824
      %3896 = vst.msk [vmem:[#allocation4 + $0xd0] sm:$0xff] %vm3869, %v3826
      %3897 = vst.msk [vmem:[#allocation4 + $0xd8] sm:$0xff] %vm3869, %v3828
      %3898 = vst.msk [vmem:[#allocation4 + $0xe0] sm:$0xff] %vm3869, %v3830
      %3899 = vst.msk [vmem:[#allocation4 + $0xe8] sm:$0xff] %vm3869, %v3832
      %3900 = vst.msk [vmem:[#allocation4 + $0xf0] sm:$0xff] %vm3869, %v3834
      %3901 = vst.msk [vmem:[#allocation4 + $0xf8] sm:$0xff] %vm3869, %v3836
      %v3902 = vrot.slane %v441, 4
      %v3903 = vrot.slane %v442, 4
      %v3904 = vsel %vm1154, %v3902, %v3903
      %v3905 = vrot.slane %v443, 4
      %v3906 = vsel %vm1154, %v3903, %v3905
      %3907 = vrot.lane.b32.xlu0 %v1177, 96
      %v3908 = vpop.permute.xlu0 %3907
      %3909 = vrot.lane.b32.xlu0 %v1179, 96
      %v3910 = vpop.permute.xlu0 %3909
      %3911 = vrot.lane.b32.xlu0 %v1182, 96
      %v3912 = vpop.permute.xlu0 %3911
      %3913 = vrot.lane.b32.xlu0 %v1184, 96
      %v3914 = vpop.permute.xlu0 %3913
      %3915 = vrot.lane.b32.xlu0 %v1187, 96
      %v3916 = vpop.permute.xlu0 %3915
      %3917 = vrot.lane.b32.xlu0 %v1189, 96
      %v3918 = vpop.permute.xlu0 %3917
      %3919 = vrot.lane.b32.xlu0 %v1192, 96
      %v3920 = vpop.permute.xlu0 %3919
      %3921 = vrot.lane.b32.xlu0 %v1194, 96
      %v3922 = vpop.permute.xlu0 %3921
      %3923 = vrot.lane.b32.xlu0 %v1197, 96
      %v3924 = vpop.permute.xlu0 %3923
      %3925 = vrot.lane.b32.xlu0 %v1199, 96
      %v3926 = vpop.permute.xlu0 %3925
      %3927 = vrot.lane.b32.xlu0 %v1202, 96
      %v3928 = vpop.permute.xlu0 %3927
      %3929 = vrot.lane.b32.xlu0 %v1204, 96
      %v3930 = vpop.permute.xlu0 %3929
      %3931 = vrot.lane.b32.xlu0 %v1207, 96
      %v3932 = vpop.permute.xlu0 %3931
      %3933 = vrot.lane.b32.xlu0 %v1209, 96
      %v3934 = vpop.permute.xlu0 %3933
      %3935 = vrot.lane.b32.xlu0 %v1212, 96
      %v3936 = vpop.permute.xlu0 %3935
      %3937 = vrot.lane.b32.xlu0 %v1214, 96
      %v3938 = vpop.permute.xlu0 %3937
      %3939 = vrot.lane.b32.xlu0 %v1217, 96
      %v3940 = vpop.permute.xlu0 %3939
      %3941 = vrot.lane.b32.xlu0 %v1219, 96
      %v3942 = vpop.permute.xlu0 %3941
      %3943 = vrot.lane.b32.xlu0 %v1222, 96
      %v3944 = vpop.permute.xlu0 %3943
      %3945 = vrot.lane.b32.xlu0 %v1224, 96
      %v3946 = vpop.permute.xlu0 %3945
      %3947 = vrot.lane.b32.xlu0 %v1227, 96
      %v3948 = vpop.permute.xlu0 %3947
      %3949 = vrot.lane.b32.xlu0 %v1229, 96
      %v3950 = vpop.permute.xlu0 %3949
      %3951 = vrot.lane.b32.xlu0 %v1232, 96
      %v3952 = vpop.permute.xlu0 %3951
      %3953 = vrot.lane.b32.xlu0 %v1234, 96
      %v3954 = vpop.permute.xlu0 %3953
      %3955 = vrot.lane.b32.xlu0 %v1900, 96
      %v3956 = vpop.permute.xlu0 %3955
      %3957 = vrot.lane.b32.xlu0 %v1902, 96
      %v3958 = vpop.permute.xlu0 %3957
      %3959 = vrot.lane.b32.xlu0 %v2568, 96
      %v3960 = vpop.permute.xlu0 %3959
      %3961 = vrot.lane.b32.xlu0 %v2570, 96
      %v3962 = vpop.permute.xlu0 %3961
      %3963 = vrot.lane.b32.xlu0 %v3236, 96
      %v3964 = vpop.permute.xlu0 %3963
      %3965 = vrot.lane.b32.xlu0 %v3238, 96
      %v3966 = vpop.permute.xlu0 %3965
      %3967 = vrot.lane.b32.xlu0 %v3904, 96
      %v3968 = vpop.permute.xlu0 %3967
      %3969 = vrot.lane.b32.xlu0 %v3906, 96
      %v3970 = vpop.permute.xlu0 %3969
      %vm4003 = vcmask 818944
      %4004 = vst.msk [vmem:[#allocation4] sm:$0xff] %vm4003, %v3908
      %4005 = vst.msk [vmem:[#allocation4 + $0x8] sm:$0xff] %vm4003, %v3910
      %4006 = vst.msk [vmem:[#allocation4 + $0x10] sm:$0xff] %vm4003, %v3912
      %4007 = vst.msk [vmem:[#allocation4 + $0x18] sm:$0xff] %vm4003, %v3914
      %4008 = vst.msk [vmem:[#allocation4 + $0x20] sm:$0xff] %vm4003, %v3916
      %4009 = vst.msk [vmem:[#allocation4 + $0x28] sm:$0xff] %vm4003, %v3918
      %4010 = vst.msk [vmem:[#allocation4 + $0x30] sm:$0xff] %vm4003, %v3920
      %4011 = vst.msk [vmem:[#allocation4 + $0x38] sm:$0xff] %vm4003, %v3922
      %4012 = vst.msk [vmem:[#allocation4 + $0x40] sm:$0xff] %vm4003, %v3924
      %4013 = vst.msk [vmem:[#allocation4 + $0x48] sm:$0xff] %vm4003, %v3926
      %4014 = vst.msk [vmem:[#allocation4 + $0x50] sm:$0xff] %vm4003, %v3928
      %4015 = vst.msk [vmem:[#allocation4 + $0x58] sm:$0xff] %vm4003, %v3930
      %4016 = vst.msk [vmem:[#allocation4 + $0x60] sm:$0xff] %vm4003, %v3932
      %4017 = vst.msk [vmem:[#allocation4 + $0x68] sm:$0xff] %vm4003, %v3934
      %4018 = vst.msk [vmem:[#allocation4 + $0x70] sm:$0xff] %vm4003, %v3936
      %4019 = vst.msk [vmem:[#allocation4 + $0x78] sm:$0xff] %vm4003, %v3938
      %4020 = vst.msk [vmem:[#allocation4 + $0x80] sm:$0xff] %vm4003, %v3940
      %4021 = vst.msk [vmem:[#allocation4 + $0x88] sm:$0xff] %vm4003, %v3942
      %4022 = vst.msk [vmem:[#allocation4 + $0x90] sm:$0xff] %vm4003, %v3944
      %4023 = vst.msk [vmem:[#allocation4 + $0x98] sm:$0xff] %vm4003, %v3946
      %4024 = vst.msk [vmem:[#allocation4 + $0xa0] sm:$0xff] %vm4003, %v3948
      %4025 = vst.msk [vmem:[#allocation4 + $0xa8] sm:$0xff] %vm4003, %v3950
      %4026 = vst.msk [vmem:[#allocation4 + $0xb0] sm:$0xff] %vm4003, %v3952
      %4027 = vst.msk [vmem:[#allocation4 + $0xb8] sm:$0xff] %vm4003, %v3954
      %4028 = vst.msk [vmem:[#allocation4 + $0xc0] sm:$0xff] %vm4003, %v3956
      %4029 = vst.msk [vmem:[#allocation4 + $0xc8] sm:$0xff] %vm4003, %v3958
      %4030 = vst.msk [vmem:[#allocation4 + $0xd0] sm:$0xff] %vm4003, %v3960
      %4031 = vst.msk [vmem:[#allocation4 + $0xd8] sm:$0xff] %vm4003, %v3962
      %4032 = vst.msk [vmem:[#allocation4 + $0xe0] sm:$0xff] %vm4003, %v3964
      %4033 = vst.msk [vmem:[#allocation4 + $0xe8] sm:$0xff] %vm4003, %v3966
      %4034 = vst.msk [vmem:[#allocation4 + $0xf0] sm:$0xff] %vm4003, %v3968
      %4035 = vst.msk [vmem:[#allocation4 + $0xf8] sm:$0xff] %vm4003, %v3970
      %v4036 = vld [vmem:[#allocation4] sm:$0xff]
      %v4037 = vld [vmem:[#allocation4 + $0x8] sm:$0xff]
      %v4038 = vld [vmem:[#allocation4 + $0x10] sm:$0xff]
      %v4039 = vld [vmem:[#allocation4 + $0x18] sm:$0xff]
      %v4040 = vld [vmem:[#allocation4 + $0x20] sm:$0xff]
      %v4041 = vld [vmem:[#allocation4 + $0x28] sm:$0xff]
      %v4042 = vld [vmem:[#allocation4 + $0x30] sm:$0xff]
      %v4043 = vld [vmem:[#allocation4 + $0x38] sm:$0xff]
      %v4044 = vld [vmem:[#allocation4 + $0x40] sm:$0xff]
      %v4045 = vld [vmem:[#allocation4 + $0x48] sm:$0xff]
      %v4046 = vld [vmem:[#allocation4 + $0x50] sm:$0xff]
      %v4047 = vld [vmem:[#allocation4 + $0x58] sm:$0xff]
      %v4048 = vld [vmem:[#allocation4 + $0x60] sm:$0xff]
      %v4049 = vld [vmem:[#allocation4 + $0x68] sm:$0xff]
      %v4050 = vld [vmem:[#allocation4 + $0x70] sm:$0xff]
      %v4051 = vld [vmem:[#allocation4 + $0x78] sm:$0xff]
      %v4052 = vld [vmem:[#allocation4 + $0x80] sm:$0xff]
      %v4053 = vld [vmem:[#allocation4 + $0x88] sm:$0xff]
      %v4054 = vld [vmem:[#allocation4 + $0x90] sm:$0xff]
      %v4055 = vld [vmem:[#allocation4 + $0x98] sm:$0xff]
      %v4056 = vld [vmem:[#allocation4 + $0xa0] sm:$0xff]
      %v4057 = vld [vmem:[#allocation4 + $0xa8] sm:$0xff]
      %v4058 = vld [vmem:[#allocation4 + $0xb0] sm:$0xff]
      %v4059 = vld [vmem:[#allocation4 + $0xb8] sm:$0xff]
      %v4060 = vld [vmem:[#allocation4 + $0xc0] sm:$0xff]
      %v4061 = vld [vmem:[#allocation4 + $0xc8] sm:$0xff]
      %v4062 = vld [vmem:[#allocation4 + $0xd0] sm:$0xff]
      %v4063 = vld [vmem:[#allocation4 + $0xd8] sm:$0xff]
      %v4064 = vld [vmem:[#allocation4 + $0xe0] sm:$0xff]
      %v4065 = vld [vmem:[#allocation4 + $0xe8] sm:$0xff]
      %v4066 = vld [vmem:[#allocation4 + $0xf0] sm:$0xff]
      %v4067 = vld [vmem:[#allocation4 + $0xf8] sm:$0xff]
      %v4068 = vld [vmem:[%s1] sm:$0xff]
      %v4069 = vld [vmem:[%s1 + $0x8] sm:$0xff]
      %v4070 = vld [vmem:[%s1 + $0x10] sm:$0xff]
      %v4071 = vld [vmem:[%s1 + $0x18] sm:$0xff]
      %v4072 = vld [vmem:[%s1 + $0x20] sm:$0xff]
      %v4073 = vld [vmem:[%s1 + $0x28] sm:$0xff]
      %v4074 = vld [vmem:[%s1 + $0x30] sm:$0xff]
      %v4075 = vld [vmem:[%s1 + $0x38] sm:$0xff]
      %v4076 = vld [vmem:[%s1 + $0x40] sm:$0xff]
      %v4077 = vld [vmem:[%s1 + $0x48] sm:$0xff]
      %v4078 = vld [vmem:[%s1 + $0x50] sm:$0xff]
      %v4079 = vld [vmem:[%s1 + $0x58] sm:$0xff]
      %v4080 = vld [vmem:[%s1 + $0x60] sm:$0xf]
      %v4081 = vld [vmem:[%s3] sm:$0x1]
      %v4083 = vperm.slane %v4081, 0
      %vm4085 = vcmask 818176
      %v4087 = vsel %vm4085, %v4036, 0
      %v4090 = vsel %vm4085, %v4037, 0
      %v4093 = vsel %vm4085, %v4038, 0
      %v4096 = vsel %vm4085, %v4039, 0
      %v4099 = vsel %vm4085, %v4040, 0
      %v4102 = vsel %vm4085, %v4041, 0
      %v4105 = vsel %vm4085, %v4042, 0
      %v4108 = vsel %vm4085, %v4043, 0
      %v4111 = vsel %vm4085, %v4044, 0
      %v4114 = vsel %vm4085, %v4045, 0
      %v4117 = vsel %vm4085, %v4046, 0
      %v4120 = vsel %vm4085, %v4047, 0
      %v4123 = vsel %vm4085, %v4048, 0
      %v4126 = vsel %vm4085, %v4049, 0
      %v4129 = vsel %vm4085, %v4050, 0
      %v4132 = vsel %vm4085, %v4051, 0
      %v4135 = vsel %vm4085, %v4052, 0
      %v4138 = vsel %vm4085, %v4053, 0
      %v4141 = vsel %vm4085, %v4054, 0
      %v4144 = vsel %vm4085, %v4055, 0
      %v4147 = vsel %vm4085, %v4056, 0
      %v4150 = vsel %vm4085, %v4057, 0
      %v4153 = vsel %vm4085, %v4058, 0
      %v4156 = vsel %vm4085, %v4059, 0
      %v4159 = vsel %vm4085, %v4060, 0
      %v4162 = vsel %vm4085, %v4061, 0
      %v4165 = vsel %vm4085, %v4062, 0
      %v4168 = vsel %vm4085, %v4063, 0
      %v4171 = vsel %vm4085, %v4064, 0
      %v4174 = vsel %vm4085, %v4065, 0
      %v4177 = vsel %vm4085, %v4066, 0
      %v4180 = vsel %vm4085, %v4067, 0
      %v4183 = vsel %vm1154, %v4080, 0
      %4185 = vmatpush.msra.mxu0 0.0
      %4186 = vmatpush.msra.mxu0 0.0
      %4187 = vmatpush.msra.mxu0 0.0
      %4188 = vmatpush.msra.mxu0 %v4183
      %4189 = vmatpush.msra.mxu0 %v4079
      %4190 = vmatpush.msra.mxu0 %v4078
      %4191 = vmatpush.msra.mxu0 %v4077
      %4192 = vmatpush.msra.mxu0 %v4076
      %4193 = vmatpush.msra.mxu0 %v4075
      %4194 = vmatpush.msra.mxu0 %v4074
      %4195 = vmatpush.msra.mxu0 %v4073
      %4196 = vmatpush.msra.mxu0 %v4072
      %4197 = vmatpush.msra.mxu0 %v4071
      %4198 = vmatpush.msra.mxu0 %v4070
      %4199 = vmatpush.msra.mxu0 %v4069
      %4200 = vmatpush.msra.mxu0 %v4068
      %4201 = vmatmul.f32.gmra.mxu0 %v4087
      %v4202 = vpop.f32.mrf.mxu0
      %v4203 = vadd.f32 %v4083, %v4202
      %4204 = vmatmul.f32.gmra.mxu0 %v4090
      %v4205 = vpop.f32.mrf.mxu0
      %v4206 = vadd.f32 %v4083, %v4205
      %4207 = vmatmul.f32.gmra.mxu0 %v4093
      %v4208 = vpop.f32.mrf.mxu0
      %v4209 = vadd.f32 %v4083, %v4208
      %4210 = vmatmul.f32.gmra.mxu0 %v4096
      %v4211 = vpop.f32.mrf.mxu0
      %v4212 = vadd.f32 %v4083, %v4211
      %4213 = vmatmul.f32.gmra.mxu0 %v4099
      %v4214 = vpop.f32.mrf.mxu0
      %v4215 = vadd.f32 %v4083, %v4214
      %4216 = vmatmul.f32.gmra.mxu0 %v4102
      %v4217 = vpop.f32.mrf.mxu0
      %v4218 = vadd.f32 %v4083, %v4217
      %4219 = vmatmul.f32.gmra.mxu0 %v4105
      %v4220 = vpop.f32.mrf.mxu0
      %v4221 = vadd.f32 %v4083, %v4220
      %4222 = vmatmul.f32.gmra.mxu0 %v4108
      %v4223 = vpop.f32.mrf.mxu0
      %v4224 = vadd.f32 %v4083, %v4223
      %4225 = vmatmul.f32.gmra.mxu0 %v4111
      %v4226 = vpop.f32.mrf.mxu0
      %v4227 = vadd.f32 %v4083, %v4226
      %4228 = vmatmul.f32.gmra.mxu0 %v4114
      %v4229 = vpop.f32.mrf.mxu0
      %v4230 = vadd.f32 %v4083, %v4229
      %4231 = vmatmul.f32.gmra.mxu0 %v4117
      %v4232 = vpop.f32.mrf.mxu0
      %v4233 = vadd.f32 %v4083, %v4232
      %4234 = vmatmul.f32.gmra.mxu0 %v4120
      %v4235 = vpop.f32.mrf.mxu0
      %v4236 = vadd.f32 %v4083, %v4235
      %4237 = vmatmul.f32.gmra.mxu0 %v4123
      %v4238 = vpop.f32.mrf.mxu0
      %v4239 = vadd.f32 %v4083, %v4238
      %4240 = vmatmul.f32.gmra.mxu0 %v4126
      %v4241 = vpop.f32.mrf.mxu0
      %v4242 = vadd.f32 %v4083, %v4241
      %4243 = vmatmul.f32.gmra.mxu0 %v4129
      %v4244 = vpop.f32.mrf.mxu0
      %v4245 = vadd.f32 %v4083, %v4244
      %4246 = vmatmul.f32.gmra.mxu0 %v4132
      %v4247 = vpop.f32.mrf.mxu0
      %v4248 = vadd.f32 %v4083, %v4247
      %4249 = vmatmul.f32.gmra.mxu0 %v4135
      %v4250 = vpop.f32.mrf.mxu0
      %v4251 = vadd.f32 %v4083, %v4250
      %4252 = vmatmul.f32.gmra.mxu0 %v4138
      %v4253 = vpop.f32.mrf.mxu0
      %v4254 = vadd.f32 %v4083, %v4253
      %4255 = vmatmul.f32.gmra.mxu0 %v4141
      %v4256 = vpop.f32.mrf.mxu0
      %v4257 = vadd.f32 %v4083, %v4256
      %4258 = vmatmul.f32.gmra.mxu0 %v4144
      %v4259 = vpop.f32.mrf.mxu0
      %v4260 = vadd.f32 %v4083, %v4259
      %4261 = vmatmul.f32.gmra.mxu0 %v4147
      %v4262 = vpop.f32.mrf.mxu0
      %v4263 = vadd.f32 %v4083, %v4262
      %4264 = vmatmul.f32.gmra.mxu0 %v4150
      %v4265 = vpop.f32.mrf.mxu0
      %v4266 = vadd.f32 %v4083, %v4265
      %4267 = vmatmul.f32.gmra.mxu0 %v4153
      %v4268 = vpop.f32.mrf.mxu0
      %v4269 = vadd.f32 %v4083, %v4268
      %4270 = vmatmul.f32.gmra.mxu0 %v4156
      %v4271 = vpop.f32.mrf.mxu0
      %v4272 = vadd.f32 %v4083, %v4271
      %4273 = vmatmul.f32.gmra.mxu0 %v4159
      %v4274 = vpop.f32.mrf.mxu0
      %v4275 = vadd.f32 %v4083, %v4274
      %4276 = vmatmul.f32.gmra.mxu0 %v4162
      %v4277 = vpop.f32.mrf.mxu0
      %v4278 = vadd.f32 %v4083, %v4277
      %4279 = vmatmul.f32.gmra.mxu0 %v4165
      %v4280 = vpop.f32.mrf.mxu0
      %v4281 = vadd.f32 %v4083, %v4280
      %4282 = vmatmul.f32.gmra.mxu0 %v4168
      %v4283 = vpop.f32.mrf.mxu0
      %v4284 = vadd.f32 %v4083, %v4283
      %4285 = vmatmul.f32.gmra.mxu0 %v4171
      %v4286 = vpop.f32.mrf.mxu0
      %v4287 = vadd.f32 %v4083, %v4286
      %4288 = vmatmul.f32.gmra.mxu0 %v4174
      %v4289 = vpop.f32.mrf.mxu0
      %v4290 = vadd.f32 %v4083, %v4289
      %4291 = vmatmul.f32.gmra.mxu0 %v4177
      %v4292 = vpop.f32.mrf.mxu0
      %v4293 = vadd.f32 %v4083, %v4292
      %4294 = vmatmul.f32.gmra.mxu0 %v4180
      %v4295 = vpop.f32.mrf.mxu0
      %v4296 = vadd.f32 %v4083, %v4295
      %4297 = vdwg.mxu0
      %v4298 = vmax.f32 %v4203, 0.0
      %v4299 = vmax.f32 %v4206, 0.0
      %v4300 = vmax.f32 %v4209, 0.0
      %v4301 = vmax.f32 %v4212, 0.0
      %v4302 = vmax.f32 %v4215, 0.0
      %v4303 = vmax.f32 %v4218, 0.0
      %v4304 = vmax.f32 %v4221, 0.0
      %v4305 = vmax.f32 %v4224, 0.0
      %v4306 = vmax.f32 %v4227, 0.0
      %v4307 = vmax.f32 %v4230, 0.0
      %v4308 = vmax.f32 %v4233, 0.0
      %v4309 = vmax.f32 %v4236, 0.0
      %v4310 = vmax.f32 %v4239, 0.0
      %v4311 = vmax.f32 %v4242, 0.0
      %v4312 = vmax.f32 %v4245, 0.0
      %v4313 = vmax.f32 %v4248, 0.0
      %v4314 = vmax.f32 %v4251, 0.0
      %v4315 = vmax.f32 %v4254, 0.0
      %v4316 = vmax.f32 %v4257, 0.0
      %v4317 = vmax.f32 %v4260, 0.0
      %v4318 = vmax.f32 %v4263, 0.0
      %v4319 = vmax.f32 %v4266, 0.0
      %v4320 = vmax.f32 %v4269, 0.0
      %v4321 = vmax.f32 %v4272, 0.0
      %v4322 = vmax.f32 %v4275, 0.0
      %v4323 = vmax.f32 %v4278, 0.0
      %v4324 = vmax.f32 %v4281, 0.0
      %v4325 = vmax.f32 %v4284, 0.0
      %v4326 = vmax.f32 %v4287, 0.0
      %v4327 = vmax.f32 %v4290, 0.0
      %v4328 = vmax.f32 %v4293, 0.0
      %v4329 = vmax.f32 %v4296, 0.0
      %vm4330 = vcmask 64512
      %4331 = vst.msk [vmem:[#allocation3] sm:$0xff] %vm4330, 0.0
      %4332 = vst.msk [vmem:[#allocation3 + $0x8] sm:$0xff] %vm4330, 0.0
      %vm4333 = vcmask 60416
      %4334 = vst.msk [vmem:[#allocation3 + $0x10] sm:$0xf] %vm4333, 0.0
      %4335 = vst.msk [vmem:[#allocation3 + $0x18] sm:$0xff] %vm4330, 0.0
      %4336 = vst.msk [vmem:[#allocation3 + $0x20] sm:$0xff] %vm4330, 0.0
      %4337 = vst.msk [vmem:[#allocation3 + $0x28] sm:$0xf] %vm4333, 0.0
      %4338 = vst.msk [vmem:[#allocation3 + $0x30] sm:$0xff] %vm4330, 0.0
      %4339 = vst.msk [vmem:[#allocation3 + $0x38] sm:$0xff] %vm4330, 0.0
      %4340 = vst.msk [vmem:[#allocation3 + $0x40] sm:$0xf] %vm4333, 0.0
      %4341 = vst.msk [vmem:[#allocation3 + $0x48] sm:$0xff] %vm4330, 0.0
      %4342 = vst.msk [vmem:[#allocation3 + $0x50] sm:$0xff] %vm4330, 0.0
      %4343 = vst.msk [vmem:[#allocation3 + $0x58] sm:$0xf] %vm4333, 0.0
      %4344 = vst.msk [vmem:[#allocation3 + $0x60] sm:$0xff] %vm4330, 0.0
      %4345 = vst.msk [vmem:[#allocation3 + $0x68] sm:$0xff] %vm4330, 0.0
      %4346 = vst.msk [vmem:[#allocation3 + $0x70] sm:$0xf] %vm4333, 0.0
      %4347 = vst.msk [vmem:[#allocation3 + $0x78] sm:$0xff] %vm4330, 0.0
      %4348 = vst.msk [vmem:[#allocation3 + $0x80] sm:$0xff] %vm4330, 0.0
      %4349 = vst.msk [vmem:[#allocation3 + $0x88] sm:$0xf] %vm4333, 0.0
      %4350 = vst.msk [vmem:[#allocation3 + $0x90] sm:$0xff] %vm4330, 0.0
      %4351 = vst.msk [vmem:[#allocation3 + $0x98] sm:$0xff] %vm4330, 0.0
      %4352 = vst.msk [vmem:[#allocation3 + $0xa0] sm:$0xf] %vm4333, 0.0
      %4353 = vst.msk [vmem:[#allocation3 + $0xa8] sm:$0xff] %vm4330, 0.0
      %4354 = vst.msk [vmem:[#allocation3 + $0xb0] sm:$0xff] %vm4330, 0.0
      %4355 = vst.msk [vmem:[#allocation3 + $0xb8] sm:$0xf] %vm4333, 0.0
      %4356 = vst.msk [vmem:[#allocation3 + $0xc0] sm:$0xff] %vm4330, 0.0
      %4357 = vst.msk [vmem:[#allocation3 + $0xc8] sm:$0xff] %vm4330, 0.0
      %4358 = vst.msk [vmem:[#allocation3 + $0xd0] sm:$0xf] %vm4333, 0.0
      %4359 = vst.msk [vmem:[#allocation3 + $0xd8] sm:$0xff] %vm4330, 0.0
      %4360 = vst.msk [vmem:[#allocation3 + $0xe0] sm:$0xff] %vm4330, 0.0
      %4361 = vst.msk [vmem:[#allocation3 + $0xe8] sm:$0xf] %vm4333, 0.0
      %4362 = vst.msk [vmem:[#allocation3 + $0xf0] sm:$0xff] %vm4330, 0.0
      %4363 = vst.msk [vmem:[#allocation3 + $0xf8] sm:$0xff] %vm4330, 0.0
      %4364 = vst.msk [vmem:[#allocation3 + $0x100] sm:$0xf] %vm4333, 0.0
      %4365 = vst.msk [vmem:[#allocation3 + $0x108] sm:$0xff] %vm4330, 0.0
      %4366 = vst.msk [vmem:[#allocation3 + $0x110] sm:$0xff] %vm4330, 0.0
      %4367 = vst.msk [vmem:[#allocation3 + $0x118] sm:$0xf] %vm4333, 0.0
      %4368 = vst.msk [vmem:[#allocation3 + $0x120] sm:$0xff] %vm4330, 0.0
      %4369 = vst.msk [vmem:[#allocation3 + $0x128] sm:$0xff] %vm4330, 0.0
      %4370 = vst.msk [vmem:[#allocation3 + $0x130] sm:$0xf] %vm4333, 0.0
      %4371 = vst.msk [vmem:[#allocation3 + $0x138] sm:$0xff] %vm4330, 0.0
      %4372 = vst.msk [vmem:[#allocation3 + $0x140] sm:$0xff] %vm4330, 0.0
      %4373 = vst.msk [vmem:[#allocation3 + $0x148] sm:$0xf] %vm4333, 0.0
      %4374 = vst.msk [vmem:[#allocation3 + $0x150] sm:$0xff] %vm4330, 0.0
      %4375 = vst.msk [vmem:[#allocation3 + $0x158] sm:$0xff] %vm4330, 0.0
      %4376 = vst.msk [vmem:[#allocation3 + $0x160] sm:$0xf] %vm4333, 0.0
      %4377 = vst.msk [vmem:[#allocation3 + $0x168] sm:$0xff] %vm4330, 0.0
      %4378 = vst.msk [vmem:[#allocation3 + $0x170] sm:$0xff] %vm4330, 0.0
      %4379 = vst.msk [vmem:[#allocation3 + $0x178] sm:$0xf] %vm4333, 0.0
      %4380 = vst.msk [vmem:[#allocation3 + $0x180] sm:$0xff] %vm4330, 0.0
      %4381 = vst.msk [vmem:[#allocation3 + $0x188] sm:$0xff] %vm4330, 0.0
      %4382 = vst.msk [vmem:[#allocation3 + $0x190] sm:$0xf] %vm4333, 0.0
      %4383 = vst.msk [vmem:[#allocation3 + $0x198] sm:$0xff] %vm4330, 0.0
      %4384 = vst.msk [vmem:[#allocation3 + $0x1a0] sm:$0xff] %vm4330, 0.0
      %4385 = vst.msk [vmem:[#allocation3 + $0x1a8] sm:$0xf] %vm4333, 0.0
      %4386 = vst.msk [vmem:[#allocation3 + $0x1b0] sm:$0xff] %vm4330, 0.0
      %4387 = vst.msk [vmem:[#allocation3 + $0x1b8] sm:$0xff] %vm4330, 0.0
      %4388 = vst.msk [vmem:[#allocation3 + $0x1c0] sm:$0xf] %vm4333, 0.0
      %4389 = vst.msk [vmem:[#allocation3 + $0x1c8] sm:$0xff] %vm4330, 0.0
      %4390 = vst.msk [vmem:[#allocation3 + $0x1d0] sm:$0xff] %vm4330, 0.0
      %4391 = vst.msk [vmem:[#allocation3 + $0x1d8] sm:$0xf] %vm4333, 0.0
      %s4392 = scalar_lea.vmem [#allocation3], 48
      %4393 = vst.msk [vmem:[%s4392 + $0x2] sm:$0xff] %vm4330, %v4298
      %4394 = vst.msk [vmem:[%s4392 + $0xa] sm:$0xff] %vm4330, %v4299
      %4395 = vst.msk [vmem:[%s4392 + $0x1a] sm:$0xff] %vm4330, %v4300
      %4396 = vst.msk [vmem:[%s4392 + $0x22] sm:$0xff] %vm4330, %v4301
      %4397 = vst.msk [vmem:[%s4392 + $0x32] sm:$0xff] %vm4330, %v4302
      %4398 = vst.msk [vmem:[%s4392 + $0x3a] sm:$0xff] %vm4330, %v4303
      %4399 = vst.msk [vmem:[%s4392 + $0x4a] sm:$0xff] %vm4330, %v4304
      %4400 = vst.msk [vmem:[%s4392 + $0x52] sm:$0xff] %vm4330, %v4305
      %4401 = vst.msk [vmem:[%s4392 + $0x62] sm:$0xff] %vm4330, %v4306
      %4402 = vst.msk [vmem:[%s4392 + $0x6a] sm:$0xff] %vm4330, %v4307
      %4403 = vst.msk [vmem:[%s4392 + $0x7a] sm:$0xff] %vm4330, %v4308
      %4404 = vst.msk [vmem:[%s4392 + $0x82] sm:$0xff] %vm4330, %v4309
      %4405 = vst.msk [vmem:[%s4392 + $0x92] sm:$0xff] %vm4330, %v4310
      %4406 = vst.msk [vmem:[%s4392 + $0x9a] sm:$0xff] %vm4330, %v4311
      %4407 = vst.msk [vmem:[%s4392 + $0xaa] sm:$0xff] %vm4330, %v4312
      %4408 = vst.msk [vmem:[%s4392 + $0xb2] sm:$0xff] %vm4330, %v4313
      %4409 = vst.msk [vmem:[%s4392 + $0xc2] sm:$0xff] %vm4330, %v4314
      %4410 = vst.msk [vmem:[%s4392 + $0xca] sm:$0xff] %vm4330, %v4315
      %4411 = vst.msk [vmem:[%s4392 + $0xda] sm:$0xff] %vm4330, %v4316
      %4412 = vst.msk [vmem:[%s4392 + $0xe2] sm:$0xff] %vm4330, %v4317
      %4413 = vst.msk [vmem:[%s4392 + $0xf2] sm:$0xff] %vm4330, %v4318
      %4414 = vst.msk [vmem:[%s4392 + $0xfa] sm:$0xff] %vm4330, %v4319
      %4415 = vst.msk [vmem:[%s4392 + $0x10a] sm:$0xff] %vm4330, %v4320
      %4416 = vst.msk [vmem:[%s4392 + $0x112] sm:$0xff] %vm4330, %v4321
      %4417 = vst.msk [vmem:[%s4392 + $0x122] sm:$0xff] %vm4330, %v4322
      %4418 = vst.msk [vmem:[%s4392 + $0x12a] sm:$0xff] %vm4330, %v4323
      %4419 = vst.msk [vmem:[%s4392 + $0x13a] sm:$0xff] %vm4330, %v4324
      %4420 = vst.msk [vmem:[%s4392 + $0x142] sm:$0xff] %vm4330, %v4325
      %4421 = vst.msk [vmem:[%s4392 + $0x152] sm:$0xff] %vm4330, %v4326
      %4422 = vst.msk [vmem:[%s4392 + $0x15a] sm:$0xff] %vm4330, %v4327
      %4423 = vst.msk [vmem:[%s4392 + $0x16a] sm:$0xff] %vm4330, %v4328
      %4424 = vst.msk [vmem:[%s4392 + $0x172] sm:$0xff] %vm4330, %v4329
      %v4425 = vld [vmem:[#allocation3] sm:$0xff]
      %v4426 = vld [vmem:[#allocation3 + $0x8] sm:$0xff]
      %v4427 = vld [vmem:[#allocation3 + $0x10] sm:$0xf]
      %v4428 = vld [vmem:[#allocation3 + $0x18] sm:$0xff]
      %v4429 = vld [vmem:[#allocation3 + $0x20] sm:$0xff]
      %v4430 = vld [vmem:[#allocation3 + $0x28] sm:$0xf]
      %v4431 = vld [vmem:[#allocation3 + $0x30] sm:$0xff]
      %v4432 = vld [vmem:[#allocation3 + $0x38] sm:$0xff]
      %v4433 = vld [vmem:[#allocation3 + $0x40] sm:$0xf]
      %v4434 = vld [vmem:[#allocation3 + $0x48] sm:$0xff]
      %v4435 = vld [vmem:[#allocation3 + $0x50] sm:$0xff]
      %v4436 = vld [vmem:[#allocation3 + $0x58] sm:$0xf]
      %v4437 = vld [vmem:[#allocation3 + $0x60] sm:$0xff]
      %v4438 = vld [vmem:[#allocation3 + $0x68] sm:$0xff]
      %v4439 = vld [vmem:[#allocation3 + $0x70] sm:$0xf]
      %v4440 = vld [vmem:[#allocation3 + $0x78] sm:$0xff]
      %v4441 = vld [vmem:[#allocation3 + $0x80] sm:$0xff]
      %v4442 = vld [vmem:[#allocation3 + $0x88] sm:$0xf]
      %v4443 = vld [vmem:[#allocation3 + $0x90] sm:$0xff]
      %v4444 = vld [vmem:[#allocation3 + $0x98] sm:$0xff]
      %v4445 = vld [vmem:[#allocation3 + $0xa0] sm:$0xf]
      %v4446 = vld [vmem:[#allocation3 + $0xa8] sm:$0xff]
      %v4447 = vld [vmem:[#allocation3 + $0xb0] sm:$0xff]
      %v4448 = vld [vmem:[#allocation3 + $0xb8] sm:$0xf]
      %v4449 = vld [vmem:[#allocation3 + $0xc0] sm:$0xff]
      %v4450 = vld [vmem:[#allocation3 + $0xc8] sm:$0xff]
      %v4451 = vld [vmem:[#allocation3 + $0xd0] sm:$0xf]
      %v4452 = vld [vmem:[#allocation3 + $0xd8] sm:$0xff]
      %v4453 = vld [vmem:[#allocation3 + $0xe0] sm:$0xff]
      %v4454 = vld [vmem:[#allocation3 + $0xe8] sm:$0xf]
      %v4455 = vld [vmem:[#allocation3 + $0xf0] sm:$0xff]
      %v4456 = vld [vmem:[#allocation3 + $0xf8] sm:$0xff]
      %v4457 = vld [vmem:[#allocation3 + $0x100] sm:$0xf]
      %v4458 = vld [vmem:[#allocation3 + $0x108] sm:$0xff]
      %v4459 = vld [vmem:[#allocation3 + $0x110] sm:$0xff]
      %v4460 = vld [vmem:[#allocation3 + $0x118] sm:$0xf]
      %v4461 = vld [vmem:[#allocation3 + $0x120] sm:$0xff]
      %v4462 = vld [vmem:[#allocation3 + $0x128] sm:$0xff]
      %v4463 = vld [vmem:[#allocation3 + $0x130] sm:$0xf]
      %v4464 = vld [vmem:[#allocation3 + $0x138] sm:$0xff]
      %v4465 = vld [vmem:[#allocation3 + $0x140] sm:$0xff]
      %v4466 = vld [vmem:[#allocation3 + $0x148] sm:$0xf]
      %v4467 = vld [vmem:[#allocation3 + $0x150] sm:$0xff]
      %v4468 = vld [vmem:[#allocation3 + $0x158] sm:$0xff]
      %v4469 = vld [vmem:[#allocation3 + $0x160] sm:$0xf]
      %v4470 = vld [vmem:[#allocation3 + $0x168] sm:$0xff]
      %v4471 = vld [vmem:[#allocation3 + $0x170] sm:$0xff]
      %v4472 = vld [vmem:[#allocation3 + $0x178] sm:$0xf]
      %v4473 = vld [vmem:[#allocation3 + $0x180] sm:$0xff]
      %v4474 = vld [vmem:[#allocation3 + $0x188] sm:$0xff]
      %v4475 = vld [vmem:[#allocation3 + $0x190] sm:$0xf]
      %v4476 = vld [vmem:[#allocation3 + $0x198] sm:$0xff]
      %v4477 = vld [vmem:[#allocation3 + $0x1a0] sm:$0xff]
      %v4478 = vld [vmem:[#allocation3 + $0x1a8] sm:$0xf]
      %v4479 = vld [vmem:[#allocation3 + $0x1b0] sm:$0xff]
      %v4480 = vld [vmem:[#allocation3 + $0x1b8] sm:$0xff]
      %v4481 = vld [vmem:[#allocation3 + $0x1c0] sm:$0xf]
      %v4482 = vld [vmem:[#allocation3 + $0x1c8] sm:$0xff]
      %v4483 = vld [vmem:[#allocation3 + $0x1d0] sm:$0xff]
      %v4484 = vld [vmem:[#allocation3 + $0x1d8] sm:$0xf]
      %4485 = vst.msk [vmem:[#allocation5] sm:$0xff] %vm4330, %v4425
      %4486 = vst.msk [vmem:[#allocation5 + $0x10] sm:$0xff] %vm4330, %v4426
      %4487 = vst.msk [vmem:[#allocation5 + $0x20] sm:$0xff] %vm4330, %v4428
      %4488 = vst.msk [vmem:[#allocation5 + $0x30] sm:$0xff] %vm4330, %v4429
      %4489 = vst.msk [vmem:[#allocation5 + $0x40] sm:$0xff] %vm4330, %v4431
      %4490 = vst.msk [vmem:[#allocation5 + $0x50] sm:$0xff] %vm4330, %v4432
      %4491 = vst.msk [vmem:[#allocation5 + $0x60] sm:$0xff] %vm4330, %v4434
      %4492 = vst.msk [vmem:[#allocation5 + $0x70] sm:$0xff] %vm4330, %v4435
      %4493 = vst.msk [vmem:[#allocation5 + $0x80] sm:$0xff] %vm4330, %v4437
      %4494 = vst.msk [vmem:[#allocation5 + $0x90] sm:$0xff] %vm4330, %v4438
      %4495 = vst.msk [vmem:[#allocation5 + $0xa0] sm:$0xff] %vm4330, %v4440
      %4496 = vst.msk [vmem:[#allocation5 + $0xb0] sm:$0xff] %vm4330, %v4441
      %4497 = vst.msk [vmem:[#allocation5 + $0xc0] sm:$0xff] %vm4330, %v4443
      %4498 = vst.msk [vmem:[#allocation5 + $0xd0] sm:$0xff] %vm4330, %v4444
      %4499 = vst.msk [vmem:[#allocation5 + $0xe0] sm:$0xff] %vm4330, %v4446
      %4500 = vst.msk [vmem:[#allocation5 + $0xf0] sm:$0xff] %vm4330, %v4447
      %4501 = vst.msk [vmem:[#allocation5 + $0x100] sm:$0xff] %vm4330, %v4449
      %4502 = vst.msk [vmem:[#allocation5 + $0x110] sm:$0xff] %vm4330, %v4450
      %4503 = vst.msk [vmem:[#allocation5 + $0x120] sm:$0xff] %vm4330, %v4452
      %4504 = vst.msk [vmem:[#allocation5 + $0x130] sm:$0xff] %vm4330, %v4453
      %4505 = vst.msk [vmem:[#allocation5 + $0x140] sm:$0xff] %vm4330, %v4455
      %4506 = vst.msk [vmem:[#allocation5 + $0x150] sm:$0xff] %vm4330, %v4456
      %4507 = vst.msk [vmem:[#allocation5 + $0x160] sm:$0xff] %vm4330, %v4458
      %4508 = vst.msk [vmem:[#allocation5 + $0x170] sm:$0xff] %vm4330, %v4459
      %4509 = vst.msk [vmem:[#allocation5 + $0x180] sm:$0xff] %vm4330, %v4461
      %4510 = vst.msk [vmem:[#allocation5 + $0x190] sm:$0xff] %vm4330, %v4462
      %4511 = vst.msk [vmem:[#allocation5 + $0x1a0] sm:$0xff] %vm4330, %v4464
      %4512 = vst.msk [vmem:[#allocation5 + $0x1b0] sm:$0xff] %vm4330, %v4465
      %4513 = vst.msk [vmem:[#allocation5 + $0x1c0] sm:$0xff] %vm4330, %v4467
      %4514 = vst.msk [vmem:[#allocation5 + $0x1d0] sm:$0xff] %vm4330, %v4468
      %4515 = vst.msk [vmem:[#allocation5 + $0x1e0] sm:$0xff] %vm4330, %v4470
      %4516 = vst.msk [vmem:[#allocation5 + $0x1f0] sm:$0xff] %vm4330, %v4471
      %v4565 = vrot.slane %v4425, 1
      %v4566 = vrot.slane %v4426, 1
      %v4567 = vsel %vm524, %v4565, %v4566
      %v4568 = vrot.slane %v4427, 1
      %v4569 = vsel %vm524, %v4566, %v4568
      %v4570 = vrot.slane %v4428, 1
      %v4571 = vrot.slane %v4429, 1
      %v4572 = vsel %vm524, %v4570, %v4571
      %v4573 = vrot.slane %v4430, 1
      %v4574 = vsel %vm524, %v4571, %v4573
      %v4575 = vrot.slane %v4431, 1
      %v4576 = vrot.slane %v4432, 1
      %v4577 = vsel %vm524, %v4575, %v4576
      %v4578 = vrot.slane %v4433, 1
      %v4579 = vsel %vm524, %v4576, %v4578
      %v4580 = vrot.slane %v4434, 1
      %v4581 = vrot.slane %v4435, 1
      %v4582 = vsel %vm524, %v4580, %v4581
      %v4583 = vrot.slane %v4436, 1
      %v4584 = vsel %vm524, %v4581, %v4583
      %v4585 = vrot.slane %v4437, 1
      %v4586 = vrot.slane %v4438, 1
      %v4587 = vsel %vm524, %v4585, %v4586
      %v4588 = vrot.slane %v4439, 1
      %v4589 = vsel %vm524, %v4586, %v4588
      %v4590 = vrot.slane %v4440, 1
      %v4591 = vrot.slane %v4441, 1
      %v4592 = vsel %vm524, %v4590, %v4591
      %v4593 = vrot.slane %v4442, 1
      %v4594 = vsel %vm524, %v4591, %v4593
      %v4595 = vrot.slane %v4443, 1
      %v4596 = vrot.slane %v4444, 1
      %v4597 = vsel %vm524, %v4595, %v4596
      %v4598 = vrot.slane %v4445, 1
      %v4599 = vsel %vm524, %v4596, %v4598
      %v4600 = vrot.slane %v4446, 1
      %v4601 = vrot.slane %v4447, 1
      %v4602 = vsel %vm524, %v4600, %v4601
      %v4603 = vrot.slane %v4448, 1
      %v4604 = vsel %vm524, %v4601, %v4603
      %v4605 = vrot.slane %v4449, 1
      %v4606 = vrot.slane %v4450, 1
      %v4607 = vsel %vm524, %v4605, %v4606
      %v4608 = vrot.slane %v4451, 1
      %v4609 = vsel %vm524, %v4606, %v4608
      %v4610 = vrot.slane %v4452, 1
      %v4611 = vrot.slane %v4453, 1
      %v4612 = vsel %vm524, %v4610, %v4611
      %v4613 = vrot.slane %v4454, 1
      %v4614 = vsel %vm524, %v4611, %v4613
      %v4615 = vrot.slane %v4455, 1
      %v4616 = vrot.slane %v4456, 1
      %v4617 = vsel %vm524, %v4615, %v4616
      %v4618 = vrot.slane %v4457, 1
      %v4619 = vsel %vm524, %v4616, %v4618
      %v4620 = vrot.slane %v4458, 1
      %v4621 = vrot.slane %v4459, 1
      %v4622 = vsel %vm524, %v4620, %v4621
      %v4623 = vrot.slane %v4460, 1
      %v4624 = vsel %vm524, %v4621, %v4623
      %v4625 = vrot.slane %v4461, 1
      %v4626 = vrot.slane %v4462, 1
      %v4627 = vsel %vm524, %v4625, %v4626
      %v4628 = vrot.slane %v4463, 1
      %v4629 = vsel %vm524, %v4626, %v4628
      %v4630 = vrot.slane %v4464, 1
      %v4631 = vrot.slane %v4465, 1
      %v4632 = vsel %vm524, %v4630, %v4631
      %v4633 = vrot.slane %v4466, 1
      %v4634 = vsel %vm524, %v4631, %v4633
      %v4635 = vrot.slane %v4467, 1
      %v4636 = vrot.slane %v4468, 1
      %v4637 = vsel %vm524, %v4635, %v4636
      %v4638 = vrot.slane %v4469, 1
      %v4639 = vsel %vm524, %v4636, %v4638
      %v4640 = vrot.slane %v4470, 1
      %v4641 = vrot.slane %v4471, 1
      %v4642 = vsel %vm524, %v4640, %v4641
      %v4643 = vrot.slane %v4472, 1
      %v4644 = vsel %vm524, %v4641, %v4643
      %4645 = vrot.lane.b32.xlu0 %v4567, 8
      %v4646 = vpop.permute.xlu0 %4645
      %4647 = vrot.lane.b32.xlu0 %v4569, 8
      %v4648 = vpop.permute.xlu0 %4647
      %4649 = vrot.lane.b32.xlu0 %v4572, 8
      %v4650 = vpop.permute.xlu0 %4649
      %4651 = vrot.lane.b32.xlu0 %v4574, 8
      %v4652 = vpop.permute.xlu0 %4651
      %4653 = vrot.lane.b32.xlu0 %v4577, 8
      %v4654 = vpop.permute.xlu0 %4653
      %4655 = vrot.lane.b32.xlu0 %v4579, 8
      %v4656 = vpop.permute.xlu0 %4655
      %4657 = vrot.lane.b32.xlu0 %v4582, 8
      %v4658 = vpop.permute.xlu0 %4657
      %4659 = vrot.lane.b32.xlu0 %v4584, 8
      %v4660 = vpop.permute.xlu0 %4659
      %4661 = vrot.lane.b32.xlu0 %v4587, 8
      %v4662 = vpop.permute.xlu0 %4661
      %4663 = vrot.lane.b32.xlu0 %v4589, 8
      %v4664 = vpop.permute.xlu0 %4663
      %4665 = vrot.lane.b32.xlu0 %v4592, 8
      %v4666 = vpop.permute.xlu0 %4665
      %4667 = vrot.lane.b32.xlu0 %v4594, 8
      %v4668 = vpop.permute.xlu0 %4667
      %4669 = vrot.lane.b32.xlu0 %v4597, 8
      %v4670 = vpop.permute.xlu0 %4669
      %4671 = vrot.lane.b32.xlu0 %v4599, 8
      %v4672 = vpop.permute.xlu0 %4671
      %4673 = vrot.lane.b32.xlu0 %v4602, 8
      %v4674 = vpop.permute.xlu0 %4673
      %4675 = vrot.lane.b32.xlu0 %v4604, 8
      %v4676 = vpop.permute.xlu0 %4675
      %4677 = vrot.lane.b32.xlu0 %v4607, 8
      %v4678 = vpop.permute.xlu0 %4677
      %4679 = vrot.lane.b32.xlu0 %v4609, 8
      %v4680 = vpop.permute.xlu0 %4679
      %4681 = vrot.lane.b32.xlu0 %v4612, 8
      %v4682 = vpop.permute.xlu0 %4681
      %4683 = vrot.lane.b32.xlu0 %v4614, 8
      %v4684 = vpop.permute.xlu0 %4683
      %4685 = vrot.lane.b32.xlu0 %v4617, 8
      %v4686 = vpop.permute.xlu0 %4685
      %4687 = vrot.lane.b32.xlu0 %v4619, 8
      %v4688 = vpop.permute.xlu0 %4687
      %4689 = vrot.lane.b32.xlu0 %v4622, 8
      %v4690 = vpop.permute.xlu0 %4689
      %4691 = vrot.lane.b32.xlu0 %v4624, 8
      %v4692 = vpop.permute.xlu0 %4691
      %4693 = vrot.lane.b32.xlu0 %v4627, 8
      %v4694 = vpop.permute.xlu0 %4693
      %4695 = vrot.lane.b32.xlu0 %v4629, 8
      %v4696 = vpop.permute.xlu0 %4695
      %4697 = vrot.lane.b32.xlu0 %v4632, 8
      %v4698 = vpop.permute.xlu0 %4697
      %4699 = vrot.lane.b32.xlu0 %v4634, 8
      %v4700 = vpop.permute.xlu0 %4699
      %4701 = vrot.lane.b32.xlu0 %v4637, 8
      %v4702 = vpop.permute.xlu0 %4701
      %4703 = vrot.lane.b32.xlu0 %v4639, 8
      %v4704 = vpop.permute.xlu0 %4703
      %4705 = vrot.lane.b32.xlu0 %v4642, 8
      %v4706 = vpop.permute.xlu0 %4705
      %4707 = vrot.lane.b32.xlu0 %v4644, 8
      %v4708 = vpop.permute.xlu0 %4707
      %vm4741 = vcmask 130112
      %4742 = vst.msk [vmem:[#allocation5] sm:$0xff] %vm4741, %v4646
      %4743 = vst.msk [vmem:[#allocation5 + $0x10] sm:$0xff] %vm4741, %v4648
      %4744 = vst.msk [vmem:[#allocation5 + $0x20] sm:$0xff] %vm4741, %v4650
      %4745 = vst.msk [vmem:[#allocation5 + $0x30] sm:$0xff] %vm4741, %v4652
      %4746 = vst.msk [vmem:[#allocation5 + $0x40] sm:$0xff] %vm4741, %v4654
      %4747 = vst.msk [vmem:[#allocation5 + $0x50] sm:$0xff] %vm4741, %v4656
      %4748 = vst.msk [vmem:[#allocation5 + $0x60] sm:$0xff] %vm4741, %v4658
      %4749 = vst.msk [vmem:[#allocation5 + $0x70] sm:$0xff] %vm4741, %v4660
      %4750 = vst.msk [vmem:[#allocation5 + $0x80] sm:$0xff] %vm4741, %v4662
      %4751 = vst.msk [vmem:[#allocation5 + $0x90] sm:$0xff] %vm4741, %v4664
      %4752 = vst.msk [vmem:[#allocation5 + $0xa0] sm:$0xff] %vm4741, %v4666
      %4753 = vst.msk [vmem:[#allocation5 + $0xb0] sm:$0xff] %vm4741, %v4668
      %4754 = vst.msk [vmem:[#allocation5 + $0xc0] sm:$0xff] %vm4741, %v4670
      %4755 = vst.msk [vmem:[#allocation5 + $0xd0] sm:$0xff] %vm4741, %v4672
      %4756 = vst.msk [vmem:[#allocation5 + $0xe0] sm:$0xff] %vm4741, %v4674
      %4757 = vst.msk [vmem:[#allocation5 + $0xf0] sm:$0xff] %vm4741, %v4676
      %4758 = vst.msk [vmem:[#allocation5 + $0x100] sm:$0xff] %vm4741, %v4678
      %4759 = vst.msk [vmem:[#allocation5 + $0x110] sm:$0xff] %vm4741, %v4680
      %4760 = vst.msk [vmem:[#allocation5 + $0x120] sm:$0xff] %vm4741, %v4682
      %4761 = vst.msk [vmem:[#allocation5 + $0x130] sm:$0xff] %vm4741, %v4684
      %4762 = vst.msk [vmem:[#allocation5 + $0x140] sm:$0xff] %vm4741, %v4686
      %4763 = vst.msk [vmem:[#allocation5 + $0x150] sm:$0xff] %vm4741, %v4688
      %4764 = vst.msk [vmem:[#allocation5 + $0x160] sm:$0xff] %vm4741, %v4690
      %4765 = vst.msk [vmem:[#allocation5 + $0x170] sm:$0xff] %vm4741, %v4692
      %4766 = vst.msk [vmem:[#allocation5 + $0x180] sm:$0xff] %vm4741, %v4694
      %4767 = vst.msk [vmem:[#allocation5 + $0x190] sm:$0xff] %vm4741, %v4696
      %4768 = vst.msk [vmem:[#allocation5 + $0x1a0] sm:$0xff] %vm4741, %v4698
      %4769 = vst.msk [vmem:[#allocation5 + $0x1b0] sm:$0xff] %vm4741, %v4700
      %4770 = vst.msk [vmem:[#allocation5 + $0x1c0] sm:$0xff] %vm4741, %v4702
      %4771 = vst.msk [vmem:[#allocation5 + $0x1d0] sm:$0xff] %vm4741, %v4704
      %4772 = vst.msk [vmem:[#allocation5 + $0x1e0] sm:$0xff] %vm4741, %v4706
      %4773 = vst.msk [vmem:[#allocation5 + $0x1f0] sm:$0xff] %vm4741, %v4708
      %v4774 = vrot.slane %v4425, 2
      %v4775 = vrot.slane %v4426, 2
      %v4776 = vsel %vm734, %v4774, %v4775
      %v4777 = vrot.slane %v4427, 2
      %v4778 = vsel %vm734, %v4775, %v4777
      %v4779 = vrot.slane %v4428, 2
      %v4780 = vrot.slane %v4429, 2
      %v4781 = vsel %vm734, %v4779, %v4780
      %v4782 = vrot.slane %v4430, 2
      %v4783 = vsel %vm734, %v4780, %v4782
      %v4784 = vrot.slane %v4431, 2
      %v4785 = vrot.slane %v4432, 2
      %v4786 = vsel %vm734, %v4784, %v4785
      %v4787 = vrot.slane %v4433, 2
      %v4788 = vsel %vm734, %v4785, %v4787
      %v4789 = vrot.slane %v4434, 2
      %v4790 = vrot.slane %v4435, 2
      %v4791 = vsel %vm734, %v4789, %v4790
      %v4792 = vrot.slane %v4436, 2
      %v4793 = vsel %vm734, %v4790, %v4792
      %v4794 = vrot.slane %v4437, 2
      %v4795 = vrot.slane %v4438, 2
      %v4796 = vsel %vm734, %v4794, %v4795
      %v4797 = vrot.slane %v4439, 2
      %v4798 = vsel %vm734, %v4795, %v4797
      %v4799 = vrot.slane %v4440, 2
      %v4800 = vrot.slane %v4441, 2
      %v4801 = vsel %vm734, %v4799, %v4800
      %v4802 = vrot.slane %v4442, 2
      %v4803 = vsel %vm734, %v4800, %v4802
      %v4804 = vrot.slane %v4443, 2
      %v4805 = vrot.slane %v4444, 2
      %v4806 = vsel %vm734, %v4804, %v4805
      %v4807 = vrot.slane %v4445, 2
      %v4808 = vsel %vm734, %v4805, %v4807
      %v4809 = vrot.slane %v4446, 2
      %v4810 = vrot.slane %v4447, 2
      %v4811 = vsel %vm734, %v4809, %v4810
      %v4812 = vrot.slane %v4448, 2
      %v4813 = vsel %vm734, %v4810, %v4812
      %v4814 = vrot.slane %v4449, 2
      %v4815 = vrot.slane %v4450, 2
      %v4816 = vsel %vm734, %v4814, %v4815
      %v4817 = vrot.slane %v4451, 2
      %v4818 = vsel %vm734, %v4815, %v4817
      %v4819 = vrot.slane %v4452, 2
      %v4820 = vrot.slane %v4453, 2
      %v4821 = vsel %vm734, %v4819, %v4820
      %v4822 = vrot.slane %v4454, 2
      %v4823 = vsel %vm734, %v4820, %v4822
      %v4824 = vrot.slane %v4455, 2
      %v4825 = vrot.slane %v4456, 2
      %v4826 = vsel %vm734, %v4824, %v4825
      %v4827 = vrot.slane %v4457, 2
      %v4828 = vsel %vm734, %v4825, %v4827
      %v4829 = vrot.slane %v4458, 2
      %v4830 = vrot.slane %v4459, 2
      %v4831 = vsel %vm734, %v4829, %v4830
      %v4832 = vrot.slane %v4460, 2
      %v4833 = vsel %vm734, %v4830, %v4832
      %v4834 = vrot.slane %v4461, 2
      %v4835 = vrot.slane %v4462, 2
      %v4836 = vsel %vm734, %v4834, %v4835
      %v4837 = vrot.slane %v4463, 2
      %v4838 = vsel %vm734, %v4835, %v4837
      %v4839 = vrot.slane %v4464, 2
      %v4840 = vrot.slane %v4465, 2
      %v4841 = vsel %vm734, %v4839, %v4840
      %v4842 = vrot.slane %v4466, 2
      %v4843 = vsel %vm734, %v4840, %v4842
      %v4844 = vrot.slane %v4467, 2
      %v4845 = vrot.slane %v4468, 2
      %v4846 = vsel %vm734, %v4844, %v4845
      %v4847 = vrot.slane %v4469, 2
      %v4848 = vsel %vm734, %v4845, %v4847
      %v4849 = vrot.slane %v4470, 2
      %v4850 = vrot.slane %v4471, 2
      %v4851 = vsel %vm734, %v4849, %v4850
      %v4852 = vrot.slane %v4472, 2
      %v4853 = vsel %vm734, %v4850, %v4852
      %4854 = vrot.lane.b32.xlu0 %v4776, 16
      %v4855 = vpop.permute.xlu0 %4854
      %4856 = vrot.lane.b32.xlu0 %v4778, 16
      %v4857 = vpop.permute.xlu0 %4856
      %4858 = vrot.lane.b32.xlu0 %v4781, 16
      %v4859 = vpop.permute.xlu0 %4858
      %4860 = vrot.lane.b32.xlu0 %v4783, 16
      %v4861 = vpop.permute.xlu0 %4860
      %4862 = vrot.lane.b32.xlu0 %v4786, 16
      %v4863 = vpop.permute.xlu0 %4862
      %4864 = vrot.lane.b32.xlu0 %v4788, 16
      %v4865 = vpop.permute.xlu0 %4864
      %4866 = vrot.lane.b32.xlu0 %v4791, 16
      %v4867 = vpop.permute.xlu0 %4866
      %4868 = vrot.lane.b32.xlu0 %v4793, 16
      %v4869 = vpop.permute.xlu0 %4868
      %4870 = vrot.lane.b32.xlu0 %v4796, 16
      %v4871 = vpop.permute.xlu0 %4870
      %4872 = vrot.lane.b32.xlu0 %v4798, 16
      %v4873 = vpop.permute.xlu0 %4872
      %4874 = vrot.lane.b32.xlu0 %v4801, 16
      %v4875 = vpop.permute.xlu0 %4874
      %4876 = vrot.lane.b32.xlu0 %v4803, 16
      %v4877 = vpop.permute.xlu0 %4876
      %4878 = vrot.lane.b32.xlu0 %v4806, 16
      %v4879 = vpop.permute.xlu0 %4878
      %4880 = vrot.lane.b32.xlu0 %v4808, 16
      %v4881 = vpop.permute.xlu0 %4880
      %4882 = vrot.lane.b32.xlu0 %v4811, 16
      %v4883 = vpop.permute.xlu0 %4882
      %4884 = vrot.lane.b32.xlu0 %v4813, 16
      %v4885 = vpop.permute.xlu0 %4884
      %4886 = vrot.lane.b32.xlu0 %v4816, 16
      %v4887 = vpop.permute.xlu0 %4886
      %4888 = vrot.lane.b32.xlu0 %v4818, 16
      %v4889 = vpop.permute.xlu0 %4888
      %4890 = vrot.lane.b32.xlu0 %v4821, 16
      %v4891 = vpop.permute.xlu0 %4890
      %4892 = vrot.lane.b32.xlu0 %v4823, 16
      %v4893 = vpop.permute.xlu0 %4892
      %4894 = vrot.lane.b32.xlu0 %v4826, 16
      %v4895 = vpop.permute.xlu0 %4894
      %4896 = vrot.lane.b32.xlu0 %v4828, 16
      %v4897 = vpop.permute.xlu0 %4896
      %4898 = vrot.lane.b32.xlu0 %v4831, 16
      %v4899 = vpop.permute.xlu0 %4898
      %4900 = vrot.lane.b32.xlu0 %v4833, 16
      %v4901 = vpop.permute.xlu0 %4900
      %4902 = vrot.lane.b32.xlu0 %v4836, 16
      %v4903 = vpop.permute.xlu0 %4902
      %4904 = vrot.lane.b32.xlu0 %v4838, 16
      %v4905 = vpop.permute.xlu0 %4904
      %4906 = vrot.lane.b32.xlu0 %v4841, 16
      %v4907 = vpop.permute.xlu0 %4906
      %4908 = vrot.lane.b32.xlu0 %v4843, 16
      %v4909 = vpop.permute.xlu0 %4908
      %4910 = vrot.lane.b32.xlu0 %v4846, 16
      %v4911 = vpop.permute.xlu0 %4910
      %4912 = vrot.lane.b32.xlu0 %v4848, 16
      %v4913 = vpop.permute.xlu0 %4912
      %4914 = vrot.lane.b32.xlu0 %v4851, 16
      %v4915 = vpop.permute.xlu0 %4914
      %4916 = vrot.lane.b32.xlu0 %v4853, 16
      %v4917 = vpop.permute.xlu0 %4916
      %vm4950 = vcmask 195712
      %4951 = vst.msk [vmem:[#allocation5] sm:$0xff] %vm4950, %v4855
      %4952 = vst.msk [vmem:[#allocation5 + $0x10] sm:$0xff] %vm4950, %v4857
      %4953 = vst.msk [vmem:[#allocation5 + $0x20] sm:$0xff] %vm4950, %v4859
      %4954 = vst.msk [vmem:[#allocation5 + $0x30] sm:$0xff] %vm4950, %v4861
      %4955 = vst.msk [vmem:[#allocation5 + $0x40] sm:$0xff] %vm4950, %v4863
      %4956 = vst.msk [vmem:[#allocation5 + $0x50] sm:$0xff] %vm4950, %v4865
      %4957 = vst.msk [vmem:[#allocation5 + $0x60] sm:$0xff] %vm4950, %v4867
      %4958 = vst.msk [vmem:[#allocation5 + $0x70] sm:$0xff] %vm4950, %v4869
      %4959 = vst.msk [vmem:[#allocation5 + $0x80] sm:$0xff] %vm4950, %v4871
      %4960 = vst.msk [vmem:[#allocation5 + $0x90] sm:$0xff] %vm4950, %v4873
      %4961 = vst.msk [vmem:[#allocation5 + $0xa0] sm:$0xff] %vm4950, %v4875
      %4962 = vst.msk [vmem:[#allocation5 + $0xb0] sm:$0xff] %vm4950, %v4877
      %4963 = vst.msk [vmem:[#allocation5 + $0xc0] sm:$0xff] %vm4950, %v4879
      %4964 = vst.msk [vmem:[#allocation5 + $0xd0] sm:$0xff] %vm4950, %v4881
      %4965 = vst.msk [vmem:[#allocation5 + $0xe0] sm:$0xff] %vm4950, %v4883
      %4966 = vst.msk [vmem:[#allocation5 + $0xf0] sm:$0xff] %vm4950, %v4885
      %4967 = vst.msk [vmem:[#allocation5 + $0x100] sm:$0xff] %vm4950, %v4887
      %4968 = vst.msk [vmem:[#allocation5 + $0x110] sm:$0xff] %vm4950, %v4889
      %4969 = vst.msk [vmem:[#allocation5 + $0x120] sm:$0xff] %vm4950, %v4891
      %4970 = vst.msk [vmem:[#allocation5 + $0x130] sm:$0xff] %vm4950, %v4893
      %4971 = vst.msk [vmem:[#allocation5 + $0x140] sm:$0xff] %vm4950, %v4895
      %4972 = vst.msk [vmem:[#allocation5 + $0x150] sm:$0xff] %vm4950, %v4897
      %4973 = vst.msk [vmem:[#allocation5 + $0x160] sm:$0xff] %vm4950, %v4899
      %4974 = vst.msk [vmem:[#allocation5 + $0x170] sm:$0xff] %vm4950, %v4901
      %4975 = vst.msk [vmem:[#allocation5 + $0x180] sm:$0xff] %vm4950, %v4903
      %4976 = vst.msk [vmem:[#allocation5 + $0x190] sm:$0xff] %vm4950, %v4905
      %4977 = vst.msk [vmem:[#allocation5 + $0x1a0] sm:$0xff] %vm4950, %v4907
      %4978 = vst.msk [vmem:[#allocation5 + $0x1b0] sm:$0xff] %vm4950, %v4909
      %4979 = vst.msk [vmem:[#allocation5 + $0x1c0] sm:$0xff] %vm4950, %v4911
      %4980 = vst.msk [vmem:[#allocation5 + $0x1d0] sm:$0xff] %vm4950, %v4913
      %4981 = vst.msk [vmem:[#allocation5 + $0x1e0] sm:$0xff] %vm4950, %v4915
      %4982 = vst.msk [vmem:[#allocation5 + $0x1f0] sm:$0xff] %vm4950, %v4917
      %v4983 = vrot.slane %v4425, 3
      %v4984 = vrot.slane %v4426, 3
      %v4985 = vsel %vm944, %v4983, %v4984
      %v4986 = vrot.slane %v4427, 3
      %v4987 = vsel %vm944, %v4984, %v4986
      %v4988 = vrot.slane %v4428, 3
      %v4989 = vrot.slane %v4429, 3
      %v4990 = vsel %vm944, %v4988, %v4989
      %v4991 = vrot.slane %v4430, 3
      %v4992 = vsel %vm944, %v4989, %v4991
      %v4993 = vrot.slane %v4431, 3
      %v4994 = vrot.slane %v4432, 3
      %v4995 = vsel %vm944, %v4993, %v4994
      %v4996 = vrot.slane %v4433, 3
      %v4997 = vsel %vm944, %v4994, %v4996
      %v4998 = vrot.slane %v4434, 3
      %v4999 = vrot.slane %v4435, 3
      %v5000 = vsel %vm944, %v4998, %v4999
      %v5001 = vrot.slane %v4436, 3
      %v5002 = vsel %vm944, %v4999, %v5001
      %v5003 = vrot.slane %v4437, 3
      %v5004 = vrot.slane %v4438, 3
      %v5005 = vsel %vm944, %v5003, %v5004
      %v5006 = vrot.slane %v4439, 3
      %v5007 = vsel %vm944, %v5004, %v5006
      %v5008 = vrot.slane %v4440, 3
      %v5009 = vrot.slane %v4441, 3
      %v5010 = vsel %vm944, %v5008, %v5009
      %v5011 = vrot.slane %v4442, 3
      %v5012 = vsel %vm944, %v5009, %v5011
      %v5013 = vrot.slane %v4443, 3
      %v5014 = vrot.slane %v4444, 3
      %v5015 = vsel %vm944, %v5013, %v5014
      %v5016 = vrot.slane %v4445, 3
      %v5017 = vsel %vm944, %v5014, %v5016
      %v5018 = vrot.slane %v4446, 3
      %v5019 = vrot.slane %v4447, 3
      %v5020 = vsel %vm944, %v5018, %v5019
      %v5021 = vrot.slane %v4448, 3
      %v5022 = vsel %vm944, %v5019, %v5021
      %v5023 = vrot.slane %v4449, 3
      %v5024 = vrot.slane %v4450, 3
      %v5025 = vsel %vm944, %v5023, %v5024
      %v5026 = vrot.slane %v4451, 3
      %v5027 = vsel %vm944, %v5024, %v5026
      %v5028 = vrot.slane %v4452, 3
      %v5029 = vrot.slane %v4453, 3
      %v5030 = vsel %vm944, %v5028, %v5029
      %v5031 = vrot.slane %v4454, 3
      %v5032 = vsel %vm944, %v5029, %v5031
      %v5033 = vrot.slane %v4455, 3
      %v5034 = vrot.slane %v4456, 3
      %v5035 = vsel %vm944, %v5033, %v5034
      %v5036 = vrot.slane %v4457, 3
      %v5037 = vsel %vm944, %v5034, %v5036
      %v5038 = vrot.slane %v4458, 3
      %v5039 = vrot.slane %v4459, 3
      %v5040 = vsel %vm944, %v5038, %v5039
      %v5041 = vrot.slane %v4460, 3
      %v5042 = vsel %vm944, %v5039, %v5041
      %v5043 = vrot.slane %v4461, 3
      %v5044 = vrot.slane %v4462, 3
      %v5045 = vsel %vm944, %v5043, %v5044
      %v5046 = vrot.slane %v4463, 3
      %v5047 = vsel %vm944, %v5044, %v5046
      %v5048 = vrot.slane %v4464, 3
      %v5049 = vrot.slane %v4465, 3
      %v5050 = vsel %vm944, %v5048, %v5049
      %v5051 = vrot.slane %v4466, 3
      %v5052 = vsel %vm944, %v5049, %v5051
      %v5053 = vrot.slane %v4467, 3
      %v5054 = vrot.slane %v4468, 3
      %v5055 = vsel %vm944, %v5053, %v5054
      %v5056 = vrot.slane %v4469, 3
      %v5057 = vsel %vm944, %v5054, %v5056
      %v5058 = vrot.slane %v4470, 3
      %v5059 = vrot.slane %v4471, 3
      %v5060 = vsel %vm944, %v5058, %v5059
      %v5061 = vrot.slane %v4472, 3
      %v5062 = vsel %vm944, %v5059, %v5061
      %5063 = vrot.lane.b32.xlu0 %v4985, 24
      %v5064 = vpop.permute.xlu0 %5063
      %5065 = vrot.lane.b32.xlu0 %v4987, 24
      %v5066 = vpop.permute.xlu0 %5065
      %5067 = vrot.lane.b32.xlu0 %v4990, 24
      %v5068 = vpop.permute.xlu0 %5067
      %5069 = vrot.lane.b32.xlu0 %v4992, 24
      %v5070 = vpop.permute.xlu0 %5069
      %5071 = vrot.lane.b32.xlu0 %v4995, 24
      %v5072 = vpop.permute.xlu0 %5071
      %5073 = vrot.lane.b32.xlu0 %v4997, 24
      %v5074 = vpop.permute.xlu0 %5073
      %5075 = vrot.lane.b32.xlu0 %v5000, 24
      %v5076 = vpop.permute.xlu0 %5075
      %5077 = vrot.lane.b32.xlu0 %v5002, 24
      %v5078 = vpop.permute.xlu0 %5077
      %5079 = vrot.lane.b32.xlu0 %v5005, 24
      %v5080 = vpop.permute.xlu0 %5079
      %5081 = vrot.lane.b32.xlu0 %v5007, 24
      %v5082 = vpop.permute.xlu0 %5081
      %5083 = vrot.lane.b32.xlu0 %v5010, 24
      %v5084 = vpop.permute.xlu0 %5083
      %5085 = vrot.lane.b32.xlu0 %v5012, 24
      %v5086 = vpop.permute.xlu0 %5085
      %5087 = vrot.lane.b32.xlu0 %v5015, 24
      %v5088 = vpop.permute.xlu0 %5087
      %5089 = vrot.lane.b32.xlu0 %v5017, 24
      %v5090 = vpop.permute.xlu0 %5089
      %5091 = vrot.lane.b32.xlu0 %v5020, 24
      %v5092 = vpop.permute.xlu0 %5091
      %5093 = vrot.lane.b32.xlu0 %v5022, 24
      %v5094 = vpop.permute.xlu0 %5093
      %5095 = vrot.lane.b32.xlu0 %v5025, 24
      %v5096 = vpop.permute.xlu0 %5095
      %5097 = vrot.lane.b32.xlu0 %v5027, 24
      %v5098 = vpop.permute.xlu0 %5097
      %5099 = vrot.lane.b32.xlu0 %v5030, 24
      %v5100 = vpop.permute.xlu0 %5099
      %5101 = vrot.lane.b32.xlu0 %v5032, 24
      %v5102 = vpop.permute.xlu0 %5101
      %5103 = vrot.lane.b32.xlu0 %v5035, 24
      %v5104 = vpop.permute.xlu0 %5103
      %5105 = vrot.lane.b32.xlu0 %v5037, 24
      %v5106 = vpop.permute.xlu0 %5105
      %5107 = vrot.lane.b32.xlu0 %v5040, 24
      %v5108 = vpop.permute.xlu0 %5107
      %5109 = vrot.lane.b32.xlu0 %v5042, 24
      %v5110 = vpop.permute.xlu0 %5109
      %5111 = vrot.lane.b32.xlu0 %v5045, 24
      %v5112 = vpop.permute.xlu0 %5111
      %5113 = vrot.lane.b32.xlu0 %v5047, 24
      %v5114 = vpop.permute.xlu0 %5113
      %5115 = vrot.lane.b32.xlu0 %v5050, 24
      %v5116 = vpop.permute.xlu0 %5115
      %5117 = vrot.lane.b32.xlu0 %v5052, 24
      %v5118 = vpop.permute.xlu0 %5117
      %5119 = vrot.lane.b32.xlu0 %v5055, 24
      %v5120 = vpop.permute.xlu0 %5119
      %5121 = vrot.lane.b32.xlu0 %v5057, 24
      %v5122 = vpop.permute.xlu0 %5121
      %5123 = vrot.lane.b32.xlu0 %v5060, 24
      %v5124 = vpop.permute.xlu0 %5123
      %5125 = vrot.lane.b32.xlu0 %v5062, 24
      %v5126 = vpop.permute.xlu0 %5125
      %vm5159 = vcmask 261312
      %5160 = vst.msk [vmem:[#allocation5] sm:$0xff] %vm5159, %v5064
      %5161 = vst.msk [vmem:[#allocation5 + $0x10] sm:$0xff] %vm5159, %v5066
      %5162 = vst.msk [vmem:[#allocation5 + $0x20] sm:$0xff] %vm5159, %v5068
      %5163 = vst.msk [vmem:[#allocation5 + $0x30] sm:$0xff] %vm5159, %v5070
      %5164 = vst.msk [vmem:[#allocation5 + $0x40] sm:$0xff] %vm5159, %v5072
      %5165 = vst.msk [vmem:[#allocation5 + $0x50] sm:$0xff] %vm5159, %v5074
      %5166 = vst.msk [vmem:[#allocation5 + $0x60] sm:$0xff] %vm5159, %v5076
      %5167 = vst.msk [vmem:[#allocation5 + $0x70] sm:$0xff] %vm5159, %v5078
      %5168 = vst.msk [vmem:[#allocation5 + $0x80] sm:$0xff] %vm5159, %v5080
      %5169 = vst.msk [vmem:[#allocation5 + $0x90] sm:$0xff] %vm5159, %v5082
      %5170 = vst.msk [vmem:[#allocation5 + $0xa0] sm:$0xff] %vm5159, %v5084
      %5171 = vst.msk [vmem:[#allocation5 + $0xb0] sm:$0xff] %vm5159, %v5086
      %5172 = vst.msk [vmem:[#allocation5 + $0xc0] sm:$0xff] %vm5159, %v5088
      %5173 = vst.msk [vmem:[#allocation5 + $0xd0] sm:$0xff] %vm5159, %v5090
      %5174 = vst.msk [vmem:[#allocation5 + $0xe0] sm:$0xff] %vm5159, %v5092
      %5175 = vst.msk [vmem:[#allocation5 + $0xf0] sm:$0xff] %vm5159, %v5094
      %5176 = vst.msk [vmem:[#allocation5 + $0x100] sm:$0xff] %vm5159, %v5096
      %5177 = vst.msk [vmem:[#allocation5 + $0x110] sm:$0xff] %vm5159, %v5098
      %5178 = vst.msk [vmem:[#allocation5 + $0x120] sm:$0xff] %vm5159, %v5100
      %5179 = vst.msk [vmem:[#allocation5 + $0x130] sm:$0xff] %vm5159, %v5102
      %5180 = vst.msk [vmem:[#allocation5 + $0x140] sm:$0xff] %vm5159, %v5104
      %5181 = vst.msk [vmem:[#allocation5 + $0x150] sm:$0xff] %vm5159, %v5106
      %5182 = vst.msk [vmem:[#allocation5 + $0x160] sm:$0xff] %vm5159, %v5108
      %5183 = vst.msk [vmem:[#allocation5 + $0x170] sm:$0xff] %vm5159, %v5110
      %5184 = vst.msk [vmem:[#allocation5 + $0x180] sm:$0xff] %vm5159, %v5112
      %5185 = vst.msk [vmem:[#allocation5 + $0x190] sm:$0xff] %vm5159, %v5114
      %5186 = vst.msk [vmem:[#allocation5 + $0x1a0] sm:$0xff] %vm5159, %v5116
      %5187 = vst.msk [vmem:[#allocation5 + $0x1b0] sm:$0xff] %vm5159, %v5118
      %5188 = vst.msk [vmem:[#allocation5 + $0x1c0] sm:$0xff] %vm5159, %v5120
      %5189 = vst.msk [vmem:[#allocation5 + $0x1d0] sm:$0xff] %vm5159, %v5122
      %5190 = vst.msk [vmem:[#allocation5 + $0x1e0] sm:$0xff] %vm5159, %v5124
      %5191 = vst.msk [vmem:[#allocation5 + $0x1f0] sm:$0xff] %vm5159, %v5126
      %v5192 = vrot.slane %v4425, 4
      %v5193 = vrot.slane %v4426, 4
      %v5194 = vsel %vm1154, %v5192, %v5193
      %v5195 = vrot.slane %v4427, 4
      %v5196 = vsel %vm1154, %v5193, %v5195
      %v5197 = vrot.slane %v4428, 4
      %v5198 = vrot.slane %v4429, 4
      %v5199 = vsel %vm1154, %v5197, %v5198
      %v5200 = vrot.slane %v4430, 4
      %v5201 = vsel %vm1154, %v5198, %v5200
      %v5202 = vrot.slane %v4431, 4
      %v5203 = vrot.slane %v4432, 4
      %v5204 = vsel %vm1154, %v5202, %v5203
      %v5205 = vrot.slane %v4433, 4
      %v5206 = vsel %vm1154, %v5203, %v5205
      %v5207 = vrot.slane %v4434, 4
      %v5208 = vrot.slane %v4435, 4
      %v5209 = vsel %vm1154, %v5207, %v5208
      %v5210 = vrot.slane %v4436, 4
      %v5211 = vsel %vm1154, %v5208, %v5210
      %v5212 = vrot.slane %v4437, 4
      %v5213 = vrot.slane %v4438, 4
      %v5214 = vsel %vm1154, %v5212, %v5213
      %v5215 = vrot.slane %v4439, 4
      %v5216 = vsel %vm1154, %v5213, %v5215
      %v5217 = vrot.slane %v4440, 4
      %v5218 = vrot.slane %v4441, 4
      %v5219 = vsel %vm1154, %v5217, %v5218
      %v5220 = vrot.slane %v4442, 4
      %v5221 = vsel %vm1154, %v5218, %v5220
      %v5222 = vrot.slane %v4443, 4
      %v5223 = vrot.slane %v4444, 4
      %v5224 = vsel %vm1154, %v5222, %v5223
      %v5225 = vrot.slane %v4445, 4
      %v5226 = vsel %vm1154, %v5223, %v5225
      %v5227 = vrot.slane %v4446, 4
      %v5228 = vrot.slane %v4447, 4
      %v5229 = vsel %vm1154, %v5227, %v5228
      %v5230 = vrot.slane %v4448, 4
      %v5231 = vsel %vm1154, %v5228, %v5230
      %v5232 = vrot.slane %v4449, 4
      %v5233 = vrot.slane %v4450, 4
      %v5234 = vsel %vm1154, %v5232, %v5233
      %v5235 = vrot.slane %v4451, 4
      %v5236 = vsel %vm1154, %v5233, %v5235
      %v5237 = vrot.slane %v4452, 4
      %v5238 = vrot.slane %v4453, 4
      %v5239 = vsel %vm1154, %v5237, %v5238
      %v5240 = vrot.slane %v4454, 4
      %v5241 = vsel %vm1154, %v5238, %v5240
      %v5242 = vrot.slane %v4455, 4
      %v5243 = vrot.slane %v4456, 4
      %v5244 = vsel %vm1154, %v5242, %v5243
      %v5245 = vrot.slane %v4457, 4
      %v5246 = vsel %vm1154, %v5243, %v5245
      %v5247 = vrot.slane %v4458, 4
      %v5248 = vrot.slane %v4459, 4
      %v5249 = vsel %vm1154, %v5247, %v5248
      %v5250 = vrot.slane %v4460, 4
      %v5251 = vsel %vm1154, %v5248, %v5250
      %v5252 = vrot.slane %v4461, 4
      %v5253 = vrot.slane %v4462, 4
      %v5254 = vsel %vm1154, %v5252, %v5253
      %v5255 = vrot.slane %v4463, 4
      %v5256 = vsel %vm1154, %v5253, %v5255
      %v5257 = vrot.slane %v4464, 4
      %v5258 = vrot.slane %v4465, 4
      %v5259 = vsel %vm1154, %v5257, %v5258
      %v5260 = vrot.slane %v4466, 4
      %v5261 = vsel %vm1154, %v5258, %v5260
      %v5262 = vrot.slane %v4467, 4
      %v5263 = vrot.slane %v4468, 4
      %v5264 = vsel %vm1154, %v5262, %v5263
      %v5265 = vrot.slane %v4469, 4
      %v5266 = vsel %vm1154, %v5263, %v5265
      %v5267 = vrot.slane %v4470, 4
      %v5268 = vrot.slane %v4471, 4
      %v5269 = vsel %vm1154, %v5267, %v5268
      %v5270 = vrot.slane %v4472, 4
      %v5271 = vsel %vm1154, %v5268, %v5270
      %5272 = vrot.lane.b32.xlu0 %v5194, 32
      %v5273 = vpop.permute.xlu0 %5272
      %5274 = vrot.lane.b32.xlu0 %v5196, 32
      %v5275 = vpop.permute.xlu0 %5274
      %5276 = vrot.lane.b32.xlu0 %v5199, 32
      %v5277 = vpop.permute.xlu0 %5276
      %5278 = vrot.lane.b32.xlu0 %v5201, 32
      %v5279 = vpop.permute.xlu0 %5278
      %5280 = vrot.lane.b32.xlu0 %v5204, 32
      %v5281 = vpop.permute.xlu0 %5280
      %5282 = vrot.lane.b32.xlu0 %v5206, 32
      %v5283 = vpop.permute.xlu0 %5282
      %5284 = vrot.lane.b32.xlu0 %v5209, 32
      %v5285 = vpop.permute.xlu0 %5284
      %5286 = vrot.lane.b32.xlu0 %v5211, 32
      %v5287 = vpop.permute.xlu0 %5286
      %5288 = vrot.lane.b32.xlu0 %v5214, 32
      %v5289 = vpop.permute.xlu0 %5288
      %5290 = vrot.lane.b32.xlu0 %v5216, 32
      %v5291 = vpop.permute.xlu0 %5290
      %5292 = vrot.lane.b32.xlu0 %v5219, 32
      %v5293 = vpop.permute.xlu0 %5292
      %5294 = vrot.lane.b32.xlu0 %v5221, 32
      %v5295 = vpop.permute.xlu0 %5294
      %5296 = vrot.lane.b32.xlu0 %v5224, 32
      %v5297 = vpop.permute.xlu0 %5296
      %5298 = vrot.lane.b32.xlu0 %v5226, 32
      %v5299 = vpop.permute.xlu0 %5298
      %5300 = vrot.lane.b32.xlu0 %v5229, 32
      %v5301 = vpop.permute.xlu0 %5300
      %5302 = vrot.lane.b32.xlu0 %v5231, 32
      %v5303 = vpop.permute.xlu0 %5302
      %5304 = vrot.lane.b32.xlu0 %v5234, 32
      %v5305 = vpop.permute.xlu0 %5304
      %5306 = vrot.lane.b32.xlu0 %v5236, 32
      %v5307 = vpop.permute.xlu0 %5306
      %5308 = vrot.lane.b32.xlu0 %v5239, 32
      %v5309 = vpop.permute.xlu0 %5308
      %5310 = vrot.lane.b32.xlu0 %v5241, 32
      %v5311 = vpop.permute.xlu0 %5310
      %5312 = vrot.lane.b32.xlu0 %v5244, 32
      %v5313 = vpop.permute.xlu0 %5312
      %5314 = vrot.lane.b32.xlu0 %v5246, 32
      %v5315 = vpop.permute.xlu0 %5314
      %5316 = vrot.lane.b32.xlu0 %v5249, 32
      %v5317 = vpop.permute.xlu0 %5316
      %5318 = vrot.lane.b32.xlu0 %v5251, 32
      %v5319 = vpop.permute.xlu0 %5318
      %5320 = vrot.lane.b32.xlu0 %v5254, 32
      %v5321 = vpop.permute.xlu0 %5320
      %5322 = vrot.lane.b32.xlu0 %v5256, 32
      %v5323 = vpop.permute.xlu0 %5322
      %5324 = vrot.lane.b32.xlu0 %v5259, 32
      %v5325 = vpop.permute.xlu0 %5324
      %5326 = vrot.lane.b32.xlu0 %v5261, 32
      %v5327 = vpop.permute.xlu0 %5326
      %5328 = vrot.lane.b32.xlu0 %v5264, 32
      %v5329 = vpop.permute.xlu0 %5328
      %5330 = vrot.lane.b32.xlu0 %v5266, 32
      %v5331 = vpop.permute.xlu0 %5330
      %5332 = vrot.lane.b32.xlu0 %v5269, 32
      %v5333 = vpop.permute.xlu0 %5332
      %5334 = vrot.lane.b32.xlu0 %v5271, 32
      %v5335 = vpop.permute.xlu0 %5334
      %vm5368 = vcmask 326912
      %5369 = vst.msk [vmem:[#allocation5] sm:$0xff] %vm5368, %v5273
      %5370 = vst.msk [vmem:[#allocation5 + $0x10] sm:$0xff] %vm5368, %v5275
      %5371 = vst.msk [vmem:[#allocation5 + $0x20] sm:$0xff] %vm5368, %v5277
      %5372 = vst.msk [vmem:[#allocation5 + $0x30] sm:$0xff] %vm5368, %v5279
      %5373 = vst.msk [vmem:[#allocation5 + $0x40] sm:$0xff] %vm5368, %v5281
      %5374 = vst.msk [vmem:[#allocation5 + $0x50] sm:$0xff] %vm5368, %v5283
      %5375 = vst.msk [vmem:[#allocation5 + $0x60] sm:$0xff] %vm5368, %v5285
      %5376 = vst.msk [vmem:[#allocation5 + $0x70] sm:$0xff] %vm5368, %v5287
      %5377 = vst.msk [vmem:[#allocation5 + $0x80] sm:$0xff] %vm5368, %v5289
      %5378 = vst.msk [vmem:[#allocation5 + $0x90] sm:$0xff] %vm5368, %v5291
      %5379 = vst.msk [vmem:[#allocation5 + $0xa0] sm:$0xff] %vm5368, %v5293
      %5380 = vst.msk [vmem:[#allocation5 + $0xb0] sm:$0xff] %vm5368, %v5295
      %5381 = vst.msk [vmem:[#allocation5 + $0xc0] sm:$0xff] %vm5368, %v5297
      %5382 = vst.msk [vmem:[#allocation5 + $0xd0] sm:$0xff] %vm5368, %v5299
      %5383 = vst.msk [vmem:[#allocation5 + $0xe0] sm:$0xff] %vm5368, %v5301
      %5384 = vst.msk [vmem:[#allocation5 + $0xf0] sm:$0xff] %vm5368, %v5303
      %5385 = vst.msk [vmem:[#allocation5 + $0x100] sm:$0xff] %vm5368, %v5305
      %5386 = vst.msk [vmem:[#allocation5 + $0x110] sm:$0xff] %vm5368, %v5307
      %5387 = vst.msk [vmem:[#allocation5 + $0x120] sm:$0xff] %vm5368, %v5309
      %5388 = vst.msk [vmem:[#allocation5 + $0x130] sm:$0xff] %vm5368, %v5311
      %5389 = vst.msk [vmem:[#allocation5 + $0x140] sm:$0xff] %vm5368, %v5313
      %5390 = vst.msk [vmem:[#allocation5 + $0x150] sm:$0xff] %vm5368, %v5315
      %5391 = vst.msk [vmem:[#allocation5 + $0x160] sm:$0xff] %vm5368, %v5317
      %5392 = vst.msk [vmem:[#allocation5 + $0x170] sm:$0xff] %vm5368, %v5319
      %5393 = vst.msk [vmem:[#allocation5 + $0x180] sm:$0xff] %vm5368, %v5321
      %5394 = vst.msk [vmem:[#allocation5 + $0x190] sm:$0xff] %vm5368, %v5323
      %5395 = vst.msk [vmem:[#allocation5 + $0x1a0] sm:$0xff] %vm5368, %v5325
      %5396 = vst.msk [vmem:[#allocation5 + $0x1b0] sm:$0xff] %vm5368, %v5327
      %5397 = vst.msk [vmem:[#allocation5 + $0x1c0] sm:$0xff] %vm5368, %v5329
      %5398 = vst.msk [vmem:[#allocation5 + $0x1d0] sm:$0xff] %vm5368, %v5331
      %5399 = vst.msk [vmem:[#allocation5 + $0x1e0] sm:$0xff] %vm5368, %v5333
      %5400 = vst.msk [vmem:[#allocation5 + $0x1f0] sm:$0xff] %vm5368, %v5335
      %5403 = vrot.lane.b32.xlu0 %v4428, 40
      %v5404 = vpop.permute.xlu0 %5403
      %5405 = vrot.lane.b32.xlu0 %v4429, 40
      %v5406 = vpop.permute.xlu0 %5405
      %5407 = vrot.lane.b32.xlu0 %v4431, 40
      %v5408 = vpop.permute.xlu0 %5407
      %5409 = vrot.lane.b32.xlu0 %v4432, 40
      %v5410 = vpop.permute.xlu0 %5409
      %5411 = vrot.lane.b32.xlu0 %v4434, 40
      %v5412 = vpop.permute.xlu0 %5411
      %5413 = vrot.lane.b32.xlu0 %v4435, 40
      %v5414 = vpop.permute.xlu0 %5413
      %5415 = vrot.lane.b32.xlu0 %v4437, 40
      %v5416 = vpop.permute.xlu0 %5415
      %5417 = vrot.lane.b32.xlu0 %v4438, 40
      %v5418 = vpop.permute.xlu0 %5417
      %5419 = vrot.lane.b32.xlu0 %v4440, 40
      %v5420 = vpop.permute.xlu0 %5419
      %5421 = vrot.lane.b32.xlu0 %v4441, 40
      %v5422 = vpop.permute.xlu0 %5421
      %5423 = vrot.lane.b32.xlu0 %v4443, 40
      %v5424 = vpop.permute.xlu0 %5423
      %5425 = vrot.lane.b32.xlu0 %v4444, 40
      %v5426 = vpop.permute.xlu0 %5425
      %5427 = vrot.lane.b32.xlu0 %v4446, 40
      %v5428 = vpop.permute.xlu0 %5427
      %5429 = vrot.lane.b32.xlu0 %v4447, 40
      %v5430 = vpop.permute.xlu0 %5429
      %5431 = vrot.lane.b32.xlu0 %v4449, 40
      %v5432 = vpop.permute.xlu0 %5431
      %5433 = vrot.lane.b32.xlu0 %v4450, 40
      %v5434 = vpop.permute.xlu0 %5433
      %5435 = vrot.lane.b32.xlu0 %v4452, 40
      %v5436 = vpop.permute.xlu0 %5435
      %5437 = vrot.lane.b32.xlu0 %v4453, 40
      %v5438 = vpop.permute.xlu0 %5437
      %5439 = vrot.lane.b32.xlu0 %v4455, 40
      %v5440 = vpop.permute.xlu0 %5439
      %5441 = vrot.lane.b32.xlu0 %v4456, 40
      %v5442 = vpop.permute.xlu0 %5441
      %5443 = vrot.lane.b32.xlu0 %v4458, 40
      %v5444 = vpop.permute.xlu0 %5443
      %5445 = vrot.lane.b32.xlu0 %v4459, 40
      %v5446 = vpop.permute.xlu0 %5445
      %5447 = vrot.lane.b32.xlu0 %v4461, 40
      %v5448 = vpop.permute.xlu0 %5447
      %5449 = vrot.lane.b32.xlu0 %v4462, 40
      %v5450 = vpop.permute.xlu0 %5449
      %5451 = vrot.lane.b32.xlu0 %v4464, 40
      %v5452 = vpop.permute.xlu0 %5451
      %5453 = vrot.lane.b32.xlu0 %v4465, 40
      %v5454 = vpop.permute.xlu0 %5453
      %5455 = vrot.lane.b32.xlu0 %v4467, 40
      %v5456 = vpop.permute.xlu0 %5455
      %5457 = vrot.lane.b32.xlu0 %v4468, 40
      %v5458 = vpop.permute.xlu0 %5457
      %5459 = vrot.lane.b32.xlu0 %v4470, 40
      %v5460 = vpop.permute.xlu0 %5459
      %5461 = vrot.lane.b32.xlu0 %v4471, 40
      %v5462 = vpop.permute.xlu0 %5461
      %5463 = vrot.lane.b32.xlu0 %v4473, 40
      %v5464 = vpop.permute.xlu0 %5463
      %5465 = vrot.lane.b32.xlu0 %v4474, 40
      %v5466 = vpop.permute.xlu0 %5465
      %vm5499 = vcmask 392512
      %5500 = vst.msk [vmem:[#allocation5] sm:$0xff] %vm5499, %v5404
      %5501 = vst.msk [vmem:[#allocation5 + $0x10] sm:$0xff] %vm5499, %v5406
      %5502 = vst.msk [vmem:[#allocation5 + $0x20] sm:$0xff] %vm5499, %v5408
      %5503 = vst.msk [vmem:[#allocation5 + $0x30] sm:$0xff] %vm5499, %v5410
      %5504 = vst.msk [vmem:[#allocation5 + $0x40] sm:$0xff] %vm5499, %v5412
      %5505 = vst.msk [vmem:[#allocation5 + $0x50] sm:$0xff] %vm5499, %v5414
      %5506 = vst.msk [vmem:[#allocation5 + $0x60] sm:$0xff] %vm5499, %v5416
      %5507 = vst.msk [vmem:[#allocation5 + $0x70] sm:$0xff] %vm5499, %v5418
      %5508 = vst.msk [vmem:[#allocation5 + $0x80] sm:$0xff] %vm5499, %v5420
      %5509 = vst.msk [vmem:[#allocation5 + $0x90] sm:$0xff] %vm5499, %v5422
      %5510 = vst.msk [vmem:[#allocation5 + $0xa0] sm:$0xff] %vm5499, %v5424
      %5511 = vst.msk [vmem:[#allocation5 + $0xb0] sm:$0xff] %vm5499, %v5426
      %5512 = vst.msk [vmem:[#allocation5 + $0xc0] sm:$0xff] %vm5499, %v5428
      %5513 = vst.msk [vmem:[#allocation5 + $0xd0] sm:$0xff] %vm5499, %v5430
      %5514 = vst.msk [vmem:[#allocation5 + $0xe0] sm:$0xff] %vm5499, %v5432
      %5515 = vst.msk [vmem:[#allocation5 + $0xf0] sm:$0xff] %vm5499, %v5434
      %5516 = vst.msk [vmem:[#allocation5 + $0x100] sm:$0xff] %vm5499, %v5436
      %5517 = vst.msk [vmem:[#allocation5 + $0x110] sm:$0xff] %vm5499, %v5438
      %5518 = vst.msk [vmem:[#allocation5 + $0x120] sm:$0xff] %vm5499, %v5440
      %5519 = vst.msk [vmem:[#allocation5 + $0x130] sm:$0xff] %vm5499, %v5442
      %5520 = vst.msk [vmem:[#allocation5 + $0x140] sm:$0xff] %vm5499, %v5444
      %5521 = vst.msk [vmem:[#allocation5 + $0x150] sm:$0xff] %vm5499, %v5446
      %5522 = vst.msk [vmem:[#allocation5 + $0x160] sm:$0xff] %vm5499, %v5448
      %5523 = vst.msk [vmem:[#allocation5 + $0x170] sm:$0xff] %vm5499, %v5450
      %5524 = vst.msk [vmem:[#allocation5 + $0x180] sm:$0xff] %vm5499, %v5452
      %5525 = vst.msk [vmem:[#allocation5 + $0x190] sm:$0xff] %vm5499, %v5454
      %5526 = vst.msk [vmem:[#allocation5 + $0x1a0] sm:$0xff] %vm5499, %v5456
      %5527 = vst.msk [vmem:[#allocation5 + $0x1b0] sm:$0xff] %vm5499, %v5458
      %5528 = vst.msk [vmem:[#allocation5 + $0x1c0] sm:$0xff] %vm5499, %v5460
      %5529 = vst.msk [vmem:[#allocation5 + $0x1d0] sm:$0xff] %vm5499, %v5462
      %5530 = vst.msk [vmem:[#allocation5 + $0x1e0] sm:$0xff] %vm5499, %v5464
      %5531 = vst.msk [vmem:[#allocation5 + $0x1f0] sm:$0xff] %vm5499, %v5466
      %v5533 = vrot.slane %v4473, 1
      %v5534 = vrot.slane %v4474, 1
      %v5535 = vsel %vm524, %v5533, %v5534
      %v5536 = vrot.slane %v4475, 1
      %v5537 = vsel %vm524, %v5534, %v5536
      %5538 = vrot.lane.b32.xlu0 %v4572, 48
      %v5539 = vpop.permute.xlu0 %5538
      %5540 = vrot.lane.b32.xlu0 %v4574, 48
      %v5541 = vpop.permute.xlu0 %5540
      %5542 = vrot.lane.b32.xlu0 %v4577, 48
      %v5543 = vpop.permute.xlu0 %5542
      %5544 = vrot.lane.b32.xlu0 %v4579, 48
      %v5545 = vpop.permute.xlu0 %5544
      %5546 = vrot.lane.b32.xlu0 %v4582, 48
      %v5547 = vpop.permute.xlu0 %5546
      %5548 = vrot.lane.b32.xlu0 %v4584, 48
      %v5549 = vpop.permute.xlu0 %5548
      %5550 = vrot.lane.b32.xlu0 %v4587, 48
      %v5551 = vpop.permute.xlu0 %5550
      %5552 = vrot.lane.b32.xlu0 %v4589, 48
      %v5553 = vpop.permute.xlu0 %5552
      %5554 = vrot.lane.b32.xlu0 %v4592, 48
      %v5555 = vpop.permute.xlu0 %5554
      %5556 = vrot.lane.b32.xlu0 %v4594, 48
      %v5557 = vpop.permute.xlu0 %5556
      %5558 = vrot.lane.b32.xlu0 %v4597, 48
      %v5559 = vpop.permute.xlu0 %5558
      %5560 = vrot.lane.b32.xlu0 %v4599, 48
      %v5561 = vpop.permute.xlu0 %5560
      %5562 = vrot.lane.b32.xlu0 %v4602, 48
      %v5563 = vpop.permute.xlu0 %5562
      %5564 = vrot.lane.b32.xlu0 %v4604, 48
      %v5565 = vpop.permute.xlu0 %5564
      %5566 = vrot.lane.b32.xlu0 %v4607, 48
      %v5567 = vpop.permute.xlu0 %5566
      %5568 = vrot.lane.b32.xlu0 %v4609, 48
      %v5569 = vpop.permute.xlu0 %5568
      %5570 = vrot.lane.b32.xlu0 %v4612, 48
      %v5571 = vpop.permute.xlu0 %5570
      %5572 = vrot.lane.b32.xlu0 %v4614, 48
      %v5573 = vpop.permute.xlu0 %5572
      %5574 = vrot.lane.b32.xlu0 %v4617, 48
      %v5575 = vpop.permute.xlu0 %5574
      %5576 = vrot.lane.b32.xlu0 %v4619, 48
      %v5577 = vpop.permute.xlu0 %5576
      %5578 = vrot.lane.b32.xlu0 %v4622, 48
      %v5579 = vpop.permute.xlu0 %5578
      %5580 = vrot.lane.b32.xlu0 %v4624, 48
      %v5581 = vpop.permute.xlu0 %5580
      %5582 = vrot.lane.b32.xlu0 %v4627, 48
      %v5583 = vpop.permute.xlu0 %5582
      %5584 = vrot.lane.b32.xlu0 %v4629, 48
      %v5585 = vpop.permute.xlu0 %5584
      %5586 = vrot.lane.b32.xlu0 %v4632, 48
      %v5587 = vpop.permute.xlu0 %5586
      %5588 = vrot.lane.b32.xlu0 %v4634, 48
      %v5589 = vpop.permute.xlu0 %5588
      %5590 = vrot.lane.b32.xlu0 %v4637, 48
      %v5591 = vpop.permute.xlu0 %5590
      %5592 = vrot.lane.b32.xlu0 %v4639, 48
      %v5593 = vpop.permute.xlu0 %5592
      %5594 = vrot.lane.b32.xlu0 %v4642, 48
      %v5595 = vpop.permute.xlu0 %5594
      %5596 = vrot.lane.b32.xlu0 %v4644, 48
      %v5597 = vpop.permute.xlu0 %5596
      %5598 = vrot.lane.b32.xlu0 %v5535, 48
      %v5599 = vpop.permute.xlu0 %5598
      %5600 = vrot.lane.b32.xlu0 %v5537, 48
      %v5601 = vpop.permute.xlu0 %5600
      %vm5634 = vcmask 458112
      %5635 = vst.msk [vmem:[#allocation5] sm:$0xff] %vm5634, %v5539
      %5636 = vst.msk [vmem:[#allocation5 + $0x10] sm:$0xff] %vm5634, %v5541
      %5637 = vst.msk [vmem:[#allocation5 + $0x20] sm:$0xff] %vm5634, %v5543
      %5638 = vst.msk [vmem:[#allocation5 + $0x30] sm:$0xff] %vm5634, %v5545
      %5639 = vst.msk [vmem:[#allocation5 + $0x40] sm:$0xff] %vm5634, %v5547
      %5640 = vst.msk [vmem:[#allocation5 + $0x50] sm:$0xff] %vm5634, %v5549
      %5641 = vst.msk [vmem:[#allocation5 + $0x60] sm:$0xff] %vm5634, %v5551
      %5642 = vst.msk [vmem:[#allocation5 + $0x70] sm:$0xff] %vm5634, %v5553
      %5643 = vst.msk [vmem:[#allocation5 + $0x80] sm:$0xff] %vm5634, %v5555
      %5644 = vst.msk [vmem:[#allocation5 + $0x90] sm:$0xff] %vm5634, %v5557
      %5645 = vst.msk [vmem:[#allocation5 + $0xa0] sm:$0xff] %vm5634, %v5559
      %5646 = vst.msk [vmem:[#allocation5 + $0xb0] sm:$0xff] %vm5634, %v5561
      %5647 = vst.msk [vmem:[#allocation5 + $0xc0] sm:$0xff] %vm5634, %v5563
      %5648 = vst.msk [vmem:[#allocation5 + $0xd0] sm:$0xff] %vm5634, %v5565
      %5649 = vst.msk [vmem:[#allocation5 + $0xe0] sm:$0xff] %vm5634, %v5567
      %5650 = vst.msk [vmem:[#allocation5 + $0xf0] sm:$0xff] %vm5634, %v5569
      %5651 = vst.msk [vmem:[#allocation5 + $0x100] sm:$0xff] %vm5634, %v5571
      %5652 = vst.msk [vmem:[#allocation5 + $0x110] sm:$0xff] %vm5634, %v5573
      %5653 = vst.msk [vmem:[#allocation5 + $0x120] sm:$0xff] %vm5634, %v5575
      %5654 = vst.msk [vmem:[#allocation5 + $0x130] sm:$0xff] %vm5634, %v5577
      %5655 = vst.msk [vmem:[#allocation5 + $0x140] sm:$0xff] %vm5634, %v5579
      %5656 = vst.msk [vmem:[#allocation5 + $0x150] sm:$0xff] %vm5634, %v5581
      %5657 = vst.msk [vmem:[#allocation5 + $0x160] sm:$0xff] %vm5634, %v5583
      %5658 = vst.msk [vmem:[#allocation5 + $0x170] sm:$0xff] %vm5634, %v5585
      %5659 = vst.msk [vmem:[#allocation5 + $0x180] sm:$0xff] %vm5634, %v5587
      %5660 = vst.msk [vmem:[#allocation5 + $0x190] sm:$0xff] %vm5634, %v5589
      %5661 = vst.msk [vmem:[#allocation5 + $0x1a0] sm:$0xff] %vm5634, %v5591
      %5662 = vst.msk [vmem:[#allocation5 + $0x1b0] sm:$0xff] %vm5634, %v5593
      %5663 = vst.msk [vmem:[#allocation5 + $0x1c0] sm:$0xff] %vm5634, %v5595
      %5664 = vst.msk [vmem:[#allocation5 + $0x1d0] sm:$0xff] %vm5634, %v5597
      %5665 = vst.msk [vmem:[#allocation5 + $0x1e0] sm:$0xff] %vm5634, %v5599
      %5666 = vst.msk [vmem:[#allocation5 + $0x1f0] sm:$0xff] %vm5634, %v5601
      %v5667 = vrot.slane %v4473, 2
      %v5668 = vrot.slane %v4474, 2
      %v5669 = vsel %vm734, %v5667, %v5668
      %v5670 = vrot.slane %v4475, 2
      %v5671 = vsel %vm734, %v5668, %v5670
      %5672 = vrot.lane.b32.xlu0 %v4781, 56
      %v5673 = vpop.permute.xlu0 %5672
      %5674 = vrot.lane.b32.xlu0 %v4783, 56
      %v5675 = vpop.permute.xlu0 %5674
      %5676 = vrot.lane.b32.xlu0 %v4786, 56
      %v5677 = vpop.permute.xlu0 %5676
      %5678 = vrot.lane.b32.xlu0 %v4788, 56
      %v5679 = vpop.permute.xlu0 %5678
      %5680 = vrot.lane.b32.xlu0 %v4791, 56
      %v5681 = vpop.permute.xlu0 %5680
      %5682 = vrot.lane.b32.xlu0 %v4793, 56
      %v5683 = vpop.permute.xlu0 %5682
      %5684 = vrot.lane.b32.xlu0 %v4796, 56
      %v5685 = vpop.permute.xlu0 %5684
      %5686 = vrot.lane.b32.xlu0 %v4798, 56
      %v5687 = vpop.permute.xlu0 %5686
      %5688 = vrot.lane.b32.xlu0 %v4801, 56
      %v5689 = vpop.permute.xlu0 %5688
      %5690 = vrot.lane.b32.xlu0 %v4803, 56
      %v5691 = vpop.permute.xlu0 %5690
      %5692 = vrot.lane.b32.xlu0 %v4806, 56
      %v5693 = vpop.permute.xlu0 %5692
      %5694 = vrot.lane.b32.xlu0 %v4808, 56
      %v5695 = vpop.permute.xlu0 %5694
      %5696 = vrot.lane.b32.xlu0 %v4811, 56
      %v5697 = vpop.permute.xlu0 %5696
      %5698 = vrot.lane.b32.xlu0 %v4813, 56
      %v5699 = vpop.permute.xlu0 %5698
      %5700 = vrot.lane.b32.xlu0 %v4816, 56
      %v5701 = vpop.permute.xlu0 %5700
      %5702 = vrot.lane.b32.xlu0 %v4818, 56
      %v5703 = vpop.permute.xlu0 %5702
      %5704 = vrot.lane.b32.xlu0 %v4821, 56
      %v5705 = vpop.permute.xlu0 %5704
      %5706 = vrot.lane.b32.xlu0 %v4823, 56
      %v5707 = vpop.permute.xlu0 %5706
      %5708 = vrot.lane.b32.xlu0 %v4826, 56
      %v5709 = vpop.permute.xlu0 %5708
      %5710 = vrot.lane.b32.xlu0 %v4828, 56
      %v5711 = vpop.permute.xlu0 %5710
      %5712 = vrot.lane.b32.xlu0 %v4831, 56
      %v5713 = vpop.permute.xlu0 %5712
      %5714 = vrot.lane.b32.xlu0 %v4833, 56
      %v5715 = vpop.permute.xlu0 %5714
      %5716 = vrot.lane.b32.xlu0 %v4836, 56
      %v5717 = vpop.permute.xlu0 %5716
      %5718 = vrot.lane.b32.xlu0 %v4838, 56
      %v5719 = vpop.permute.xlu0 %5718
      %5720 = vrot.lane.b32.xlu0 %v4841, 56
      %v5721 = vpop.permute.xlu0 %5720
      %5722 = vrot.lane.b32.xlu0 %v4843, 56
      %v5723 = vpop.permute.xlu0 %5722
      %5724 = vrot.lane.b32.xlu0 %v4846, 56
      %v5725 = vpop.permute.xlu0 %5724
      %5726 = vrot.lane.b32.xlu0 %v4848, 56
      %v5727 = vpop.permute.xlu0 %5726
      %5728 = vrot.lane.b32.xlu0 %v4851, 56
      %v5729 = vpop.permute.xlu0 %5728
      %5730 = vrot.lane.b32.xlu0 %v4853, 56
      %v5731 = vpop.permute.xlu0 %5730
      %5732 = vrot.lane.b32.xlu0 %v5669, 56
      %v5733 = vpop.permute.xlu0 %5732
      %5734 = vrot.lane.b32.xlu0 %v5671, 56
      %v5735 = vpop.permute.xlu0 %5734
      %vm5768 = vcmask 523712
      %5769 = vst.msk [vmem:[#allocation5] sm:$0xff] %vm5768, %v5673
      %5770 = vst.msk [vmem:[#allocation5 + $0x10] sm:$0xff] %vm5768, %v5675
      %5771 = vst.msk [vmem:[#allocation5 + $0x20] sm:$0xff] %vm5768, %v5677
      %5772 = vst.msk [vmem:[#allocation5 + $0x30] sm:$0xff] %vm5768, %v5679
      %5773 = vst.msk [vmem:[#allocation5 + $0x40] sm:$0xff] %vm5768, %v5681
      %5774 = vst.msk [vmem:[#allocation5 + $0x50] sm:$0xff] %vm5768, %v5683
      %5775 = vst.msk [vmem:[#allocation5 + $0x60] sm:$0xff] %vm5768, %v5685
      %5776 = vst.msk [vmem:[#allocation5 + $0x70] sm:$0xff] %vm5768, %v5687
      %5777 = vst.msk [vmem:[#allocation5 + $0x80] sm:$0xff] %vm5768, %v5689
      %5778 = vst.msk [vmem:[#allocation5 + $0x90] sm:$0xff] %vm5768, %v5691
      %5779 = vst.msk [vmem:[#allocation5 + $0xa0] sm:$0xff] %vm5768, %v5693
      %5780 = vst.msk [vmem:[#allocation5 + $0xb0] sm:$0xff] %vm5768, %v5695
      %5781 = vst.msk [vmem:[#allocation5 + $0xc0] sm:$0xff] %vm5768, %v5697
      %5782 = vst.msk [vmem:[#allocation5 + $0xd0] sm:$0xff] %vm5768, %v5699
      %5783 = vst.msk [vmem:[#allocation5 + $0xe0] sm:$0xff] %vm5768, %v5701
      %5784 = vst.msk [vmem:[#allocation5 + $0xf0] sm:$0xff] %vm5768, %v5703
      %5785 = vst.msk [vmem:[#allocation5 + $0x100] sm:$0xff] %vm5768, %v5705
      %5786 = vst.msk [vmem:[#allocation5 + $0x110] sm:$0xff] %vm5768, %v5707
      %5787 = vst.msk [vmem:[#allocation5 + $0x120] sm:$0xff] %vm5768, %v5709
      %5788 = vst.msk [vmem:[#allocation5 + $0x130] sm:$0xff] %vm5768, %v5711
      %5789 = vst.msk [vmem:[#allocation5 + $0x140] sm:$0xff] %vm5768, %v5713
      %5790 = vst.msk [vmem:[#allocation5 + $0x150] sm:$0xff] %vm5768, %v5715
      %5791 = vst.msk [vmem:[#allocation5 + $0x160] sm:$0xff] %vm5768, %v5717
      %5792 = vst.msk [vmem:[#allocation5 + $0x170] sm:$0xff] %vm5768, %v5719
      %5793 = vst.msk [vmem:[#allocation5 + $0x180] sm:$0xff] %vm5768, %v5721
      %5794 = vst.msk [vmem:[#allocation5 + $0x190] sm:$0xff] %vm5768, %v5723
      %5795 = vst.msk [vmem:[#allocation5 + $0x1a0] sm:$0xff] %vm5768, %v5725
      %5796 = vst.msk [vmem:[#allocation5 + $0x1b0] sm:$0xff] %vm5768, %v5727
      %5797 = vst.msk [vmem:[#allocation5 + $0x1c0] sm:$0xff] %vm5768, %v5729
      %5798 = vst.msk [vmem:[#allocation5 + $0x1d0] sm:$0xff] %vm5768, %v5731
      %5799 = vst.msk [vmem:[#allocation5 + $0x1e0] sm:$0xff] %vm5768, %v5733
      %5800 = vst.msk [vmem:[#allocation5 + $0x1f0] sm:$0xff] %vm5768, %v5735
      %v5801 = vrot.slane %v4473, 3
      %v5802 = vrot.slane %v4474, 3
      %v5803 = vsel %vm944, %v5801, %v5802
      %v5804 = vrot.slane %v4475, 3
      %v5805 = vsel %vm944, %v5802, %v5804
      %5806 = vrot.lane.b32.xlu0 %v4990, 64
      %v5807 = vpop.permute.xlu0 %5806
      %5808 = vrot.lane.b32.xlu0 %v4992, 64
      %v5809 = vpop.permute.xlu0 %5808
      %5810 = vrot.lane.b32.xlu0 %v4995, 64
      %v5811 = vpop.permute.xlu0 %5810
      %5812 = vrot.lane.b32.xlu0 %v4997, 64
      %v5813 = vpop.permute.xlu0 %5812
      %5814 = vrot.lane.b32.xlu0 %v5000, 64
      %v5815 = vpop.permute.xlu0 %5814
      %5816 = vrot.lane.b32.xlu0 %v5002, 64
      %v5817 = vpop.permute.xlu0 %5816
      %5818 = vrot.lane.b32.xlu0 %v5005, 64
      %v5819 = vpop.permute.xlu0 %5818
      %5820 = vrot.lane.b32.xlu0 %v5007, 64
      %v5821 = vpop.permute.xlu0 %5820
      %5822 = vrot.lane.b32.xlu0 %v5010, 64
      %v5823 = vpop.permute.xlu0 %5822
      %5824 = vrot.lane.b32.xlu0 %v5012, 64
      %v5825 = vpop.permute.xlu0 %5824
      %5826 = vrot.lane.b32.xlu0 %v5015, 64
      %v5827 = vpop.permute.xlu0 %5826
      %5828 = vrot.lane.b32.xlu0 %v5017, 64
      %v5829 = vpop.permute.xlu0 %5828
      %5830 = vrot.lane.b32.xlu0 %v5020, 64
      %v5831 = vpop.permute.xlu0 %5830
      %5832 = vrot.lane.b32.xlu0 %v5022, 64
      %v5833 = vpop.permute.xlu0 %5832
      %5834 = vrot.lane.b32.xlu0 %v5025, 64
      %v5835 = vpop.permute.xlu0 %5834
      %5836 = vrot.lane.b32.xlu0 %v5027, 64
      %v5837 = vpop.permute.xlu0 %5836
      %5838 = vrot.lane.b32.xlu0 %v5030, 64
      %v5839 = vpop.permute.xlu0 %5838
      %5840 = vrot.lane.b32.xlu0 %v5032, 64
      %v5841 = vpop.permute.xlu0 %5840
      %5842 = vrot.lane.b32.xlu0 %v5035, 64
      %v5843 = vpop.permute.xlu0 %5842
      %5844 = vrot.lane.b32.xlu0 %v5037, 64
      %v5845 = vpop.permute.xlu0 %5844
      %5846 = vrot.lane.b32.xlu0 %v5040, 64
      %v5847 = vpop.permute.xlu0 %5846
      %5848 = vrot.lane.b32.xlu0 %v5042, 64
      %v5849 = vpop.permute.xlu0 %5848
      %5850 = vrot.lane.b32.xlu0 %v5045, 64
      %v5851 = vpop.permute.xlu0 %5850
      %5852 = vrot.lane.b32.xlu0 %v5047, 64
      %v5853 = vpop.permute.xlu0 %5852
      %5854 = vrot.lane.b32.xlu0 %v5050, 64
      %v5855 = vpop.permute.xlu0 %5854
      %5856 = vrot.lane.b32.xlu0 %v5052, 64
      %v5857 = vpop.permute.xlu0 %5856
      %5858 = vrot.lane.b32.xlu0 %v5055, 64
      %v5859 = vpop.permute.xlu0 %5858
      %5860 = vrot.lane.b32.xlu0 %v5057, 64
      %v5861 = vpop.permute.xlu0 %5860
      %5862 = vrot.lane.b32.xlu0 %v5060, 64
      %v5863 = vpop.permute.xlu0 %5862
      %5864 = vrot.lane.b32.xlu0 %v5062, 64
      %v5865 = vpop.permute.xlu0 %5864
      %5866 = vrot.lane.b32.xlu0 %v5803, 64
      %v5867 = vpop.permute.xlu0 %5866
      %5868 = vrot.lane.b32.xlu0 %v5805, 64
      %v5869 = vpop.permute.xlu0 %5868
      %vm5902 = vcmask 589312
      %5903 = vst.msk [vmem:[#allocation5] sm:$0xff] %vm5902, %v5807
      %5904 = vst.msk [vmem:[#allocation5 + $0x10] sm:$0xff] %vm5902, %v5809
      %5905 = vst.msk [vmem:[#allocation5 + $0x20] sm:$0xff] %vm5902, %v5811
      %5906 = vst.msk [vmem:[#allocation5 + $0x30] sm:$0xff] %vm5902, %v5813
      %5907 = vst.msk [vmem:[#allocation5 + $0x40] sm:$0xff] %vm5902, %v5815
      %5908 = vst.msk [vmem:[#allocation5 + $0x50] sm:$0xff] %vm5902, %v5817
      %5909 = vst.msk [vmem:[#allocation5 + $0x60] sm:$0xff] %vm5902, %v5819
      %5910 = vst.msk [vmem:[#allocation5 + $0x70] sm:$0xff] %vm5902, %v5821
      %5911 = vst.msk [vmem:[#allocation5 + $0x80] sm:$0xff] %vm5902, %v5823
      %5912 = vst.msk [vmem:[#allocation5 + $0x90] sm:$0xff] %vm5902, %v5825
      %5913 = vst.msk [vmem:[#allocation5 + $0xa0] sm:$0xff] %vm5902, %v5827
      %5914 = vst.msk [vmem:[#allocation5 + $0xb0] sm:$0xff] %vm5902, %v5829
      %5915 = vst.msk [vmem:[#allocation5 + $0xc0] sm:$0xff] %vm5902, %v5831
      %5916 = vst.msk [vmem:[#allocation5 + $0xd0] sm:$0xff] %vm5902, %v5833
      %5917 = vst.msk [vmem:[#allocation5 + $0xe0] sm:$0xff] %vm5902, %v5835
      %5918 = vst.msk [vmem:[#allocation5 + $0xf0] sm:$0xff] %vm5902, %v5837
      %5919 = vst.msk [vmem:[#allocation5 + $0x100] sm:$0xff] %vm5902, %v5839
      %5920 = vst.msk [vmem:[#allocation5 + $0x110] sm:$0xff] %vm5902, %v5841
      %5921 = vst.msk [vmem:[#allocation5 + $0x120] sm:$0xff] %vm5902, %v5843
      %5922 = vst.msk [vmem:[#allocation5 + $0x130] sm:$0xff] %vm5902, %v5845
      %5923 = vst.msk [vmem:[#allocation5 + $0x140] sm:$0xff] %vm5902, %v5847
      %5924 = vst.msk [vmem:[#allocation5 + $0x150] sm:$0xff] %vm5902, %v5849
      %5925 = vst.msk [vmem:[#allocation5 + $0x160] sm:$0xff] %vm5902, %v5851
      %5926 = vst.msk [vmem:[#allocation5 + $0x170] sm:$0xff] %vm5902, %v5853
      %5927 = vst.msk [vmem:[#allocation5 + $0x180] sm:$0xff] %vm5902, %v5855
      %5928 = vst.msk [vmem:[#allocation5 + $0x190] sm:$0xff] %vm5902, %v5857
      %5929 = vst.msk [vmem:[#allocation5 + $0x1a0] sm:$0xff] %vm5902, %v5859
      %5930 = vst.msk [vmem:[#allocation5 + $0x1b0] sm:$0xff] %vm5902, %v5861
      %5931 = vst.msk [vmem:[#allocation5 + $0x1c0] sm:$0xff] %vm5902, %v5863
      %5932 = vst.msk [vmem:[#allocation5 + $0x1d0] sm:$0xff] %vm5902, %v5865
      %5933 = vst.msk [vmem:[#allocation5 + $0x1e0] sm:$0xff] %vm5902, %v5867
      %5934 = vst.msk [vmem:[#allocation5 + $0x1f0] sm:$0xff] %vm5902, %v5869
      %v5935 = vrot.slane %v4473, 4
      %v5936 = vrot.slane %v4474, 4
      %v5937 = vsel %vm1154, %v5935, %v5936
      %v5938 = vrot.slane %v4475, 4
      %v5939 = vsel %vm1154, %v5936, %v5938
      %5940 = vrot.lane.b32.xlu0 %v5199, 72
      %v5941 = vpop.permute.xlu0 %5940
      %5942 = vrot.lane.b32.xlu0 %v5201, 72
      %v5943 = vpop.permute.xlu0 %5942
      %5944 = vrot.lane.b32.xlu0 %v5204, 72
      %v5945 = vpop.permute.xlu0 %5944
      %5946 = vrot.lane.b32.xlu0 %v5206, 72
      %v5947 = vpop.permute.xlu0 %5946
      %5948 = vrot.lane.b32.xlu0 %v5209, 72
      %v5949 = vpop.permute.xlu0 %5948
      %5950 = vrot.lane.b32.xlu0 %v5211, 72
      %v5951 = vpop.permute.xlu0 %5950
      %5952 = vrot.lane.b32.xlu0 %v5214, 72
      %v5953 = vpop.permute.xlu0 %5952
      %5954 = vrot.lane.b32.xlu0 %v5216, 72
      %v5955 = vpop.permute.xlu0 %5954
      %5956 = vrot.lane.b32.xlu0 %v5219, 72
      %v5957 = vpop.permute.xlu0 %5956
      %5958 = vrot.lane.b32.xlu0 %v5221, 72
      %v5959 = vpop.permute.xlu0 %5958
      %5960 = vrot.lane.b32.xlu0 %v5224, 72
      %v5961 = vpop.permute.xlu0 %5960
      %5962 = vrot.lane.b32.xlu0 %v5226, 72
      %v5963 = vpop.permute.xlu0 %5962
      %5964 = vrot.lane.b32.xlu0 %v5229, 72
      %v5965 = vpop.permute.xlu0 %5964
      %5966 = vrot.lane.b32.xlu0 %v5231, 72
      %v5967 = vpop.permute.xlu0 %5966
      %5968 = vrot.lane.b32.xlu0 %v5234, 72
      %v5969 = vpop.permute.xlu0 %5968
      %5970 = vrot.lane.b32.xlu0 %v5236, 72
      %v5971 = vpop.permute.xlu0 %5970
      %5972 = vrot.lane.b32.xlu0 %v5239, 72
      %v5973 = vpop.permute.xlu0 %5972
      %5974 = vrot.lane.b32.xlu0 %v5241, 72
      %v5975 = vpop.permute.xlu0 %5974
      %5976 = vrot.lane.b32.xlu0 %v5244, 72
      %v5977 = vpop.permute.xlu0 %5976
      %5978 = vrot.lane.b32.xlu0 %v5246, 72
      %v5979 = vpop.permute.xlu0 %5978
      %5980 = vrot.lane.b32.xlu0 %v5249, 72
      %v5981 = vpop.permute.xlu0 %5980
      %5982 = vrot.lane.b32.xlu0 %v5251, 72
      %v5983 = vpop.permute.xlu0 %5982
      %5984 = vrot.lane.b32.xlu0 %v5254, 72
      %v5985 = vpop.permute.xlu0 %5984
      %5986 = vrot.lane.b32.xlu0 %v5256, 72
      %v5987 = vpop.permute.xlu0 %5986
      %5988 = vrot.lane.b32.xlu0 %v5259, 72
      %v5989 = vpop.permute.xlu0 %5988
      %5990 = vrot.lane.b32.xlu0 %v5261, 72
      %v5991 = vpop.permute.xlu0 %5990
      %5992 = vrot.lane.b32.xlu0 %v5264, 72
      %v5993 = vpop.permute.xlu0 %5992
      %5994 = vrot.lane.b32.xlu0 %v5266, 72
      %v5995 = vpop.permute.xlu0 %5994
      %5996 = vrot.lane.b32.xlu0 %v5269, 72
      %v5997 = vpop.permute.xlu0 %5996
      %5998 = vrot.lane.b32.xlu0 %v5271, 72
      %v5999 = vpop.permute.xlu0 %5998
      %6000 = vrot.lane.b32.xlu0 %v5937, 72
      %v6001 = vpop.permute.xlu0 %6000
      %6002 = vrot.lane.b32.xlu0 %v5939, 72
      %v6003 = vpop.permute.xlu0 %6002
      %vm6036 = vcmask 654912
      %6037 = vst.msk [vmem:[#allocation5] sm:$0xff] %vm6036, %v5941
      %6038 = vst.msk [vmem:[#allocation5 + $0x10] sm:$0xff] %vm6036, %v5943
      %6039 = vst.msk [vmem:[#allocation5 + $0x20] sm:$0xff] %vm6036, %v5945
      %6040 = vst.msk [vmem:[#allocation5 + $0x30] sm:$0xff] %vm6036, %v5947
      %6041 = vst.msk [vmem:[#allocation5 + $0x40] sm:$0xff] %vm6036, %v5949
      %6042 = vst.msk [vmem:[#allocation5 + $0x50] sm:$0xff] %vm6036, %v5951
      %6043 = vst.msk [vmem:[#allocation5 + $0x60] sm:$0xff] %vm6036, %v5953
      %6044 = vst.msk [vmem:[#allocation5 + $0x70] sm:$0xff] %vm6036, %v5955
      %6045 = vst.msk [vmem:[#allocation5 + $0x80] sm:$0xff] %vm6036, %v5957
      %6046 = vst.msk [vmem:[#allocation5 + $0x90] sm:$0xff] %vm6036, %v5959
      %6047 = vst.msk [vmem:[#allocation5 + $0xa0] sm:$0xff] %vm6036, %v5961
      %6048 = vst.msk [vmem:[#allocation5 + $0xb0] sm:$0xff] %vm6036, %v5963
      %6049 = vst.msk [vmem:[#allocation5 + $0xc0] sm:$0xff] %vm6036, %v5965
      %6050 = vst.msk [vmem:[#allocation5 + $0xd0] sm:$0xff] %vm6036, %v5967
      %6051 = vst.msk [vmem:[#allocation5 + $0xe0] sm:$0xff] %vm6036, %v5969
      %6052 = vst.msk [vmem:[#allocation5 + $0xf0] sm:$0xff] %vm6036, %v5971
      %6053 = vst.msk [vmem:[#allocation5 + $0x100] sm:$0xff] %vm6036, %v5973
      %6054 = vst.msk [vmem:[#allocation5 + $0x110] sm:$0xff] %vm6036, %v5975
      %6055 = vst.msk [vmem:[#allocation5 + $0x120] sm:$0xff] %vm6036, %v5977
      %6056 = vst.msk [vmem:[#allocation5 + $0x130] sm:$0xff] %vm6036, %v5979
      %6057 = vst.msk [vmem:[#allocation5 + $0x140] sm:$0xff] %vm6036, %v5981
      %6058 = vst.msk [vmem:[#allocation5 + $0x150] sm:$0xff] %vm6036, %v5983
      %6059 = vst.msk [vmem:[#allocation5 + $0x160] sm:$0xff] %vm6036, %v5985
      %6060 = vst.msk [vmem:[#allocation5 + $0x170] sm:$0xff] %vm6036, %v5987
      %6061 = vst.msk [vmem:[#allocation5 + $0x180] sm:$0xff] %vm6036, %v5989
      %6062 = vst.msk [vmem:[#allocation5 + $0x190] sm:$0xff] %vm6036, %v5991
      %6063 = vst.msk [vmem:[#allocation5 + $0x1a0] sm:$0xff] %vm6036, %v5993
      %6064 = vst.msk [vmem:[#allocation5 + $0x1b0] sm:$0xff] %vm6036, %v5995
      %6065 = vst.msk [vmem:[#allocation5 + $0x1c0] sm:$0xff] %vm6036, %v5997
      %6066 = vst.msk [vmem:[#allocation5 + $0x1d0] sm:$0xff] %vm6036, %v5999
      %6067 = vst.msk [vmem:[#allocation5 + $0x1e0] sm:$0xff] %vm6036, %v6001
      %6068 = vst.msk [vmem:[#allocation5 + $0x1f0] sm:$0xff] %vm6036, %v6003
      %6071 = vrot.lane.b32.xlu0 %v4431, 80
      %v6072 = vpop.permute.xlu0 %6071
      %6073 = vrot.lane.b32.xlu0 %v4432, 80
      %v6074 = vpop.permute.xlu0 %6073
      %6075 = vrot.lane.b32.xlu0 %v4434, 80
      %v6076 = vpop.permute.xlu0 %6075
      %6077 = vrot.lane.b32.xlu0 %v4435, 80
      %v6078 = vpop.permute.xlu0 %6077
      %6079 = vrot.lane.b32.xlu0 %v4437, 80
      %v6080 = vpop.permute.xlu0 %6079
      %6081 = vrot.lane.b32.xlu0 %v4438, 80
      %v6082 = vpop.permute.xlu0 %6081
      %6083 = vrot.lane.b32.xlu0 %v4440, 80
      %v6084 = vpop.permute.xlu0 %6083
      %6085 = vrot.lane.b32.xlu0 %v4441, 80
      %v6086 = vpop.permute.xlu0 %6085
      %6087 = vrot.lane.b32.xlu0 %v4443, 80
      %v6088 = vpop.permute.xlu0 %6087
      %6089 = vrot.lane.b32.xlu0 %v4444, 80
      %v6090 = vpop.permute.xlu0 %6089
      %6091 = vrot.lane.b32.xlu0 %v4446, 80
      %v6092 = vpop.permute.xlu0 %6091
      %6093 = vrot.lane.b32.xlu0 %v4447, 80
      %v6094 = vpop.permute.xlu0 %6093
      %6095 = vrot.lane.b32.xlu0 %v4449, 80
      %v6096 = vpop.permute.xlu0 %6095
      %6097 = vrot.lane.b32.xlu0 %v4450, 80
      %v6098 = vpop.permute.xlu0 %6097
      %6099 = vrot.lane.b32.xlu0 %v4452, 80
      %v6100 = vpop.permute.xlu0 %6099
      %6101 = vrot.lane.b32.xlu0 %v4453, 80
      %v6102 = vpop.permute.xlu0 %6101
      %6103 = vrot.lane.b32.xlu0 %v4455, 80
      %v6104 = vpop.permute.xlu0 %6103
      %6105 = vrot.lane.b32.xlu0 %v4456, 80
      %v6106 = vpop.permute.xlu0 %6105
      %6107 = vrot.lane.b32.xlu0 %v4458, 80
      %v6108 = vpop.permute.xlu0 %6107
      %6109 = vrot.lane.b32.xlu0 %v4459, 80
      %v6110 = vpop.permute.xlu0 %6109
      %6111 = vrot.lane.b32.xlu0 %v4461, 80
      %v6112 = vpop.permute.xlu0 %6111
      %6113 = vrot.lane.b32.xlu0 %v4462, 80
      %v6114 = vpop.permute.xlu0 %6113
      %6115 = vrot.lane.b32.xlu0 %v4464, 80
      %v6116 = vpop.permute.xlu0 %6115
      %6117 = vrot.lane.b32.xlu0 %v4465, 80
      %v6118 = vpop.permute.xlu0 %6117
      %6119 = vrot.lane.b32.xlu0 %v4467, 80
      %v6120 = vpop.permute.xlu0 %6119
      %6121 = vrot.lane.b32.xlu0 %v4468, 80
      %v6122 = vpop.permute.xlu0 %6121
      %6123 = vrot.lane.b32.xlu0 %v4470, 80
      %v6124 = vpop.permute.xlu0 %6123
      %6125 = vrot.lane.b32.xlu0 %v4471, 80
      %v6126 = vpop.permute.xlu0 %6125
      %6127 = vrot.lane.b32.xlu0 %v4473, 80
      %v6128 = vpop.permute.xlu0 %6127
      %6129 = vrot.lane.b32.xlu0 %v4474, 80
      %v6130 = vpop.permute.xlu0 %6129
      %6131 = vrot.lane.b32.xlu0 %v4476, 80
      %v6132 = vpop.permute.xlu0 %6131
      %6133 = vrot.lane.b32.xlu0 %v4477, 80
      %v6134 = vpop.permute.xlu0 %6133
      %vm6167 = vcmask 720512
      %6168 = vst.msk [vmem:[#allocation5] sm:$0xff] %vm6167, %v6072
      %6169 = vst.msk [vmem:[#allocation5 + $0x10] sm:$0xff] %vm6167, %v6074
      %6170 = vst.msk [vmem:[#allocation5 + $0x20] sm:$0xff] %vm6167, %v6076
      %6171 = vst.msk [vmem:[#allocation5 + $0x30] sm:$0xff] %vm6167, %v6078
      %6172 = vst.msk [vmem:[#allocation5 + $0x40] sm:$0xff] %vm6167, %v6080
      %6173 = vst.msk [vmem:[#allocation5 + $0x50] sm:$0xff] %vm6167, %v6082
      %6174 = vst.msk [vmem:[#allocation5 + $0x60] sm:$0xff] %vm6167, %v6084
      %6175 = vst.msk [vmem:[#allocation5 + $0x70] sm:$0xff] %vm6167, %v6086
      %6176 = vst.msk [vmem:[#allocation5 + $0x80] sm:$0xff] %vm6167, %v6088
      %6177 = vst.msk [vmem:[#allocation5 + $0x90] sm:$0xff] %vm6167, %v6090
      %6178 = vst.msk [vmem:[#allocation5 + $0xa0] sm:$0xff] %vm6167, %v6092
      %6179 = vst.msk [vmem:[#allocation5 + $0xb0] sm:$0xff] %vm6167, %v6094
      %6180 = vst.msk [vmem:[#allocation5 + $0xc0] sm:$0xff] %vm6167, %v6096
      %6181 = vst.msk [vmem:[#allocation5 + $0xd0] sm:$0xff] %vm6167, %v6098
      %6182 = vst.msk [vmem:[#allocation5 + $0xe0] sm:$0xff] %vm6167, %v6100
      %6183 = vst.msk [vmem:[#allocation5 + $0xf0] sm:$0xff] %vm6167, %v6102
      %6184 = vst.msk [vmem:[#allocation5 + $0x100] sm:$0xff] %vm6167, %v6104
      %6185 = vst.msk [vmem:[#allocation5 + $0x110] sm:$0xff] %vm6167, %v6106
      %6186 = vst.msk [vmem:[#allocation5 + $0x120] sm:$0xff] %vm6167, %v6108
      %6187 = vst.msk [vmem:[#allocation5 + $0x130] sm:$0xff] %vm6167, %v6110
      %6188 = vst.msk [vmem:[#allocation5 + $0x140] sm:$0xff] %vm6167, %v6112
      %6189 = vst.msk [vmem:[#allocation5 + $0x150] sm:$0xff] %vm6167, %v6114
      %6190 = vst.msk [vmem:[#allocation5 + $0x160] sm:$0xff] %vm6167, %v6116
      %6191 = vst.msk [vmem:[#allocation5 + $0x170] sm:$0xff] %vm6167, %v6118
      %6192 = vst.msk [vmem:[#allocation5 + $0x180] sm:$0xff] %vm6167, %v6120
      %6193 = vst.msk [vmem:[#allocation5 + $0x190] sm:$0xff] %vm6167, %v6122
      %6194 = vst.msk [vmem:[#allocation5 + $0x1a0] sm:$0xff] %vm6167, %v6124
      %6195 = vst.msk [vmem:[#allocation5 + $0x1b0] sm:$0xff] %vm6167, %v6126
      %6196 = vst.msk [vmem:[#allocation5 + $0x1c0] sm:$0xff] %vm6167, %v6128
      %6197 = vst.msk [vmem:[#allocation5 + $0x1d0] sm:$0xff] %vm6167, %v6130
      %6198 = vst.msk [vmem:[#allocation5 + $0x1e0] sm:$0xff] %vm6167, %v6132
      %6199 = vst.msk [vmem:[#allocation5 + $0x1f0] sm:$0xff] %vm6167, %v6134
      %v6201 = vrot.slane %v4476, 1
      %v6202 = vrot.slane %v4477, 1
      %v6203 = vsel %vm524, %v6201, %v6202
      %v6204 = vrot.slane %v4478, 1
      %v6205 = vsel %vm524, %v6202, %v6204
      %6206 = vrot.lane.b32.xlu0 %v4577, 88
      %v6207 = vpop.permute.xlu0 %6206
      %6208 = vrot.lane.b32.xlu0 %v4579, 88
      %v6209 = vpop.permute.xlu0 %6208
      %6210 = vrot.lane.b32.xlu0 %v4582, 88
      %v6211 = vpop.permute.xlu0 %6210
      %6212 = vrot.lane.b32.xlu0 %v4584, 88
      %v6213 = vpop.permute.xlu0 %6212
      %6214 = vrot.lane.b32.xlu0 %v4587, 88
      %v6215 = vpop.permute.xlu0 %6214
      %6216 = vrot.lane.b32.xlu0 %v4589, 88
      %v6217 = vpop.permute.xlu0 %6216
      %6218 = vrot.lane.b32.xlu0 %v4592, 88
      %v6219 = vpop.permute.xlu0 %6218
      %6220 = vrot.lane.b32.xlu0 %v4594, 88
      %v6221 = vpop.permute.xlu0 %6220
      %6222 = vrot.lane.b32.xlu0 %v4597, 88
      %v6223 = vpop.permute.xlu0 %6222
      %6224 = vrot.lane.b32.xlu0 %v4599, 88
      %v6225 = vpop.permute.xlu0 %6224
      %6226 = vrot.lane.b32.xlu0 %v4602, 88
      %v6227 = vpop.permute.xlu0 %6226
      %6228 = vrot.lane.b32.xlu0 %v4604, 88
      %v6229 = vpop.permute.xlu0 %6228
      %6230 = vrot.lane.b32.xlu0 %v4607, 88
      %v6231 = vpop.permute.xlu0 %6230
      %6232 = vrot.lane.b32.xlu0 %v4609, 88
      %v6233 = vpop.permute.xlu0 %6232
      %6234 = vrot.lane.b32.xlu0 %v4612, 88
      %v6235 = vpop.permute.xlu0 %6234
      %6236 = vrot.lane.b32.xlu0 %v4614, 88
      %v6237 = vpop.permute.xlu0 %6236
      %6238 = vrot.lane.b32.xlu0 %v4617, 88
      %v6239 = vpop.permute.xlu0 %6238
      %6240 = vrot.lane.b32.xlu0 %v4619, 88
      %v6241 = vpop.permute.xlu0 %6240
      %6242 = vrot.lane.b32.xlu0 %v4622, 88
      %v6243 = vpop.permute.xlu0 %6242
      %6244 = vrot.lane.b32.xlu0 %v4624, 88
      %v6245 = vpop.permute.xlu0 %6244
      %6246 = vrot.lane.b32.xlu0 %v4627, 88
      %v6247 = vpop.permute.xlu0 %6246
      %6248 = vrot.lane.b32.xlu0 %v4629, 88
      %v6249 = vpop.permute.xlu0 %6248
      %6250 = vrot.lane.b32.xlu0 %v4632, 88
      %v6251 = vpop.permute.xlu0 %6250
      %6252 = vrot.lane.b32.xlu0 %v4634, 88
      %v6253 = vpop.permute.xlu0 %6252
      %6254 = vrot.lane.b32.xlu0 %v4637, 88
      %v6255 = vpop.permute.xlu0 %6254
      %6256 = vrot.lane.b32.xlu0 %v4639, 88
      %v6257 = vpop.permute.xlu0 %6256
      %6258 = vrot.lane.b32.xlu0 %v4642, 88
      %v6259 = vpop.permute.xlu0 %6258
      %6260 = vrot.lane.b32.xlu0 %v4644, 88
      %v6261 = vpop.permute.xlu0 %6260
      %6262 = vrot.lane.b32.xlu0 %v5535, 88
      %v6263 = vpop.permute.xlu0 %6262
      %6264 = vrot.lane.b32.xlu0 %v5537, 88
      %v6265 = vpop.permute.xlu0 %6264
      %6266 = vrot.lane.b32.xlu0 %v6203, 88
      %v6267 = vpop.permute.xlu0 %6266
      %6268 = vrot.lane.b32.xlu0 %v6205, 88
      %v6269 = vpop.permute.xlu0 %6268
      %vm6302 = vcmask 786112
      %6303 = vst.msk [vmem:[#allocation5] sm:$0xff] %vm6302, %v6207
      %6304 = vst.msk [vmem:[#allocation5 + $0x10] sm:$0xff] %vm6302, %v6209
      %6305 = vst.msk [vmem:[#allocation5 + $0x20] sm:$0xff] %vm6302, %v6211
      %6306 = vst.msk [vmem:[#allocation5 + $0x30] sm:$0xff] %vm6302, %v6213
      %6307 = vst.msk [vmem:[#allocation5 + $0x40] sm:$0xff] %vm6302, %v6215
      %6308 = vst.msk [vmem:[#allocation5 + $0x50] sm:$0xff] %vm6302, %v6217
      %6309 = vst.msk [vmem:[#allocation5 + $0x60] sm:$0xff] %vm6302, %v6219
      %6310 = vst.msk [vmem:[#allocation5 + $0x70] sm:$0xff] %vm6302, %v6221
      %6311 = vst.msk [vmem:[#allocation5 + $0x80] sm:$0xff] %vm6302, %v6223
      %6312 = vst.msk [vmem:[#allocation5 + $0x90] sm:$0xff] %vm6302, %v6225
      %6313 = vst.msk [vmem:[#allocation5 + $0xa0] sm:$0xff] %vm6302, %v6227
      %6314 = vst.msk [vmem:[#allocation5 + $0xb0] sm:$0xff] %vm6302, %v6229
      %6315 = vst.msk [vmem:[#allocation5 + $0xc0] sm:$0xff] %vm6302, %v6231
      %6316 = vst.msk [vmem:[#allocation5 + $0xd0] sm:$0xff] %vm6302, %v6233
      %6317 = vst.msk [vmem:[#allocation5 + $0xe0] sm:$0xff] %vm6302, %v6235
      %6318 = vst.msk [vmem:[#allocation5 + $0xf0] sm:$0xff] %vm6302, %v6237
      %6319 = vst.msk [vmem:[#allocation5 + $0x100] sm:$0xff] %vm6302, %v6239
      %6320 = vst.msk [vmem:[#allocation5 + $0x110] sm:$0xff] %vm6302, %v6241
      %6321 = vst.msk [vmem:[#allocation5 + $0x120] sm:$0xff] %vm6302, %v6243
      %6322 = vst.msk [vmem:[#allocation5 + $0x130] sm:$0xff] %vm6302, %v6245
      %6323 = vst.msk [vmem:[#allocation5 + $0x140] sm:$0xff] %vm6302, %v6247
      %6324 = vst.msk [vmem:[#allocation5 + $0x150] sm:$0xff] %vm6302, %v6249
      %6325 = vst.msk [vmem:[#allocation5 + $0x160] sm:$0xff] %vm6302, %v6251
      %6326 = vst.msk [vmem:[#allocation5 + $0x170] sm:$0xff] %vm6302, %v6253
      %6327 = vst.msk [vmem:[#allocation5 + $0x180] sm:$0xff] %vm6302, %v6255
      %6328 = vst.msk [vmem:[#allocation5 + $0x190] sm:$0xff] %vm6302, %v6257
      %6329 = vst.msk [vmem:[#allocation5 + $0x1a0] sm:$0xff] %vm6302, %v6259
      %6330 = vst.msk [vmem:[#allocation5 + $0x1b0] sm:$0xff] %vm6302, %v6261
      %6331 = vst.msk [vmem:[#allocation5 + $0x1c0] sm:$0xff] %vm6302, %v6263
      %6332 = vst.msk [vmem:[#allocation5 + $0x1d0] sm:$0xff] %vm6302, %v6265
      %6333 = vst.msk [vmem:[#allocation5 + $0x1e0] sm:$0xff] %vm6302, %v6267
      %6334 = vst.msk [vmem:[#allocation5 + $0x1f0] sm:$0xff] %vm6302, %v6269
      %v6335 = vrot.slane %v4476, 2
      %v6336 = vrot.slane %v4477, 2
      %v6337 = vsel %vm734, %v6335, %v6336
      %v6338 = vrot.slane %v4478, 2
      %v6339 = vsel %vm734, %v6336, %v6338
      %6340 = vrot.lane.b32.xlu0 %v4786, 96
      %v6341 = vpop.permute.xlu0 %6340
      %6342 = vrot.lane.b32.xlu0 %v4788, 96
      %v6343 = vpop.permute.xlu0 %6342
      %6344 = vrot.lane.b32.xlu0 %v4791, 96
      %v6345 = vpop.permute.xlu0 %6344
      %6346 = vrot.lane.b32.xlu0 %v4793, 96
      %v6347 = vpop.permute.xlu0 %6346
      %6348 = vrot.lane.b32.xlu0 %v4796, 96
      %v6349 = vpop.permute.xlu0 %6348
      %6350 = vrot.lane.b32.xlu0 %v4798, 96
      %v6351 = vpop.permute.xlu0 %6350
      %6352 = vrot.lane.b32.xlu0 %v4801, 96
      %v6353 = vpop.permute.xlu0 %6352
      %6354 = vrot.lane.b32.xlu0 %v4803, 96
      %v6355 = vpop.permute.xlu0 %6354
      %6356 = vrot.lane.b32.xlu0 %v4806, 96
      %v6357 = vpop.permute.xlu0 %6356
      %6358 = vrot.lane.b32.xlu0 %v4808, 96
      %v6359 = vpop.permute.xlu0 %6358
      %6360 = vrot.lane.b32.xlu0 %v4811, 96
      %v6361 = vpop.permute.xlu0 %6360
      %6362 = vrot.lane.b32.xlu0 %v4813, 96
      %v6363 = vpop.permute.xlu0 %6362
      %6364 = vrot.lane.b32.xlu0 %v4816, 96
      %v6365 = vpop.permute.xlu0 %6364
      %6366 = vrot.lane.b32.xlu0 %v4818, 96
      %v6367 = vpop.permute.xlu0 %6366
      %6368 = vrot.lane.b32.xlu0 %v4821, 96
      %v6369 = vpop.permute.xlu0 %6368
      %6370 = vrot.lane.b32.xlu0 %v4823, 96
      %v6371 = vpop.permute.xlu0 %6370
      %6372 = vrot.lane.b32.xlu0 %v4826, 96
      %v6373 = vpop.permute.xlu0 %6372
      %6374 = vrot.lane.b32.xlu0 %v4828, 96
      %v6375 = vpop.permute.xlu0 %6374
      %6376 = vrot.lane.b32.xlu0 %v4831, 96
      %v6377 = vpop.permute.xlu0 %6376
      %6378 = vrot.lane.b32.xlu0 %v4833, 96
      %v6379 = vpop.permute.xlu0 %6378
      %6380 = vrot.lane.b32.xlu0 %v4836, 96
      %v6381 = vpop.permute.xlu0 %6380
      %6382 = vrot.lane.b32.xlu0 %v4838, 96
      %v6383 = vpop.permute.xlu0 %6382
      %6384 = vrot.lane.b32.xlu0 %v4841, 96
      %v6385 = vpop.permute.xlu0 %6384
      %6386 = vrot.lane.b32.xlu0 %v4843, 96
      %v6387 = vpop.permute.xlu0 %6386
      %6388 = vrot.lane.b32.xlu0 %v4846, 96
      %v6389 = vpop.permute.xlu0 %6388
      %6390 = vrot.lane.b32.xlu0 %v4848, 96
      %v6391 = vpop.permute.xlu0 %6390
      %6392 = vrot.lane.b32.xlu0 %v4851, 96
      %v6393 = vpop.permute.xlu0 %6392
      %6394 = vrot.lane.b32.xlu0 %v4853, 96
      %v6395 = vpop.permute.xlu0 %6394
      %6396 = vrot.lane.b32.xlu0 %v5669, 96
      %v6397 = vpop.permute.xlu0 %6396
      %6398 = vrot.lane.b32.xlu0 %v5671, 96
      %v6399 = vpop.permute.xlu0 %6398
      %6400 = vrot.lane.b32.xlu0 %v6337, 96
      %v6401 = vpop.permute.xlu0 %6400
      %6402 = vrot.lane.b32.xlu0 %v6339, 96
      %v6403 = vpop.permute.xlu0 %6402
      %vm6436 = vcmask 851712
      %6437 = vst.msk [vmem:[#allocation5] sm:$0xff] %vm6436, %v6341
      %6438 = vst.msk [vmem:[#allocation5 + $0x10] sm:$0xff] %vm6436, %v6343
      %6439 = vst.msk [vmem:[#allocation5 + $0x20] sm:$0xff] %vm6436, %v6345
      %6440 = vst.msk [vmem:[#allocation5 + $0x30] sm:$0xff] %vm6436, %v6347
      %6441 = vst.msk [vmem:[#allocation5 + $0x40] sm:$0xff] %vm6436, %v6349
      %6442 = vst.msk [vmem:[#allocation5 + $0x50] sm:$0xff] %vm6436, %v6351
      %6443 = vst.msk [vmem:[#allocation5 + $0x60] sm:$0xff] %vm6436, %v6353
      %6444 = vst.msk [vmem:[#allocation5 + $0x70] sm:$0xff] %vm6436, %v6355
      %6445 = vst.msk [vmem:[#allocation5 + $0x80] sm:$0xff] %vm6436, %v6357
      %6446 = vst.msk [vmem:[#allocation5 + $0x90] sm:$0xff] %vm6436, %v6359
      %6447 = vst.msk [vmem:[#allocation5 + $0xa0] sm:$0xff] %vm6436, %v6361
      %6448 = vst.msk [vmem:[#allocation5 + $0xb0] sm:$0xff] %vm6436, %v6363
      %6449 = vst.msk [vmem:[#allocation5 + $0xc0] sm:$0xff] %vm6436, %v6365
      %6450 = vst.msk [vmem:[#allocation5 + $0xd0] sm:$0xff] %vm6436, %v6367
      %6451 = vst.msk [vmem:[#allocation5 + $0xe0] sm:$0xff] %vm6436, %v6369
      %6452 = vst.msk [vmem:[#allocation5 + $0xf0] sm:$0xff] %vm6436, %v6371
      %6453 = vst.msk [vmem:[#allocation5 + $0x100] sm:$0xff] %vm6436, %v6373
      %6454 = vst.msk [vmem:[#allocation5 + $0x110] sm:$0xff] %vm6436, %v6375
      %6455 = vst.msk [vmem:[#allocation5 + $0x120] sm:$0xff] %vm6436, %v6377
      %6456 = vst.msk [vmem:[#allocation5 + $0x130] sm:$0xff] %vm6436, %v6379
      %6457 = vst.msk [vmem:[#allocation5 + $0x140] sm:$0xff] %vm6436, %v6381
      %6458 = vst.msk [vmem:[#allocation5 + $0x150] sm:$0xff] %vm6436, %v6383
      %6459 = vst.msk [vmem:[#allocation5 + $0x160] sm:$0xff] %vm6436, %v6385
      %6460 = vst.msk [vmem:[#allocation5 + $0x170] sm:$0xff] %vm6436, %v6387
      %6461 = vst.msk [vmem:[#allocation5 + $0x180] sm:$0xff] %vm6436, %v6389
      %6462 = vst.msk [vmem:[#allocation5 + $0x190] sm:$0xff] %vm6436, %v6391
      %6463 = vst.msk [vmem:[#allocation5 + $0x1a0] sm:$0xff] %vm6436, %v6393
      %6464 = vst.msk [vmem:[#allocation5 + $0x1b0] sm:$0xff] %vm6436, %v6395
      %6465 = vst.msk [vmem:[#allocation5 + $0x1c0] sm:$0xff] %vm6436, %v6397
      %6466 = vst.msk [vmem:[#allocation5 + $0x1d0] sm:$0xff] %vm6436, %v6399
      %6467 = vst.msk [vmem:[#allocation5 + $0x1e0] sm:$0xff] %vm6436, %v6401
      %6468 = vst.msk [vmem:[#allocation5 + $0x1f0] sm:$0xff] %vm6436, %v6403
      %v6469 = vrot.slane %v4476, 3
      %v6470 = vrot.slane %v4477, 3
      %v6471 = vsel %vm944, %v6469, %v6470
      %v6472 = vrot.slane %v4478, 3
      %v6473 = vsel %vm944, %v6470, %v6472
      %6474 = vrot.lane.b32.xlu0 %v4995, 104
      %v6475 = vpop.permute.xlu0 %6474
      %6476 = vrot.lane.b32.xlu0 %v4997, 104
      %v6477 = vpop.permute.xlu0 %6476
      %6478 = vrot.lane.b32.xlu0 %v5000, 104
      %v6479 = vpop.permute.xlu0 %6478
      %6480 = vrot.lane.b32.xlu0 %v5002, 104
      %v6481 = vpop.permute.xlu0 %6480
      %6482 = vrot.lane.b32.xlu0 %v5005, 104
      %v6483 = vpop.permute.xlu0 %6482
      %6484 = vrot.lane.b32.xlu0 %v5007, 104
      %v6485 = vpop.permute.xlu0 %6484
      %6486 = vrot.lane.b32.xlu0 %v5010, 104
      %v6487 = vpop.permute.xlu0 %6486
      %6488 = vrot.lane.b32.xlu0 %v5012, 104
      %v6489 = vpop.permute.xlu0 %6488
      %6490 = vrot.lane.b32.xlu0 %v5015, 104
      %v6491 = vpop.permute.xlu0 %6490
      %6492 = vrot.lane.b32.xlu0 %v5017, 104
      %v6493 = vpop.permute.xlu0 %6492
      %6494 = vrot.lane.b32.xlu0 %v5020, 104
      %v6495 = vpop.permute.xlu0 %6494
      %6496 = vrot.lane.b32.xlu0 %v5022, 104
      %v6497 = vpop.permute.xlu0 %6496
      %6498 = vrot.lane.b32.xlu0 %v5025, 104
      %v6499 = vpop.permute.xlu0 %6498
      %6500 = vrot.lane.b32.xlu0 %v5027, 104
      %v6501 = vpop.permute.xlu0 %6500
      %6502 = vrot.lane.b32.xlu0 %v5030, 104
      %v6503 = vpop.permute.xlu0 %6502
      %6504 = vrot.lane.b32.xlu0 %v5032, 104
      %v6505 = vpop.permute.xlu0 %6504
      %6506 = vrot.lane.b32.xlu0 %v5035, 104
      %v6507 = vpop.permute.xlu0 %6506
      %6508 = vrot.lane.b32.xlu0 %v5037, 104
      %v6509 = vpop.permute.xlu0 %6508
      %6510 = vrot.lane.b32.xlu0 %v5040, 104
      %v6511 = vpop.permute.xlu0 %6510
      %6512 = vrot.lane.b32.xlu0 %v5042, 104
      %v6513 = vpop.permute.xlu0 %6512
      %6514 = vrot.lane.b32.xlu0 %v5045, 104
      %v6515 = vpop.permute.xlu0 %6514
      %6516 = vrot.lane.b32.xlu0 %v5047, 104
      %v6517 = vpop.permute.xlu0 %6516
      %6518 = vrot.lane.b32.xlu0 %v5050, 104
      %v6519 = vpop.permute.xlu0 %6518
      %6520 = vrot.lane.b32.xlu0 %v5052, 104
      %v6521 = vpop.permute.xlu0 %6520
      %6522 = vrot.lane.b32.xlu0 %v5055, 104
      %v6523 = vpop.permute.xlu0 %6522
      %6524 = vrot.lane.b32.xlu0 %v5057, 104
      %v6525 = vpop.permute.xlu0 %6524
      %6526 = vrot.lane.b32.xlu0 %v5060, 104
      %v6527 = vpop.permute.xlu0 %6526
      %6528 = vrot.lane.b32.xlu0 %v5062, 104
      %v6529 = vpop.permute.xlu0 %6528
      %6530 = vrot.lane.b32.xlu0 %v5803, 104
      %v6531 = vpop.permute.xlu0 %6530
      %6532 = vrot.lane.b32.xlu0 %v5805, 104
      %v6533 = vpop.permute.xlu0 %6532
      %6534 = vrot.lane.b32.xlu0 %v6471, 104
      %v6535 = vpop.permute.xlu0 %6534
      %6536 = vrot.lane.b32.xlu0 %v6473, 104
      %v6537 = vpop.permute.xlu0 %6536
      %vm6570 = vcmask 917312
      %6571 = vst.msk [vmem:[#allocation5] sm:$0xff] %vm6570, %v6475
      %6572 = vst.msk [vmem:[#allocation5 + $0x10] sm:$0xff] %vm6570, %v6477
      %6573 = vst.msk [vmem:[#allocation5 + $0x20] sm:$0xff] %vm6570, %v6479
      %6574 = vst.msk [vmem:[#allocation5 + $0x30] sm:$0xff] %vm6570, %v6481
      %6575 = vst.msk [vmem:[#allocation5 + $0x40] sm:$0xff] %vm6570, %v6483
      %6576 = vst.msk [vmem:[#allocation5 + $0x50] sm:$0xff] %vm6570, %v6485
      %6577 = vst.msk [vmem:[#allocation5 + $0x60] sm:$0xff] %vm6570, %v6487
      %6578 = vst.msk [vmem:[#allocation5 + $0x70] sm:$0xff] %vm6570, %v6489
      %6579 = vst.msk [vmem:[#allocation5 + $0x80] sm:$0xff] %vm6570, %v6491
      %6580 = vst.msk [vmem:[#allocation5 + $0x90] sm:$0xff] %vm6570, %v6493
      %6581 = vst.msk [vmem:[#allocation5 + $0xa0] sm:$0xff] %vm6570, %v6495
      %6582 = vst.msk [vmem:[#allocation5 + $0xb0] sm:$0xff] %vm6570, %v6497
      %6583 = vst.msk [vmem:[#allocation5 + $0xc0] sm:$0xff] %vm6570, %v6499
      %6584 = vst.msk [vmem:[#allocation5 + $0xd0] sm:$0xff] %vm6570, %v6501
      %6585 = vst.msk [vmem:[#allocation5 + $0xe0] sm:$0xff] %vm6570, %v6503
      %6586 = vst.msk [vmem:[#allocation5 + $0xf0] sm:$0xff] %vm6570, %v6505
      %6587 = vst.msk [vmem:[#allocation5 + $0x100] sm:$0xff] %vm6570, %v6507
      %6588 = vst.msk [vmem:[#allocation5 + $0x110] sm:$0xff] %vm6570, %v6509
      %6589 = vst.msk [vmem:[#allocation5 + $0x120] sm:$0xff] %vm6570, %v6511
      %6590 = vst.msk [vmem:[#allocation5 + $0x130] sm:$0xff] %vm6570, %v6513
      %6591 = vst.msk [vmem:[#allocation5 + $0x140] sm:$0xff] %vm6570, %v6515
      %6592 = vst.msk [vmem:[#allocation5 + $0x150] sm:$0xff] %vm6570, %v6517
      %6593 = vst.msk [vmem:[#allocation5 + $0x160] sm:$0xff] %vm6570, %v6519
      %6594 = vst.msk [vmem:[#allocation5 + $0x170] sm:$0xff] %vm6570, %v6521
      %6595 = vst.msk [vmem:[#allocation5 + $0x180] sm:$0xff] %vm6570, %v6523
      %6596 = vst.msk [vmem:[#allocation5 + $0x190] sm:$0xff] %vm6570, %v6525
      %6597 = vst.msk [vmem:[#allocation5 + $0x1a0] sm:$0xff] %vm6570, %v6527
      %6598 = vst.msk [vmem:[#allocation5 + $0x1b0] sm:$0xff] %vm6570, %v6529
      %6599 = vst.msk [vmem:[#allocation5 + $0x1c0] sm:$0xff] %vm6570, %v6531
      %6600 = vst.msk [vmem:[#allocation5 + $0x1d0] sm:$0xff] %vm6570, %v6533
      %6601 = vst.msk [vmem:[#allocation5 + $0x1e0] sm:$0xff] %vm6570, %v6535
      %6602 = vst.msk [vmem:[#allocation5 + $0x1f0] sm:$0xff] %vm6570, %v6537
      %v6603 = vrot.slane %v4476, 4
      %v6604 = vrot.slane %v4477, 4
      %v6605 = vsel %vm1154, %v6603, %v6604
      %v6606 = vrot.slane %v4478, 4
      %v6607 = vsel %vm1154, %v6604, %v6606
      %6608 = vrot.lane.b32.xlu0 %v5204, 112
      %v6609 = vpop.permute.xlu0 %6608
      %6610 = vrot.lane.b32.xlu0 %v5206, 112
      %v6611 = vpop.permute.xlu0 %6610
      %6612 = vrot.lane.b32.xlu0 %v5209, 112
      %v6613 = vpop.permute.xlu0 %6612
      %6614 = vrot.lane.b32.xlu0 %v5211, 112
      %v6615 = vpop.permute.xlu0 %6614
      %6616 = vrot.lane.b32.xlu0 %v5214, 112
      %v6617 = vpop.permute.xlu0 %6616
      %6618 = vrot.lane.b32.xlu0 %v5216, 112
      %v6619 = vpop.permute.xlu0 %6618
      %6620 = vrot.lane.b32.xlu0 %v5219, 112
      %v6621 = vpop.permute.xlu0 %6620
      %6622 = vrot.lane.b32.xlu0 %v5221, 112
      %v6623 = vpop.permute.xlu0 %6622
      %6624 = vrot.lane.b32.xlu0 %v5224, 112
      %v6625 = vpop.permute.xlu0 %6624
      %6626 = vrot.lane.b32.xlu0 %v5226, 112
      %v6627 = vpop.permute.xlu0 %6626
      %6628 = vrot.lane.b32.xlu0 %v5229, 112
      %v6629 = vpop.permute.xlu0 %6628
      %6630 = vrot.lane.b32.xlu0 %v5231, 112
      %v6631 = vpop.permute.xlu0 %6630
      %6632 = vrot.lane.b32.xlu0 %v5234, 112
      %v6633 = vpop.permute.xlu0 %6632
      %6634 = vrot.lane.b32.xlu0 %v5236, 112
      %v6635 = vpop.permute.xlu0 %6634
      %6636 = vrot.lane.b32.xlu0 %v5239, 112
      %v6637 = vpop.permute.xlu0 %6636
      %6638 = vrot.lane.b32.xlu0 %v5241, 112
      %v6639 = vpop.permute.xlu0 %6638
      %6640 = vrot.lane.b32.xlu0 %v5244, 112
      %v6641 = vpop.permute.xlu0 %6640
      %6642 = vrot.lane.b32.xlu0 %v5246, 112
      %v6643 = vpop.permute.xlu0 %6642
      %6644 = vrot.lane.b32.xlu0 %v5249, 112
      %v6645 = vpop.permute.xlu0 %6644
      %6646 = vrot.lane.b32.xlu0 %v5251, 112
      %v6647 = vpop.permute.xlu0 %6646
      %6648 = vrot.lane.b32.xlu0 %v5254, 112
      %v6649 = vpop.permute.xlu0 %6648
      %6650 = vrot.lane.b32.xlu0 %v5256, 112
      %v6651 = vpop.permute.xlu0 %6650
      %6652 = vrot.lane.b32.xlu0 %v5259, 112
      %v6653 = vpop.permute.xlu0 %6652
      %6654 = vrot.lane.b32.xlu0 %v5261, 112
      %v6655 = vpop.permute.xlu0 %6654
      %6656 = vrot.lane.b32.xlu0 %v5264, 112
      %v6657 = vpop.permute.xlu0 %6656
      %6658 = vrot.lane.b32.xlu0 %v5266, 112
      %v6659 = vpop.permute.xlu0 %6658
      %6660 = vrot.lane.b32.xlu0 %v5269, 112
      %v6661 = vpop.permute.xlu0 %6660
      %6662 = vrot.lane.b32.xlu0 %v5271, 112
      %v6663 = vpop.permute.xlu0 %6662
      %6664 = vrot.lane.b32.xlu0 %v5937, 112
      %v6665 = vpop.permute.xlu0 %6664
      %6666 = vrot.lane.b32.xlu0 %v5939, 112
      %v6667 = vpop.permute.xlu0 %6666
      %6668 = vrot.lane.b32.xlu0 %v6605, 112
      %v6669 = vpop.permute.xlu0 %6668
      %6670 = vrot.lane.b32.xlu0 %v6607, 112
      %v6671 = vpop.permute.xlu0 %6670
      %vm6704 = vcmask 982912
      %6705 = vst.msk [vmem:[#allocation5] sm:$0xff] %vm6704, %v6609
      %6706 = vst.msk [vmem:[#allocation5 + $0x10] sm:$0xff] %vm6704, %v6611
      %6707 = vst.msk [vmem:[#allocation5 + $0x20] sm:$0xff] %vm6704, %v6613
      %6708 = vst.msk [vmem:[#allocation5 + $0x30] sm:$0xff] %vm6704, %v6615
      %6709 = vst.msk [vmem:[#allocation5 + $0x40] sm:$0xff] %vm6704, %v6617
      %6710 = vst.msk [vmem:[#allocation5 + $0x50] sm:$0xff] %vm6704, %v6619
      %6711 = vst.msk [vmem:[#allocation5 + $0x60] sm:$0xff] %vm6704, %v6621
      %6712 = vst.msk [vmem:[#allocation5 + $0x70] sm:$0xff] %vm6704, %v6623
      %6713 = vst.msk [vmem:[#allocation5 + $0x80] sm:$0xff] %vm6704, %v6625
      %6714 = vst.msk [vmem:[#allocation5 + $0x90] sm:$0xff] %vm6704, %v6627
      %6715 = vst.msk [vmem:[#allocation5 + $0xa0] sm:$0xff] %vm6704, %v6629
      %6716 = vst.msk [vmem:[#allocation5 + $0xb0] sm:$0xff] %vm6704, %v6631
      %6717 = vst.msk [vmem:[#allocation5 + $0xc0] sm:$0xff] %vm6704, %v6633
      %6718 = vst.msk [vmem:[#allocation5 + $0xd0] sm:$0xff] %vm6704, %v6635
      %6719 = vst.msk [vmem:[#allocation5 + $0xe0] sm:$0xff] %vm6704, %v6637
      %6720 = vst.msk [vmem:[#allocation5 + $0xf0] sm:$0xff] %vm6704, %v6639
      %6721 = vst.msk [vmem:[#allocation5 + $0x100] sm:$0xff] %vm6704, %v6641
      %6722 = vst.msk [vmem:[#allocation5 + $0x110] sm:$0xff] %vm6704, %v6643
      %6723 = vst.msk [vmem:[#allocation5 + $0x120] sm:$0xff] %vm6704, %v6645
      %6724 = vst.msk [vmem:[#allocation5 + $0x130] sm:$0xff] %vm6704, %v6647
      %6725 = vst.msk [vmem:[#allocation5 + $0x140] sm:$0xff] %vm6704, %v6649
      %6726 = vst.msk [vmem:[#allocation5 + $0x150] sm:$0xff] %vm6704, %v6651
      %6727 = vst.msk [vmem:[#allocation5 + $0x160] sm:$0xff] %vm6704, %v6653
      %6728 = vst.msk [vmem:[#allocation5 + $0x170] sm:$0xff] %vm6704, %v6655
      %6729 = vst.msk [vmem:[#allocation5 + $0x180] sm:$0xff] %vm6704, %v6657
      %6730 = vst.msk [vmem:[#allocation5 + $0x190] sm:$0xff] %vm6704, %v6659
      %6731 = vst.msk [vmem:[#allocation5 + $0x1a0] sm:$0xff] %vm6704, %v6661
      %6732 = vst.msk [vmem:[#allocation5 + $0x1b0] sm:$0xff] %vm6704, %v6663
      %6733 = vst.msk [vmem:[#allocation5 + $0x1c0] sm:$0xff] %vm6704, %v6665
      %6734 = vst.msk [vmem:[#allocation5 + $0x1d0] sm:$0xff] %vm6704, %v6667
      %6735 = vst.msk [vmem:[#allocation5 + $0x1e0] sm:$0xff] %vm6704, %v6669
      %6736 = vst.msk [vmem:[#allocation5 + $0x1f0] sm:$0xff] %vm6704, %v6671
      %6739 = vrot.lane.b32.xlu0 %v4434, 120
      %v6740 = vpop.permute.xlu0 %6739
      %6741 = vrot.lane.b32.xlu0 %v4435, 120
      %v6742 = vpop.permute.xlu0 %6741
      %6743 = vrot.lane.b32.xlu0 %v4437, 120
      %v6744 = vpop.permute.xlu0 %6743
      %6745 = vrot.lane.b32.xlu0 %v4438, 120
      %v6746 = vpop.permute.xlu0 %6745
      %6747 = vrot.lane.b32.xlu0 %v4440, 120
      %v6748 = vpop.permute.xlu0 %6747
      %6749 = vrot.lane.b32.xlu0 %v4441, 120
      %v6750 = vpop.permute.xlu0 %6749
      %6751 = vrot.lane.b32.xlu0 %v4443, 120
      %v6752 = vpop.permute.xlu0 %6751
      %6753 = vrot.lane.b32.xlu0 %v4444, 120
      %v6754 = vpop.permute.xlu0 %6753
      %6755 = vrot.lane.b32.xlu0 %v4446, 120
      %v6756 = vpop.permute.xlu0 %6755
      %6757 = vrot.lane.b32.xlu0 %v4447, 120
      %v6758 = vpop.permute.xlu0 %6757
      %6759 = vrot.lane.b32.xlu0 %v4449, 120
      %v6760 = vpop.permute.xlu0 %6759
      %6761 = vrot.lane.b32.xlu0 %v4450, 120
      %v6762 = vpop.permute.xlu0 %6761
      %6763 = vrot.lane.b32.xlu0 %v4452, 120
      %v6764 = vpop.permute.xlu0 %6763
      %6765 = vrot.lane.b32.xlu0 %v4453, 120
      %v6766 = vpop.permute.xlu0 %6765
      %6767 = vrot.lane.b32.xlu0 %v4455, 120
      %v6768 = vpop.permute.xlu0 %6767
      %6769 = vrot.lane.b32.xlu0 %v4456, 120
      %v6770 = vpop.permute.xlu0 %6769
      %6771 = vrot.lane.b32.xlu0 %v4458, 120
      %v6772 = vpop.permute.xlu0 %6771
      %6773 = vrot.lane.b32.xlu0 %v4459, 120
      %v6774 = vpop.permute.xlu0 %6773
      %6775 = vrot.lane.b32.xlu0 %v4461, 120
      %v6776 = vpop.permute.xlu0 %6775
      %6777 = vrot.lane.b32.xlu0 %v4462, 120
      %v6778 = vpop.permute.xlu0 %6777
      %6779 = vrot.lane.b32.xlu0 %v4464, 120
      %v6780 = vpop.permute.xlu0 %6779
      %6781 = vrot.lane.b32.xlu0 %v4465, 120
      %v6782 = vpop.permute.xlu0 %6781
      %6783 = vrot.lane.b32.xlu0 %v4467, 120
      %v6784 = vpop.permute.xlu0 %6783
      %6785 = vrot.lane.b32.xlu0 %v4468, 120
      %v6786 = vpop.permute.xlu0 %6785
      %6787 = vrot.lane.b32.xlu0 %v4470, 120
      %v6788 = vpop.permute.xlu0 %6787
      %6789 = vrot.lane.b32.xlu0 %v4471, 120
      %v6790 = vpop.permute.xlu0 %6789
      %6791 = vrot.lane.b32.xlu0 %v4473, 120
      %v6792 = vpop.permute.xlu0 %6791
      %6793 = vrot.lane.b32.xlu0 %v4474, 120
      %v6794 = vpop.permute.xlu0 %6793
      %6795 = vrot.lane.b32.xlu0 %v4476, 120
      %v6796 = vpop.permute.xlu0 %6795
      %6797 = vrot.lane.b32.xlu0 %v4477, 120
      %v6798 = vpop.permute.xlu0 %6797
      %6799 = vrot.lane.b32.xlu0 %v4479, 120
      %v6800 = vpop.permute.xlu0 %6799
      %6801 = vrot.lane.b32.xlu0 %v4480, 120
      %v6802 = vpop.permute.xlu0 %6801
      %vm6835 = vcmask 1048512
      %6836 = vst.msk [vmem:[#allocation5] sm:$0xff] %vm6835, %v6740
      %6837 = vst.msk [vmem:[#allocation5 + $0x10] sm:$0xff] %vm6835, %v6742
      %6838 = vst.msk [vmem:[#allocation5 + $0x20] sm:$0xff] %vm6835, %v6744
      %6839 = vst.msk [vmem:[#allocation5 + $0x30] sm:$0xff] %vm6835, %v6746
      %6840 = vst.msk [vmem:[#allocation5 + $0x40] sm:$0xff] %vm6835, %v6748
      %6841 = vst.msk [vmem:[#allocation5 + $0x50] sm:$0xff] %vm6835, %v6750
      %6842 = vst.msk [vmem:[#allocation5 + $0x60] sm:$0xff] %vm6835, %v6752
      %6843 = vst.msk [vmem:[#allocation5 + $0x70] sm:$0xff] %vm6835, %v6754
      %6844 = vst.msk [vmem:[#allocation5 + $0x80] sm:$0xff] %vm6835, %v6756
      %6845 = vst.msk [vmem:[#allocation5 + $0x90] sm:$0xff] %vm6835, %v6758
      %6846 = vst.msk [vmem:[#allocation5 + $0xa0] sm:$0xff] %vm6835, %v6760
      %6847 = vst.msk [vmem:[#allocation5 + $0xb0] sm:$0xff] %vm6835, %v6762
      %6848 = vst.msk [vmem:[#allocation5 + $0xc0] sm:$0xff] %vm6835, %v6764
      %6849 = vst.msk [vmem:[#allocation5 + $0xd0] sm:$0xff] %vm6835, %v6766
      %6850 = vst.msk [vmem:[#allocation5 + $0xe0] sm:$0xff] %vm6835, %v6768
      %6851 = vst.msk [vmem:[#allocation5 + $0xf0] sm:$0xff] %vm6835, %v6770
      %6852 = vst.msk [vmem:[#allocation5 + $0x100] sm:$0xff] %vm6835, %v6772
      %6853 = vst.msk [vmem:[#allocation5 + $0x110] sm:$0xff] %vm6835, %v6774
      %6854 = vst.msk [vmem:[#allocation5 + $0x120] sm:$0xff] %vm6835, %v6776
      %6855 = vst.msk [vmem:[#allocation5 + $0x130] sm:$0xff] %vm6835, %v6778
      %6856 = vst.msk [vmem:[#allocation5 + $0x140] sm:$0xff] %vm6835, %v6780
      %6857 = vst.msk [vmem:[#allocation5 + $0x150] sm:$0xff] %vm6835, %v6782
      %6858 = vst.msk [vmem:[#allocation5 + $0x160] sm:$0xff] %vm6835, %v6784
      %6859 = vst.msk [vmem:[#allocation5 + $0x170] sm:$0xff] %vm6835, %v6786
      %6860 = vst.msk [vmem:[#allocation5 + $0x180] sm:$0xff] %vm6835, %v6788
      %6861 = vst.msk [vmem:[#allocation5 + $0x190] sm:$0xff] %vm6835, %v6790
      %6862 = vst.msk [vmem:[#allocation5 + $0x1a0] sm:$0xff] %vm6835, %v6792
      %6863 = vst.msk [vmem:[#allocation5 + $0x1b0] sm:$0xff] %vm6835, %v6794
      %6864 = vst.msk [vmem:[#allocation5 + $0x1c0] sm:$0xff] %vm6835, %v6796
      %6865 = vst.msk [vmem:[#allocation5 + $0x1d0] sm:$0xff] %vm6835, %v6798
      %6866 = vst.msk [vmem:[#allocation5 + $0x1e0] sm:$0xff] %vm6835, %v6800
      %6867 = vst.msk [vmem:[#allocation5 + $0x1f0] sm:$0xff] %vm6835, %v6802
      %v6869 = vrot.slane %v4479, 1
      %v6870 = vrot.slane %v4480, 1
      %v6871 = vsel %vm524, %v6869, %v6870
      %v6872 = vrot.slane %v4481, 1
      %v6873 = vsel %vm524, %v6870, %v6872
      %6906 = vst.msk [vmem:[#allocation5 + $0x8] sm:$0xff] %vm4330, %v4582
      %6907 = vst.msk [vmem:[#allocation5 + $0x18] sm:$0xff] %vm4330, %v4584
      %6908 = vst.msk [vmem:[#allocation5 + $0x28] sm:$0xff] %vm4330, %v4587
      %6909 = vst.msk [vmem:[#allocation5 + $0x38] sm:$0xff] %vm4330, %v4589
      %6910 = vst.msk [vmem:[#allocation5 + $0x48] sm:$0xff] %vm4330, %v4592
      %6911 = vst.msk [vmem:[#allocation5 + $0x58] sm:$0xff] %vm4330, %v4594
      %6912 = vst.msk [vmem:[#allocation5 + $0x68] sm:$0xff] %vm4330, %v4597
      %6913 = vst.msk [vmem:[#allocation5 + $0x78] sm:$0xff] %vm4330, %v4599
      %6914 = vst.msk [vmem:[#allocation5 + $0x88] sm:$0xff] %vm4330, %v4602
      %6915 = vst.msk [vmem:[#allocation5 + $0x98] sm:$0xff] %vm4330, %v4604
      %6916 = vst.msk [vmem:[#allocation5 + $0xa8] sm:$0xff] %vm4330, %v4607
      %6917 = vst.msk [vmem:[#allocation5 + $0xb8] sm:$0xff] %vm4330, %v4609
      %6918 = vst.msk [vmem:[#allocation5 + $0xc8] sm:$0xff] %vm4330, %v4612
      %6919 = vst.msk [vmem:[#allocation5 + $0xd8] sm:$0xff] %vm4330, %v4614
      %6920 = vst.msk [vmem:[#allocation5 + $0xe8] sm:$0xff] %vm4330, %v4617
      %6921 = vst.msk [vmem:[#allocation5 + $0xf8] sm:$0xff] %vm4330, %v4619
      %6922 = vst.msk [vmem:[#allocation5 + $0x108] sm:$0xff] %vm4330, %v4622
      %6923 = vst.msk [vmem:[#allocation5 + $0x118] sm:$0xff] %vm4330, %v4624
      %6924 = vst.msk [vmem:[#allocation5 + $0x128] sm:$0xff] %vm4330, %v4627
      %6925 = vst.msk [vmem:[#allocation5 + $0x138] sm:$0xff] %vm4330, %v4629
      %6926 = vst.msk [vmem:[#allocation5 + $0x148] sm:$0xff] %vm4330, %v4632
      %6927 = vst.msk [vmem:[#allocation5 + $0x158] sm:$0xff] %vm4330, %v4634
      %6928 = vst.msk [vmem:[#allocation5 + $0x168] sm:$0xff] %vm4330, %v4637
      %6929 = vst.msk [vmem:[#allocation5 + $0x178] sm:$0xff] %vm4330, %v4639
      %6930 = vst.msk [vmem:[#allocation5 + $0x188] sm:$0xff] %vm4330, %v4642
      %6931 = vst.msk [vmem:[#allocation5 + $0x198] sm:$0xff] %vm4330, %v4644
      %6932 = vst.msk [vmem:[#allocation5 + $0x1a8] sm:$0xff] %vm4330, %v5535
      %6933 = vst.msk [vmem:[#allocation5 + $0x1b8] sm:$0xff] %vm4330, %v5537
      %6934 = vst.msk [vmem:[#allocation5 + $0x1c8] sm:$0xff] %vm4330, %v6203
      %6935 = vst.msk [vmem:[#allocation5 + $0x1d8] sm:$0xff] %vm4330, %v6205
      %6936 = vst.msk [vmem:[#allocation5 + $0x1e8] sm:$0xff] %vm4330, %v6871
      %6937 = vst.msk [vmem:[#allocation5 + $0x1f8] sm:$0xff] %vm4330, %v6873
      %v6938 = vrot.slane %v4479, 2
      %v6939 = vrot.slane %v4480, 2
      %v6940 = vsel %vm734, %v6938, %v6939
      %v6941 = vrot.slane %v4481, 2
      %v6942 = vsel %vm734, %v6939, %v6941
      %6943 = vrot.lane.b32.xlu0 %v4791, 8
      %v6944 = vpop.permute.xlu0 %6943
      %6945 = vrot.lane.b32.xlu0 %v4793, 8
      %v6946 = vpop.permute.xlu0 %6945
      %6947 = vrot.lane.b32.xlu0 %v4796, 8
      %v6948 = vpop.permute.xlu0 %6947
      %6949 = vrot.lane.b32.xlu0 %v4798, 8
      %v6950 = vpop.permute.xlu0 %6949
      %6951 = vrot.lane.b32.xlu0 %v4801, 8
      %v6952 = vpop.permute.xlu0 %6951
      %6953 = vrot.lane.b32.xlu0 %v4803, 8
      %v6954 = vpop.permute.xlu0 %6953
      %6955 = vrot.lane.b32.xlu0 %v4806, 8
      %v6956 = vpop.permute.xlu0 %6955
      %6957 = vrot.lane.b32.xlu0 %v4808, 8
      %v6958 = vpop.permute.xlu0 %6957
      %6959 = vrot.lane.b32.xlu0 %v4811, 8
      %v6960 = vpop.permute.xlu0 %6959
      %6961 = vrot.lane.b32.xlu0 %v4813, 8
      %v6962 = vpop.permute.xlu0 %6961
      %6963 = vrot.lane.b32.xlu0 %v4816, 8
      %v6964 = vpop.permute.xlu0 %6963
      %6965 = vrot.lane.b32.xlu0 %v4818, 8
      %v6966 = vpop.permute.xlu0 %6965
      %6967 = vrot.lane.b32.xlu0 %v4821, 8
      %v6968 = vpop.permute.xlu0 %6967
      %6969 = vrot.lane.b32.xlu0 %v4823, 8
      %v6970 = vpop.permute.xlu0 %6969
      %6971 = vrot.lane.b32.xlu0 %v4826, 8
      %v6972 = vpop.permute.xlu0 %6971
      %6973 = vrot.lane.b32.xlu0 %v4828, 8
      %v6974 = vpop.permute.xlu0 %6973
      %6975 = vrot.lane.b32.xlu0 %v4831, 8
      %v6976 = vpop.permute.xlu0 %6975
      %6977 = vrot.lane.b32.xlu0 %v4833, 8
      %v6978 = vpop.permute.xlu0 %6977
      %6979 = vrot.lane.b32.xlu0 %v4836, 8
      %v6980 = vpop.permute.xlu0 %6979
      %6981 = vrot.lane.b32.xlu0 %v4838, 8
      %v6982 = vpop.permute.xlu0 %6981
      %6983 = vrot.lane.b32.xlu0 %v4841, 8
      %v6984 = vpop.permute.xlu0 %6983
      %6985 = vrot.lane.b32.xlu0 %v4843, 8
      %v6986 = vpop.permute.xlu0 %6985
      %6987 = vrot.lane.b32.xlu0 %v4846, 8
      %v6988 = vpop.permute.xlu0 %6987
      %6989 = vrot.lane.b32.xlu0 %v4848, 8
      %v6990 = vpop.permute.xlu0 %6989
      %6991 = vrot.lane.b32.xlu0 %v4851, 8
      %v6992 = vpop.permute.xlu0 %6991
      %6993 = vrot.lane.b32.xlu0 %v4853, 8
      %v6994 = vpop.permute.xlu0 %6993
      %6995 = vrot.lane.b32.xlu0 %v5669, 8
      %v6996 = vpop.permute.xlu0 %6995
      %6997 = vrot.lane.b32.xlu0 %v5671, 8
      %v6998 = vpop.permute.xlu0 %6997
      %6999 = vrot.lane.b32.xlu0 %v6337, 8
      %v7000 = vpop.permute.xlu0 %6999
      %7001 = vrot.lane.b32.xlu0 %v6339, 8
      %v7002 = vpop.permute.xlu0 %7001
      %7003 = vrot.lane.b32.xlu0 %v6940, 8
      %v7004 = vpop.permute.xlu0 %7003
      %7005 = vrot.lane.b32.xlu0 %v6942, 8
      %v7006 = vpop.permute.xlu0 %7005
      %7039 = vst.msk [vmem:[#allocation5 + $0x8] sm:$0xff] %vm4741, %v6944
      %7040 = vst.msk [vmem:[#allocation5 + $0x18] sm:$0xff] %vm4741, %v6946
      %7041 = vst.msk [vmem:[#allocation5 + $0x28] sm:$0xff] %vm4741, %v6948
      %7042 = vst.msk [vmem:[#allocation5 + $0x38] sm:$0xff] %vm4741, %v6950
      %7043 = vst.msk [vmem:[#allocation5 + $0x48] sm:$0xff] %vm4741, %v6952
      %7044 = vst.msk [vmem:[#allocation5 + $0x58] sm:$0xff] %vm4741, %v6954
      %7045 = vst.msk [vmem:[#allocation5 + $0x68] sm:$0xff] %vm4741, %v6956
      %7046 = vst.msk [vmem:[#allocation5 + $0x78] sm:$0xff] %vm4741, %v6958
      %7047 = vst.msk [vmem:[#allocation5 + $0x88] sm:$0xff] %vm4741, %v6960
      %7048 = vst.msk [vmem:[#allocation5 + $0x98] sm:$0xff] %vm4741, %v6962
      %7049 = vst.msk [vmem:[#allocation5 + $0xa8] sm:$0xff] %vm4741, %v6964
      %7050 = vst.msk [vmem:[#allocation5 + $0xb8] sm:$0xff] %vm4741, %v6966
      %7051 = vst.msk [vmem:[#allocation5 + $0xc8] sm:$0xff] %vm4741, %v6968
      %7052 = vst.msk [vmem:[#allocation5 + $0xd8] sm:$0xff] %vm4741, %v6970
      %7053 = vst.msk [vmem:[#allocation5 + $0xe8] sm:$0xff] %vm4741, %v6972
      %7054 = vst.msk [vmem:[#allocation5 + $0xf8] sm:$0xff] %vm4741, %v6974
      %7055 = vst.msk [vmem:[#allocation5 + $0x108] sm:$0xff] %vm4741, %v6976
      %7056 = vst.msk [vmem:[#allocation5 + $0x118] sm:$0xff] %vm4741, %v6978
      %7057 = vst.msk [vmem:[#allocation5 + $0x128] sm:$0xff] %vm4741, %v6980
      %7058 = vst.msk [vmem:[#allocation5 + $0x138] sm:$0xff] %vm4741, %v6982
      %7059 = vst.msk [vmem:[#allocation5 + $0x148] sm:$0xff] %vm4741, %v6984
      %7060 = vst.msk [vmem:[#allocation5 + $0x158] sm:$0xff] %vm4741, %v6986
      %7061 = vst.msk [vmem:[#allocation5 + $0x168] sm:$0xff] %vm4741, %v6988
      %7062 = vst.msk [vmem:[#allocation5 + $0x178] sm:$0xff] %vm4741, %v6990
      %7063 = vst.msk [vmem:[#allocation5 + $0x188] sm:$0xff] %vm4741, %v6992
      %7064 = vst.msk [vmem:[#allocation5 + $0x198] sm:$0xff] %vm4741, %v6994
      %7065 = vst.msk [vmem:[#allocation5 + $0x1a8] sm:$0xff] %vm4741, %v6996
      %7066 = vst.msk [vmem:[#allocation5 + $0x1b8] sm:$0xff] %vm4741, %v6998
      %7067 = vst.msk [vmem:[#allocation5 + $0x1c8] sm:$0xff] %vm4741, %v7000
      %7068 = vst.msk [vmem:[#allocation5 + $0x1d8] sm:$0xff] %vm4741, %v7002
      %7069 = vst.msk [vmem:[#allocation5 + $0x1e8] sm:$0xff] %vm4741, %v7004
      %7070 = vst.msk [vmem:[#allocation5 + $0x1f8] sm:$0xff] %vm4741, %v7006
      %v7071 = vrot.slane %v4479, 3
      %v7072 = vrot.slane %v4480, 3
      %v7073 = vsel %vm944, %v7071, %v7072
      %v7074 = vrot.slane %v4481, 3
      %v7075 = vsel %vm944, %v7072, %v7074
      %7076 = vrot.lane.b32.xlu0 %v5000, 16
      %v7077 = vpop.permute.xlu0 %7076
      %7078 = vrot.lane.b32.xlu0 %v5002, 16
      %v7079 = vpop.permute.xlu0 %7078
      %7080 = vrot.lane.b32.xlu0 %v5005, 16
      %v7081 = vpop.permute.xlu0 %7080
      %7082 = vrot.lane.b32.xlu0 %v5007, 16
      %v7083 = vpop.permute.xlu0 %7082
      %7084 = vrot.lane.b32.xlu0 %v5010, 16
      %v7085 = vpop.permute.xlu0 %7084
      %7086 = vrot.lane.b32.xlu0 %v5012, 16
      %v7087 = vpop.permute.xlu0 %7086
      %7088 = vrot.lane.b32.xlu0 %v5015, 16
      %v7089 = vpop.permute.xlu0 %7088
      %7090 = vrot.lane.b32.xlu0 %v5017, 16
      %v7091 = vpop.permute.xlu0 %7090
      %7092 = vrot.lane.b32.xlu0 %v5020, 16
      %v7093 = vpop.permute.xlu0 %7092
      %7094 = vrot.lane.b32.xlu0 %v5022, 16
      %v7095 = vpop.permute.xlu0 %7094
      %7096 = vrot.lane.b32.xlu0 %v5025, 16
      %v7097 = vpop.permute.xlu0 %7096
      %7098 = vrot.lane.b32.xlu0 %v5027, 16
      %v7099 = vpop.permute.xlu0 %7098
      %7100 = vrot.lane.b32.xlu0 %v5030, 16
      %v7101 = vpop.permute.xlu0 %7100
      %7102 = vrot.lane.b32.xlu0 %v5032, 16
      %v7103 = vpop.permute.xlu0 %7102
      %7104 = vrot.lane.b32.xlu0 %v5035, 16
      %v7105 = vpop.permute.xlu0 %7104
      %7106 = vrot.lane.b32.xlu0 %v5037, 16
      %v7107 = vpop.permute.xlu0 %7106
      %7108 = vrot.lane.b32.xlu0 %v5040, 16
      %v7109 = vpop.permute.xlu0 %7108
      %7110 = vrot.lane.b32.xlu0 %v5042, 16
      %v7111 = vpop.permute.xlu0 %7110
      %7112 = vrot.lane.b32.xlu0 %v5045, 16
      %v7113 = vpop.permute.xlu0 %7112
      %7114 = vrot.lane.b32.xlu0 %v5047, 16
      %v7115 = vpop.permute.xlu0 %7114
      %7116 = vrot.lane.b32.xlu0 %v5050, 16
      %v7117 = vpop.permute.xlu0 %7116
      %7118 = vrot.lane.b32.xlu0 %v5052, 16
      %v7119 = vpop.permute.xlu0 %7118
      %7120 = vrot.lane.b32.xlu0 %v5055, 16
      %v7121 = vpop.permute.xlu0 %7120
      %7122 = vrot.lane.b32.xlu0 %v5057, 16
      %v7123 = vpop.permute.xlu0 %7122
      %7124 = vrot.lane.b32.xlu0 %v5060, 16
      %v7125 = vpop.permute.xlu0 %7124
      %7126 = vrot.lane.b32.xlu0 %v5062, 16
      %v7127 = vpop.permute.xlu0 %7126
      %7128 = vrot.lane.b32.xlu0 %v5803, 16
      %v7129 = vpop.permute.xlu0 %7128
      %7130 = vrot.lane.b32.xlu0 %v5805, 16
      %v7131 = vpop.permute.xlu0 %7130
      %7132 = vrot.lane.b32.xlu0 %v6471, 16
      %v7133 = vpop.permute.xlu0 %7132
      %7134 = vrot.lane.b32.xlu0 %v6473, 16
      %v7135 = vpop.permute.xlu0 %7134
      %7136 = vrot.lane.b32.xlu0 %v7073, 16
      %v7137 = vpop.permute.xlu0 %7136
      %7138 = vrot.lane.b32.xlu0 %v7075, 16
      %v7139 = vpop.permute.xlu0 %7138
      %7172 = vst.msk [vmem:[#allocation5 + $0x8] sm:$0xff] %vm4950, %v7077
      %7173 = vst.msk [vmem:[#allocation5 + $0x18] sm:$0xff] %vm4950, %v7079
      %7174 = vst.msk [vmem:[#allocation5 + $0x28] sm:$0xff] %vm4950, %v7081
      %7175 = vst.msk [vmem:[#allocation5 + $0x38] sm:$0xff] %vm4950, %v7083
      %7176 = vst.msk [vmem:[#allocation5 + $0x48] sm:$0xff] %vm4950, %v7085
      %7177 = vst.msk [vmem:[#allocation5 + $0x58] sm:$0xff] %vm4950, %v7087
      %7178 = vst.msk [vmem:[#allocation5 + $0x68] sm:$0xff] %vm4950, %v7089
      %7179 = vst.msk [vmem:[#allocation5 + $0x78] sm:$0xff] %vm4950, %v7091
      %7180 = vst.msk [vmem:[#allocation5 + $0x88] sm:$0xff] %vm4950, %v7093
      %7181 = vst.msk [vmem:[#allocation5 + $0x98] sm:$0xff] %vm4950, %v7095
      %7182 = vst.msk [vmem:[#allocation5 + $0xa8] sm:$0xff] %vm4950, %v7097
      %7183 = vst.msk [vmem:[#allocation5 + $0xb8] sm:$0xff] %vm4950, %v7099
      %7184 = vst.msk [vmem:[#allocation5 + $0xc8] sm:$0xff] %vm4950, %v7101
      %7185 = vst.msk [vmem:[#allocation5 + $0xd8] sm:$0xff] %vm4950, %v7103
      %7186 = vst.msk [vmem:[#allocation5 + $0xe8] sm:$0xff] %vm4950, %v7105
      %7187 = vst.msk [vmem:[#allocation5 + $0xf8] sm:$0xff] %vm4950, %v7107
      %7188 = vst.msk [vmem:[#allocation5 + $0x108] sm:$0xff] %vm4950, %v7109
      %7189 = vst.msk [vmem:[#allocation5 + $0x118] sm:$0xff] %vm4950, %v7111
      %7190 = vst.msk [vmem:[#allocation5 + $0x128] sm:$0xff] %vm4950, %v7113
      %7191 = vst.msk [vmem:[#allocation5 + $0x138] sm:$0xff] %vm4950, %v7115
      %7192 = vst.msk [vmem:[#allocation5 + $0x148] sm:$0xff] %vm4950, %v7117
      %7193 = vst.msk [vmem:[#allocation5 + $0x158] sm:$0xff] %vm4950, %v7119
      %7194 = vst.msk [vmem:[#allocation5 + $0x168] sm:$0xff] %vm4950, %v7121
      %7195 = vst.msk [vmem:[#allocation5 + $0x178] sm:$0xff] %vm4950, %v7123
      %7196 = vst.msk [vmem:[#allocation5 + $0x188] sm:$0xff] %vm4950, %v7125
      %7197 = vst.msk [vmem:[#allocation5 + $0x198] sm:$0xff] %vm4950, %v7127
      %7198 = vst.msk [vmem:[#allocation5 + $0x1a8] sm:$0xff] %vm4950, %v7129
      %7199 = vst.msk [vmem:[#allocation5 + $0x1b8] sm:$0xff] %vm4950, %v7131
      %7200 = vst.msk [vmem:[#allocation5 + $0x1c8] sm:$0xff] %vm4950, %v7133
      %7201 = vst.msk [vmem:[#allocation5 + $0x1d8] sm:$0xff] %vm4950, %v7135
      %7202 = vst.msk [vmem:[#allocation5 + $0x1e8] sm:$0xff] %vm4950, %v7137
      %7203 = vst.msk [vmem:[#allocation5 + $0x1f8] sm:$0xff] %vm4950, %v7139
      %v7204 = vrot.slane %v4479, 4
      %v7205 = vrot.slane %v4480, 4
      %v7206 = vsel %vm1154, %v7204, %v7205
      %v7207 = vrot.slane %v4481, 4
      %v7208 = vsel %vm1154, %v7205, %v7207
      %7209 = vrot.lane.b32.xlu0 %v5209, 24
      %v7210 = vpop.permute.xlu0 %7209
      %7211 = vrot.lane.b32.xlu0 %v5211, 24
      %v7212 = vpop.permute.xlu0 %7211
      %7213 = vrot.lane.b32.xlu0 %v5214, 24
      %v7214 = vpop.permute.xlu0 %7213
      %7215 = vrot.lane.b32.xlu0 %v5216, 24
      %v7216 = vpop.permute.xlu0 %7215
      %7217 = vrot.lane.b32.xlu0 %v5219, 24
      %v7218 = vpop.permute.xlu0 %7217
      %7219 = vrot.lane.b32.xlu0 %v5221, 24
      %v7220 = vpop.permute.xlu0 %7219
      %7221 = vrot.lane.b32.xlu0 %v5224, 24
      %v7222 = vpop.permute.xlu0 %7221
      %7223 = vrot.lane.b32.xlu0 %v5226, 24
      %v7224 = vpop.permute.xlu0 %7223
      %7225 = vrot.lane.b32.xlu0 %v5229, 24
      %v7226 = vpop.permute.xlu0 %7225
      %7227 = vrot.lane.b32.xlu0 %v5231, 24
      %v7228 = vpop.permute.xlu0 %7227
      %7229 = vrot.lane.b32.xlu0 %v5234, 24
      %v7230 = vpop.permute.xlu0 %7229
      %7231 = vrot.lane.b32.xlu0 %v5236, 24
      %v7232 = vpop.permute.xlu0 %7231
      %7233 = vrot.lane.b32.xlu0 %v5239, 24
      %v7234 = vpop.permute.xlu0 %7233
      %7235 = vrot.lane.b32.xlu0 %v5241, 24
      %v7236 = vpop.permute.xlu0 %7235
      %7237 = vrot.lane.b32.xlu0 %v5244, 24
      %v7238 = vpop.permute.xlu0 %7237
      %7239 = vrot.lane.b32.xlu0 %v5246, 24
      %v7240 = vpop.permute.xlu0 %7239
      %7241 = vrot.lane.b32.xlu0 %v5249, 24
      %v7242 = vpop.permute.xlu0 %7241
      %7243 = vrot.lane.b32.xlu0 %v5251, 24
      %v7244 = vpop.permute.xlu0 %7243
      %7245 = vrot.lane.b32.xlu0 %v5254, 24
      %v7246 = vpop.permute.xlu0 %7245
      %7247 = vrot.lane.b32.xlu0 %v5256, 24
      %v7248 = vpop.permute.xlu0 %7247
      %7249 = vrot.lane.b32.xlu0 %v5259, 24
      %v7250 = vpop.permute.xlu0 %7249
      %7251 = vrot.lane.b32.xlu0 %v5261, 24
      %v7252 = vpop.permute.xlu0 %7251
      %7253 = vrot.lane.b32.xlu0 %v5264, 24
      %v7254 = vpop.permute.xlu0 %7253
      %7255 = vrot.lane.b32.xlu0 %v5266, 24
      %v7256 = vpop.permute.xlu0 %7255
      %7257 = vrot.lane.b32.xlu0 %v5269, 24
      %v7258 = vpop.permute.xlu0 %7257
      %7259 = vrot.lane.b32.xlu0 %v5271, 24
      %v7260 = vpop.permute.xlu0 %7259
      %7261 = vrot.lane.b32.xlu0 %v5937, 24
      %v7262 = vpop.permute.xlu0 %7261
      %7263 = vrot.lane.b32.xlu0 %v5939, 24
      %v7264 = vpop.permute.xlu0 %7263
      %7265 = vrot.lane.b32.xlu0 %v6605, 24
      %v7266 = vpop.permute.xlu0 %7265
      %7267 = vrot.lane.b32.xlu0 %v6607, 24
      %v7268 = vpop.permute.xlu0 %7267
      %7269 = vrot.lane.b32.xlu0 %v7206, 24
      %v7270 = vpop.permute.xlu0 %7269
      %7271 = vrot.lane.b32.xlu0 %v7208, 24
      %v7272 = vpop.permute.xlu0 %7271
      %7305 = vst.msk [vmem:[#allocation5 + $0x8] sm:$0xff] %vm5159, %v7210
      %7306 = vst.msk [vmem:[#allocation5 + $0x18] sm:$0xff] %vm5159, %v7212
      %7307 = vst.msk [vmem:[#allocation5 + $0x28] sm:$0xff] %vm5159, %v7214
      %7308 = vst.msk [vmem:[#allocation5 + $0x38] sm:$0xff] %vm5159, %v7216
      %7309 = vst.msk [vmem:[#allocation5 + $0x48] sm:$0xff] %vm5159, %v7218
      %7310 = vst.msk [vmem:[#allocation5 + $0x58] sm:$0xff] %vm5159, %v7220
      %7311 = vst.msk [vmem:[#allocation5 + $0x68] sm:$0xff] %vm5159, %v7222
      %7312 = vst.msk [vmem:[#allocation5 + $0x78] sm:$0xff] %vm5159, %v7224
      %7313 = vst.msk [vmem:[#allocation5 + $0x88] sm:$0xff] %vm5159, %v7226
      %7314 = vst.msk [vmem:[#allocation5 + $0x98] sm:$0xff] %vm5159, %v7228
      %7315 = vst.msk [vmem:[#allocation5 + $0xa8] sm:$0xff] %vm5159, %v7230
      %7316 = vst.msk [vmem:[#allocation5 + $0xb8] sm:$0xff] %vm5159, %v7232
      %7317 = vst.msk [vmem:[#allocation5 + $0xc8] sm:$0xff] %vm5159, %v7234
      %7318 = vst.msk [vmem:[#allocation5 + $0xd8] sm:$0xff] %vm5159, %v7236
      %7319 = vst.msk [vmem:[#allocation5 + $0xe8] sm:$0xff] %vm5159, %v7238
      %7320 = vst.msk [vmem:[#allocation5 + $0xf8] sm:$0xff] %vm5159, %v7240
      %7321 = vst.msk [vmem:[#allocation5 + $0x108] sm:$0xff] %vm5159, %v7242
      %7322 = vst.msk [vmem:[#allocation5 + $0x118] sm:$0xff] %vm5159, %v7244
      %7323 = vst.msk [vmem:[#allocation5 + $0x128] sm:$0xff] %vm5159, %v7246
      %7324 = vst.msk [vmem:[#allocation5 + $0x138] sm:$0xff] %vm5159, %v7248
      %7325 = vst.msk [vmem:[#allocation5 + $0x148] sm:$0xff] %vm5159, %v7250
      %7326 = vst.msk [vmem:[#allocation5 + $0x158] sm:$0xff] %vm5159, %v7252
      %7327 = vst.msk [vmem:[#allocation5 + $0x168] sm:$0xff] %vm5159, %v7254
      %7328 = vst.msk [vmem:[#allocation5 + $0x178] sm:$0xff] %vm5159, %v7256
      %7329 = vst.msk [vmem:[#allocation5 + $0x188] sm:$0xff] %vm5159, %v7258
      %7330 = vst.msk [vmem:[#allocation5 + $0x198] sm:$0xff] %vm5159, %v7260
      %7331 = vst.msk [vmem:[#allocation5 + $0x1a8] sm:$0xff] %vm5159, %v7262
      %7332 = vst.msk [vmem:[#allocation5 + $0x1b8] sm:$0xff] %vm5159, %v7264
      %7333 = vst.msk [vmem:[#allocation5 + $0x1c8] sm:$0xff] %vm5159, %v7266
      %7334 = vst.msk [vmem:[#allocation5 + $0x1d8] sm:$0xff] %vm5159, %v7268
      %7335 = vst.msk [vmem:[#allocation5 + $0x1e8] sm:$0xff] %vm5159, %v7270
      %7336 = vst.msk [vmem:[#allocation5 + $0x1f8] sm:$0xff] %vm5159, %v7272
      %7339 = vrot.lane.b32.xlu0 %v4437, 32
      %v7340 = vpop.permute.xlu0 %7339
      %7341 = vrot.lane.b32.xlu0 %v4438, 32
      %v7342 = vpop.permute.xlu0 %7341
      %7343 = vrot.lane.b32.xlu0 %v4440, 32
      %v7344 = vpop.permute.xlu0 %7343
      %7345 = vrot.lane.b32.xlu0 %v4441, 32
      %v7346 = vpop.permute.xlu0 %7345
      %7347 = vrot.lane.b32.xlu0 %v4443, 32
      %v7348 = vpop.permute.xlu0 %7347
      %7349 = vrot.lane.b32.xlu0 %v4444, 32
      %v7350 = vpop.permute.xlu0 %7349
      %7351 = vrot.lane.b32.xlu0 %v4446, 32
      %v7352 = vpop.permute.xlu0 %7351
      %7353 = vrot.lane.b32.xlu0 %v4447, 32
      %v7354 = vpop.permute.xlu0 %7353
      %7355 = vrot.lane.b32.xlu0 %v4449, 32
      %v7356 = vpop.permute.xlu0 %7355
      %7357 = vrot.lane.b32.xlu0 %v4450, 32
      %v7358 = vpop.permute.xlu0 %7357
      %7359 = vrot.lane.b32.xlu0 %v4452, 32
      %v7360 = vpop.permute.xlu0 %7359
      %7361 = vrot.lane.b32.xlu0 %v4453, 32
      %v7362 = vpop.permute.xlu0 %7361
      %7363 = vrot.lane.b32.xlu0 %v4455, 32
      %v7364 = vpop.permute.xlu0 %7363
      %7365 = vrot.lane.b32.xlu0 %v4456, 32
      %v7366 = vpop.permute.xlu0 %7365
      %7367 = vrot.lane.b32.xlu0 %v4458, 32
      %v7368 = vpop.permute.xlu0 %7367
      %7369 = vrot.lane.b32.xlu0 %v4459, 32
      %v7370 = vpop.permute.xlu0 %7369
      %7371 = vrot.lane.b32.xlu0 %v4461, 32
      %v7372 = vpop.permute.xlu0 %7371
      %7373 = vrot.lane.b32.xlu0 %v4462, 32
      %v7374 = vpop.permute.xlu0 %7373
      %7375 = vrot.lane.b32.xlu0 %v4464, 32
      %v7376 = vpop.permute.xlu0 %7375
      %7377 = vrot.lane.b32.xlu0 %v4465, 32
      %v7378 = vpop.permute.xlu0 %7377
      %7379 = vrot.lane.b32.xlu0 %v4467, 32
      %v7380 = vpop.permute.xlu0 %7379
      %7381 = vrot.lane.b32.xlu0 %v4468, 32
      %v7382 = vpop.permute.xlu0 %7381
      %7383 = vrot.lane.b32.xlu0 %v4470, 32
      %v7384 = vpop.permute.xlu0 %7383
      %7385 = vrot.lane.b32.xlu0 %v4471, 32
      %v7386 = vpop.permute.xlu0 %7385
      %7387 = vrot.lane.b32.xlu0 %v4473, 32
      %v7388 = vpop.permute.xlu0 %7387
      %7389 = vrot.lane.b32.xlu0 %v4474, 32
      %v7390 = vpop.permute.xlu0 %7389
      %7391 = vrot.lane.b32.xlu0 %v4476, 32
      %v7392 = vpop.permute.xlu0 %7391
      %7393 = vrot.lane.b32.xlu0 %v4477, 32
      %v7394 = vpop.permute.xlu0 %7393
      %7395 = vrot.lane.b32.xlu0 %v4479, 32
      %v7396 = vpop.permute.xlu0 %7395
      %7397 = vrot.lane.b32.xlu0 %v4480, 32
      %v7398 = vpop.permute.xlu0 %7397
      %7399 = vrot.lane.b32.xlu0 %v4482, 32
      %v7400 = vpop.permute.xlu0 %7399
      %7401 = vrot.lane.b32.xlu0 %v4483, 32
      %v7402 = vpop.permute.xlu0 %7401
      %7435 = vst.msk [vmem:[#allocation5 + $0x8] sm:$0xff] %vm5368, %v7340
      %7436 = vst.msk [vmem:[#allocation5 + $0x18] sm:$0xff] %vm5368, %v7342
      %7437 = vst.msk [vmem:[#allocation5 + $0x28] sm:$0xff] %vm5368, %v7344
      %7438 = vst.msk [vmem:[#allocation5 + $0x38] sm:$0xff] %vm5368, %v7346
      %7439 = vst.msk [vmem:[#allocation5 + $0x48] sm:$0xff] %vm5368, %v7348
      %7440 = vst.msk [vmem:[#allocation5 + $0x58] sm:$0xff] %vm5368, %v7350
      %7441 = vst.msk [vmem:[#allocation5 + $0x68] sm:$0xff] %vm5368, %v7352
      %7442 = vst.msk [vmem:[#allocation5 + $0x78] sm:$0xff] %vm5368, %v7354
      %7443 = vst.msk [vmem:[#allocation5 + $0x88] sm:$0xff] %vm5368, %v7356
      %7444 = vst.msk [vmem:[#allocation5 + $0x98] sm:$0xff] %vm5368, %v7358
      %7445 = vst.msk [vmem:[#allocation5 + $0xa8] sm:$0xff] %vm5368, %v7360
      %7446 = vst.msk [vmem:[#allocation5 + $0xb8] sm:$0xff] %vm5368, %v7362
      %7447 = vst.msk [vmem:[#allocation5 + $0xc8] sm:$0xff] %vm5368, %v7364
      %7448 = vst.msk [vmem:[#allocation5 + $0xd8] sm:$0xff] %vm5368, %v7366
      %7449 = vst.msk [vmem:[#allocation5 + $0xe8] sm:$0xff] %vm5368, %v7368
      %7450 = vst.msk [vmem:[#allocation5 + $0xf8] sm:$0xff] %vm5368, %v7370
      %7451 = vst.msk [vmem:[#allocation5 + $0x108] sm:$0xff] %vm5368, %v7372
      %7452 = vst.msk [vmem:[#allocation5 + $0x118] sm:$0xff] %vm5368, %v7374
      %7453 = vst.msk [vmem:[#allocation5 + $0x128] sm:$0xff] %vm5368, %v7376
      %7454 = vst.msk [vmem:[#allocation5 + $0x138] sm:$0xff] %vm5368, %v7378
      %7455 = vst.msk [vmem:[#allocation5 + $0x148] sm:$0xff] %vm5368, %v7380
      %7456 = vst.msk [vmem:[#allocation5 + $0x158] sm:$0xff] %vm5368, %v7382
      %7457 = vst.msk [vmem:[#allocation5 + $0x168] sm:$0xff] %vm5368, %v7384
      %7458 = vst.msk [vmem:[#allocation5 + $0x178] sm:$0xff] %vm5368, %v7386
      %7459 = vst.msk [vmem:[#allocation5 + $0x188] sm:$0xff] %vm5368, %v7388
      %7460 = vst.msk [vmem:[#allocation5 + $0x198] sm:$0xff] %vm5368, %v7390
      %7461 = vst.msk [vmem:[#allocation5 + $0x1a8] sm:$0xff] %vm5368, %v7392
      %7462 = vst.msk [vmem:[#allocation5 + $0x1b8] sm:$0xff] %vm5368, %v7394
      %7463 = vst.msk [vmem:[#allocation5 + $0x1c8] sm:$0xff] %vm5368, %v7396
      %7464 = vst.msk [vmem:[#allocation5 + $0x1d8] sm:$0xff] %vm5368, %v7398
      %7465 = vst.msk [vmem:[#allocation5 + $0x1e8] sm:$0xff] %vm5368, %v7400
      %7466 = vst.msk [vmem:[#allocation5 + $0x1f8] sm:$0xff] %vm5368, %v7402
      %v7468 = vrot.slane %v4482, 1
      %v7469 = vrot.slane %v4483, 1
      %v7470 = vsel %vm524, %v7468, %v7469
      %v7471 = vrot.slane %v4484, 1
      %v7472 = vsel %vm524, %v7469, %v7471
      %7473 = vrot.lane.b32.xlu0 %v4587, 40
      %v7474 = vpop.permute.xlu0 %7473
      %7475 = vrot.lane.b32.xlu0 %v4589, 40
      %v7476 = vpop.permute.xlu0 %7475
      %7477 = vrot.lane.b32.xlu0 %v4592, 40
      %v7478 = vpop.permute.xlu0 %7477
      %7479 = vrot.lane.b32.xlu0 %v4594, 40
      %v7480 = vpop.permute.xlu0 %7479
      %7481 = vrot.lane.b32.xlu0 %v4597, 40
      %v7482 = vpop.permute.xlu0 %7481
      %7483 = vrot.lane.b32.xlu0 %v4599, 40
      %v7484 = vpop.permute.xlu0 %7483
      %7485 = vrot.lane.b32.xlu0 %v4602, 40
      %v7486 = vpop.permute.xlu0 %7485
      %7487 = vrot.lane.b32.xlu0 %v4604, 40
      %v7488 = vpop.permute.xlu0 %7487
      %7489 = vrot.lane.b32.xlu0 %v4607, 40
      %v7490 = vpop.permute.xlu0 %7489
      %7491 = vrot.lane.b32.xlu0 %v4609, 40
      %v7492 = vpop.permute.xlu0 %7491
      %7493 = vrot.lane.b32.xlu0 %v4612, 40
      %v7494 = vpop.permute.xlu0 %7493
      %7495 = vrot.lane.b32.xlu0 %v4614, 40
      %v7496 = vpop.permute.xlu0 %7495
      %7497 = vrot.lane.b32.xlu0 %v4617, 40
      %v7498 = vpop.permute.xlu0 %7497
      %7499 = vrot.lane.b32.xlu0 %v4619, 40
      %v7500 = vpop.permute.xlu0 %7499
      %7501 = vrot.lane.b32.xlu0 %v4622, 40
      %v7502 = vpop.permute.xlu0 %7501
      %7503 = vrot.lane.b32.xlu0 %v4624, 40
      %v7504 = vpop.permute.xlu0 %7503
      %7505 = vrot.lane.b32.xlu0 %v4627, 40
      %v7506 = vpop.permute.xlu0 %7505
      %7507 = vrot.lane.b32.xlu0 %v4629, 40
      %v7508 = vpop.permute.xlu0 %7507
      %7509 = vrot.lane.b32.xlu0 %v4632, 40
      %v7510 = vpop.permute.xlu0 %7509
      %7511 = vrot.lane.b32.xlu0 %v4634, 40
      %v7512 = vpop.permute.xlu0 %7511
      %7513 = vrot.lane.b32.xlu0 %v4637, 40
      %v7514 = vpop.permute.xlu0 %7513
      %7515 = vrot.lane.b32.xlu0 %v4639, 40
      %v7516 = vpop.permute.xlu0 %7515
      %7517 = vrot.lane.b32.xlu0 %v4642, 40
      %v7518 = vpop.permute.xlu0 %7517
      %7519 = vrot.lane.b32.xlu0 %v4644, 40
      %v7520 = vpop.permute.xlu0 %7519
      %7521 = vrot.lane.b32.xlu0 %v5535, 40
      %v7522 = vpop.permute.xlu0 %7521
      %7523 = vrot.lane.b32.xlu0 %v5537, 40
      %v7524 = vpop.permute.xlu0 %7523
      %7525 = vrot.lane.b32.xlu0 %v6203, 40
      %v7526 = vpop.permute.xlu0 %7525
      %7527 = vrot.lane.b32.xlu0 %v6205, 40
      %v7528 = vpop.permute.xlu0 %7527
      %7529 = vrot.lane.b32.xlu0 %v6871, 40
      %v7530 = vpop.permute.xlu0 %7529
      %7531 = vrot.lane.b32.xlu0 %v6873, 40
      %v7532 = vpop.permute.xlu0 %7531
      %7533 = vrot.lane.b32.xlu0 %v7470, 40
      %v7534 = vpop.permute.xlu0 %7533
      %7535 = vrot.lane.b32.xlu0 %v7472, 40
      %v7536 = vpop.permute.xlu0 %7535
      %7569 = vst.msk [vmem:[#allocation5 + $0x8] sm:$0xff] %vm5499, %v7474
      %7570 = vst.msk [vmem:[#allocation5 + $0x18] sm:$0xff] %vm5499, %v7476
      %7571 = vst.msk [vmem:[#allocation5 + $0x28] sm:$0xff] %vm5499, %v7478
      %7572 = vst.msk [vmem:[#allocation5 + $0x38] sm:$0xff] %vm5499, %v7480
      %7573 = vst.msk [vmem:[#allocation5 + $0x48] sm:$0xff] %vm5499, %v7482
      %7574 = vst.msk [vmem:[#allocation5 + $0x58] sm:$0xff] %vm5499, %v7484
      %7575 = vst.msk [vmem:[#allocation5 + $0x68] sm:$0xff] %vm5499, %v7486
      %7576 = vst.msk [vmem:[#allocation5 + $0x78] sm:$0xff] %vm5499, %v7488
      %7577 = vst.msk [vmem:[#allocation5 + $0x88] sm:$0xff] %vm5499, %v7490
      %7578 = vst.msk [vmem:[#allocation5 + $0x98] sm:$0xff] %vm5499, %v7492
      %7579 = vst.msk [vmem:[#allocation5 + $0xa8] sm:$0xff] %vm5499, %v7494
      %7580 = vst.msk [vmem:[#allocation5 + $0xb8] sm:$0xff] %vm5499, %v7496
      %7581 = vst.msk [vmem:[#allocation5 + $0xc8] sm:$0xff] %vm5499, %v7498
      %7582 = vst.msk [vmem:[#allocation5 + $0xd8] sm:$0xff] %vm5499, %v7500
      %7583 = vst.msk [vmem:[#allocation5 + $0xe8] sm:$0xff] %vm5499, %v7502
      %7584 = vst.msk [vmem:[#allocation5 + $0xf8] sm:$0xff] %vm5499, %v7504
      %7585 = vst.msk [vmem:[#allocation5 + $0x108] sm:$0xff] %vm5499, %v7506
      %7586 = vst.msk [vmem:[#allocation5 + $0x118] sm:$0xff] %vm5499, %v7508
      %7587 = vst.msk [vmem:[#allocation5 + $0x128] sm:$0xff] %vm5499, %v7510
      %7588 = vst.msk [vmem:[#allocation5 + $0x138] sm:$0xff] %vm5499, %v7512
      %7589 = vst.msk [vmem:[#allocation5 + $0x148] sm:$0xff] %vm5499, %v7514
      %7590 = vst.msk [vmem:[#allocation5 + $0x158] sm:$0xff] %vm5499, %v7516
      %7591 = vst.msk [vmem:[#allocation5 + $0x168] sm:$0xff] %vm5499, %v7518
      %7592 = vst.msk [vmem:[#allocation5 + $0x178] sm:$0xff] %vm5499, %v7520
      %7593 = vst.msk [vmem:[#allocation5 + $0x188] sm:$0xff] %vm5499, %v7522
      %7594 = vst.msk [vmem:[#allocation5 + $0x198] sm:$0xff] %vm5499, %v7524
      %7595 = vst.msk [vmem:[#allocation5 + $0x1a8] sm:$0xff] %vm5499, %v7526
      %7596 = vst.msk [vmem:[#allocation5 + $0x1b8] sm:$0xff] %vm5499, %v7528
      %7597 = vst.msk [vmem:[#allocation5 + $0x1c8] sm:$0xff] %vm5499, %v7530
      %7598 = vst.msk [vmem:[#allocation5 + $0x1d8] sm:$0xff] %vm5499, %v7532
      %7599 = vst.msk [vmem:[#allocation5 + $0x1e8] sm:$0xff] %vm5499, %v7534
      %7600 = vst.msk [vmem:[#allocation5 + $0x1f8] sm:$0xff] %vm5499, %v7536
      %v7601 = vrot.slane %v4482, 2
      %v7602 = vrot.slane %v4483, 2
      %v7603 = vsel %vm734, %v7601, %v7602
      %v7604 = vrot.slane %v4484, 2
      %v7605 = vsel %vm734, %v7602, %v7604
      %7606 = vrot.lane.b32.xlu0 %v4796, 48
      %v7607 = vpop.permute.xlu0 %7606
      %7608 = vrot.lane.b32.xlu0 %v4798, 48
      %v7609 = vpop.permute.xlu0 %7608
      %7610 = vrot.lane.b32.xlu0 %v4801, 48
      %v7611 = vpop.permute.xlu0 %7610
      %7612 = vrot.lane.b32.xlu0 %v4803, 48
      %v7613 = vpop.permute.xlu0 %7612
      %7614 = vrot.lane.b32.xlu0 %v4806, 48
      %v7615 = vpop.permute.xlu0 %7614
      %7616 = vrot.lane.b32.xlu0 %v4808, 48
      %v7617 = vpop.permute.xlu0 %7616
      %7618 = vrot.lane.b32.xlu0 %v4811, 48
      %v7619 = vpop.permute.xlu0 %7618
      %7620 = vrot.lane.b32.xlu0 %v4813, 48
      %v7621 = vpop.permute.xlu0 %7620
      %7622 = vrot.lane.b32.xlu0 %v4816, 48
      %v7623 = vpop.permute.xlu0 %7622
      %7624 = vrot.lane.b32.xlu0 %v4818, 48
      %v7625 = vpop.permute.xlu0 %7624
      %7626 = vrot.lane.b32.xlu0 %v4821, 48
      %v7627 = vpop.permute.xlu0 %7626
      %7628 = vrot.lane.b32.xlu0 %v4823, 48
      %v7629 = vpop.permute.xlu0 %7628
      %7630 = vrot.lane.b32.xlu0 %v4826, 48
      %v7631 = vpop.permute.xlu0 %7630
      %7632 = vrot.lane.b32.xlu0 %v4828, 48
      %v7633 = vpop.permute.xlu0 %7632
      %7634 = vrot.lane.b32.xlu0 %v4831, 48
      %v7635 = vpop.permute.xlu0 %7634
      %7636 = vrot.lane.b32.xlu0 %v4833, 48
      %v7637 = vpop.permute.xlu0 %7636
      %7638 = vrot.lane.b32.xlu0 %v4836, 48
      %v7639 = vpop.permute.xlu0 %7638
      %7640 = vrot.lane.b32.xlu0 %v4838, 48
      %v7641 = vpop.permute.xlu0 %7640
      %7642 = vrot.lane.b32.xlu0 %v4841, 48
      %v7643 = vpop.permute.xlu0 %7642
      %7644 = vrot.lane.b32.xlu0 %v4843, 48
      %v7645 = vpop.permute.xlu0 %7644
      %7646 = vrot.lane.b32.xlu0 %v4846, 48
      %v7647 = vpop.permute.xlu0 %7646
      %7648 = vrot.lane.b32.xlu0 %v4848, 48
      %v7649 = vpop.permute.xlu0 %7648
      %7650 = vrot.lane.b32.xlu0 %v4851, 48
      %v7651 = vpop.permute.xlu0 %7650
      %7652 = vrot.lane.b32.xlu0 %v4853, 48
      %v7653 = vpop.permute.xlu0 %7652
      %7654 = vrot.lane.b32.xlu0 %v5669, 48
      %v7655 = vpop.permute.xlu0 %7654
      %7656 = vrot.lane.b32.xlu0 %v5671, 48
      %v7657 = vpop.permute.xlu0 %7656
      %7658 = vrot.lane.b32.xlu0 %v6337, 48
      %v7659 = vpop.permute.xlu0 %7658
      %7660 = vrot.lane.b32.xlu0 %v6339, 48
      %v7661 = vpop.permute.xlu0 %7660
      %7662 = vrot.lane.b32.xlu0 %v6940, 48
      %v7663 = vpop.permute.xlu0 %7662
      %7664 = vrot.lane.b32.xlu0 %v6942, 48
      %v7665 = vpop.permute.xlu0 %7664
      %7666 = vrot.lane.b32.xlu0 %v7603, 48
      %v7667 = vpop.permute.xlu0 %7666
      %7668 = vrot.lane.b32.xlu0 %v7605, 48
      %v7669 = vpop.permute.xlu0 %7668
      %7702 = vst.msk [vmem:[#allocation5 + $0x8] sm:$0xff] %vm5634, %v7607
      %7703 = vst.msk [vmem:[#allocation5 + $0x18] sm:$0xff] %vm5634, %v7609
      %7704 = vst.msk [vmem:[#allocation5 + $0x28] sm:$0xff] %vm5634, %v7611
      %7705 = vst.msk [vmem:[#allocation5 + $0x38] sm:$0xff] %vm5634, %v7613
      %7706 = vst.msk [vmem:[#allocation5 + $0x48] sm:$0xff] %vm5634, %v7615
      %7707 = vst.msk [vmem:[#allocation5 + $0x58] sm:$0xff] %vm5634, %v7617
      %7708 = vst.msk [vmem:[#allocation5 + $0x68] sm:$0xff] %vm5634, %v7619
      %7709 = vst.msk [vmem:[#allocation5 + $0x78] sm:$0xff] %vm5634, %v7621
      %7710 = vst.msk [vmem:[#allocation5 + $0x88] sm:$0xff] %vm5634, %v7623
      %7711 = vst.msk [vmem:[#allocation5 + $0x98] sm:$0xff] %vm5634, %v7625
      %7712 = vst.msk [vmem:[#allocation5 + $0xa8] sm:$0xff] %vm5634, %v7627
      %7713 = vst.msk [vmem:[#allocation5 + $0xb8] sm:$0xff] %vm5634, %v7629
      %7714 = vst.msk [vmem:[#allocation5 + $0xc8] sm:$0xff] %vm5634, %v7631
      %7715 = vst.msk [vmem:[#allocation5 + $0xd8] sm:$0xff] %vm5634, %v7633
      %7716 = vst.msk [vmem:[#allocation5 + $0xe8] sm:$0xff] %vm5634, %v7635
      %7717 = vst.msk [vmem:[#allocation5 + $0xf8] sm:$0xff] %vm5634, %v7637
      %7718 = vst.msk [vmem:[#allocation5 + $0x108] sm:$0xff] %vm5634, %v7639
      %7719 = vst.msk [vmem:[#allocation5 + $0x118] sm:$0xff] %vm5634, %v7641
      %7720 = vst.msk [vmem:[#allocation5 + $0x128] sm:$0xff] %vm5634, %v7643
      %7721 = vst.msk [vmem:[#allocation5 + $0x138] sm:$0xff] %vm5634, %v7645
      %7722 = vst.msk [vmem:[#allocation5 + $0x148] sm:$0xff] %vm5634, %v7647
      %7723 = vst.msk [vmem:[#allocation5 + $0x158] sm:$0xff] %vm5634, %v7649
      %7724 = vst.msk [vmem:[#allocation5 + $0x168] sm:$0xff] %vm5634, %v7651
      %7725 = vst.msk [vmem:[#allocation5 + $0x178] sm:$0xff] %vm5634, %v7653
      %7726 = vst.msk [vmem:[#allocation5 + $0x188] sm:$0xff] %vm5634, %v7655
      %7727 = vst.msk [vmem:[#allocation5 + $0x198] sm:$0xff] %vm5634, %v7657
      %7728 = vst.msk [vmem:[#allocation5 + $0x1a8] sm:$0xff] %vm5634, %v7659
      %7729 = vst.msk [vmem:[#allocation5 + $0x1b8] sm:$0xff] %vm5634, %v7661
      %7730 = vst.msk [vmem:[#allocation5 + $0x1c8] sm:$0xff] %vm5634, %v7663
      %7731 = vst.msk [vmem:[#allocation5 + $0x1d8] sm:$0xff] %vm5634, %v7665
      %7732 = vst.msk [vmem:[#allocation5 + $0x1e8] sm:$0xff] %vm5634, %v7667
      %7733 = vst.msk [vmem:[#allocation5 + $0x1f8] sm:$0xff] %vm5634, %v7669
      %v7734 = vrot.slane %v4482, 3
      %v7735 = vrot.slane %v4483, 3
      %v7736 = vsel %vm944, %v7734, %v7735
      %v7737 = vrot.slane %v4484, 3
      %v7738 = vsel %vm944, %v7735, %v7737
      %7739 = vrot.lane.b32.xlu0 %v5005, 56
      %v7740 = vpop.permute.xlu0 %7739
      %7741 = vrot.lane.b32.xlu0 %v5007, 56
      %v7742 = vpop.permute.xlu0 %7741
      %7743 = vrot.lane.b32.xlu0 %v5010, 56
      %v7744 = vpop.permute.xlu0 %7743
      %7745 = vrot.lane.b32.xlu0 %v5012, 56
      %v7746 = vpop.permute.xlu0 %7745
      %7747 = vrot.lane.b32.xlu0 %v5015, 56
      %v7748 = vpop.permute.xlu0 %7747
      %7749 = vrot.lane.b32.xlu0 %v5017, 56
      %v7750 = vpop.permute.xlu0 %7749
      %7751 = vrot.lane.b32.xlu0 %v5020, 56
      %v7752 = vpop.permute.xlu0 %7751
      %7753 = vrot.lane.b32.xlu0 %v5022, 56
      %v7754 = vpop.permute.xlu0 %7753
      %7755 = vrot.lane.b32.xlu0 %v5025, 56
      %v7756 = vpop.permute.xlu0 %7755
      %7757 = vrot.lane.b32.xlu0 %v5027, 56
      %v7758 = vpop.permute.xlu0 %7757
      %7759 = vrot.lane.b32.xlu0 %v5030, 56
      %v7760 = vpop.permute.xlu0 %7759
      %7761 = vrot.lane.b32.xlu0 %v5032, 56
      %v7762 = vpop.permute.xlu0 %7761
      %7763 = vrot.lane.b32.xlu0 %v5035, 56
      %v7764 = vpop.permute.xlu0 %7763
      %7765 = vrot.lane.b32.xlu0 %v5037, 56
      %v7766 = vpop.permute.xlu0 %7765
      %7767 = vrot.lane.b32.xlu0 %v5040, 56
      %v7768 = vpop.permute.xlu0 %7767
      %7769 = vrot.lane.b32.xlu0 %v5042, 56
      %v7770 = vpop.permute.xlu0 %7769
      %7771 = vrot.lane.b32.xlu0 %v5045, 56
      %v7772 = vpop.permute.xlu0 %7771
      %7773 = vrot.lane.b32.xlu0 %v5047, 56
      %v7774 = vpop.permute.xlu0 %7773
      %7775 = vrot.lane.b32.xlu0 %v5050, 56
      %v7776 = vpop.permute.xlu0 %7775
      %7777 = vrot.lane.b32.xlu0 %v5052, 56
      %v7778 = vpop.permute.xlu0 %7777
      %7779 = vrot.lane.b32.xlu0 %v5055, 56
      %v7780 = vpop.permute.xlu0 %7779
      %7781 = vrot.lane.b32.xlu0 %v5057, 56
      %v7782 = vpop.permute.xlu0 %7781
      %7783 = vrot.lane.b32.xlu0 %v5060, 56
      %v7784 = vpop.permute.xlu0 %7783
      %7785 = vrot.lane.b32.xlu0 %v5062, 56
      %v7786 = vpop.permute.xlu0 %7785
      %7787 = vrot.lane.b32.xlu0 %v5803, 56
      %v7788 = vpop.permute.xlu0 %7787
      %7789 = vrot.lane.b32.xlu0 %v5805, 56
      %v7790 = vpop.permute.xlu0 %7789
      %7791 = vrot.lane.b32.xlu0 %v6471, 56
      %v7792 = vpop.permute.xlu0 %7791
      %7793 = vrot.lane.b32.xlu0 %v6473, 56
      %v7794 = vpop.permute.xlu0 %7793
      %7795 = vrot.lane.b32.xlu0 %v7073, 56
      %v7796 = vpop.permute.xlu0 %7795
      %7797 = vrot.lane.b32.xlu0 %v7075, 56
      %v7798 = vpop.permute.xlu0 %7797
      %7799 = vrot.lane.b32.xlu0 %v7736, 56
      %v7800 = vpop.permute.xlu0 %7799
      %7801 = vrot.lane.b32.xlu0 %v7738, 56
      %v7802 = vpop.permute.xlu0 %7801
      %7835 = vst.msk [vmem:[#allocation5 + $0x8] sm:$0xff] %vm5768, %v7740
      %7836 = vst.msk [vmem:[#allocation5 + $0x18] sm:$0xff] %vm5768, %v7742
      %7837 = vst.msk [vmem:[#allocation5 + $0x28] sm:$0xff] %vm5768, %v7744
      %7838 = vst.msk [vmem:[#allocation5 + $0x38] sm:$0xff] %vm5768, %v7746
      %7839 = vst.msk [vmem:[#allocation5 + $0x48] sm:$0xff] %vm5768, %v7748
      %7840 = vst.msk [vmem:[#allocation5 + $0x58] sm:$0xff] %vm5768, %v7750
      %7841 = vst.msk [vmem:[#allocation5 + $0x68] sm:$0xff] %vm5768, %v7752
      %7842 = vst.msk [vmem:[#allocation5 + $0x78] sm:$0xff] %vm5768, %v7754
      %7843 = vst.msk [vmem:[#allocation5 + $0x88] sm:$0xff] %vm5768, %v7756
      %7844 = vst.msk [vmem:[#allocation5 + $0x98] sm:$0xff] %vm5768, %v7758
      %7845 = vst.msk [vmem:[#allocation5 + $0xa8] sm:$0xff] %vm5768, %v7760
      %7846 = vst.msk [vmem:[#allocation5 + $0xb8] sm:$0xff] %vm5768, %v7762
      %7847 = vst.msk [vmem:[#allocation5 + $0xc8] sm:$0xff] %vm5768, %v7764
      %7848 = vst.msk [vmem:[#allocation5 + $0xd8] sm:$0xff] %vm5768, %v7766
      %7849 = vst.msk [vmem:[#allocation5 + $0xe8] sm:$0xff] %vm5768, %v7768
      %7850 = vst.msk [vmem:[#allocation5 + $0xf8] sm:$0xff] %vm5768, %v7770
      %7851 = vst.msk [vmem:[#allocation5 + $0x108] sm:$0xff] %vm5768, %v7772
      %7852 = vst.msk [vmem:[#allocation5 + $0x118] sm:$0xff] %vm5768, %v7774
      %7853 = vst.msk [vmem:[#allocation5 + $0x128] sm:$0xff] %vm5768, %v7776
      %7854 = vst.msk [vmem:[#allocation5 + $0x138] sm:$0xff] %vm5768, %v7778
      %7855 = vst.msk [vmem:[#allocation5 + $0x148] sm:$0xff] %vm5768, %v7780
      %7856 = vst.msk [vmem:[#allocation5 + $0x158] sm:$0xff] %vm5768, %v7782
      %7857 = vst.msk [vmem:[#allocation5 + $0x168] sm:$0xff] %vm5768, %v7784
      %7858 = vst.msk [vmem:[#allocation5 + $0x178] sm:$0xff] %vm5768, %v7786
      %7859 = vst.msk [vmem:[#allocation5 + $0x188] sm:$0xff] %vm5768, %v7788
      %7860 = vst.msk [vmem:[#allocation5 + $0x198] sm:$0xff] %vm5768, %v7790
      %7861 = vst.msk [vmem:[#allocation5 + $0x1a8] sm:$0xff] %vm5768, %v7792
      %7862 = vst.msk [vmem:[#allocation5 + $0x1b8] sm:$0xff] %vm5768, %v7794
      %7863 = vst.msk [vmem:[#allocation5 + $0x1c8] sm:$0xff] %vm5768, %v7796
      %7864 = vst.msk [vmem:[#allocation5 + $0x1d8] sm:$0xff] %vm5768, %v7798
      %7865 = vst.msk [vmem:[#allocation5 + $0x1e8] sm:$0xff] %vm5768, %v7800
      %7866 = vst.msk [vmem:[#allocation5 + $0x1f8] sm:$0xff] %vm5768, %v7802
      %v7867 = vrot.slane %v4482, 4
      %v7868 = vrot.slane %v4483, 4
      %v7869 = vsel %vm1154, %v7867, %v7868
      %v7870 = vrot.slane %v4484, 4
      %v7871 = vsel %vm1154, %v7868, %v7870
      %7872 = vrot.lane.b32.xlu0 %v5214, 64
      %v7873 = vpop.permute.xlu0 %7872
      %7874 = vrot.lane.b32.xlu0 %v5216, 64
      %v7875 = vpop.permute.xlu0 %7874
      %7876 = vrot.lane.b32.xlu0 %v5219, 64
      %v7877 = vpop.permute.xlu0 %7876
      %7878 = vrot.lane.b32.xlu0 %v5221, 64
      %v7879 = vpop.permute.xlu0 %7878
      %7880 = vrot.lane.b32.xlu0 %v5224, 64
      %v7881 = vpop.permute.xlu0 %7880
      %7882 = vrot.lane.b32.xlu0 %v5226, 64
      %v7883 = vpop.permute.xlu0 %7882
      %7884 = vrot.lane.b32.xlu0 %v5229, 64
      %v7885 = vpop.permute.xlu0 %7884
      %7886 = vrot.lane.b32.xlu0 %v5231, 64
      %v7887 = vpop.permute.xlu0 %7886
      %7888 = vrot.lane.b32.xlu0 %v5234, 64
      %v7889 = vpop.permute.xlu0 %7888
      %7890 = vrot.lane.b32.xlu0 %v5236, 64
      %v7891 = vpop.permute.xlu0 %7890
      %7892 = vrot.lane.b32.xlu0 %v5239, 64
      %v7893 = vpop.permute.xlu0 %7892
      %7894 = vrot.lane.b32.xlu0 %v5241, 64
      %v7895 = vpop.permute.xlu0 %7894
      %7896 = vrot.lane.b32.xlu0 %v5244, 64
      %v7897 = vpop.permute.xlu0 %7896
      %7898 = vrot.lane.b32.xlu0 %v5246, 64
      %v7899 = vpop.permute.xlu0 %7898
      %7900 = vrot.lane.b32.xlu0 %v5249, 64
      %v7901 = vpop.permute.xlu0 %7900
      %7902 = vrot.lane.b32.xlu0 %v5251, 64
      %v7903 = vpop.permute.xlu0 %7902
      %7904 = vrot.lane.b32.xlu0 %v5254, 64
      %v7905 = vpop.permute.xlu0 %7904
      %7906 = vrot.lane.b32.xlu0 %v5256, 64
      %v7907 = vpop.permute.xlu0 %7906
      %7908 = vrot.lane.b32.xlu0 %v5259, 64
      %v7909 = vpop.permute.xlu0 %7908
      %7910 = vrot.lane.b32.xlu0 %v5261, 64
      %v7911 = vpop.permute.xlu0 %7910
      %7912 = vrot.lane.b32.xlu0 %v5264, 64
      %v7913 = vpop.permute.xlu0 %7912
      %7914 = vrot.lane.b32.xlu0 %v5266, 64
      %v7915 = vpop.permute.xlu0 %7914
      %7916 = vrot.lane.b32.xlu0 %v5269, 64
      %v7917 = vpop.permute.xlu0 %7916
      %7918 = vrot.lane.b32.xlu0 %v5271, 64
      %v7919 = vpop.permute.xlu0 %7918
      %7920 = vrot.lane.b32.xlu0 %v5937, 64
      %v7921 = vpop.permute.xlu0 %7920
      %7922 = vrot.lane.b32.xlu0 %v5939, 64
      %v7923 = vpop.permute.xlu0 %7922
      %7924 = vrot.lane.b32.xlu0 %v6605, 64
      %v7925 = vpop.permute.xlu0 %7924
      %7926 = vrot.lane.b32.xlu0 %v6607, 64
      %v7927 = vpop.permute.xlu0 %7926
      %7928 = vrot.lane.b32.xlu0 %v7206, 64
      %v7929 = vpop.permute.xlu0 %7928
      %7930 = vrot.lane.b32.xlu0 %v7208, 64
      %v7931 = vpop.permute.xlu0 %7930
      %7932 = vrot.lane.b32.xlu0 %v7869, 64
      %v7933 = vpop.permute.xlu0 %7932
      %7934 = vrot.lane.b32.xlu0 %v7871, 64
      %v7935 = vpop.permute.xlu0 %7934
      %7968 = vst.msk [vmem:[#allocation5 + $0x8] sm:$0xff] %vm5902, %v7873
      %7969 = vst.msk [vmem:[#allocation5 + $0x18] sm:$0xff] %vm5902, %v7875
      %7970 = vst.msk [vmem:[#allocation5 + $0x28] sm:$0xff] %vm5902, %v7877
      %7971 = vst.msk [vmem:[#allocation5 + $0x38] sm:$0xff] %vm5902, %v7879
      %7972 = vst.msk [vmem:[#allocation5 + $0x48] sm:$0xff] %vm5902, %v7881
      %7973 = vst.msk [vmem:[#allocation5 + $0x58] sm:$0xff] %vm5902, %v7883
      %7974 = vst.msk [vmem:[#allocation5 + $0x68] sm:$0xff] %vm5902, %v7885
      %7975 = vst.msk [vmem:[#allocation5 + $0x78] sm:$0xff] %vm5902, %v7887
      %7976 = vst.msk [vmem:[#allocation5 + $0x88] sm:$0xff] %vm5902, %v7889
      %7977 = vst.msk [vmem:[#allocation5 + $0x98] sm:$0xff] %vm5902, %v7891
      %7978 = vst.msk [vmem:[#allocation5 + $0xa8] sm:$0xff] %vm5902, %v7893
      %7979 = vst.msk [vmem:[#allocation5 + $0xb8] sm:$0xff] %vm5902, %v7895
      %7980 = vst.msk [vmem:[#allocation5 + $0xc8] sm:$0xff] %vm5902, %v7897
      %7981 = vst.msk [vmem:[#allocation5 + $0xd8] sm:$0xff] %vm5902, %v7899
      %7982 = vst.msk [vmem:[#allocation5 + $0xe8] sm:$0xff] %vm5902, %v7901
      %7983 = vst.msk [vmem:[#allocation5 + $0xf8] sm:$0xff] %vm5902, %v7903
      %7984 = vst.msk [vmem:[#allocation5 + $0x108] sm:$0xff] %vm5902, %v7905
      %7985 = vst.msk [vmem:[#allocation5 + $0x118] sm:$0xff] %vm5902, %v7907
      %7986 = vst.msk [vmem:[#allocation5 + $0x128] sm:$0xff] %vm5902, %v7909
      %7987 = vst.msk [vmem:[#allocation5 + $0x138] sm:$0xff] %vm5902, %v7911
      %7988 = vst.msk [vmem:[#allocation5 + $0x148] sm:$0xff] %vm5902, %v7913
      %7989 = vst.msk [vmem:[#allocation5 + $0x158] sm:$0xff] %vm5902, %v7915
      %7990 = vst.msk [vmem:[#allocation5 + $0x168] sm:$0xff] %vm5902, %v7917
      %7991 = vst.msk [vmem:[#allocation5 + $0x178] sm:$0xff] %vm5902, %v7919
      %7992 = vst.msk [vmem:[#allocation5 + $0x188] sm:$0xff] %vm5902, %v7921
      %7993 = vst.msk [vmem:[#allocation5 + $0x198] sm:$0xff] %vm5902, %v7923
      %7994 = vst.msk [vmem:[#allocation5 + $0x1a8] sm:$0xff] %vm5902, %v7925
      %7995 = vst.msk [vmem:[#allocation5 + $0x1b8] sm:$0xff] %vm5902, %v7927
      %7996 = vst.msk [vmem:[#allocation5 + $0x1c8] sm:$0xff] %vm5902, %v7929
      %7997 = vst.msk [vmem:[#allocation5 + $0x1d8] sm:$0xff] %vm5902, %v7931
      %7998 = vst.msk [vmem:[#allocation5 + $0x1e8] sm:$0xff] %vm5902, %v7933
      %7999 = vst.msk [vmem:[#allocation5 + $0x1f8] sm:$0xff] %vm5902, %v7935
      %v8000 = vld [vmem:[#allocation5] sm:$0xff]
      %v8001 = vld [vmem:[#allocation5 + $0x8] sm:$0xff]
      %v8002 = vld [vmem:[#allocation5 + $0x10] sm:$0xff]
      %v8003 = vld [vmem:[#allocation5 + $0x18] sm:$0xff]
      %v8004 = vld [vmem:[#allocation5 + $0x20] sm:$0xff]
      %v8005 = vld [vmem:[#allocation5 + $0x28] sm:$0xff]
      %v8006 = vld [vmem:[#allocation5 + $0x30] sm:$0xff]
      %v8007 = vld [vmem:[#allocation5 + $0x38] sm:$0xff]
      %v8008 = vld [vmem:[#allocation5 + $0x40] sm:$0xff]
      %v8009 = vld [vmem:[#allocation5 + $0x48] sm:$0xff]
      %v8010 = vld [vmem:[#allocation5 + $0x50] sm:$0xff]
      %v8011 = vld [vmem:[#allocation5 + $0x58] sm:$0xff]
      %v8012 = vld [vmem:[#allocation5 + $0x60] sm:$0xff]
      %v8013 = vld [vmem:[#allocation5 + $0x68] sm:$0xff]
      %v8014 = vld [vmem:[#allocation5 + $0x70] sm:$0xff]
      %v8015 = vld [vmem:[#allocation5 + $0x78] sm:$0xff]
      %v8016 = vld [vmem:[#allocation5 + $0x80] sm:$0xff]
      %v8017 = vld [vmem:[#allocation5 + $0x88] sm:$0xff]
      %v8018 = vld [vmem:[#allocation5 + $0x90] sm:$0xff]
      %v8019 = vld [vmem:[#allocation5 + $0x98] sm:$0xff]
      %v8020 = vld [vmem:[#allocation5 + $0xa0] sm:$0xff]
      %v8021 = vld [vmem:[#allocation5 + $0xa8] sm:$0xff]
      %v8022 = vld [vmem:[#allocation5 + $0xb0] sm:$0xff]
      %v8023 = vld [vmem:[#allocation5 + $0xb8] sm:$0xff]
      %v8024 = vld [vmem:[#allocation5 + $0xc0] sm:$0xff]
      %v8025 = vld [vmem:[#allocation5 + $0xc8] sm:$0xff]
      %v8026 = vld [vmem:[#allocation5 + $0xd0] sm:$0xff]
      %v8027 = vld [vmem:[#allocation5 + $0xd8] sm:$0xff]
      %v8028 = vld [vmem:[#allocation5 + $0xe0] sm:$0xff]
      %v8029 = vld [vmem:[#allocation5 + $0xe8] sm:$0xff]
      %v8030 = vld [vmem:[#allocation5 + $0xf0] sm:$0xff]
      %v8031 = vld [vmem:[#allocation5 + $0xf8] sm:$0xff]
      %v8032 = vld [vmem:[#allocation5 + $0x100] sm:$0xff]
      %v8033 = vld [vmem:[#allocation5 + $0x108] sm:$0xff]
      %v8034 = vld [vmem:[#allocation5 + $0x110] sm:$0xff]
      %v8035 = vld [vmem:[#allocation5 + $0x118] sm:$0xff]
      %v8036 = vld [vmem:[#allocation5 + $0x120] sm:$0xff]
      %v8037 = vld [vmem:[#allocation5 + $0x128] sm:$0xff]
      %v8038 = vld [vmem:[#allocation5 + $0x130] sm:$0xff]
      %v8039 = vld [vmem:[#allocation5 + $0x138] sm:$0xff]
      %v8040 = vld [vmem:[#allocation5 + $0x140] sm:$0xff]
      %v8041 = vld [vmem:[#allocation5 + $0x148] sm:$0xff]
      %v8042 = vld [vmem:[#allocation5 + $0x150] sm:$0xff]
      %v8043 = vld [vmem:[#allocation5 + $0x158] sm:$0xff]
      %v8044 = vld [vmem:[#allocation5 + $0x160] sm:$0xff]
      %v8045 = vld [vmem:[#allocation5 + $0x168] sm:$0xff]
      %v8046 = vld [vmem:[#allocation5 + $0x170] sm:$0xff]
      %v8047 = vld [vmem:[#allocation5 + $0x178] sm:$0xff]
      %v8048 = vld [vmem:[#allocation5 + $0x180] sm:$0xff]
      %v8049 = vld [vmem:[#allocation5 + $0x188] sm:$0xff]
      %v8050 = vld [vmem:[#allocation5 + $0x190] sm:$0xff]
      %v8051 = vld [vmem:[#allocation5 + $0x198] sm:$0xff]
      %v8052 = vld [vmem:[#allocation5 + $0x1a0] sm:$0xff]
      %v8053 = vld [vmem:[#allocation5 + $0x1a8] sm:$0xff]
      %v8054 = vld [vmem:[#allocation5 + $0x1b0] sm:$0xff]
      %v8055 = vld [vmem:[#allocation5 + $0x1b8] sm:$0xff]
      %v8056 = vld [vmem:[#allocation5 + $0x1c0] sm:$0xff]
      %v8057 = vld [vmem:[#allocation5 + $0x1c8] sm:$0xff]
      %v8058 = vld [vmem:[#allocation5 + $0x1d0] sm:$0xff]
      %v8059 = vld [vmem:[#allocation5 + $0x1d8] sm:$0xff]
      %v8060 = vld [vmem:[#allocation5 + $0x1e0] sm:$0xff]
      %v8061 = vld [vmem:[#allocation5 + $0x1e8] sm:$0xff]
      %v8062 = vld [vmem:[#allocation5 + $0x1f0] sm:$0xff]
      %v8063 = vld [vmem:[#allocation5 + $0x1f8] sm:$0xff]
      %v8064 = vld [vmem:[%s2] sm:$0xff]
      %v8065 = vld [vmem:[%s4] sm:$0xf]
      %8067 = vset.pattern.permute.xlu0 0
      %8068 = vperm.xlu0 %8067, %v8065
      %v8069 = vpop.permute.xlu0 %8068
      %8072 = vst [vmem:[#allocation1] ss:$2 sm:$0xff] %v8064
      %v8073 = vld.sshfl [vmem:[#allocation1] sm:$0xff pattern:$0x75316420]
      %v8074 = vld.sshfl [vmem:[#allocation1 + $0x8] sm:$0xff pattern:$0x75316420]
      %vm8076 = vcmask 588800
      %v8077 = vsel %vm8076, %v8074, 0
      %v8080 = vsel %vm8076, %v8001, 0
      %v8083 = vsel %vm8076, %v8003, 0
      %v8086 = vsel %vm8076, %v8005, 0
      %v8089 = vsel %vm8076, %v8007, 0
      %v8092 = vsel %vm8076, %v8009, 0
      %v8095 = vsel %vm8076, %v8011, 0
      %v8098 = vsel %vm8076, %v8013, 0
      %v8101 = vsel %vm8076, %v8015, 0
      %v8104 = vsel %vm8076, %v8017, 0
      %v8107 = vsel %vm8076, %v8019, 0
      %v8110 = vsel %vm8076, %v8021, 0
      %v8113 = vsel %vm8076, %v8023, 0
      %v8116 = vsel %vm8076, %v8025, 0
      %v8119 = vsel %vm8076, %v8027, 0
      %v8122 = vsel %vm8076, %v8029, 0
      %v8125 = vsel %vm8076, %v8031, 0
      %v8128 = vsel %vm8076, %v8033, 0
      %v8131 = vsel %vm8076, %v8035, 0
      %v8134 = vsel %vm8076, %v8037, 0
      %v8137 = vsel %vm8076, %v8039, 0
      %v8140 = vsel %vm8076, %v8041, 0
      %v8143 = vsel %vm8076, %v8043, 0
      %v8146 = vsel %vm8076, %v8045, 0
      %v8149 = vsel %vm8076, %v8047, 0
      %v8152 = vsel %vm8076, %v8049, 0
      %v8155 = vsel %vm8076, %v8051, 0
      %v8158 = vsel %vm8076, %v8053, 0
      %v8161 = vsel %vm8076, %v8055, 0
      %v8164 = vsel %vm8076, %v8057, 0
      %v8167 = vsel %vm8076, %v8059, 0
      %v8170 = vsel %vm8076, %v8061, 0
      %v8173 = vsel %vm8076, %v8063, 0
      %8175 = vmatpush.xpose.msra.mxu0 %v8030
      %8176 = vmatpush.xpose.msra.mxu0 %v8028
      %8177 = vmatpush.xpose.msra.mxu0 %v8026
      %8178 = vmatpush.xpose.msra.mxu0 %v8024
      %8179 = vmatpush.xpose.msra.mxu0 %v8022
      %8180 = vmatpush.xpose.msra.mxu0 %v8020
      %8181 = vmatpush.xpose.msra.mxu0 %v8018
      %8182 = vmatpush.xpose.msra.mxu0 %v8016
      %8183 = vmatpush.xpose.msra.mxu0 %v8014
      %8184 = vmatpush.xpose.msra.mxu0 %v8012
      %8185 = vmatpush.xpose.msra.mxu0 %v8010
      %8186 = vmatpush.xpose.msra.mxu0 %v8008
      %8187 = vmatpush.xpose.msra.mxu0 %v8006
      %8188 = vmatpush.xpose.msra.mxu0 %v8004
      %8189 = vmatpush.xpose.msra.mxu0 %v8002
      %8190 = vmatpush.xpose.msra.mxu0 %v8000
      %8191 = vmatmul.f32.gmra.mxu0 %v8073
      %v8192 = vpop.f32.mrf.mxu0
      %v8193 = vadd.f32 %v8069, %v8192
      %8194 = vdwg.mxu0
      %8195 = vmatpush.xpose.msra.mxu0 %v8125
      %8196 = vmatpush.xpose.msra.mxu0 %v8122
      %8197 = vmatpush.xpose.msra.mxu0 %v8119
      %8198 = vmatpush.xpose.msra.mxu0 %v8116
      %8199 = vmatpush.xpose.msra.mxu0 %v8113
      %8200 = vmatpush.xpose.msra.mxu0 %v8110
      %8201 = vmatpush.xpose.msra.mxu0 %v8107
      %8202 = vmatpush.xpose.msra.mxu0 %v8104
      %8203 = vmatpush.xpose.msra.mxu0 %v8101
      %8204 = vmatpush.xpose.msra.mxu0 %v8098
      %8205 = vmatpush.xpose.msra.mxu0 %v8095
      %8206 = vmatpush.xpose.msra.mxu0 %v8092
      %8207 = vmatpush.xpose.msra.mxu0 %v8089
      %8208 = vmatpush.xpose.msra.mxu0 %v8086
      %8209 = vmatpush.xpose.msra.mxu0 %v8083
      %8210 = vmatpush.xpose.msra.mxu0 %v8080
      %8211 = vmatmul.f32.gmra.mxu0 %v8077
      %v8212 = vpop.f32.mrf.mxu0
      %v8213 = vadd.f32 %v8193, %v8212
      %8214 = vdwg.mxu0
      %8215 = vmatpush.xpose.msra.mxu0 %v8062
      %8216 = vmatpush.xpose.msra.mxu0 %v8060
      %8217 = vmatpush.xpose.msra.mxu0 %v8058
      %8218 = vmatpush.xpose.msra.mxu0 %v8056
      %8219 = vmatpush.xpose.msra.mxu0 %v8054
      %8220 = vmatpush.xpose.msra.mxu0 %v8052
      %8221 = vmatpush.xpose.msra.mxu0 %v8050
      %8222 = vmatpush.xpose.msra.mxu0 %v8048
      %8223 = vmatpush.xpose.msra.mxu0 %v8046
      %8224 = vmatpush.xpose.msra.mxu0 %v8044
      %8225 = vmatpush.xpose.msra.mxu0 %v8042
      %8226 = vmatpush.xpose.msra.mxu0 %v8040
      %8227 = vmatpush.xpose.msra.mxu0 %v8038
      %8228 = vmatpush.xpose.msra.mxu0 %v8036
      %8229 = vmatpush.xpose.msra.mxu0 %v8034
      %8230 = vmatpush.xpose.msra.mxu0 %v8032
      %8231 = vmatmul.f32.gmra.mxu0 %v8073
      %v8232 = vpop.f32.mrf.mxu0
      %v8233 = vadd.f32 %v8069, %v8232
      %8234 = vdwg.mxu0
      %8235 = vmatpush.xpose.msra.mxu0 %v8173
      %8236 = vmatpush.xpose.msra.mxu0 %v8170
      %8237 = vmatpush.xpose.msra.mxu0 %v8167
      %8238 = vmatpush.xpose.msra.mxu0 %v8164
      %8239 = vmatpush.xpose.msra.mxu0 %v8161
      %8240 = vmatpush.xpose.msra.mxu0 %v8158
      %8241 = vmatpush.xpose.msra.mxu0 %v8155
      %8242 = vmatpush.xpose.msra.mxu0 %v8152
      %8243 = vmatpush.xpose.msra.mxu0 %v8149
      %8244 = vmatpush.xpose.msra.mxu0 %v8146
      %8245 = vmatpush.xpose.msra.mxu0 %v8143
      %8246 = vmatpush.xpose.msra.mxu0 %v8140
      %8247 = vmatpush.xpose.msra.mxu0 %v8137
      %8248 = vmatpush.xpose.msra.mxu0 %v8134
      %8249 = vmatpush.xpose.msra.mxu0 %v8131
      %8250 = vmatpush.xpose.msra.mxu0 %v8128
      %8251 = vmatmul.f32.gmra.mxu0 %v8077
      %v8252 = vpop.f32.mrf.mxu0
      %v8253 = vadd.f32 %v8233, %v8252
      %8254 = vdwg.mxu0
      %v8257 = vrot.slane %v8253, 4
      %v8258 = vsel %vm1154, %v8213, %v8257
      %8260 = vst [vmem:[%s224] sm:$0xff] %v8258
      %p8261 = scmp.lt.s32.totalorder %s16, 1
      %s8262 = scalar_select %p8261, %s16, 1
      %s8263 = smul.addr %s8262, 2
      %s8264 = smul.addr %s8263, 4
      %s8265 = scalar_lea.vmem %s5, %s8264
      // Predicated region
      $region41: #{cnn_forward.1} parent=39 // pred_check
        %p8266 = pneg %p144
      $region42: #{cnn_forward.1} parent=39 // pred_check_branch
        %8268 = sbr.rel (%p8266) target = $region44
      $region43: #{cnn_forward.1} parent=39 // pred_region
        _
      $region44: #{cnn_forward.1} parent=39 // pred_fallthru
        _
    $region40: #{cnn_forward.1} parent=5 // pred_fallthru
      _
    %p8269 = scmp.le.s32.totalorder 2, %s11
    // Predicated region
    $region45: #{cnn_forward.1} parent=5 // pred_check
      %p8270 = pneg %p8269
    $region46: #{cnn_forward.1} parent=5 // pred_check_branch
      %8272 = sbr.rel (%p8270) target = $region48
    $region47: #{cnn_forward.1} parent=5 // pred_region
      %s8273 = ssub.s32 %s11, 2
      // Predicated region
      $region49: #{cnn_forward.1} parent=47 // pred_check
        %p8274 = pneg %p150
      $region50: #{cnn_forward.1} parent=47 // pred_check_branch
        %8276 = sbr.rel (%p8274) target = $region52
      $region51: #{cnn_forward.1} parent=47 // pred_region
        %p8277 = scmp.lt.s32.totalorder %s17, 1
        %s8278 = scalar_select %p8277, %s17, 1
        %s8279 = smul.addr %s8278, 2
        %s8280 = smul.addr %s8279, 4
        %s8281 = scalar_lea.vmem %s5, %s8280
      $region52: #{cnn_forward.1} parent=47 // pred_fallthru
        _
    $region48: #{cnn_forward.1} parent=5 // pred_fallthru
      _
  $region6: #{cnn_forward.1} parent=0 // loop_footer
    %s15 = sadd.s32 1, %s11
  $region7: #{cnn_forward.1} parent=0 // loop_footer_branch
    %10 = sbr.rel target = $region3
  $region8: #{cnn_forward.1} parent=0 // loop_exit
    _

</llo_original>
